<compile_context>
chip_gen: v6e
topology: v6e:2x2x1
jax: 0.10.0
libtpu: 0.0.40
codegen_flags: <defaults>
</compile_context>

<pallas_src>
import jax
import jax.numpy as jnp
from jax.experimental import pallas as pl
from jax.experimental.pallas import tpu as pltpu


# ---------------------- generic tiled matmul + bias kernel ----------------------

def _matmul_bias_kernel(x_ref, w_ref, b_ref, o_ref):
    # x (tm, K) bf16, w (K, tn) bf16, b (1, tn) f32 -> o (tm, tn) in o.dtype
    acc = jnp.dot(x_ref[...], w_ref[...], preferred_element_type=jnp.float32)
    o_ref[...] = (acc + b_ref[...]).astype(o_ref.dtype)


def _pick_tile(n, candidates):
    for c in candidates:
        if c <= n and n % c == 0:
            return c
    return n


def _matmul_bias(x, w, b, out_dtype):
    """(M, K) @ (K, N) + b with bf16 MXU operands and f32 accumulation.

    Both grid axes are "parallel" (v7x megacore can split them); (K, tn) weight tiles
    are streamed so fc_w never needs to be fully VMEM-resident; output blocks are
    lane-dense multiples of 128.
    """
    M, K = x.shape
    N = w.shape[1]
    tm = _pick_tile(M, (256, 128, 64, 32, 16, 8))
    tn = _pick_tile(N, (512, 256, 128))
    grid = (M // tm, N // tn)

    out_size = jnp.dtype(out_dtype).itemsize
    # double-buffered input/output blocks + headroom
    need = 2 * (tm * K * 2 + K * tn * 2 + tn * 4 + tm * tn * out_size)
    vmem_limit = int(min(max(need + (4 << 20), 32 << 20), 128 << 20))

    return pl.pallas_call(
        _matmul_bias_kernel,
        out_shape=jax.ShapeDtypeStruct((M, N), out_dtype),
        grid_spec=pltpu.PrefetchScalarGridSpec(
            num_scalar_prefetch=0,
            grid=grid,
            in_specs=[
                pl.BlockSpec((tm, K), lambda i, j: (i, 0)),
                pl.BlockSpec((K, tn), lambda i, j: (0, j)),
                pl.BlockSpec((1, tn), lambda i, j: (0, j)),
            ],
            out_specs=pl.BlockSpec((tm, tn), lambda i, j: (i, j)),
        ),
        compiler_params=pltpu.CompilerParams(
            dimension_semantics=("parallel", "parallel"),
            vmem_limit_bytes=vmem_limit,
        ),
    )(x, w, b)


# --------------------------- fused LSTM recurrence kernel ------------------------

def _recurrence_kernel(enc_xp_ref, dec_xp_ref, enc_w_hh_ref, dec_w_hh_ref,
                       hs_ref, h_scr, c_scr):
    T_enc = enc_xp_ref.shape[0]
    T_dec = dec_xp_ref.shape[0]
    Hp = h_scr.shape[-1]

    h_scr[...] = jnp.zeros_like(h_scr)
    c_scr[...] = jnp.zeros_like(c_scr)

    def lstm_step(xp_t, w_hh_ref):
        # xp_t already holds x_t @ W_ih^T + (b_ih + b_hh) (bf16); upcast for gate math.
        # W_hh is read from the ref here (not hoisted) so it folds into the MXU operand
        # stream instead of living across the whole loop in vregs.
        gates = xp_t.astype(jnp.float32) + jnp.dot(
            h_scr[...].astype(jnp.bfloat16), w_hh_ref[...],
            preferred_element_type=jnp.float32)                      # (Bp, 4Hp) f32
        i = jax.nn.sigmoid(gates[:, 0 * Hp:1 * Hp])
        f = jax.nn.sigmoid(gates[:, 1 * Hp:2 * Hp])
        g = jnp.tanh(gates[:, 2 * Hp:3 * Hp])
        o = jax.nn.sigmoid(gates[:, 3 * Hp:4 * Hp])
        c_new = f * c_scr[...] + i * g
        h_new = o * jnp.tanh(c_new)
        c_scr[...] = c_new
        h_scr[...] = h_new
        return h_new

    # Fully unroll only short recurrences; long ones stay rolled to bound the bundle
    # stream and vreg live ranges.
    @pl.loop(0, T_enc, unroll=(T_enc <= 16))
    def _(t):
        lstm_step(enc_xp_ref[t], enc_w_hh_ref)

    @pl.loop(0, T_dec, unroll=(T_dec <= 16))
    def _(t):
        h_new = lstm_step(dec_xp_ref[t], dec_w_hh_ref)
        hs_ref[t] = h_new.astype(hs_ref.dtype)


def _run_recurrence(enc_xp, dec_xp, enc_w_hh_t, dec_w_hh_t):
    T_enc, Bp, _ = enc_xp.shape
    T_dec = dec_xp.shape[0]
    Hp = enc_w_hh_t.shape[0]

    need = ((enc_xp.size + dec_xp.size + enc_w_hh_t.size + dec_w_hh_t.size) * 2
            + T_dec * Bp * Hp * 2            # hs output (bf16)
            + 2 * Bp * Hp * 4)               # h, c scratch (f32)
    vmem_limit = int(min(max(need + (4 << 20), 32 << 20), 128 << 20))

    # No grid: single invocation, every operand single-buffered in VMEM (a grid of (1,)
    # would double-buffer every constant).  The recurrence is inherently sequential, so
    # it stays on one TensorCore; the parallel work lives in _matmul_bias.
    return pl.pallas_call(
        _recurrence_kernel,
        out_shape=jax.ShapeDtypeStruct((T_dec, Bp, Hp), jnp.bfloat16),
        scratch_shapes=[
            pltpu.VMEM((Bp, Hp), jnp.float32),   # h
            pltpu.VMEM((Bp, Hp), jnp.float32),   # c
        ],
        compiler_params=pltpu.CompilerParams(vmem_limit_bytes=vmem_limit),
    )(enc_xp, dec_xp, enc_w_hh_t, dec_w_hh_t)


# -------------------------- wrapper (pad + transpose + cast) ---------------------

def _round_up(x, m):
    return (x + m - 1) // m * m


def _pack_lstm_weights(w_ih, w_hh, b_ih, b_hh, Ep, Hp):
    """PyTorch (4H,E)/(4H,H)/(4H,) [i,f,g,o] -> padded, pre-transposed bf16 weights and
    f32 summed bias: (Ep,4Hp), (Hp,4Hp), (1,4Hp)."""
    fourH, E = w_ih.shape
    H = fourH // 4
    w_ih4 = jnp.pad(w_ih.reshape(4, H, E), ((0, 0), (0, Hp - H), (0, Ep - E)))
    w_ih_t = jnp.transpose(w_ih4.reshape(4 * Hp, Ep)).astype(jnp.bfloat16)   # (Ep, 4Hp)
    w_hh4 = jnp.pad(w_hh.reshape(4, H, H), ((0, 0), (0, Hp - H), (0, Hp - H)))
    w_hh_t = jnp.transpose(w_hh4.reshape(4 * Hp, Hp)).astype(jnp.bfloat16)   # (Hp, 4Hp)
    b = jnp.pad((b_ih + b_hh).reshape(4, H), ((0, 0), (0, Hp - H))).reshape(1, 4 * Hp)
    return w_ih_t, w_hh_t, b.astype(jnp.float32)


def _pack_fc_weights(w_fc, b_fc, Hp, Vp):
    V, H = w_fc.shape
    w_t = jnp.transpose(jnp.pad(w_fc, ((0, Vp - V), (0, Hp - H)))).astype(jnp.bfloat16)
    b = jnp.pad(b_fc, (0, Vp - V)).reshape(1, Vp).astype(jnp.float32)
    return w_t, b


def _embed_time_major(emb, ids, Bp, Ep):
    x = jnp.take(emb, ids, axis=0)                  # (B, T, E)  embedding lookup (glue)
    x = jnp.transpose(x, (1, 0, 2))                 # (T, B, E)  time-major
    T, B, E = x.shape
    x = jnp.pad(x, ((0, 0), (0, Bp - B), (0, Ep - E)))
    return x.astype(jnp.bfloat16)


def init_params(key, vocab_size, embedding_dim, hidden_dim):
    ks = jax.random.split(key, 12)
    H, E, V = hidden_dim, embedding_dim, vocab_size
    s = 0.1
    emb = jax.random.normal(ks[0], (V, E), jnp.float32) * s
    emb = emb.at[0].set(0.0)  # padding_idx=0
    return {
        "embedding": emb,
        "enc_w_ih": jax.random.normal(ks[1], (4 * H, E), jnp.float32) * s,
        "enc_w_hh": jax.random.normal(ks[2], (4 * H, H), jnp.float32) * s,
        "enc_b_ih": jax.random.normal(ks[3], (4 * H,), jnp.float32) * s,
        "enc_b_hh": jax.random.normal(ks[4], (4 * H,), jnp.float32) * s,
        "dec_w_ih": jax.random.normal(ks[5], (4 * H, E), jnp.float32) * s,
        "dec_w_hh": jax.random.normal(ks[6], (4 * H, H), jnp.float32) * s,
        "dec_b_ih": jax.random.normal(ks[7], (4 * H,), jnp.float32) * s,
        "dec_b_hh": jax.random.normal(ks[8], (4 * H,), jnp.float32) * s,
        "fc_w": jax.random.normal(ks[9], (V, H), jnp.float32) * s,
        "fc_b": jax.random.normal(ks[10], (V,), jnp.float32) * s,
    }


def seq2seq_forward(params, encoder_input, decoder_input):
    emb = params["embedding"]
    V, E = emb.shape
    H = params["enc_w_hh"].shape[1]
    B, T_dec = decoder_input.shape
    T_enc = encoder_input.shape[1]

    # Bp rounded to 16 so bf16 arrays land on exact (16,128) sublane tiles.  For real
    # throughput, batch many sequences per call (the recurrence matmul fills Bp MXU rows).
    Bp = _round_up(B, 16)
    Ep = _round_up(E, 128)
    Hp = _round_up(H, 128)
    Vp = _round_up(V, 128)

    enc_x = _embed_time_major(emb, encoder_input, Bp, Ep)     # (T_enc, Bp, Ep) bf16
    dec_x = _embed_time_major(emb, decoder_input, Bp, Ep)     # (T_dec, Bp, Ep) bf16

    enc_w_ih_t, enc_w_hh_t, enc_b = _pack_lstm_weights(
        params["enc_w_ih"], params["enc_w_hh"],
        params["enc_b_ih"], params["enc_b_hh"], Ep, Hp)
    dec_w_ih_t, dec_w_hh_t, dec_b = _pack_lstm_weights(
        params["dec_w_ih"], params["dec_w_hh"],
        params["dec_b_ih"], params["dec_b_hh"], Ep, Hp)
    fc_w_t, fc_b = _pack_fc_weights(params["fc_w"], params["fc_b"], Hp, Vp)

    # Hoisted input projections (off the recurrence critical path): tiled parallel matmuls.
    enc_xp = _matmul_bias(enc_x.reshape(T_enc * Bp, Ep), enc_w_ih_t, enc_b,
                          jnp.bfloat16).reshape(T_enc, Bp, 4 * Hp)
    dec_xp = _matmul_bias(dec_x.reshape(T_dec * Bp, Ep), dec_w_ih_t, dec_b,
                          jnp.bfloat16).reshape(T_dec, Bp, 4 * Hp)

    # Sequential encoder -> decoder recurrence (single fused kernel, h/c carried over).
    hs = _run_recurrence(enc_xp, dec_xp, enc_w_hh_t, dec_w_hh_t)  # (T_dec, Bp, Hp) bf16

    # Final Linear over all decoder timesteps, tiled over (rows, vocab), both parallel.
    logits = _matmul_bias(hs.reshape(T_dec * Bp, Hp), fc_w_t, fc_b,
                          jnp.float32).reshape(T_dec, Bp, Vp)
    logits = logits[:, :B, :V]
    return jnp.transpose(logits, (1, 0, 2))                       # (B, T_dec, V)


# ------------------------------ JAX reference (f32) ------------------------------

def _ref_lstm_cell(x_t, h, c, w_ih, w_hh, b):
    gates = x_t @ w_ih.T + h @ w_hh.T + b
    H = h.shape[-1]
    i = jax.nn.sigmoid(gates[:, 0 * H:1 * H])
    f = jax.nn.sigmoid(gates[:, 1 * H:2 * H])
    g = jnp.tanh(gates[:, 2 * H:3 * H])
    o = jax.nn.sigmoid(gates[:, 3 * H:4 * H])
    c_new = f * c + i * g
    h_new = o * jnp.tanh(c_new)
    return h_new, c_new


def _ref_lstm(x_tbe, h0, c0, w_ih, w_hh, b):
    def step(carry, x_t):
        h, c = carry
        h_new, c_new = _ref_lstm_cell(x_t, h, c, w_ih, w_hh, b)
        return (h_new, c_new), h_new
    (h_n, c_n), hs = jax.lax.scan(step, (h0, c0), x_tbe)
    return hs, h_n, c_n


def seq2seq_reference(params, encoder_input, decoder_input):
    emb = params["embedding"]
    enc_x = jnp.transpose(jnp.take(emb, encoder_input, axis=0), (1, 0, 2))
    dec_x = jnp.transpose(jnp.take(emb, decoder_input, axis=0), (1, 0, 2))
    B = encoder_input.shape[0]
    H = params["enc_w_hh"].shape[1]
    z = jnp.zeros((B, H), jnp.float32)
    enc_b = (params["enc_b_ih"] + params["enc_b_hh"])[None, :]
    dec_b = (params["dec_b_ih"] + params["dec_b_hh"])[None, :]
    _, h_n, c_n = _ref_lstm(enc_x, z, z, params["enc_w_ih"], params["enc_w_hh"], enc_b)
    hs, _, _ = _ref_lstm(dec_x, h_n, c_n, params["dec_w_ih"], params["dec_w_hh"], dec_b)
    logits = jnp.einsum("tbh,vh->tbv", hs, params["fc_w"]) + params["fc_b"]
    return jnp.transpose(logits, (1, 0, 2))


# ------------------------------------- main --------------------------------------

if __name__ == "__main__":
    VOCAB, EMB, HID = 32, 16, 32
    B, T_ENC, T_DEC = 2, 8, 8

    key = jax.random.PRNGKey(0)
    k_param, k_enc, k_dec = jax.random.split(key, 3)
    params = init_params(k_param, VOCAB, EMB, HID)

    encoder_input = jax.random.randint(k_enc, (B, T_ENC), 0, VOCAB, dtype=jnp.int32)
    decoder_input = jax.random.randint(k_dec, (B, T_DEC), 0, VOCAB, dtype=jnp.int32)

    out = jax.jit(seq2seq_forward)(params, encoder_input, decoder_input)
    out = jax.block_until_ready(out)

    ref = seq2seq_reference(params, encoder_input, decoder_input)
    assert out.shape == (B, T_DEC, VOCAB), out.shape
    # bf16 MXU operands (deliberate, per perf review) -> compare at bf16-level tolerance.
    assert jnp.allclose(out, ref, atol=2e-2, rtol=2e-2), "mismatch vs JAX reference"

    print("KERNEL_OK")
</pallas_src>

<mosaic_0001>
module attributes {stable_mosaic.version = 11 : i64} {
  func.func @_matmul_bias_kernel(%arg0: i32, %arg1: i32, %arg2: memref<128x128xbf16, #tpu.memory_space<vmem>>, %arg3: memref<128x512xbf16, #tpu.memory_space<vmem>>, %arg4: memref<1x512xf32, #tpu.memory_space<vmem>>, %arg5: memref<128x512xbf16, #tpu.memory_space<vmem>>) attributes {dimension_semantics = [#tpu.dimension_semantics<parallel>, #tpu.dimension_semantics<parallel>], iteration_bounds = array<i64: 1, 1>, scalar_prefetch = 0 : i64, scratch_operands = 0 : i64, tpu.core_type = #tpu.core_type<tc>, window_params = [{transform_indices = @transform_0, window_bounds = array<i64: 128, 128>}, {transform_indices = @transform_1, window_bounds = array<i64: 128, 512>}, {transform_indices = @transform_2, window_bounds = array<i64: 1, 512>}, {transform_indices = @transform_3, window_bounds = array<i64: 128, 512>}]} {
    %c0 = arith.constant 0 : index
    %c0_0 = arith.constant 0 : index
    %0 = vector.load %arg2[%c0, %c0_0] : memref<128x128xbf16, #tpu.memory_space<vmem>>, vector<128x128xbf16>
    %c0_1 = arith.constant 0 : index
    %c0_2 = arith.constant 0 : index
    %1 = vector.load %arg3[%c0_1, %c0_2] : memref<128x512xbf16, #tpu.memory_space<vmem>>, vector<128x512xbf16>
    %cst = arith.constant dense<0.000000e+00> : vector<128x512xf32>
    %2 = tpu.matmul %0, %1, %cst {dimension_numbers = #tpu.dot_dimension_numbers<[1], [0], [0], [1], [0, 0, 1, 1], [], []>} : vector<128x128xbf16>, vector<128x512xbf16>, vector<128x512xf32> -> vector<128x512xf32>
    %c0_3 = arith.constant 0 : index
    %c0_4 = arith.constant 0 : index
    %3 = vector.load %arg4[%c0_3, %c0_4] : memref<1x512xf32, #tpu.memory_space<vmem>>, vector<1x512xf32>
    %4 = vector.broadcast %3 : vector<1x512xf32> to vector<128x512xf32>
    %5 = arith.addf %2, %4 : vector<128x512xf32>
    %6 = arith.truncf %5 : vector<128x512xf32> to vector<128x512xbf16>
    %c0_5 = arith.constant 0 : index
    %c0_6 = arith.constant 0 : index
    %7 = vector.load %arg5[%c0_5, %c0_6] : memref<128x512xbf16, #tpu.memory_space<vmem>>, vector<128x512xbf16>
    tpu.vector_store %arg5[%c0_5, %c0_6], %6 {strides = array<i32>} : memref<128x512xbf16, #tpu.memory_space<vmem>>, vector<128x512xbf16>,
    return
  }
  func.func @transform_0(%arg0: i32, %arg1: i32) -> (i32, i32) {
    %c0_i32 = arith.constant 0 : i32
    %c0_i32_0 = arith.constant 0 : i32
    return %arg0, %c0_i32 : i32, i32
  }
  func.func @transform_1(%arg0: i32, %arg1: i32) -> (i32, i32) {
    %c0_i32 = arith.constant 0 : i32
    %c0_i32_0 = arith.constant 0 : i32
    return %c0_i32, %arg1 : i32, i32
  }
  func.func @transform_2(%arg0: i32, %arg1: i32) -> (i32, i32) {
    %c0_i32 = arith.constant 0 : i32
    %c0_i32_0 = arith.constant 0 : i32
    return %c0_i32, %arg1 : i32, i32
  }
  func.func @transform_3(%arg0: i32, %arg1: i32) -> (i32, i32) {
    %c0_i32 = arith.constant 0 : i32
    return %arg0, %arg1 : i32, i32
  }
}

module attributes {stable_mosaic.version = 11 : i64} {
  func.func @_matmul_bias_kernel(%arg0: i32, %arg1: i32, %arg2: memref<128x128xbf16, #tpu.memory_space<vmem>>, %arg3: memref<128x128xbf16, #tpu.memory_space<vmem>>, %arg4: memref<1x128xf32, #tpu.memory_space<vmem>>, %arg5: memref<128x128xf32, #tpu.memory_space<vmem>>) attributes {dimension_semantics = [#tpu.dimension_semantics<parallel>, #tpu.dimension_semantics<parallel>], iteration_bounds = array<i64: 1, 1>, scalar_prefetch = 0 : i64, scratch_operands = 0 : i64, tpu.core_type = #tpu.core_type<tc>, window_params = [{transform_indices = @transform_0, window_bounds = array<i64: 128, 128>}, {transform_indices = @transform_1, window_bounds = array<i64: 128, 128>}, {transform_indices = @transform_2, window_bounds = array<i64: 1, 128>}, {transform_indices = @transform_3, window_bounds = array<i64: 128, 128>}]} {
    %c0 = arith.constant 0 : index
    %c0_0 = arith.constant 0 : index
    %0 = vector.load %arg2[%c0, %c0_0] : memref<128x128xbf16, #tpu.memory_space<vmem>>, vector<128x128xbf16>
    %c0_1 = arith.constant 0 : index
    %c0_2 = arith.constant 0 : index
    %1 = vector.load %arg3[%c0_1, %c0_2] : memref<128x128xbf16, #tpu.memory_space<vmem>>, vector<128x128xbf16>
    %cst = arith.constant dense<0.000000e+00> : vector<128x128xf32>
    %2 = tpu.matmul %0, %1, %cst {dimension_numbers = #tpu.dot_dimension_numbers<[1], [0], [0], [1], [0, 0, 1, 1], [], []>} : vector<128x128xbf16>, vector<128x128xbf16>, vector<128x128xf32> -> vector<128x128xf32>
    %c0_3 = arith.constant 0 : index
    %c0_4 = arith.constant 0 : index
    %3 = vector.load %arg4[%c0_3, %c0_4] : memref<1x128xf32, #tpu.memory_space<vmem>>, vector<1x128xf32>
    %4 = vector.broadcast %3 : vector<1x128xf32> to vector<128x128xf32>
    %5 = arith.addf %2, %4 : vector<128x128xf32>
    %c0_5 = arith.constant 0 : index
    %c0_6 = arith.constant 0 : index
    %6 = vector.load %arg5[%c0_5, %c0_6] : memref<128x128xf32, #tpu.memory_space<vmem>>, vector<128x128xf32>
    tpu.vector_store %arg5[%c0_5, %c0_6], %5 {strides = array<i32>} : memref<128x128xf32, #tpu.memory_space<vmem>>, vector<128x128xf32>,
    return
  }
  func.func @transform_0(%arg0: i32, %arg1: i32) -> (i32, i32) {
    %c0_i32 = arith.constant 0 : i32
    %c0_i32_0 = arith.constant 0 : i32
    return %arg0, %c0_i32 : i32, i32
  }
  func.func @transform_1(%arg0: i32, %arg1: i32) -> (i32, i32) {
    %c0_i32 = arith.constant 0 : i32
    %c0_i32_0 = arith.constant 0 : i32
    return %c0_i32, %arg1 : i32, i32
  }
  func.func @transform_2(%arg0: i32, %arg1: i32) -> (i32, i32) {
    %c0_i32 = arith.constant 0 : i32
    %c0_i32_0 = arith.constant 0 : i32
    return %c0_i32, %arg1 : i32, i32
  }
  func.func @transform_3(%arg0: i32, %arg1: i32) -> (i32, i32) {
    %c0_i32 = arith.constant 0 : i32
    return %arg0, %arg1 : i32, i32
  }
}

module attributes {stable_mosaic.version = 11 : i64} {
  func.func @_recurrence_kernel(%arg0: memref<8x16x512xbf16, #tpu.memory_space<vmem>>, %arg1: memref<8x16x512xbf16, #tpu.memory_space<vmem>>, %arg2: memref<128x512xbf16, #tpu.memory_space<vmem>>, %arg3: memref<128x512xbf16, #tpu.memory_space<vmem>>, %arg4: memref<8x16x128xbf16, #tpu.memory_space<vmem>>, %arg5: memref<16x128xf32, #tpu.memory_space<vmem>>, %arg6: memref<16x128xf32, #tpu.memory_space<vmem>>) attributes {dimension_semantics = [], scalar_prefetch = 0 : i64, scratch_operands = 2 : i64, tpu.core_type = #tpu.core_type<tc>} {
    %cst = arith.constant 0.000000e+00 : f32
    %0 = vector.broadcast %cst : f32 to vector<16x128xf32>
    %c0 = arith.constant 0 : index
    %c0_0 = arith.constant 0 : index
    %1 = vector.load %arg5[%c0, %c0_0] : memref<16x128xf32, #tpu.memory_space<vmem>>, vector<16x128xf32>
    tpu.vector_store %arg5[%c0, %c0_0], %0 {strides = array<i32>} : memref<16x128xf32, #tpu.memory_space<vmem>>, vector<16x128xf32>,
    %cst_1 = arith.constant 0.000000e+00 : f32
    %2 = vector.broadcast %cst_1 : f32 to vector<16x128xf32>
    %c0_2 = arith.constant 0 : index
    %c0_3 = arith.constant 0 : index
    %3 = vector.load %arg6[%c0_2, %c0_3] : memref<16x128xf32, #tpu.memory_space<vmem>>, vector<16x128xf32>
    tpu.vector_store %arg6[%c0_2, %c0_3], %2 {strides = array<i32>} : memref<16x128xf32, #tpu.memory_space<vmem>>, vector<16x128xf32>,
    %c0_i32 = arith.constant 0 : i32
    %c1_i32 = arith.constant 1 : i32
    %4 = arith.muli %c0_i32, %c1_i32 : i32
    %c0_i32_4 = arith.constant 0 : i32
    %5 = arith.addi %c0_i32_4, %4 : i32
    %6 = arith.index_cast %5 : i32 to index
    %c0_5 = arith.constant 0 : index
    %c0_6 = arith.constant 0 : index
    %7 = vector.load %arg0[%6, %c0_5, %c0_6] : memref<8x16x512xbf16, #tpu.memory_space<vmem>>, vector<1x16x512xbf16>
    %8 = vector.shape_cast %7 : vector<1x16x512xbf16> to vector<16x512xbf16>
    %9 = arith.extf %8 : vector<16x512xbf16> to vector<16x512xf32>
    %c0_7 = arith.constant 0 : index
    %c0_8 = arith.constant 0 : index
    %10 = vector.load %arg5[%c0_7, %c0_8] : memref<16x128xf32, #tpu.memory_space<vmem>>, vector<16x128xf32>
    %11 = arith.truncf %10 : vector<16x128xf32> to vector<16x128xbf16>
    %c0_9 = arith.constant 0 : index
    %c0_10 = arith.constant 0 : index
    %12 = vector.load %arg2[%c0_9, %c0_10] : memref<128x512xbf16, #tpu.memory_space<vmem>>, vector<128x512xbf16>
    %cst_11 = arith.constant dense<0.000000e+00> : vector<16x512xf32>
    %13 = tpu.matmul %11, %12, %cst_11 {dimension_numbers = #tpu.dot_dimension_numbers<[1], [0], [0], [1], [0, 0, 1, 1], [], []>} : vector<16x128xbf16>, vector<128x512xbf16>, vector<16x512xf32> -> vector<16x512xf32>
    %14 = arith.addf %9, %13 : vector<16x512xf32>
    %15 = vector.extract_strided_slice %14 {offsets = [0, 0], sizes = [16, 128], strides = [1, 1]} : vector<16x512xf32> to vector<16x128xf32>
    %16 = arith.negf %15 : vector<16x128xf32>
    %17 = math.exp %16 : vector<16x128xf32>
    %cst_12 = arith.constant 1.000000e+00 : f32
    %18 = vector.broadcast %cst_12 : f32 to vector<16x128xf32>
    %19 = arith.addf %18, %17 : vector<16x128xf32>
    %20 = arith.divf %18, %19 : vector<16x128xf32>
    %21 = vector.extract_strided_slice %14 {offsets = [0, 128], sizes = [16, 128], strides = [1, 1]} : vector<16x512xf32> to vector<16x128xf32>
    %22 = arith.negf %21 : vector<16x128xf32>
    %23 = math.exp %22 : vector<16x128xf32>
    %cst_13 = arith.constant 1.000000e+00 : f32
    %24 = vector.broadcast %cst_13 : f32 to vector<16x128xf32>
    %25 = arith.addf %24, %23 : vector<16x128xf32>
    %26 = arith.divf %24, %25 : vector<16x128xf32>
    %27 = vector.extract_strided_slice %14 {offsets = [0, 256], sizes = [16, 128], strides = [1, 1]} : vector<16x512xf32> to vector<16x128xf32>
    %28 = math.tanh %27 : vector<16x128xf32>
    %29 = vector.extract_strided_slice %14 {offsets = [0, 384], sizes = [16, 128], strides = [1, 1]} : vector<16x512xf32> to vector<16x128xf32>
    %30 = arith.negf %29 : vector<16x128xf32>
    %31 = math.exp %30 : vector<16x128xf32>
    %cst_14 = arith.constant 1.000000e+00 : f32
    %32 = vector.broadcast %cst_14 : f32 to vector<16x128xf32>
    %33 = arith.addf %32, %31 : vector<16x128xf32>
    %34 = arith.divf %32, %33 : vector<16x128xf32>
    %c0_15 = arith.constant 0 : index
    %c0_16 = arith.constant 0 : index
    %35 = vector.load %arg6[%c0_15, %c0_16] : memref<16x128xf32, #tpu.memory_space<vmem>>, vector<16x128xf32>
    %36 = arith.mulf %26, %35 : vector<16x128xf32>
    %37 = arith.mulf %20, %28 : vector<16x128xf32>
    %38 = arith.addf %36, %37 : vector<16x128xf32>
    %39 = math.tanh %38 : vector<16x128xf32>
    %40 = arith.mulf %34, %39 : vector<16x128xf32>
    %c0_17 = arith.constant 0 : index
    %c0_18 = arith.constant 0 : index
    %41 = vector.load %arg6[%c0_17, %c0_18] : memref<16x128xf32, #tpu.memory_space<vmem>>, vector<16x128xf32>
    tpu.vector_store %arg6[%c0_17, %c0_18], %38 {strides = array<i32>} : memref<16x128xf32, #tpu.memory_space<vmem>>, vector<16x128xf32>,
    %c0_19 = arith.constant 0 : index
    %c0_20 = arith.constant 0 : index
    %42 = vector.load %arg5[%c0_19, %c0_20] : memref<16x128xf32, #tpu.memory_space<vmem>>, vector<16x128xf32>
    tpu.vector_store %arg5[%c0_19, %c0_20], %40 {strides = array<i32>} : memref<16x128xf32, #tpu.memory_space<vmem>>, vector<16x128xf32>,
    %c1_i32_21 = arith.constant 1 : i32
    %c1_i32_22 = arith.constant 1 : i32
    %43 = arith.muli %c1_i32_21, %c1_i32_22 : i32
    %c0_i32_23 = arith.constant 0 : i32
    %44 = arith.addi %c0_i32_23, %43 : i32
    %45 = arith.index_cast %44 : i32 to index
    %c0_24 = arith.constant 0 : index
    %c0_25 = arith.constant 0 : index
    %46 = vector.load %arg0[%45, %c0_24, %c0_25] : memref<8x16x512xbf16, #tpu.memory_space<vmem>>, vector<1x16x512xbf16>
    %47 = vector.shape_cast %46 : vector<1x16x512xbf16> to vector<16x512xbf16>
    %48 = arith.extf %47 : vector<16x512xbf16> to vector<16x512xf32>
    %c0_26 = arith.constant 0 : index
    %c0_27 = arith.constant 0 : index
    %49 = vector.load %arg5[%c0_26, %c0_27] : memref<16x128xf32, #tpu.memory_space<vmem>>, vector<16x128xf32>
    %50 = arith.truncf %49 : vector<16x128xf32> to vector<16x128xbf16>
    %c0_28 = arith.constant 0 : index
    %c0_29 = arith.constant 0 : index
    %51 = vector.load %arg2[%c0_28, %c0_29] : memref<128x512xbf16, #tpu.memory_space<vmem>>, vector<128x512xbf16>
    %cst_30 = arith.constant dense<0.000000e+00> : vector<16x512xf32>
    %52 = tpu.matmul %50, %51, %cst_30 {dimension_numbers = #tpu.dot_dimension_numbers<[1], [0], [0], [1], [0, 0, 1, 1], [], []>} : vector<16x128xbf16>, vector<128x512xbf16>, vector<16x512xf32> -> vector<16x512xf32>
    %53 = arith.addf %48, %52 : vector<16x512xf32>
    %54 = vector.extract_strided_slice %53 {offsets = [0, 0], sizes = [16, 128], strides = [1, 1]} : vector<16x512xf32> to vector<16x128xf32>
    %55 = arith.negf %54 : vector<16x128xf32>
    %56 = math.exp %55 : vector<16x128xf32>
    %cst_31 = arith.constant 1.000000e+00 : f32
    %57 = vector.broadcast %cst_31 : f32 to vector<16x128xf32>
    %58 = arith.addf %57, %56 : vector<16x128xf32>
    %59 = arith.divf %57, %58 : vector<16x128xf32>
    %60 = vector.extract_strided_slice %53 {offsets = [0, 128], sizes = [16, 128], strides = [1, 1]} : vector<16x512xf32> to vector<16x128xf32>
    %61 = arith.negf %60 : vector<16x128xf32>
    %62 = math.exp %61 : vector<16x128xf32>
    %cst_32 = arith.constant 1.000000e+00 : f32
    %63 = vector.broadcast %cst_32 : f32 to vector<16x128xf32>
    %64 = arith.addf %63, %62 : vector<16x128xf32>
    %65 = arith.divf %63, %64 : vector<16x128xf32>
    %66 = vector.extract_strided_slice %53 {offsets = [0, 256], sizes = [16, 128], strides = [1, 1]} : vector<16x512xf32> to vector<16x128xf32>
    %67 = math.tanh %66 : vector<16x128xf32>
    %68 = vector.extract_strided_slice %53 {offsets = [0, 384], sizes = [16, 128], strides = [1, 1]} : vector<16x512xf32> to vector<16x128xf32>
    %69 = arith.negf %68 : vector<16x128xf32>
    %70 = math.exp %69 : vector<16x128xf32>
    %cst_33 = arith.constant 1.000000e+00 : f32
    %71 = vector.broadcast %cst_33 : f32 to vector<16x128xf32>
    %72 = arith.addf %71, %70 : vector<16x128xf32>
    %73 = arith.divf %71, %72 : vector<16x128xf32>
    %c0_34 = arith.constant 0 : index
    %c0_35 = arith.constant 0 : index
    %74 = vector.load %arg6[%c0_34, %c0_35] : memref<16x128xf32, #tpu.memory_space<vmem>>, vector<16x128xf32>
    %75 = arith.mulf %65, %74 : vector<16x128xf32>
    %76 = arith.mulf %59, %67 : vector<16x128xf32>
    %77 = arith.addf %75, %76 : vector<16x128xf32>
    %78 = math.tanh %77 : vector<16x128xf32>
    %79 = arith.mulf %73, %78 : vector<16x128xf32>
    %c0_36 = arith.constant 0 : index
    %c0_37 = arith.constant 0 : index
    %80 = vector.load %arg6[%c0_36, %c0_37] : memref<16x128xf32, #tpu.memory_space<vmem>>, vector<16x128xf32>
    tpu.vector_store %arg6[%c0_36, %c0_37], %77 {strides = array<i32>} : memref<16x128xf32, #tpu.memory_space<vmem>>, vector<16x128xf32>,
    %c0_38 = arith.constant 0 : index
    %c0_39 = arith.constant 0 : index
    %81 = vector.load %arg5[%c0_38, %c0_39] : memref<16x128xf32, #tpu.memory_space<vmem>>, vector<16x128xf32>
    tpu.vector_store %arg5[%c0_38, %c0_39], %79 {strides = array<i32>} : memref<16x128xf32, #tpu.memory_space<vmem>>, vector<16x128xf32>,
    %c2_i32 = arith.constant 2 : i32
    %c1_i32_40 = arith.constant 1 : i32
    %82 = arith.muli %c2_i32, %c1_i32_40 : i32
    %c0_i32_41 = arith.constant 0 : i32
    %83 = arith.addi %c0_i32_41, %82 : i32
    %84 = arith.index_cast %83 : i32 to index
    %c0_42 = arith.constant 0 : index
    %c0_43 = arith.constant 0 : index
    %85 = vector.load %arg0[%84, %c0_42, %c0_43] : memref<8x16x512xbf16, #tpu.memory_space<vmem>>, vector<1x16x512xbf16>
    %86 = vector.shape_cast %85 : vector<1x16x512xbf16> to vector<16x512xbf16>
    %87 = arith.extf %86 : vector<16x512xbf16> to vector<16x512xf32>
    %c0_44 = arith.constant 0 : index
    %c0_45 = arith.constant 0 : index
    %88 = vector.load %arg5[%c0_44, %c0_45] : memref<16x128xf32, #tpu.memory_space<vmem>>, vector<16x128xf32>
    %89 = arith.truncf %88 : vector<16x128xf32> to vector<16x128xbf16>
    %c0_46 = arith.constant 0 : index
    %c0_47 = arith.constant 0 : index
    %90 = vector.load %arg2[%c0_46, %c0_47] : memref<128x512xbf16, #tpu.memory_space<vmem>>, vector<128x512xbf16>
    %cst_48 = arith.constant dense<0.000000e+00> : vector<16x512xf32>
    %91 = tpu.matmul %89, %90, %cst_48 {dimension_numbers = #tpu.dot_dimension_numbers<[1], [0], [0], [1], [0, 0, 1, 1], [], []>} : vector<16x128xbf16>, vector<128x512xbf16>, vector<16x512xf32> -> vector<16x512xf32>
    %92 = arith.addf %87, %91 : vector<16x512xf32>
    %93 = vector.extract_strided_slice %92 {offsets = [0, 0], sizes = [16, 128], strides = [1, 1]} : vector<16x512xf32> to vector<16x128xf32>
    %94 = arith.negf %93 : vector<16x128xf32>
    %95 = math.exp %94 : vector<16x128xf32>
    %cst_49 = arith.constant 1.000000e+00 : f32
    %96 = vector.broadcast %cst_49 : f32 to vector<16x128xf32>
    %97 = arith.addf %96, %95 : vector<16x128xf32>
    %98 = arith.divf %96, %97 : vector<16x128xf32>
    %99 = vector.extract_strided_slice %92 {offsets = [0, 128], sizes = [16, 128], strides = [1, 1]} : vector<16x512xf32> to vector<16x128xf32>
    %100 = arith.negf %99 : vector<16x128xf32>
    %101 = math.exp %100 : vector<16x128xf32>
    %cst_50 = arith.constant 1.000000e+00 : f32
    %102 = vector.broadcast %cst_50 : f32 to vector<16x128xf32>
    %103 = arith.addf %102, %101 : vector<16x128xf32>
    %104 = arith.divf %102, %103 : vector<16x128xf32>
    %105 = vector.extract_strided_slice %92 {offsets = [0, 256], sizes = [16, 128], strides = [1, 1]} : vector<16x512xf32> to vector<16x128xf32>
    %106 = math.tanh %105 : vector<16x128xf32>
    %107 = vector.extract_strided_slice %92 {offsets = [0, 384], sizes = [16, 128], strides = [1, 1]} : vector<16x512xf32> to vector<16x128xf32>
    %108 = arith.negf %107 : vector<16x128xf32>
    %109 = math.exp %108 : vector<16x128xf32>
    %cst_51 = arith.constant 1.000000e+00 : f32
    %110 = vector.broadcast %cst_51 : f32 to vector<16x128xf32>
    %111 = arith.addf %110, %109 : vector<16x128xf32>
    %112 = arith.divf %110, %111 : vector<16x128xf32>
    %c0_52 = arith.constant 0 : index
    %c0_53 = arith.constant 0 : index
    %113 = vector.load %arg6[%c0_52, %c0_53] : memref<16x128xf32, #tpu.memory_space<vmem>>, vector<16x128xf32>
    %114 = arith.mulf %104, %113 : vector<16x128xf32>
    %115 = arith.mulf %98, %106 : vector<16x128xf32>
    %116 = arith.addf %114, %115 : vector<16x128xf32>
    %117 = math.tanh %116 : vector<16x128xf32>
    %118 = arith.mulf %112, %117 : vector<16x128xf32>
    %c0_54 = arith.constant 0 : index
    %c0_55 = arith.constant 0 : index
    %119 = vector.load %arg6[%c0_54, %c0_55] : memref<16x128xf32, #tpu.memory_space<vmem>>, vector<16x128xf32>
    tpu.vector_store %arg6[%c0_54, %c0_55], %116 {strides = array<i32>} : memref<16x128xf32, #tpu.memory_space<vmem>>, vector<16x128xf32>,
    %c0_56 = arith.constant 0 : index
    %c0_57 = arith.constant 0 : index
    %120 = vector.load %arg5[%c0_56, %c0_57] : memref<16x128xf32, #tpu.memory_space<vmem>>, vector<16x128xf32>
    tpu.vector_store %arg5[%c0_56, %c0_57], %118 {strides = array<i32>} : memref<16x128xf32, #tpu.memory_space<vmem>>, vector<16x128xf32>,
    %c3_i32 = arith.constant 3 : i32
    %c1_i32_58 = arith.constant 1 : i32
    %121 = arith.muli %c3_i32, %c1_i32_58 : i32
    %c0_i32_59 = arith.constant 0 : i32
    %122 = arith.addi %c0_i32_59, %121 : i32
    %123 = arith.index_cast %122 : i32 to index
    %c0_60 = arith.constant 0 : index
    %c0_61 = arith.constant 0 : index
    %124 = vector.load %arg0[%123, %c0_60, %c0_61] : memref<8x16x512xbf16, #tpu.memory_space<vmem>>, vector<1x16x512xbf16>
    %125 = vector.shape_cast %124 : vector<1x16x512xbf16> to vector<16x512xbf16>
    %126 = arith.extf %125 : vector<16x512xbf16> to vector<16x512xf32>
    %c0_62 = arith.constant 0 : index
    %c0_63 = arith.constant 0 : index
    %127 = vector.load %arg5[%c0_62, %c0_63] : memref<16x128xf32, #tpu.memory_space<vmem>>, vector<16x128xf32>
    %128 = arith.truncf %127 : vector<16x128xf32> to vector<16x128xbf16>
    %c0_64 = arith.constant 0 : index
    %c0_65 = arith.constant 0 : index
    %129 = vector.load %arg2[%c0_64, %c0_65] : memref<128x512xbf16, #tpu.memory_space<vmem>>, vector<128x512xbf16>
    %cst_66 = arith.constant dense<0.000000e+00> : vector<16x512xf32>
    %130 = tpu.matmul %128, %129, %cst_66 {dimension_numbers = #tpu.dot_dimension_numbers<[1], [0], [0], [1], [0, 0, 1, 1], [], []>} : vector<16x128xbf16>, vector<128x512xbf16>, vector<16x512xf32> -> vector<16x512xf32>
    %131 = arith.addf %126, %130 : vector<16x512xf32>
    %132 = vector.extract_strided_slice %131 {offsets = [0, 0], sizes = [16, 128], strides = [1, 1]} : vector<16x512xf32> to vector<16x128xf32>
    %133 = arith.negf %132 : vector<16x128xf32>
    %134 = math.exp %133 : vector<16x128xf32>
    %cst_67 = arith.constant 1.000000e+00 : f32
    %135 = vector.broadcast %cst_67 : f32 to vector<16x128xf32>
    %136 = arith.addf %135, %134 : vector<16x128xf32>
    %137 = arith.divf %135, %136 : vector<16x128xf32>
    %138 = vector.extract_strided_slice %131 {offsets = [0, 128], sizes = [16, 128], strides = [1, 1]} : vector<16x512xf32> to vector<16x128xf32>
    %139 = arith.negf %138 : vector<16x128xf32>
    %140 = math.exp %139 : vector<16x128xf32>
    %cst_68 = arith.constant 1.000000e+00 : f32
    %141 = vector.broadcast %cst_68 : f32 to vector<16x128xf32>
    %142 = arith.addf %141, %140 : vector<16x128xf32>
    %143 = arith.divf %141, %142 : vector<16x128xf32>
    %144 = vector.extract_strided_slice %131 {offsets = [0, 256], sizes = [16, 128], strides = [1, 1]} : vector<16x512xf32> to vector<16x128xf32>
    %145 = math.tanh %144 : vector<16x128xf32>
    %146 = vector.extract_strided_slice %131 {offsets = [0, 384], sizes = [16, 128], strides = [1, 1]} : vector<16x512xf32> to vector<16x128xf32>
    %147 = arith.negf %146 : vector<16x128xf32>
    %148 = math.exp %147 : vector<16x128xf32>
    %cst_69 = arith.constant 1.000000e+00 : f32
    %149 = vector.broadcast %cst_69 : f32 to vector<16x128xf32>
    %150 = arith.addf %149, %148 : vector<16x128xf32>
    %151 = arith.divf %149, %150 : vector<16x128xf32>
    %c0_70 = arith.constant 0 : index
    %c0_71 = arith.constant 0 : index
    %152 = vector.load %arg6[%c0_70, %c0_71] : memref<16x128xf32, #tpu.memory_space<vmem>>, vector<16x128xf32>
    %153 = arith.mulf %143, %152 : vector<16x128xf32>
    %154 = arith.mulf %137, %145 : vector<16x128xf32>
    %155 = arith.addf %153, %154 : vector<16x128xf32>
    %156 = math.tanh %155 : vector<16x128xf32>
    %157 = arith.mulf %151, %156 : vector<16x128xf32>
    %c0_72 = arith.constant 0 : index
    %c0_73 = arith.constant 0 : index
    %158 = vector.load %arg6[%c0_72, %c0_73] : memref<16x128xf32, #tpu.memory_space<vmem>>, vector<16x128xf32>
    tpu.vector_store %arg6[%c0_72, %c0_73], %155 {strides = array<i32>} : memref<16x128xf32, #tpu.memory_space<vmem>>, vector<16x128xf32>,
    %c0_74 = arith.constant 0 : index
    %c0_75 = arith.constant 0 : index
    %159 = vector.load %arg5[%c0_74, %c0_75] : memref<16x128xf32, #tpu.memory_space<vmem>>, vector<16x128xf32>
    tpu.vector_store %arg5[%c0_74, %c0_75], %157 {strides = array<i32>} : memref<16x128xf32, #tpu.memory_space<vmem>>, vector<16x128xf32>,
    %c4_i32 = arith.constant 4 : i32
    %c1_i32_76 = arith.constant 1 : i32
    %160 = arith.muli %c4_i32, %c1_i32_76 : i32
    %c0_i32_77 = arith.constant 0 : i32
    %161 = arith.addi %c0_i32_77, %160 : i32
    %162 = arith.index_cast %161 : i32 to index
    %c0_78 = arith.constant 0 : index
    %c0_79 = arith.constant 0 : index
    %163 = vector.load %arg0[%162, %c0_78, %c0_79] : memref<8x16x512xbf16, #tpu.memory_space<vmem>>, vector<1x16x512xbf16>
    %164 = vector.shape_cast %163 : vector<1x16x512xbf16> to vector<16x512xbf16>
    %165 = arith.extf %164 : vector<16x512xbf16> to vector<16x512xf32>
    %c0_80 = arith.constant 0 : index
    %c0_81 = arith.constant 0 : index
    %166 = vector.load %arg5[%c0_80, %c0_81] : memref<16x128xf32, #tpu.memory_space<vmem>>, vector<16x128xf32>
    %167 = arith.truncf %166 : vector<16x128xf32> to vector<16x128xbf16>
    %c0_82 = arith.constant 0 : index
    %c0_83 = arith.constant 0 : index
    %168 = vector.load %arg2[%c0_82, %c0_83] : memref<128x512xbf16, #tpu.memory_space<vmem>>, vector<128x512xbf16>
    %cst_84 = arith.constant dense<0.000000e+00> : vector<16x512xf32>
    %169 = tpu.matmul %167, %168, %cst_84 {dimension_numbers = #tpu.dot_dimension_numbers<[1], [0], [0], [1], [0, 0, 1, 1], [], []>} : vector<16x128xbf16>, vector<128x512xbf16>, vector<16x512xf32> -> vector<16x512xf32>
    %170 = arith.addf %165, %169 : vector<16x512xf32>
    %171 = vector.extract_strided_slice %170 {offsets = [0, 0], sizes = [16, 128], strides = [1, 1]} : vector<16x512xf32> to vector<16x128xf32>
    %172 = arith.negf %171 : vector<16x128xf32>
    %173 = math.exp %172 : vector<16x128xf32>
    %cst_85 = arith.constant 1.000000e+00 : f32
    %174 = vector.broadcast %cst_85 : f32 to vector<16x128xf32>
    %175 = arith.addf %174, %173 : vector<16x128xf32>
    %176 = arith.divf %174, %175 : vector<16x128xf32>
    %177 = vector.extract_strided_slice %170 {offsets = [0, 128], sizes = [16, 128], strides = [1, 1]} : vector<16x512xf32> to vector<16x128xf32>
    %178 = arith.negf %177 : vector<16x128xf32>
    %179 = math.exp %178 : vector<16x128xf32>
    %cst_86 = arith.constant 1.000000e+00 : f32
    %180 = vector.broadcast %cst_86 : f32 to vector<16x128xf32>
    %181 = arith.addf %180, %179 : vector<16x128xf32>
    %182 = arith.divf %180, %181 : vector<16x128xf32>
    %183 = vector.extract_strided_slice %170 {offsets = [0, 256], sizes = [16, 128], strides = [1, 1]} : vector<16x512xf32> to vector<16x128xf32>
    %184 = math.tanh %183 : vector<16x128xf32>
    %185 = vector.extract_strided_slice %170 {offsets = [0, 384], sizes = [16, 128], strides = [1, 1]} : vector<16x512xf32> to vector<16x128xf32>
    %186 = arith.negf %185 : vector<16x128xf32>
    %187 = math.exp %186 : vector<16x128xf32>
    %cst_87 = arith.constant 1.000000e+00 : f32
    %188 = vector.broadcast %cst_87 : f32 to vector<16x128xf32>
    %189 = arith.addf %188, %187 : vector<16x128xf32>
    %190 = arith.divf %188, %189 : vector<16x128xf32>
    %c0_88 = arith.constant 0 : index
    %c0_89 = arith.constant 0 : index
    %191 = vector.load %arg6[%c0_88, %c0_89] : memref<16x128xf32, #tpu.memory_space<vmem>>, vector<16x128xf32>
    %192 = arith.mulf %182, %191 : vector<16x128xf32>
    %193 = arith.mulf %176, %184 : vector<16x128xf32>
    %194 = arith.addf %192, %193 : vector<16x128xf32>
    %195 = math.tanh %194 : vector<16x128xf32>
    %196 = arith.mulf %190, %195 : vector<16x128xf32>
    %c0_90 = arith.constant 0 : index
    %c0_91 = arith.constant 0 : index
    %197 = vector.load %arg6[%c0_90, %c0_91] : memref<16x128xf32, #tpu.memory_space<vmem>>, vector<16x128xf32>
    tpu.vector_store %arg6[%c0_90, %c0_91], %194 {strides = array<i32>} : memref<16x128xf32, #tpu.memory_space<vmem>>, vector<16x128xf32>,
    %c0_92 = arith.constant 0 : index
    %c0_93 = arith.constant 0 : index
    %198 = vector.load %arg5[%c0_92, %c0_93] : memref<16x128xf32, #tpu.memory_space<vmem>>, vector<16x128xf32>
    tpu.vector_store %arg5[%c0_92, %c0_93], %196 {strides = array<i32>} : memref<16x128xf32, #tpu.memory_space<vmem>>, vector<16x128xf32>,
    %c5_i32 = arith.constant 5 : i32
    %c1_i32_94 = arith.constant 1 : i32
    %199 = arith.muli %c5_i32, %c1_i32_94 : i32
    %c0_i32_95 = arith.constant 0 : i32
    %200 = arith.addi %c0_i32_95, %199 : i32
    %201 = arith.index_cast %200 : i32 to index
    %c0_96 = arith.constant 0 : index
    %c0_97 = arith.constant 0 : index
    %202 = vector.load %arg0[%201, %c0_96, %c0_97] : memref<8x16x512xbf16, #tpu.memory_space<vmem>>, vector<1x16x512xbf16>
    %203 = vector.shape_cast %202 : vector<1x16x512xbf16> to vector<16x512xbf16>
    %204 = arith.extf %203 : vector<16x512xbf16> to vector<16x512xf32>
    %c0_98 = arith.constant 0 : index
    %c0_99 = arith.constant 0 : index
    %205 = vector.load %arg5[%c0_98, %c0_99] : memref<16x128xf32, #tpu.memory_space<vmem>>, vector<16x128xf32>
    %206 = arith.truncf %205 : vector<16x128xf32> to vector<16x128xbf16>
    %c0_100 = arith.constant 0 : index
    %c0_101 = arith.constant 0 : index
    %207 = vector.load %arg2[%c0_100, %c0_101] : memref<128x512xbf16, #tpu.memory_space<vmem>>, vector<128x512xbf16>
    %cst_102 = arith.constant dense<0.000000e+00> : vector<16x512xf32>
    %208 = tpu.matmul %206, %207, %cst_102 {dimension_numbers = #tpu.dot_dimension_numbers<[1], [0], [0], [1], [0, 0, 1, 1], [], []>} : vector<16x128xbf16>, vector<128x512xbf16>, vector<16x512xf32> -> vector<16x512xf32>
    %209 = arith.addf %204, %208 : vector<16x512xf32>
    %210 = vector.extract_strided_slice %209 {offsets = [0, 0], sizes = [16, 128], strides = [1, 1]} : vector<16x512xf32> to vector<16x128xf32>
    %211 = arith.negf %210 : vector<16x128xf32>
    %212 = math.exp %211 : vector<16x128xf32>
    %cst_103 = arith.constant 1.000000e+00 : f32
    %213 = vector.broadcast %cst_103 : f32 to vector<16x128xf32>
    %214 = arith.addf %213, %212 : vector<16x128xf32>
    %215 = arith.divf %213, %214 : vector<16x128xf32>
    %216 = vector.extract_strided_slice %209 {offsets = [0, 128], sizes = [16, 128], strides = [1, 1]} : vector<16x512xf32> to vector<16x128xf32>
    %217 = arith.negf %216 : vector<16x128xf32>
    %218 = math.exp %217 : vector<16x128xf32>
    %cst_104 = arith.constant 1.000000e+00 : f32
    %219 = vector.broadcast %cst_104 : f32 to vector<16x128xf32>
    %220 = arith.addf %219, %218 : vector<16x128xf32>
    %221 = arith.divf %219, %220 : vector<16x128xf32>
    %222 = vector.extract_strided_slice %209 {offsets = [0, 256], sizes = [16, 128], strides = [1, 1]} : vector<16x512xf32> to vector<16x128xf32>
    %223 = math.tanh %222 : vector<16x128xf32>
    %224 = vector.extract_strided_slice %209 {offsets = [0, 384], sizes = [16, 128], strides = [1, 1]} : vector<16x512xf32> to vector<16x128xf32>
    %225 = arith.negf %224 : vector<16x128xf32>
    %226 = math.exp %225 : vector<16x128xf32>
    %cst_105 = arith.constant 1.000000e+00 : f32
    %227 = vector.broadcast %cst_105 : f32 to vector<16x128xf32>
    %228 = arith.addf %227, %226 : vector<16x128xf32>
    %229 = arith.divf %227, %228 : vector<16x128xf32>
    %c0_106 = arith.constant 0 : index
    %c0_107 = arith.constant 0 : index
    %230 = vector.load %arg6[%c0_106, %c0_107] : memref<16x128xf32, #tpu.memory_space<vmem>>, vector<16x128xf32>
    %231 = arith.mulf %221, %230 : vector<16x128xf32>
    %232 = arith.mulf %215, %223 : vector<16x128xf32>
    %233 = arith.addf %231, %232 : vector<16x128xf32>
    %234 = math.tanh %233 : vector<16x128xf32>
    %235 = arith.mulf %229, %234 : vector<16x128xf32>
    %c0_108 = arith.constant 0 : index
    %c0_109 = arith.constant 0 : index
    %236 = vector.load %arg6[%c0_108, %c0_109] : memref<16x128xf32, #tpu.memory_space<vmem>>, vector<16x128xf32>
    tpu.vector_store %arg6[%c0_108, %c0_109], %233 {strides = array<i32>} : memref<16x128xf32, #tpu.memory_space<vmem>>, vector<16x128xf32>,
    %c0_110 = arith.constant 0 : index
    %c0_111 = arith.constant 0 : index
    %237 = vector.load %arg5[%c0_110, %c0_111] : memref<16x128xf32, #tpu.memory_space<vmem>>, vector<16x128xf32>
    tpu.vector_store %arg5[%c0_110, %c0_111], %235 {strides = array<i32>} : memref<16x128xf32, #tpu.memory_space<vmem>>, vector<16x128xf32>,
    %c6_i32 = arith.constant 6 : i32
    %c1_i32_112 = arith.constant 1 : i32
    %238 = arith.muli %c6_i32, %c1_i32_112 : i32
    %c0_i32_113 = arith.constant 0 : i32
    %239 = arith.addi %c0_i32_113, %238 : i32
    %240 = arith.index_cast %239 : i32 to index
    %c0_114 = arith.constant 0 : index
    %c0_115 = arith.constant 0 : index
    %241 = vector.load %arg0[%240, %c0_114, %c0_115] : memref<8x16x512xbf16, #tpu.memory_space<vmem>>, vector<1x16x512xbf16>
    %242 = vector.shape_cast %241 : vector<1x16x512xbf16> to vector<16x512xbf16>
    %243 = arith.extf %242 : vector<16x512xbf16> to vector<16x512xf32>
    %c0_116 = arith.constant 0 : index
    %c0_117 = arith.constant 0 : index
    %244 = vector.load %arg5[%c0_116, %c0_117] : memref<16x128xf32, #tpu.memory_space<vmem>>, vector<16x128xf32>
    %245 = arith.truncf %244 : vector<16x128xf32> to vector<16x128xbf16>
    %c0_118 = arith.constant 0 : index
    %c0_119 = arith.constant 0 : index
    %246 = vector.load %arg2[%c0_118, %c0_119] : memref<128x512xbf16, #tpu.memory_space<vmem>>, vector<128x512xbf16>
    %cst_120 = arith.constant dense<0.000000e+00> : vector<16x512xf32>
    %247 = tpu.matmul %245, %246, %cst_120 {dimension_numbers = #tpu.dot_dimension_numbers<[1], [0], [0], [1], [0, 0, 1, 1], [], []>} : vector<16x128xbf16>, vector<128x512xbf16>, vector<16x512xf32> -> vector<16x512xf32>
    %248 = arith.addf %243, %247 : vector<16x512xf32>
    %249 = vector.extract_strided_slice %248 {offsets = [0, 0], sizes = [16, 128], strides = [1, 1]} : vector<16x512xf32> to vector<16x128xf32>
    %250 = arith.negf %249 : vector<16x128xf32>
    %251 = math.exp %250 : vector<16x128xf32>
    %cst_121 = arith.constant 1.000000e+00 : f32
    %252 = vector.broadcast %cst_121 : f32 to vector<16x128xf32>
    %253 = arith.addf %252, %251 : vector<16x128xf32>
    %254 = arith.divf %252, %253 : vector<16x128xf32>
    %255 = vector.extract_strided_slice %248 {offsets = [0, 128], sizes = [16, 128], strides = [1, 1]} : vector<16x512xf32> to vector<16x128xf32>
    %256 = arith.negf %255 : vector<16x128xf32>
    %257 = math.exp %256 : vector<16x128xf32>
    %cst_122 = arith.constant 1.000000e+00 : f32
    %258 = vector.broadcast %cst_122 : f32 to vector<16x128xf32>
    %259 = arith.addf %258, %257 : vector<16x128xf32>
    %260 = arith.divf %258, %259 : vector<16x128xf32>
    %261 = vector.extract_strided_slice %248 {offsets = [0, 256], sizes = [16, 128], strides = [1, 1]} : vector<16x512xf32> to vector<16x128xf32>
    %262 = math.tanh %261 : vector<16x128xf32>
    %263 = vector.extract_strided_slice %248 {offsets = [0, 384], sizes = [16, 128], strides = [1, 1]} : vector<16x512xf32> to vector<16x128xf32>
    %264 = arith.negf %263 : vector<16x128xf32>
    %265 = math.exp %264 : vector<16x128xf32>
    %cst_123 = arith.constant 1.000000e+00 : f32
    %266 = vector.broadcast %cst_123 : f32 to vector<16x128xf32>
    %267 = arith.addf %266, %265 : vector<16x128xf32>
    %268 = arith.divf %266, %267 : vector<16x128xf32>
    %c0_124 = arith.constant 0 : index
    %c0_125 = arith.constant 0 : index
    %269 = vector.load %arg6[%c0_124, %c0_125] : memref<16x128xf32, #tpu.memory_space<vmem>>, vector<16x128xf32>
    %270 = arith.mulf %260, %269 : vector<16x128xf32>
    %271 = arith.mulf %254, %262 : vector<16x128xf32>
    %272 = arith.addf %270, %271 : vector<16x128xf32>
    %273 = math.tanh %272 : vector<16x128xf32>
    %274 = arith.mulf %268, %273 : vector<16x128xf32>
    %c0_126 = arith.constant 0 : index
    %c0_127 = arith.constant 0 : index
    %275 = vector.load %arg6[%c0_126, %c0_127] : memref<16x128xf32, #tpu.memory_space<vmem>>, vector<16x128xf32>
    tpu.vector_store %arg6[%c0_126, %c0_127], %272 {strides = array<i32>} : memref<16x128xf32, #tpu.memory_space<vmem>>, vector<16x128xf32>,
    %c0_128 = arith.constant 0 : index
    %c0_129 = arith.constant 0 : index
    %276 = vector.load %arg5[%c0_128, %c0_129] : memref<16x128xf32, #tpu.memory_space<vmem>>, vector<16x128xf32>
    tpu.vector_store %arg5[%c0_128, %c0_129], %274 {strides = array<i32>} : memref<16x128xf32, #tpu.memory_space<vmem>>, vector<16x128xf32>,
    %c7_i32 = arith.constant 7 : i32
    %c1_i32_130 = arith.constant 1 : i32
    %277 = arith.muli %c7_i32, %c1_i32_130 : i32
    %c0_i32_131 = arith.constant 0 : i32
    %278 = arith.addi %c0_i32_131, %277 : i32
    %279 = arith.index_cast %278 : i32 to index
    %c0_132 = arith.constant 0 : index
    %c0_133 = arith.constant 0 : index
    %280 = vector.load %arg0[%279, %c0_132, %c0_133] : memref<8x16x512xbf16, #tpu.memory_space<vmem>>, vector<1x16x512xbf16>
    %281 = vector.shape_cast %280 : vector<1x16x512xbf16> to vector<16x512xbf16>
    %282 = arith.extf %281 : vector<16x512xbf16> to vector<16x512xf32>
    %c0_134 = arith.constant 0 : index
    %c0_135 = arith.constant 0 : index
    %283 = vector.load %arg5[%c0_134, %c0_135] : memref<16x128xf32, #tpu.memory_space<vmem>>, vector<16x128xf32>
    %284 = arith.truncf %283 : vector<16x128xf32> to vector<16x128xbf16>
    %c0_136 = arith.constant 0 : index
    %c0_137 = arith.constant 0 : index
    %285 = vector.load %arg2[%c0_136, %c0_137] : memref<128x512xbf16, #tpu.memory_space<vmem>>, vector<128x512xbf16>
    %cst_138 = arith.constant dense<0.000000e+00> : vector<16x512xf32>
    %286 = tpu.matmul %284, %285, %cst_138 {dimension_numbers = #tpu.dot_dimension_numbers<[1], [0], [0], [1], [0, 0, 1, 1], [], []>} : vector<16x128xbf16>, vector<128x512xbf16>, vector<16x512xf32> -> vector<16x512xf32>
    %287 = arith.addf %282, %286 : vector<16x512xf32>
    %288 = vector.extract_strided_slice %287 {offsets = [0, 0], sizes = [16, 128], strides = [1, 1]} : vector<16x512xf32> to vector<16x128xf32>
    %289 = arith.negf %288 : vector<16x128xf32>
    %290 = math.exp %289 : vector<16x128xf32>
    %cst_139 = arith.constant 1.000000e+00 : f32
    %291 = vector.broadcast %cst_139 : f32 to vector<16x128xf32>
    %292 = arith.addf %291, %290 : vector<16x128xf32>
    %293 = arith.divf %291, %292 : vector<16x128xf32>
    %294 = vector.extract_strided_slice %287 {offsets = [0, 128], sizes = [16, 128], strides = [1, 1]} : vector<16x512xf32> to vector<16x128xf32>
    %295 = arith.negf %294 : vector<16x128xf32>
    %296 = math.exp %295 : vector<16x128xf32>
    %cst_140 = arith.constant 1.000000e+00 : f32
    %297 = vector.broadcast %cst_140 : f32 to vector<16x128xf32>
    %298 = arith.addf %297, %296 : vector<16x128xf32>
    %299 = arith.divf %297, %298 : vector<16x128xf32>
    %300 = vector.extract_strided_slice %287 {offsets = [0, 256], sizes = [16, 128], strides = [1, 1]} : vector<16x512xf32> to vector<16x128xf32>
    %301 = math.tanh %300 : vector<16x128xf32>
    %302 = vector.extract_strided_slice %287 {offsets = [0, 384], sizes = [16, 128], strides = [1, 1]} : vector<16x512xf32> to vector<16x128xf32>
    %303 = arith.negf %302 : vector<16x128xf32>
    %304 = math.exp %303 : vector<16x128xf32>
    %cst_141 = arith.constant 1.000000e+00 : f32
    %305 = vector.broadcast %cst_141 : f32 to vector<16x128xf32>
    %306 = arith.addf %305, %304 : vector<16x128xf32>
    %307 = arith.divf %305, %306 : vector<16x128xf32>
    %c0_142 = arith.constant 0 : index
    %c0_143 = arith.constant 0 : index
    %308 = vector.load %arg6[%c0_142, %c0_143] : memref<16x128xf32, #tpu.memory_space<vmem>>, vector<16x128xf32>
    %309 = arith.mulf %299, %308 : vector<16x128xf32>
    %310 = arith.mulf %293, %301 : vector<16x128xf32>
    %311 = arith.addf %309, %310 : vector<16x128xf32>
    %312 = math.tanh %311 : vector<16x128xf32>
    %313 = arith.mulf %307, %312 : vector<16x128xf32>
    %c0_144 = arith.constant 0 : index
    %c0_145 = arith.constant 0 : index
    %314 = vector.load %arg6[%c0_144, %c0_145] : memref<16x128xf32, #tpu.memory_space<vmem>>, vector<16x128xf32>
    tpu.vector_store %arg6[%c0_144, %c0_145], %311 {strides = array<i32>} : memref<16x128xf32, #tpu.memory_space<vmem>>, vector<16x128xf32>,
    %c0_146 = arith.constant 0 : index
    %c0_147 = arith.constant 0 : index
    %315 = vector.load %arg5[%c0_146, %c0_147] : memref<16x128xf32, #tpu.memory_space<vmem>>, vector<16x128xf32>
    tpu.vector_store %arg5[%c0_146, %c0_147], %313 {strides = array<i32>} : memref<16x128xf32, #tpu.memory_space<vmem>>, vector<16x128xf32>,
    %c8_i32 = arith.constant 8 : i32
    %c0_i32_148 = arith.constant 0 : i32
    %c1_i32_149 = arith.constant 1 : i32
    %316 = arith.muli %c0_i32_148, %c1_i32_149 : i32
    %c0_i32_150 = arith.constant 0 : i32
    %317 = arith.addi %c0_i32_150, %316 : i32
    %318 = arith.index_cast %317 : i32 to index
    %c0_151 = arith.constant 0 : index
    %c0_152 = arith.constant 0 : index
    %319 = vector.load %arg1[%318, %c0_151, %c0_152] : memref<8x16x512xbf16, #tpu.memory_space<vmem>>, vector<1x16x512xbf16>
    %320 = vector.shape_cast %319 : vector<1x16x512xbf16> to vector<16x512xbf16>
    %321 = arith.extf %320 : vector<16x512xbf16> to vector<16x512xf32>
    %c0_153 = arith.constant 0 : index
    %c0_154 = arith.constant 0 : index
    %322 = vector.load %arg5[%c0_153, %c0_154] : memref<16x128xf32, #tpu.memory_space<vmem>>, vector<16x128xf32>
    %323 = arith.truncf %322 : vector<16x128xf32> to vector<16x128xbf16>
    %c0_155 = arith.constant 0 : index
    %c0_156 = arith.constant 0 : index
    %324 = vector.load %arg3[%c0_155, %c0_156] : memref<128x512xbf16, #tpu.memory_space<vmem>>, vector<128x512xbf16>
    %cst_157 = arith.constant dense<0.000000e+00> : vector<16x512xf32>
    %325 = tpu.matmul %323, %324, %cst_157 {dimension_numbers = #tpu.dot_dimension_numbers<[1], [0], [0], [1], [0, 0, 1, 1], [], []>} : vector<16x128xbf16>, vector<128x512xbf16>, vector<16x512xf32> -> vector<16x512xf32>
    %326 = arith.addf %321, %325 : vector<16x512xf32>
    %327 = vector.extract_strided_slice %326 {offsets = [0, 0], sizes = [16, 128], strides = [1, 1]} : vector<16x512xf32> to vector<16x128xf32>
    %328 = arith.negf %327 : vector<16x128xf32>
    %329 = math.exp %328 : vector<16x128xf32>
    %cst_158 = arith.constant 1.000000e+00 : f32
    %330 = vector.broadcast %cst_158 : f32 to vector<16x128xf32>
    %331 = arith.addf %330, %329 : vector<16x128xf32>
    %332 = arith.divf %330, %331 : vector<16x128xf32>
    %333 = vector.extract_strided_slice %326 {offsets = [0, 128], sizes = [16, 128], strides = [1, 1]} : vector<16x512xf32> to vector<16x128xf32>
    %334 = arith.negf %333 : vector<16x128xf32>
    %335 = math.exp %334 : vector<16x128xf32>
    %cst_159 = arith.constant 1.000000e+00 : f32
    %336 = vector.broadcast %cst_159 : f32 to vector<16x128xf32>
    %337 = arith.addf %336, %335 : vector<16x128xf32>
    %338 = arith.divf %336, %337 : vector<16x128xf32>
    %339 = vector.extract_strided_slice %326 {offsets = [0, 256], sizes = [16, 128], strides = [1, 1]} : vector<16x512xf32> to vector<16x128xf32>
    %340 = math.tanh %339 : vector<16x128xf32>
    %341 = vector.extract_strided_slice %326 {offsets = [0, 384], sizes = [16, 128], strides = [1, 1]} : vector<16x512xf32> to vector<16x128xf32>
    %342 = arith.negf %341 : vector<16x128xf32>
    %343 = math.exp %342 : vector<16x128xf32>
    %cst_160 = arith.constant 1.000000e+00 : f32
    %344 = vector.broadcast %cst_160 : f32 to vector<16x128xf32>
    %345 = arith.addf %344, %343 : vector<16x128xf32>
    %346 = arith.divf %344, %345 : vector<16x128xf32>
    %c0_161 = arith.constant 0 : index
    %c0_162 = arith.constant 0 : index
    %347 = vector.load %arg6[%c0_161, %c0_162] : memref<16x128xf32, #tpu.memory_space<vmem>>, vector<16x128xf32>
    %348 = arith.mulf %338, %347 : vector<16x128xf32>
    %349 = arith.mulf %332, %340 : vector<16x128xf32>
    %350 = arith.addf %348, %349 : vector<16x128xf32>
    %351 = math.tanh %350 : vector<16x128xf32>
    %352 = arith.mulf %346, %351 : vector<16x128xf32>
    %c0_163 = arith.constant 0 : index
    %c0_164 = arith.constant 0 : index
    %353 = vector.load %arg6[%c0_163, %c0_164] : memref<16x128xf32, #tpu.memory_space<vmem>>, vector<16x128xf32>
    tpu.vector_store %arg6[%c0_163, %c0_164], %350 {strides = array<i32>} : memref<16x128xf32, #tpu.memory_space<vmem>>, vector<16x128xf32>,
    %c0_165 = arith.constant 0 : index
    %c0_166 = arith.constant 0 : index
    %354 = vector.load %arg5[%c0_165, %c0_166] : memref<16x128xf32, #tpu.memory_space<vmem>>, vector<16x128xf32>
    tpu.vector_store %arg5[%c0_165, %c0_166], %352 {strides = array<i32>} : memref<16x128xf32, #tpu.memory_space<vmem>>, vector<16x128xf32>,
    %355 = arith.truncf %352 : vector<16x128xf32> to vector<16x128xbf16>
    %356 = arith.index_cast %317 : i32 to index
    %c0_167 = arith.constant 0 : index
    %c0_168 = arith.constant 0 : index
    %357 = vector.load %arg4[%356, %c0_167, %c0_168] : memref<8x16x128xbf16, #tpu.memory_space<vmem>>, vector<1x16x128xbf16>
    %358 = vector.shape_cast %357 : vector<1x16x128xbf16> to vector<16x128xbf16>
    %359 = vector.shape_cast %355 : vector<16x128xbf16> to vector<1x16x128xbf16>
    tpu.vector_store %arg4[%356, %c0_167, %c0_168], %359 {strides = array<i32>} : memref<8x16x128xbf16, #tpu.memory_space<vmem>>, vector<1x16x128xbf16>,
    %c1_i32_169 = arith.constant 1 : i32
    %c1_i32_170 = arith.constant 1 : i32
    %360 = arith.muli %c1_i32_169, %c1_i32_170 : i32
    %c0_i32_171 = arith.constant 0 : i32
    %361 = arith.addi %c0_i32_171, %360 : i32
    %362 = arith.index_cast %361 : i32 to index
    %c0_172 = arith.constant 0 : index
    %c0_173 = arith.constant 0 : index
    %363 = vector.load %arg1[%362, %c0_172, %c0_173] : memref<8x16x512xbf16, #tpu.memory_space<vmem>>, vector<1x16x512xbf16>
    %364 = vector.shape_cast %363 : vector<1x16x512xbf16> to vector<16x512xbf16>
    %365 = arith.extf %364 : vector<16x512xbf16> to vector<16x512xf32>
    %c0_174 = arith.constant 0 : index
    %c0_175 = arith.constant 0 : index
    %366 = vector.load %arg5[%c0_174, %c0_175] : memref<16x128xf32, #tpu.memory_space<vmem>>, vector<16x128xf32>
    %367 = arith.truncf %366 : vector<16x128xf32> to vector<16x128xbf16>
    %c0_176 = arith.constant 0 : index
    %c0_177 = arith.constant 0 : index
    %368 = vector.load %arg3[%c0_176, %c0_177] : memref<128x512xbf16, #tpu.memory_space<vmem>>, vector<128x512xbf16>
    %cst_178 = arith.constant dense<0.000000e+00> : vector<16x512xf32>
    %369 = tpu.matmul %367, %368, %cst_178 {dimension_numbers = #tpu.dot_dimension_numbers<[1], [0], [0], [1], [0, 0, 1, 1], [], []>} : vector<16x128xbf16>, vector<128x512xbf16>, vector<16x512xf32> -> vector<16x512xf32>
    %370 = arith.addf %365, %369 : vector<16x512xf32>
    %371 = vector.extract_strided_slice %370 {offsets = [0, 0], sizes = [16, 128], strides = [1, 1]} : vector<16x512xf32> to vector<16x128xf32>
    %372 = arith.negf %371 : vector<16x128xf32>
    %373 = math.exp %372 : vector<16x128xf32>
    %cst_179 = arith.constant 1.000000e+00 : f32
    %374 = vector.broadcast %cst_179 : f32 to vector<16x128xf32>
    %375 = arith.addf %374, %373 : vector<16x128xf32>
    %376 = arith.divf %374, %375 : vector<16x128xf32>
    %377 = vector.extract_strided_slice %370 {offsets = [0, 128], sizes = [16, 128], strides = [1, 1]} : vector<16x512xf32> to vector<16x128xf32>
    %378 = arith.negf %377 : vector<16x128xf32>
    %379 = math.exp %378 : vector<16x128xf32>
    %cst_180 = arith.constant 1.000000e+00 : f32
    %380 = vector.broadcast %cst_180 : f32 to vector<16x128xf32>
    %381 = arith.addf %380, %379 : vector<16x128xf32>
    %382 = arith.divf %380, %381 : vector<16x128xf32>
    %383 = vector.extract_strided_slice %370 {offsets = [0, 256], sizes = [16, 128], strides = [1, 1]} : vector<16x512xf32> to vector<16x128xf32>
    %384 = math.tanh %383 : vector<16x128xf32>
    %385 = vector.extract_strided_slice %370 {offsets = [0, 384], sizes = [16, 128], strides = [1, 1]} : vector<16x512xf32> to vector<16x128xf32>
    %386 = arith.negf %385 : vector<16x128xf32>
    %387 = math.exp %386 : vector<16x128xf32>
    %cst_181 = arith.constant 1.000000e+00 : f32
    %388 = vector.broadcast %cst_181 : f32 to vector<16x128xf32>
    %389 = arith.addf %388, %387 : vector<16x128xf32>
    %390 = arith.divf %388, %389 : vector<16x128xf32>
    %c0_182 = arith.constant 0 : index
    %c0_183 = arith.constant 0 : index
    %391 = vector.load %arg6[%c0_182, %c0_183] : memref<16x128xf32, #tpu.memory_space<vmem>>, vector<16x128xf32>
    %392 = arith.mulf %382, %391 : vector<16x128xf32>
    %393 = arith.mulf %376, %384 : vector<16x128xf32>
    %394 = arith.addf %392, %393 : vector<16x128xf32>
    %395 = math.tanh %394 : vector<16x128xf32>
    %396 = arith.mulf %390, %395 : vector<16x128xf32>
    %c0_184 = arith.constant 0 : index
    %c0_185 = arith.constant 0 : index
    %397 = vector.load %arg6[%c0_184, %c0_185] : memref<16x128xf32, #tpu.memory_space<vmem>>, vector<16x128xf32>
    tpu.vector_store %arg6[%c0_184, %c0_185], %394 {strides = array<i32>} : memref<16x128xf32, #tpu.memory_space<vmem>>, vector<16x128xf32>,
    %c0_186 = arith.constant 0 : index
    %c0_187 = arith.constant 0 : index
    %398 = vector.load %arg5[%c0_186, %c0_187] : memref<16x128xf32, #tpu.memory_space<vmem>>, vector<16x128xf32>
    tpu.vector_store %arg5[%c0_186, %c0_187], %396 {strides = array<i32>} : memref<16x128xf32, #tpu.memory_space<vmem>>, vector<16x128xf32>,
    %399 = arith.truncf %396 : vector<16x128xf32> to vector<16x128xbf16>
    %400 = arith.index_cast %361 : i32 to index
    %c0_188 = arith.constant 0 : index
    %c0_189 = arith.constant 0 : index
    %401 = vector.load %arg4[%400, %c0_188, %c0_189] : memref<8x16x128xbf16, #tpu.memory_space<vmem>>, vector<1x16x128xbf16>
    %402 = vector.shape_cast %401 : vector<1x16x128xbf16> to vector<16x128xbf16>
    %403 = vector.shape_cast %399 : vector<16x128xbf16> to vector<1x16x128xbf16>
    tpu.vector_store %arg4[%400, %c0_188, %c0_189], %403 {strides = array<i32>} : memref<8x16x128xbf16, #tpu.memory_space<vmem>>, vector<1x16x128xbf16>,
    %c2_i32_190 = arith.constant 2 : i32
    %c1_i32_191 = arith.constant 1 : i32
    %404 = arith.muli %c2_i32_190, %c1_i32_191 : i32
    %c0_i32_192 = arith.constant 0 : i32
    %405 = arith.addi %c0_i32_192, %404 : i32
    %406 = arith.index_cast %405 : i32 to index
    %c0_193 = arith.constant 0 : index
    %c0_194 = arith.constant 0 : index
    %407 = vector.load %arg1[%406, %c0_193, %c0_194] : memref<8x16x512xbf16, #tpu.memory_space<vmem>>, vector<1x16x512xbf16>
    %408 = vector.shape_cast %407 : vector<1x16x512xbf16> to vector<16x512xbf16>
    %409 = arith.extf %408 : vector<16x512xbf16> to vector<16x512xf32>
    %c0_195 = arith.constant 0 : index
    %c0_196 = arith.constant 0 : index
    %410 = vector.load %arg5[%c0_195, %c0_196] : memref<16x128xf32, #tpu.memory_space<vmem>>, vector<16x128xf32>
    %411 = arith.truncf %410 : vector<16x128xf32> to vector<16x128xbf16>
    %c0_197 = arith.constant 0 : index
    %c0_198 = arith.constant 0 : index
    %412 = vector.load %arg3[%c0_197, %c0_198] : memref<128x512xbf16, #tpu.memory_space<vmem>>, vector<128x512xbf16>
    %cst_199 = arith.constant dense<0.000000e+00> : vector<16x512xf32>
    %413 = tpu.matmul %411, %412, %cst_199 {dimension_numbers = #tpu.dot_dimension_numbers<[1], [0], [0], [1], [0, 0, 1, 1], [], []>} : vector<16x128xbf16>, vector<128x512xbf16>, vector<16x512xf32> -> vector<16x512xf32>
    %414 = arith.addf %409, %413 : vector<16x512xf32>
    %415 = vector.extract_strided_slice %414 {offsets = [0, 0], sizes = [16, 128], strides = [1, 1]} : vector<16x512xf32> to vector<16x128xf32>
    %416 = arith.negf %415 : vector<16x128xf32>
    %417 = math.exp %416 : vector<16x128xf32>
    %cst_200 = arith.constant 1.000000e+00 : f32
    %418 = vector.broadcast %cst_200 : f32 to vector<16x128xf32>
    %419 = arith.addf %418, %417 : vector<16x128xf32>
    %420 = arith.divf %418, %419 : vector<16x128xf32>
    %421 = vector.extract_strided_slice %414 {offsets = [0, 128], sizes = [16, 128], strides = [1, 1]} : vector<16x512xf32> to vector<16x128xf32>
    %422 = arith.negf %421 : vector<16x128xf32>
    %423 = math.exp %422 : vector<16x128xf32>
    %cst_201 = arith.constant 1.000000e+00 : f32
    %424 = vector.broadcast %cst_201 : f32 to vector<16x128xf32>
    %425 = arith.addf %424, %423 : vector<16x128xf32>
    %426 = arith.divf %424, %425 : vector<16x128xf32>
    %427 = vector.extract_strided_slice %414 {offsets = [0, 256], sizes = [16, 128], strides = [1, 1]} : vector<16x512xf32> to vector<16x128xf32>
    %428 = math.tanh %427 : vector<16x128xf32>
    %429 = vector.extract_strided_slice %414 {offsets = [0, 384], sizes = [16, 128], strides = [1, 1]} : vector<16x512xf32> to vector<16x128xf32>
    %430 = arith.negf %429 : vector<16x128xf32>
    %431 = math.exp %430 : vector<16x128xf32>
    %cst_202 = arith.constant 1.000000e+00 : f32
    %432 = vector.broadcast %cst_202 : f32 to vector<16x128xf32>
    %433 = arith.addf %432, %431 : vector<16x128xf32>
    %434 = arith.divf %432, %433 : vector<16x128xf32>
    %c0_203 = arith.constant 0 : index
    %c0_204 = arith.constant 0 : index
    %435 = vector.load %arg6[%c0_203, %c0_204] : memref<16x128xf32, #tpu.memory_space<vmem>>, vector<16x128xf32>
    %436 = arith.mulf %426, %435 : vector<16x128xf32>
    %437 = arith.mulf %420, %428 : vector<16x128xf32>
    %438 = arith.addf %436, %437 : vector<16x128xf32>
    %439 = math.tanh %438 : vector<16x128xf32>
    %440 = arith.mulf %434, %439 : vector<16x128xf32>
    %c0_205 = arith.constant 0 : index
    %c0_206 = arith.constant 0 : index
    %441 = vector.load %arg6[%c0_205, %c0_206] : memref<16x128xf32, #tpu.memory_space<vmem>>, vector<16x128xf32>
    tpu.vector_store %arg6[%c0_205, %c0_206], %438 {strides = array<i32>} : memref<16x128xf32, #tpu.memory_space<vmem>>, vector<16x128xf32>,
    %c0_207 = arith.constant 0 : index
    %c0_208 = arith.constant 0 : index
    %442 = vector.load %arg5[%c0_207, %c0_208] : memref<16x128xf32, #tpu.memory_space<vmem>>, vector<16x128xf32>
    tpu.vector_store %arg5[%c0_207, %c0_208], %440 {strides = array<i32>} : memref<16x128xf32, #tpu.memory_space<vmem>>, vector<16x128xf32>,
    %443 = arith.truncf %440 : vector<16x128xf32> to vector<16x128xbf16>
    %444 = arith.index_cast %405 : i32 to index
    %c0_209 = arith.constant 0 : index
    %c0_210 = arith.constant 0 : index
    %445 = vector.load %arg4[%444, %c0_209, %c0_210] : memref<8x16x128xbf16, #tpu.memory_space<vmem>>, vector<1x16x128xbf16>
    %446 = vector.shape_cast %445 : vector<1x16x128xbf16> to vector<16x128xbf16>
    %447 = vector.shape_cast %443 : vector<16x128xbf16> to vector<1x16x128xbf16>
    tpu.vector_store %arg4[%444, %c0_209, %c0_210], %447 {strides = array<i32>} : memref<8x16x128xbf16, #tpu.memory_space<vmem>>, vector<1x16x128xbf16>,
    %c3_i32_211 = arith.constant 3 : i32
    %c1_i32_212 = arith.constant 1 : i32
    %448 = arith.muli %c3_i32_211, %c1_i32_212 : i32
    %c0_i32_213 = arith.constant 0 : i32
    %449 = arith.addi %c0_i32_213, %448 : i32
    %450 = arith.index_cast %449 : i32 to index
    %c0_214 = arith.constant 0 : index
    %c0_215 = arith.constant 0 : index
    %451 = vector.load %arg1[%450, %c0_214, %c0_215] : memref<8x16x512xbf16, #tpu.memory_space<vmem>>, vector<1x16x512xbf16>
    %452 = vector.shape_cast %451 : vector<1x16x512xbf16> to vector<16x512xbf16>
    %453 = arith.extf %452 : vector<16x512xbf16> to vector<16x512xf32>
    %c0_216 = arith.constant 0 : index
    %c0_217 = arith.constant 0 : index
    %454 = vector.load %arg5[%c0_216, %c0_217] : memref<16x128xf32, #tpu.memory_space<vmem>>, vector<16x128xf32>
    %455 = arith.truncf %454 : vector<16x128xf32> to vector<16x128xbf16>
    %c0_218 = arith.constant 0 : index
    %c0_219 = arith.constant 0 : index
    %456 = vector.load %arg3[%c0_218, %c0_219] : memref<128x512xbf16, #tpu.memory_space<vmem>>, vector<128x512xbf16>
    %cst_220 = arith.constant dense<0.000000e+00> : vector<16x512xf32>
    %457 = tpu.matmul %455, %456, %cst_220 {dimension_numbers = #tpu.dot_dimension_numbers<[1], [0], [0], [1], [0, 0, 1, 1], [], []>} : vector<16x128xbf16>, vector<128x512xbf16>, vector<16x512xf32> -> vector<16x512xf32>
    %458 = arith.addf %453, %457 : vector<16x512xf32>
    %459 = vector.extract_strided_slice %458 {offsets = [0, 0], sizes = [16, 128], strides = [1, 1]} : vector<16x512xf32> to vector<16x128xf32>
    %460 = arith.negf %459 : vector<16x128xf32>
    %461 = math.exp %460 : vector<16x128xf32>
    %cst_221 = arith.constant 1.000000e+00 : f32
    %462 = vector.broadcast %cst_221 : f32 to vector<16x128xf32>
    %463 = arith.addf %462, %461 : vector<16x128xf32>
    %464 = arith.divf %462, %463 : vector<16x128xf32>
    %465 = vector.extract_strided_slice %458 {offsets = [0, 128], sizes = [16, 128], strides = [1, 1]} : vector<16x512xf32> to vector<16x128xf32>
    %466 = arith.negf %465 : vector<16x128xf32>
    %467 = math.exp %466 : vector<16x128xf32>
    %cst_222 = arith.constant 1.000000e+00 : f32
    %468 = vector.broadcast %cst_222 : f32 to vector<16x128xf32>
    %469 = arith.addf %468, %467 : vector<16x128xf32>
    %470 = arith.divf %468, %469 : vector<16x128xf32>
    %471 = vector.extract_strided_slice %458 {offsets = [0, 256], sizes = [16, 128], strides = [1, 1]} : vector<16x512xf32> to vector<16x128xf32>
    %472 = math.tanh %471 : vector<16x128xf32>
    %473 = vector.extract_strided_slice %458 {offsets = [0, 384], sizes = [16, 128], strides = [1, 1]} : vector<16x512xf32> to vector<16x128xf32>
    %474 = arith.negf %473 : vector<16x128xf32>
    %475 = math.exp %474 : vector<16x128xf32>
    %cst_223 = arith.constant 1.000000e+00 : f32
    %476 = vector.broadcast %cst_223 : f32 to vector<16x128xf32>
    %477 = arith.addf %476, %475 : vector<16x128xf32>
    %478 = arith.divf %476, %477 : vector<16x128xf32>
    %c0_224 = arith.constant 0 : index
    %c0_225 = arith.constant 0 : index
    %479 = vector.load %arg6[%c0_224, %c0_225] : memref<16x128xf32, #tpu.memory_space<vmem>>, vector<16x128xf32>
    %480 = arith.mulf %470, %479 : vector<16x128xf32>
    %481 = arith.mulf %464, %472 : vector<16x128xf32>
    %482 = arith.addf %480, %481 : vector<16x128xf32>
    %483 = math.tanh %482 : vector<16x128xf32>
    %484 = arith.mulf %478, %483 : vector<16x128xf32>
    %c0_226 = arith.constant 0 : index
    %c0_227 = arith.constant 0 : index
    %485 = vector.load %arg6[%c0_226, %c0_227] : memref<16x128xf32, #tpu.memory_space<vmem>>, vector<16x128xf32>
    tpu.vector_store %arg6[%c0_226, %c0_227], %482 {strides = array<i32>} : memref<16x128xf32, #tpu.memory_space<vmem>>, vector<16x128xf32>,
    %c0_228 = arith.constant 0 : index
    %c0_229 = arith.constant 0 : index
    %486 = vector.load %arg5[%c0_228, %c0_229] : memref<16x128xf32, #tpu.memory_space<vmem>>, vector<16x128xf32>
    tpu.vector_store %arg5[%c0_228, %c0_229], %484 {strides = array<i32>} : memref<16x128xf32, #tpu.memory_space<vmem>>, vector<16x128xf32>,
    %487 = arith.truncf %484 : vector<16x128xf32> to vector<16x128xbf16>
    %488 = arith.index_cast %449 : i32 to index
    %c0_230 = arith.constant 0 : index
    %c0_231 = arith.constant 0 : index
    %489 = vector.load %arg4[%488, %c0_230, %c0_231] : memref<8x16x128xbf16, #tpu.memory_space<vmem>>, vector<1x16x128xbf16>
    %490 = vector.shape_cast %489 : vector<1x16x128xbf16> to vector<16x128xbf16>
    %491 = vector.shape_cast %487 : vector<16x128xbf16> to vector<1x16x128xbf16>
    tpu.vector_store %arg4[%488, %c0_230, %c0_231], %491 {strides = array<i32>} : memref<8x16x128xbf16, #tpu.memory_space<vmem>>, vector<1x16x128xbf16>,
    %c4_i32_232 = arith.constant 4 : i32
    %c1_i32_233 = arith.constant 1 : i32
    %492 = arith.muli %c4_i32_232, %c1_i32_233 : i32
    %c0_i32_234 = arith.constant 0 : i32
    %493 = arith.addi %c0_i32_234, %492 : i32
    %494 = arith.index_cast %493 : i32 to index
    %c0_235 = arith.constant 0 : index
    %c0_236 = arith.constant 0 : index
    %495 = vector.load %arg1[%494, %c0_235, %c0_236] : memref<8x16x512xbf16, #tpu.memory_space<vmem>>, vector<1x16x512xbf16>
    %496 = vector.shape_cast %495 : vector<1x16x512xbf16> to vector<16x512xbf16>
    %497 = arith.extf %496 : vector<16x512xbf16> to vector<16x512xf32>
    %c0_237 = arith.constant 0 : index
    %c0_238 = arith.constant 0 : index
    %498 = vector.load %arg5[%c0_237, %c0_238] : memref<16x128xf32, #tpu.memory_space<vmem>>, vector<16x128xf32>
    %499 = arith.truncf %498 : vector<16x128xf32> to vector<16x128xbf16>
    %c0_239 = arith.constant 0 : index
    %c0_240 = arith.constant 0 : index
    %500 = vector.load %arg3[%c0_239, %c0_240] : memref<128x512xbf16, #tpu.memory_space<vmem>>, vector<128x512xbf16>
    %cst_241 = arith.constant dense<0.000000e+00> : vector<16x512xf32>
    %501 = tpu.matmul %499, %500, %cst_241 {dimension_numbers = #tpu.dot_dimension_numbers<[1], [0], [0], [1], [0, 0, 1, 1], [], []>} : vector<16x128xbf16>, vector<128x512xbf16>, vector<16x512xf32> -> vector<16x512xf32>
    %502 = arith.addf %497, %501 : vector<16x512xf32>
    %503 = vector.extract_strided_slice %502 {offsets = [0, 0], sizes = [16, 128], strides = [1, 1]} : vector<16x512xf32> to vector<16x128xf32>
    %504 = arith.negf %503 : vector<16x128xf32>
    %505 = math.exp %504 : vector<16x128xf32>
    %cst_242 = arith.constant 1.000000e+00 : f32
    %506 = vector.broadcast %cst_242 : f32 to vector<16x128xf32>
    %507 = arith.addf %506, %505 : vector<16x128xf32>
    %508 = arith.divf %506, %507 : vector<16x128xf32>
    %509 = vector.extract_strided_slice %502 {offsets = [0, 128], sizes = [16, 128], strides = [1, 1]} : vector<16x512xf32> to vector<16x128xf32>
    %510 = arith.negf %509 : vector<16x128xf32>
    %511 = math.exp %510 : vector<16x128xf32>
    %cst_243 = arith.constant 1.000000e+00 : f32
    %512 = vector.broadcast %cst_243 : f32 to vector<16x128xf32>
    %513 = arith.addf %512, %511 : vector<16x128xf32>
    %514 = arith.divf %512, %513 : vector<16x128xf32>
    %515 = vector.extract_strided_slice %502 {offsets = [0, 256], sizes = [16, 128], strides = [1, 1]} : vector<16x512xf32> to vector<16x128xf32>
    %516 = math.tanh %515 : vector<16x128xf32>
    %517 = vector.extract_strided_slice %502 {offsets = [0, 384], sizes = [16, 128], strides = [1, 1]} : vector<16x512xf32> to vector<16x128xf32>
    %518 = arith.negf %517 : vector<16x128xf32>
    %519 = math.exp %518 : vector<16x128xf32>
    %cst_244 = arith.constant 1.000000e+00 : f32
    %520 = vector.broadcast %cst_244 : f32 to vector<16x128xf32>
    %521 = arith.addf %520, %519 : vector<16x128xf32>
    %522 = arith.divf %520, %521 : vector<16x128xf32>
    %c0_245 = arith.constant 0 : index
    %c0_246 = arith.constant 0 : index
    %523 = vector.load %arg6[%c0_245, %c0_246] : memref<16x128xf32, #tpu.memory_space<vmem>>, vector<16x128xf32>
    %524 = arith.mulf %514, %523 : vector<16x128xf32>
    %525 = arith.mulf %508, %516 : vector<16x128xf32>
    %526 = arith.addf %524, %525 : vector<16x128xf32>
    %527 = math.tanh %526 : vector<16x128xf32>
    %528 = arith.mulf %522, %527 : vector<16x128xf32>
    %c0_247 = arith.constant 0 : index
    %c0_248 = arith.constant 0 : index
    %529 = vector.load %arg6[%c0_247, %c0_248] : memref<16x128xf32, #tpu.memory_space<vmem>>, vector<16x128xf32>
    tpu.vector_store %arg6[%c0_247, %c0_248], %526 {strides = array<i32>} : memref<16x128xf32, #tpu.memory_space<vmem>>, vector<16x128xf32>,
    %c0_249 = arith.constant 0 : index
    %c0_250 = arith.constant 0 : index
    %530 = vector.load %arg5[%c0_249, %c0_250] : memref<16x128xf32, #tpu.memory_space<vmem>>, vector<16x128xf32>
    tpu.vector_store %arg5[%c0_249, %c0_250], %528 {strides = array<i32>} : memref<16x128xf32, #tpu.memory_space<vmem>>, vector<16x128xf32>,
    %531 = arith.truncf %528 : vector<16x128xf32> to vector<16x128xbf16>
    %532 = arith.index_cast %493 : i32 to index
    %c0_251 = arith.constant 0 : index
    %c0_252 = arith.constant 0 : index
    %533 = vector.load %arg4[%532, %c0_251, %c0_252] : memref<8x16x128xbf16, #tpu.memory_space<vmem>>, vector<1x16x128xbf16>
    %534 = vector.shape_cast %533 : vector<1x16x128xbf16> to vector<16x128xbf16>
    %535 = vector.shape_cast %531 : vector<16x128xbf16> to vector<1x16x128xbf16>
    tpu.vector_store %arg4[%532, %c0_251, %c0_252], %535 {strides = array<i32>} : memref<8x16x128xbf16, #tpu.memory_space<vmem>>, vector<1x16x128xbf16>,
    %c5_i32_253 = arith.constant 5 : i32
    %c1_i32_254 = arith.constant 1 : i32
    %536 = arith.muli %c5_i32_253, %c1_i32_254 : i32
    %c0_i32_255 = arith.constant 0 : i32
    %537 = arith.addi %c0_i32_255, %536 : i32
    %538 = arith.index_cast %537 : i32 to index
    %c0_256 = arith.constant 0 : index
    %c0_257 = arith.constant 0 : index
    %539 = vector.load %arg1[%538, %c0_256, %c0_257] : memref<8x16x512xbf16, #tpu.memory_space<vmem>>, vector<1x16x512xbf16>
    %540 = vector.shape_cast %539 : vector<1x16x512xbf16> to vector<16x512xbf16>
    %541 = arith.extf %540 : vector<16x512xbf16> to vector<16x512xf32>
    %c0_258 = arith.constant 0 : index
    %c0_259 = arith.constant 0 : index
    %542 = vector.load %arg5[%c0_258, %c0_259] : memref<16x128xf32, #tpu.memory_space<vmem>>, vector<16x128xf32>
    %543 = arith.truncf %542 : vector<16x128xf32> to vector<16x128xbf16>
    %c0_260 = arith.constant 0 : index
    %c0_261 = arith.constant 0 : index
    %544 = vector.load %arg3[%c0_260, %c0_261] : memref<128x512xbf16, #tpu.memory_space<vmem>>, vector<128x512xbf16>
    %cst_262 = arith.constant dense<0.000000e+00> : vector<16x512xf32>
    %545 = tpu.matmul %543, %544, %cst_262 {dimension_numbers = #tpu.dot_dimension_numbers<[1], [0], [0], [1], [0, 0, 1, 1], [], []>} : vector<16x128xbf16>, vector<128x512xbf16>, vector<16x512xf32> -> vector<16x512xf32>
    %546 = arith.addf %541, %545 : vector<16x512xf32>
    %547 = vector.extract_strided_slice %546 {offsets = [0, 0], sizes = [16, 128], strides = [1, 1]} : vector<16x512xf32> to vector<16x128xf32>
    %548 = arith.negf %547 : vector<16x128xf32>
    %549 = math.exp %548 : vector<16x128xf32>
    %cst_263 = arith.constant 1.000000e+00 : f32
    %550 = vector.broadcast %cst_263 : f32 to vector<16x128xf32>
    %551 = arith.addf %550, %549 : vector<16x128xf32>
    %552 = arith.divf %550, %551 : vector<16x128xf32>
    %553 = vector.extract_strided_slice %546 {offsets = [0, 128], sizes = [16, 128], strides = [1, 1]} : vector<16x512xf32> to vector<16x128xf32>
    %554 = arith.negf %553 : vector<16x128xf32>
    %555 = math.exp %554 : vector<16x128xf32>
    %cst_264 = arith.constant 1.000000e+00 : f32
    %556 = vector.broadcast %cst_264 : f32 to vector<16x128xf32>
    %557 = arith.addf %556, %555 : vector<16x128xf32>
    %558 = arith.divf %556, %557 : vector<16x128xf32>
    %559 = vector.extract_strided_slice %546 {offsets = [0, 256], sizes = [16, 128], strides = [1, 1]} : vector<16x512xf32> to vector<16x128xf32>
    %560 = math.tanh %559 : vector<16x128xf32>
    %561 = vector.extract_strided_slice %546 {offsets = [0, 384], sizes = [16, 128], strides = [1, 1]} : vector<16x512xf32> to vector<16x128xf32>
    %562 = arith.negf %561 : vector<16x128xf32>
    %563 = math.exp %562 : vector<16x128xf32>
    %cst_265 = arith.constant 1.000000e+00 : f32
    %564 = vector.broadcast %cst_265 : f32 to vector<16x128xf32>
    %565 = arith.addf %564, %563 : vector<16x128xf32>
    %566 = arith.divf %564, %565 : vector<16x128xf32>
    %c0_266 = arith.constant 0 : index
    %c0_267 = arith.constant 0 : index
    %567 = vector.load %arg6[%c0_266, %c0_267] : memref<16x128xf32, #tpu.memory_space<vmem>>, vector<16x128xf32>
    %568 = arith.mulf %558, %567 : vector<16x128xf32>
    %569 = arith.mulf %552, %560 : vector<16x128xf32>
    %570 = arith.addf %568, %569 : vector<16x128xf32>
    %571 = math.tanh %570 : vector<16x128xf32>
    %572 = arith.mulf %566, %571 : vector<16x128xf32>
    %c0_268 = arith.constant 0 : index
    %c0_269 = arith.constant 0 : index
    %573 = vector.load %arg6[%c0_268, %c0_269] : memref<16x128xf32, #tpu.memory_space<vmem>>, vector<16x128xf32>
    tpu.vector_store %arg6[%c0_268, %c0_269], %570 {strides = array<i32>} : memref<16x128xf32, #tpu.memory_space<vmem>>, vector<16x128xf32>,
    %c0_270 = arith.constant 0 : index
    %c0_271 = arith.constant 0 : index
    %574 = vector.load %arg5[%c0_270, %c0_271] : memref<16x128xf32, #tpu.memory_space<vmem>>, vector<16x128xf32>
    tpu.vector_store %arg5[%c0_270, %c0_271], %572 {strides = array<i32>} : memref<16x128xf32, #tpu.memory_space<vmem>>, vector<16x128xf32>,
    %575 = arith.truncf %572 : vector<16x128xf32> to vector<16x128xbf16>
    %576 = arith.index_cast %537 : i32 to index
    %c0_272 = arith.constant 0 : index
    %c0_273 = arith.constant 0 : index
    %577 = vector.load %arg4[%576, %c0_272, %c0_273] : memref<8x16x128xbf16, #tpu.memory_space<vmem>>, vector<1x16x128xbf16>
    %578 = vector.shape_cast %577 : vector<1x16x128xbf16> to vector<16x128xbf16>
    %579 = vector.shape_cast %575 : vector<16x128xbf16> to vector<1x16x128xbf16>
    tpu.vector_store %arg4[%576, %c0_272, %c0_273], %579 {strides = array<i32>} : memref<8x16x128xbf16, #tpu.memory_space<vmem>>, vector<1x16x128xbf16>,
    %c6_i32_274 = arith.constant 6 : i32
    %c1_i32_275 = arith.constant 1 : i32
    %580 = arith.muli %c6_i32_274, %c1_i32_275 : i32
    %c0_i32_276 = arith.constant 0 : i32
    %581 = arith.addi %c0_i32_276, %580 : i32
    %582 = arith.index_cast %581 : i32 to index
    %c0_277 = arith.constant 0 : index
    %c0_278 = arith.constant 0 : index
    %583 = vector.load %arg1[%582, %c0_277, %c0_278] : memref<8x16x512xbf16, #tpu.memory_space<vmem>>, vector<1x16x512xbf16>
    %584 = vector.shape_cast %583 : vector<1x16x512xbf16> to vector<16x512xbf16>
    %585 = arith.extf %584 : vector<16x512xbf16> to vector<16x512xf32>
    %c0_279 = arith.constant 0 : index
    %c0_280 = arith.constant 0 : index
    %586 = vector.load %arg5[%c0_279, %c0_280] : memref<16x128xf32, #tpu.memory_space<vmem>>, vector<16x128xf32>
    %587 = arith.truncf %586 : vector<16x128xf32> to vector<16x128xbf16>
    %c0_281 = arith.constant 0 : index
    %c0_282 = arith.constant 0 : index
    %588 = vector.load %arg3[%c0_281, %c0_282] : memref<128x512xbf16, #tpu.memory_space<vmem>>, vector<128x512xbf16>
    %cst_283 = arith.constant dense<0.000000e+00> : vector<16x512xf32>
    %589 = tpu.matmul %587, %588, %cst_283 {dimension_numbers = #tpu.dot_dimension_numbers<[1], [0], [0], [1], [0, 0, 1, 1], [], []>} : vector<16x128xbf16>, vector<128x512xbf16>, vector<16x512xf32> -> vector<16x512xf32>
    %590 = arith.addf %585, %589 : vector<16x512xf32>
    %591 = vector.extract_strided_slice %590 {offsets = [0, 0], sizes = [16, 128], strides = [1, 1]} : vector<16x512xf32> to vector<16x128xf32>
    %592 = arith.negf %591 : vector<16x128xf32>
    %593 = math.exp %592 : vector<16x128xf32>
    %cst_284 = arith.constant 1.000000e+00 : f32
    %594 = vector.broadcast %cst_284 : f32 to vector<16x128xf32>
    %595 = arith.addf %594, %593 : vector<16x128xf32>
    %596 = arith.divf %594, %595 : vector<16x128xf32>
    %597 = vector.extract_strided_slice %590 {offsets = [0, 128], sizes = [16, 128], strides = [1, 1]} : vector<16x512xf32> to vector<16x128xf32>
    %598 = arith.negf %597 : vector<16x128xf32>
    %599 = math.exp %598 : vector<16x128xf32>
    %cst_285 = arith.constant 1.000000e+00 : f32
    %600 = vector.broadcast %cst_285 : f32 to vector<16x128xf32>
    %601 = arith.addf %600, %599 : vector<16x128xf32>
    %602 = arith.divf %600, %601 : vector<16x128xf32>
    %603 = vector.extract_strided_slice %590 {offsets = [0, 256], sizes = [16, 128], strides = [1, 1]} : vector<16x512xf32> to vector<16x128xf32>
    %604 = math.tanh %603 : vector<16x128xf32>
    %605 = vector.extract_strided_slice %590 {offsets = [0, 384], sizes = [16, 128], strides = [1, 1]} : vector<16x512xf32> to vector<16x128xf32>
    %606 = arith.negf %605 : vector<16x128xf32>
    %607 = math.exp %606 : vector<16x128xf32>
    %cst_286 = arith.constant 1.000000e+00 : f32
    %608 = vector.broadcast %cst_286 : f32 to vector<16x128xf32>
    %609 = arith.addf %608, %607 : vector<16x128xf32>
    %610 = arith.divf %608, %609 : vector<16x128xf32>
    %c0_287 = arith.constant 0 : index
    %c0_288 = arith.constant 0 : index
    %611 = vector.load %arg6[%c0_287, %c0_288] : memref<16x128xf32, #tpu.memory_space<vmem>>, vector<16x128xf32>
    %612 = arith.mulf %602, %611 : vector<16x128xf32>
    %613 = arith.mulf %596, %604 : vector<16x128xf32>
    %614 = arith.addf %612, %613 : vector<16x128xf32>
    %615 = math.tanh %614 : vector<16x128xf32>
    %616 = arith.mulf %610, %615 : vector<16x128xf32>
    %c0_289 = arith.constant 0 : index
    %c0_290 = arith.constant 0 : index
    %617 = vector.load %arg6[%c0_289, %c0_290] : memref<16x128xf32, #tpu.memory_space<vmem>>, vector<16x128xf32>
    tpu.vector_store %arg6[%c0_289, %c0_290], %614 {strides = array<i32>} : memref<16x128xf32, #tpu.memory_space<vmem>>, vector<16x128xf32>,
    %c0_291 = arith.constant 0 : index
    %c0_292 = arith.constant 0 : index
    %618 = vector.load %arg5[%c0_291, %c0_292] : memref<16x128xf32, #tpu.memory_space<vmem>>, vector<16x128xf32>
    tpu.vector_store %arg5[%c0_291, %c0_292], %616 {strides = array<i32>} : memref<16x128xf32, #tpu.memory_space<vmem>>, vector<16x128xf32>,
    %619 = arith.truncf %616 : vector<16x128xf32> to vector<16x128xbf16>
    %620 = arith.index_cast %581 : i32 to index
    %c0_293 = arith.constant 0 : index
    %c0_294 = arith.constant 0 : index
    %621 = vector.load %arg4[%620, %c0_293, %c0_294] : memref<8x16x128xbf16, #tpu.memory_space<vmem>>, vector<1x16x128xbf16>
    %622 = vector.shape_cast %621 : vector<1x16x128xbf16> to vector<16x128xbf16>
    %623 = vector.shape_cast %619 : vector<16x128xbf16> to vector<1x16x128xbf16>
    tpu.vector_store %arg4[%620, %c0_293, %c0_294], %623 {strides = array<i32>} : memref<8x16x128xbf16, #tpu.memory_space<vmem>>, vector<1x16x128xbf16>,
    %c7_i32_295 = arith.constant 7 : i32
    %c1_i32_296 = arith.constant 1 : i32
    %624 = arith.muli %c7_i32_295, %c1_i32_296 : i32
    %c0_i32_297 = arith.constant 0 : i32
    %625 = arith.addi %c0_i32_297, %624 : i32
    %626 = arith.index_cast %625 : i32 to index
    %c0_298 = arith.constant 0 : index
    %c0_299 = arith.constant 0 : index
    %627 = vector.load %arg1[%626, %c0_298, %c0_299] : memref<8x16x512xbf16, #tpu.memory_space<vmem>>, vector<1x16x512xbf16>
    %628 = vector.shape_cast %627 : vector<1x16x512xbf16> to vector<16x512xbf16>
    %629 = arith.extf %628 : vector<16x512xbf16> to vector<16x512xf32>
    %c0_300 = arith.constant 0 : index
    %c0_301 = arith.constant 0 : index
    %630 = vector.load %arg5[%c0_300, %c0_301] : memref<16x128xf32, #tpu.memory_space<vmem>>, vector<16x128xf32>
    %631 = arith.truncf %630 : vector<16x128xf32> to vector<16x128xbf16>
    %c0_302 = arith.constant 0 : index
    %c0_303 = arith.constant 0 : index
    %632 = vector.load %arg3[%c0_302, %c0_303] : memref<128x512xbf16, #tpu.memory_space<vmem>>, vector<128x512xbf16>
    %cst_304 = arith.constant dense<0.000000e+00> : vector<16x512xf32>
    %633 = tpu.matmul %631, %632, %cst_304 {dimension_numbers = #tpu.dot_dimension_numbers<[1], [0], [0], [1], [0, 0, 1, 1], [], []>} : vector<16x128xbf16>, vector<128x512xbf16>, vector<16x512xf32> -> vector<16x512xf32>
    %634 = arith.addf %629, %633 : vector<16x512xf32>
    %635 = vector.extract_strided_slice %634 {offsets = [0, 0], sizes = [16, 128], strides = [1, 1]} : vector<16x512xf32> to vector<16x128xf32>
    %636 = arith.negf %635 : vector<16x128xf32>
    %637 = math.exp %636 : vector<16x128xf32>
    %cst_305 = arith.constant 1.000000e+00 : f32
    %638 = vector.broadcast %cst_305 : f32 to vector<16x128xf32>
    %639 = arith.addf %638, %637 : vector<16x128xf32>
    %640 = arith.divf %638, %639 : vector<16x128xf32>
    %641 = vector.extract_strided_slice %634 {offsets = [0, 128], sizes = [16, 128], strides = [1, 1]} : vector<16x512xf32> to vector<16x128xf32>
    %642 = arith.negf %641 : vector<16x128xf32>
    %643 = math.exp %642 : vector<16x128xf32>
    %cst_306 = arith.constant 1.000000e+00 : f32
    %644 = vector.broadcast %cst_306 : f32 to vector<16x128xf32>
    %645 = arith.addf %644, %643 : vector<16x128xf32>
    %646 = arith.divf %644, %645 : vector<16x128xf32>
    %647 = vector.extract_strided_slice %634 {offsets = [0, 256], sizes = [16, 128], strides = [1, 1]} : vector<16x512xf32> to vector<16x128xf32>
    %648 = math.tanh %647 : vector<16x128xf32>
    %649 = vector.extract_strided_slice %634 {offsets = [0, 384], sizes = [16, 128], strides = [1, 1]} : vector<16x512xf32> to vector<16x128xf32>
    %650 = arith.negf %649 : vector<16x128xf32>
    %651 = math.exp %650 : vector<16x128xf32>
    %cst_307 = arith.constant 1.000000e+00 : f32
    %652 = vector.broadcast %cst_307 : f32 to vector<16x128xf32>
    %653 = arith.addf %652, %651 : vector<16x128xf32>
    %654 = arith.divf %652, %653 : vector<16x128xf32>
    %c0_308 = arith.constant 0 : index
    %c0_309 = arith.constant 0 : index
    %655 = vector.load %arg6[%c0_308, %c0_309] : memref<16x128xf32, #tpu.memory_space<vmem>>, vector<16x128xf32>
    %656 = arith.mulf %646, %655 : vector<16x128xf32>
    %657 = arith.mulf %640, %648 : vector<16x128xf32>
    %658 = arith.addf %656, %657 : vector<16x128xf32>
    %659 = math.tanh %658 : vector<16x128xf32>
    %660 = arith.mulf %654, %659 : vector<16x128xf32>
    %c0_310 = arith.constant 0 : index
    %c0_311 = arith.constant 0 : index
    %661 = vector.load %arg6[%c0_310, %c0_311] : memref<16x128xf32, #tpu.memory_space<vmem>>, vector<16x128xf32>
    tpu.vector_store %arg6[%c0_310, %c0_311], %658 {strides = array<i32>} : memref<16x128xf32, #tpu.memory_space<vmem>>, vector<16x128xf32>,
    %c0_312 = arith.constant 0 : index
    %c0_313 = arith.constant 0 : index
    %662 = vector.load %arg5[%c0_312, %c0_313] : memref<16x128xf32, #tpu.memory_space<vmem>>, vector<16x128xf32>
    tpu.vector_store %arg5[%c0_312, %c0_313], %660 {strides = array<i32>} : memref<16x128xf32, #tpu.memory_space<vmem>>, vector<16x128xf32>,
    %663 = arith.truncf %660 : vector<16x128xf32> to vector<16x128xbf16>
    %664 = arith.index_cast %625 : i32 to index
    %c0_314 = arith.constant 0 : index
    %c0_315 = arith.constant 0 : index
    %665 = vector.load %arg4[%664, %c0_314, %c0_315] : memref<8x16x128xbf16, #tpu.memory_space<vmem>>, vector<1x16x128xbf16>
    %666 = vector.shape_cast %665 : vector<1x16x128xbf16> to vector<16x128xbf16>
    %667 = vector.shape_cast %663 : vector<16x128xbf16> to vector<1x16x128xbf16>
    tpu.vector_store %arg4[%664, %c0_314, %c0_315], %667 {strides = array<i32>} : memref<8x16x128xbf16, #tpu.memory_space<vmem>>, vector<1x16x128xbf16>,
    %c8_i32_316 = arith.constant 8 : i32
    return
  }
}

</mosaic_0001>

<llo_original>
// kernel: seq2seq_forward.7
$region0: #{seq2seq_forward.7}
  #allocation0 [shape = 'u32[]', space=smem, size = 0x4, offset = 0x4, fixed_abs, tag = 'smem constant byte address 0x4 - core index']
  #allocation1 [shape = 'u32[144,128]{1,0:T(1,128)}', space=vmem, size = 0x12000, scoped, tag = 'internal scratch']
  %s0 = inlined_call_operand.vmem [shape: bf16[128,128], index: 0, kind: input, shape index: {}]
  %s1 = inlined_call_operand.vmem [shape: bf16[128,128], index: 1, kind: input, shape index: {}]
  %s2 = inlined_call_operand.vmem [shape: f32[1,128], index: 2, kind: input, shape index: {}]
  %s3 = inlined_call_operand.vmem [shape: f32[128,128], index: 3, kind: output, shape index: {}]
  %s4 = sld [smem:[#allocation0]]
  $region22: #{seq2seq_forward.7} parent=0
    _
  %s6 = ssub.s32 1, %s4
  %s7 = scalar_select 0, %s6, %s4
  // Predicated region
  $region2: #{seq2seq_forward.7} parent=0 // pred_check
    _
  $region3: #{seq2seq_forward.7} parent=0 // pred_check_branch
    %9 = sbr.rel (0) target = $region5
  $region4: #{seq2seq_forward.7} parent=0 // pred_region
    _
  $region5: #{seq2seq_forward.7} parent=0 // pred_fallthru
    _
  // Predicated region
  $region6: #{seq2seq_forward.7} parent=0 // pred_check
    _
  $region7: #{seq2seq_forward.7} parent=0 // pred_check_branch
    %11 = sbr.rel (0) target = $region9
  $region8: #{seq2seq_forward.7} parent=0 // pred_region
    _
  $region9: #{seq2seq_forward.7} parent=0 // pred_fallthru
    _
  // Predicated region
  $region10: #{seq2seq_forward.7} parent=0 // pred_check
    _
  $region11: #{seq2seq_forward.7} parent=0 // pred_check_branch
    %13 = sbr.rel (0) target = $region13
  $region12: #{seq2seq_forward.7} parent=0 // pred_region
    _
  $region13: #{seq2seq_forward.7} parent=0 // pred_fallthru
    _
  %v15 = vld [vmem:[%s0] sm:$0xf]
  %v16 = vld [vmem:[%s0 + $0x4] sm:$0xf]
  %v17 = vld [vmem:[%s0 + $0x8] sm:$0xf]
  %v18 = vld [vmem:[%s0 + $0xc] sm:$0xf]
  %v19 = vld [vmem:[%s0 + $0x10] sm:$0xf]
  %v20 = vld [vmem:[%s0 + $0x14] sm:$0xf]
  %v21 = vld [vmem:[%s0 + $0x18] sm:$0xf]
  %v22 = vld [vmem:[%s0 + $0x1c] sm:$0xf]
  %v23 = vld [vmem:[%s0 + $0x20] sm:$0xf]
  %v24 = vld [vmem:[%s0 + $0x24] sm:$0xf]
  %v25 = vld [vmem:[%s0 + $0x28] sm:$0xf]
  %v26 = vld [vmem:[%s0 + $0x2c] sm:$0xf]
  %v27 = vld [vmem:[%s0 + $0x30] sm:$0xf]
  %v28 = vld [vmem:[%s0 + $0x34] sm:$0xf]
  %v29 = vld [vmem:[%s0 + $0x38] sm:$0xf]
  %v30 = vld [vmem:[%s0 + $0x3c] sm:$0xf]
  %v31 = vld [vmem:[%s1] sm:$0xf]
  %v32 = vld [vmem:[%s1 + $0x4] sm:$0xf]
  %v33 = vld [vmem:[%s1 + $0x8] sm:$0xf]
  %v34 = vld [vmem:[%s1 + $0xc] sm:$0xf]
  %v35 = vld [vmem:[%s1 + $0x10] sm:$0xf]
  %v36 = vld [vmem:[%s1 + $0x14] sm:$0xf]
  %v37 = vld [vmem:[%s1 + $0x18] sm:$0xf]
  %v38 = vld [vmem:[%s1 + $0x1c] sm:$0xf]
  %v39 = vld [vmem:[%s1 + $0x20] sm:$0xf]
  %v40 = vld [vmem:[%s1 + $0x24] sm:$0xf]
  %v41 = vld [vmem:[%s1 + $0x28] sm:$0xf]
  %v42 = vld [vmem:[%s1 + $0x2c] sm:$0xf]
  %v43 = vld [vmem:[%s1 + $0x30] sm:$0xf]
  %v44 = vld [vmem:[%s1 + $0x34] sm:$0xf]
  %v45 = vld [vmem:[%s1 + $0x38] sm:$0xf]
  %v46 = vld [vmem:[%s1 + $0x3c] sm:$0xf]
  %v47 = vld [vmem:[%s2] sm:$0x1]
  %v49 = vlaneseq
  %v50 = vshrl.u32 %v49, 7
  %v51 = vsub.s32 0, %v50
  %v52 = vrot.slane %v47, %v51
  %v70 = vunpack.c.l.b16 %v15
  %v71 = vunpack.c.l.b16 %v16
  %v72 = vunpack.c.l.b16 %v17
  %v73 = vunpack.c.l.b16 %v18
  %v74 = vunpack.c.l.b16 %v19
  %v75 = vunpack.c.l.b16 %v20
  %v76 = vunpack.c.l.b16 %v21
  %v77 = vunpack.c.l.b16 %v22
  %v78 = vunpack.c.l.b16 %v23
  %v79 = vunpack.c.l.b16 %v24
  %v80 = vunpack.c.l.b16 %v25
  %v81 = vunpack.c.l.b16 %v26
  %v82 = vunpack.c.l.b16 %v27
  %v83 = vunpack.c.l.b16 %v28
  %v84 = vunpack.c.l.b16 %v29
  %v85 = vunpack.c.l.b16 %v30
  %v86 = vpack.c.b16 %v71, %v70
  %v87 = vpack.c.b16 %v73, %v72
  %v88 = vpack.c.b16 %v75, %v74
  %v89 = vpack.c.b16 %v77, %v76
  %v90 = vpack.c.b16 %v79, %v78
  %v91 = vpack.c.b16 %v81, %v80
  %v92 = vpack.c.b16 %v83, %v82
  %v93 = vpack.c.b16 %v85, %v84
  %v118 = vunpack.c.l.b16 %v31
  %v119 = vunpack.c.l.b16 %v32
  %v120 = vunpack.c.l.b16 %v33
  %v121 = vunpack.c.l.b16 %v34
  %v122 = vunpack.c.l.b16 %v35
  %v123 = vunpack.c.l.b16 %v36
  %v124 = vunpack.c.l.b16 %v37
  %v125 = vunpack.c.l.b16 %v38
  %v126 = vunpack.c.l.b16 %v39
  %v127 = vunpack.c.l.b16 %v40
  %v128 = vunpack.c.l.b16 %v41
  %v129 = vunpack.c.l.b16 %v42
  %v130 = vunpack.c.l.b16 %v43
  %v131 = vunpack.c.l.b16 %v44
  %v132 = vunpack.c.l.b16 %v45
  %v133 = vunpack.c.l.b16 %v46
  %v134 = vpack.c.b16 %v119, %v118
  %v135 = vpack.c.b16 %v121, %v120
  %v136 = vpack.c.b16 %v123, %v122
  %v137 = vpack.c.b16 %v125, %v124
  %v138 = vpack.c.b16 %v127, %v126
  %v139 = vpack.c.b16 %v129, %v128
  %v140 = vpack.c.b16 %v131, %v130
  %v141 = vpack.c.b16 %v133, %v132
  %150 = vmatprep.subr.bf16.mxu0 0
  %151 = vmatpush1.bf16.msra.mxu0 %v141
  %152 = vmatprep.subr.bf16.mxu0 0
  %153 = vmatpush1.bf16.msra.mxu0 %v140
  %154 = vmatprep.subr.bf16.mxu0 0
  %155 = vmatpush1.bf16.msra.mxu0 %v139
  %156 = vmatprep.subr.bf16.mxu0 0
  %157 = vmatpush1.bf16.msra.mxu0 %v138
  %158 = vmatprep.subr.bf16.mxu0 0
  %159 = vmatpush1.bf16.msra.mxu0 %v137
  %160 = vmatprep.subr.bf16.mxu0 0
  %161 = vmatpush1.bf16.msra.mxu0 %v136
  %162 = vmatprep.subr.bf16.mxu0 0
  %163 = vmatpush1.bf16.msra.mxu0 %v135
  %164 = vmatprep.subr.bf16.mxu0 0
  %165 = vmatpush1.bf16.msra.mxu0 %v134
  %166 = vmatprep.subr.bf16.mxu0 0
  %167 = vmatpush2.bf16.msra.mxu0 0
  %168 = vmatprep.subr.bf16.mxu0 0
  %169 = vmatpush2.bf16.msra.mxu0 0
  %170 = vmatprep.subr.bf16.mxu0 0
  %171 = vmatpush2.bf16.msra.mxu0 0
  %172 = vmatprep.subr.bf16.mxu0 0
  %173 = vmatpush2.bf16.msra.mxu0 0
  %174 = vmatprep.subr.bf16.mxu0 0
  %175 = vmatpush2.bf16.msra.mxu0 0
  %176 = vmatprep.subr.bf16.mxu0 0
  %177 = vmatpush2.bf16.msra.mxu0 0
  %178 = vmatprep.subr.bf16.mxu0 0
  %179 = vmatpush2.bf16.msra.mxu0 0
  %180 = vmatprep.subr.bf16.mxu0 0
  %181 = vmatpush2.bf16.msra.mxu0 0
  %182 = vmatprep.mubr.bf16.mxu0 0
  %183 = vmatmul.mubr.bf16.gmra.mxu0 %v86
  %v184 = vpop.f32.mrf.mxu0
  %v185 = vadd.f32 %v52, %v184
  %v186 = vpop.f32.mrf.mxu0
  %v187 = vpop.f32.mrf.mxu0
  %v188 = vadd.f32 %v52, %v187
  %v189 = vpop.f32.mrf.mxu0
  %190 = vmatprep.mubr.bf16.mxu0 0
  %191 = vmatmul.mubr.bf16.gmra.mxu0 %v87
  %v192 = vpop.f32.mrf.mxu0
  %v193 = vadd.f32 %v52, %v192
  %v194 = vpop.f32.mrf.mxu0
  %v195 = vpop.f32.mrf.mxu0
  %v196 = vadd.f32 %v52, %v195
  %v197 = vpop.f32.mrf.mxu0
  %198 = vmatprep.mubr.bf16.mxu0 0
  %199 = vmatmul.mubr.bf16.gmra.mxu0 %v88
  %v200 = vpop.f32.mrf.mxu0
  %v201 = vadd.f32 %v52, %v200
  %v202 = vpop.f32.mrf.mxu0
  %v203 = vpop.f32.mrf.mxu0
  %v204 = vadd.f32 %v52, %v203
  %v205 = vpop.f32.mrf.mxu0
  %206 = vmatprep.mubr.bf16.mxu0 0
  %207 = vmatmul.mubr.bf16.gmra.mxu0 %v89
  %v208 = vpop.f32.mrf.mxu0
  %v209 = vadd.f32 %v52, %v208
  %v210 = vpop.f32.mrf.mxu0
  %v211 = vpop.f32.mrf.mxu0
  %v212 = vadd.f32 %v52, %v211
  %v213 = vpop.f32.mrf.mxu0
  %214 = vmatprep.mubr.bf16.mxu0 0
  %215 = vmatmul.mubr.bf16.gmra.mxu0 %v90
  %v216 = vpop.f32.mrf.mxu0
  %v217 = vadd.f32 %v52, %v216
  %v218 = vpop.f32.mrf.mxu0
  %v219 = vpop.f32.mrf.mxu0
  %v220 = vadd.f32 %v52, %v219
  %v221 = vpop.f32.mrf.mxu0
  %222 = vmatprep.mubr.bf16.mxu0 0
  %223 = vmatmul.mubr.bf16.gmra.mxu0 %v91
  %v224 = vpop.f32.mrf.mxu0
  %v225 = vadd.f32 %v52, %v224
  %v226 = vpop.f32.mrf.mxu0
  %v227 = vpop.f32.mrf.mxu0
  %v228 = vadd.f32 %v52, %v227
  %v229 = vpop.f32.mrf.mxu0
  %230 = vmatprep.mubr.bf16.mxu0 0
  %231 = vmatmul.mubr.bf16.gmra.mxu0 %v92
  %v232 = vpop.f32.mrf.mxu0
  %v233 = vadd.f32 %v52, %v232
  %v234 = vpop.f32.mrf.mxu0
  %v235 = vpop.f32.mrf.mxu0
  %v236 = vadd.f32 %v52, %v235
  %v237 = vpop.f32.mrf.mxu0
  %238 = vmatprep.mubr.bf16.mxu0 0
  %239 = vmatmul.mubr.bf16.gmra.mxu0 %v93
  %v240 = vpop.f32.mrf.mxu0
  %v241 = vadd.f32 %v52, %v240
  %v242 = vpop.f32.mrf.mxu0
  %v243 = vpop.f32.mrf.mxu0
  %v244 = vadd.f32 %v52, %v243
  %v245 = vpop.f32.mrf.mxu0
  %246 = vdwg.mxu0
  %247 = vst [vmem:[%s3] sm:$0xff] %v185
  %248 = vst [vmem:[%s3 + $0x8] sm:$0xff] %v188
  %249 = vst [vmem:[%s3 + $0x10] sm:$0xff] %v193
  %250 = vst [vmem:[%s3 + $0x18] sm:$0xff] %v196
  %251 = vst [vmem:[%s3 + $0x20] sm:$0xff] %v201
  %252 = vst [vmem:[%s3 + $0x28] sm:$0xff] %v204
  %253 = vst [vmem:[%s3 + $0x30] sm:$0xff] %v209
  %254 = vst [vmem:[%s3 + $0x38] sm:$0xff] %v212
  %255 = vst [vmem:[%s3 + $0x40] sm:$0xff] %v217
  %256 = vst [vmem:[%s3 + $0x48] sm:$0xff] %v220
  %257 = vst [vmem:[%s3 + $0x50] sm:$0xff] %v225
  %258 = vst [vmem:[%s3 + $0x58] sm:$0xff] %v228
  %259 = vst [vmem:[%s3 + $0x60] sm:$0xff] %v233
  %260 = vst [vmem:[%s3 + $0x68] sm:$0xff] %v236
  %261 = vst [vmem:[%s3 + $0x70] sm:$0xff] %v241
  %262 = vst [vmem:[%s3 + $0x78] sm:$0xff] %v244
  // Predicated region
  $region14: #{seq2seq_forward.7} parent=0 // pred_check
    _
  $region15: #{seq2seq_forward.7} parent=0 // pred_check_branch
    %264 = sbr.rel (0) target = $region17
  $region16: #{seq2seq_forward.7} parent=0 // pred_region
    _
  $region17: #{seq2seq_forward.7} parent=0 // pred_fallthru
    _
  // Predicated region
  $region18: #{seq2seq_forward.7} parent=0 // pred_check
    _
  $region19: #{seq2seq_forward.7} parent=0 // pred_check_branch
    %266 = sbr.rel (0) target = $region21
  $region20: #{seq2seq_forward.7} parent=0 // pred_region
    _
  $region21: #{seq2seq_forward.7} parent=0 // pred_fallthru
    _

// kernel: seq2seq_forward.5
$region0: #{seq2seq_forward.5}
  #allocation0 [shape = 'u32[]', space=smem, size = 0x4, offset = 0x4, fixed_abs, tag = 'smem constant byte address 0x4 - core index']
  #allocation1 [shape = 'u32[144,128]{1,0:T(1,128)}', space=vmem, size = 0x12000, scoped, tag = 'internal scratch']
  %s0 = inlined_call_operand.vmem [shape: bf16[128,128], index: 0, kind: input, shape index: {}]
  %s1 = inlined_call_operand.vmem [shape: bf16[128,512], index: 1, kind: input, shape index: {}]
  %s2 = inlined_call_operand.vmem [shape: f32[1,512], index: 2, kind: input, shape index: {}]
  %s3 = inlined_call_operand.vmem [shape: bf16[128,512], index: 3, kind: output, shape index: {}]
  %s4 = sld [smem:[#allocation0]]
  $region22: #{seq2seq_forward.5} parent=0
    _
  %s6 = ssub.s32 1, %s4
  %s7 = scalar_select 0, %s6, %s4
  // Predicated region
  $region2: #{seq2seq_forward.5} parent=0 // pred_check
    _
  $region3: #{seq2seq_forward.5} parent=0 // pred_check_branch
    %9 = sbr.rel (0) target = $region5
  $region4: #{seq2seq_forward.5} parent=0 // pred_region
    _
  $region5: #{seq2seq_forward.5} parent=0 // pred_fallthru
    _
  // Predicated region
  $region6: #{seq2seq_forward.5} parent=0 // pred_check
    _
  $region7: #{seq2seq_forward.5} parent=0 // pred_check_branch
    %11 = sbr.rel (0) target = $region9
  $region8: #{seq2seq_forward.5} parent=0 // pred_region
    _
  $region9: #{seq2seq_forward.5} parent=0 // pred_fallthru
    _
  // Predicated region
  $region10: #{seq2seq_forward.5} parent=0 // pred_check
    _
  $region11: #{seq2seq_forward.5} parent=0 // pred_check_branch
    %13 = sbr.rel (0) target = $region13
  $region12: #{seq2seq_forward.5} parent=0 // pred_region
    _
  $region13: #{seq2seq_forward.5} parent=0 // pred_fallthru
    _
  %v15 = vld [vmem:[%s0] sm:$0xf]
  %v16 = vld [vmem:[%s0 + $0x4] sm:$0xf]
  %v17 = vld [vmem:[%s0 + $0x8] sm:$0xf]
  %v18 = vld [vmem:[%s0 + $0xc] sm:$0xf]
  %v19 = vld [vmem:[%s0 + $0x10] sm:$0xf]
  %v20 = vld [vmem:[%s0 + $0x14] sm:$0xf]
  %v21 = vld [vmem:[%s0 + $0x18] sm:$0xf]
  %v22 = vld [vmem:[%s0 + $0x1c] sm:$0xf]
  %v23 = vld [vmem:[%s0 + $0x20] sm:$0xf]
  %v24 = vld [vmem:[%s0 + $0x24] sm:$0xf]
  %v25 = vld [vmem:[%s0 + $0x28] sm:$0xf]
  %v26 = vld [vmem:[%s0 + $0x2c] sm:$0xf]
  %v27 = vld [vmem:[%s0 + $0x30] sm:$0xf]
  %v28 = vld [vmem:[%s0 + $0x34] sm:$0xf]
  %v29 = vld [vmem:[%s0 + $0x38] sm:$0xf]
  %v30 = vld [vmem:[%s0 + $0x3c] sm:$0xf]
  %v31 = vld [vmem:[%s1] sm:$0xff]
  %v32 = vld [vmem:[%s1 + $0x8] sm:$0xff]
  %v33 = vld [vmem:[%s1 + $0x10] sm:$0xff]
  %v34 = vld [vmem:[%s1 + $0x18] sm:$0xff]
  %v35 = vld [vmem:[%s1 + $0x20] sm:$0xff]
  %v36 = vld [vmem:[%s1 + $0x28] sm:$0xff]
  %v37 = vld [vmem:[%s1 + $0x30] sm:$0xff]
  %v38 = vld [vmem:[%s1 + $0x38] sm:$0xff]
  %v39 = vld [vmem:[%s1 + $0x40] sm:$0xff]
  %v40 = vld [vmem:[%s1 + $0x48] sm:$0xff]
  %v41 = vld [vmem:[%s1 + $0x50] sm:$0xff]
  %v42 = vld [vmem:[%s1 + $0x58] sm:$0xff]
  %v43 = vld [vmem:[%s1 + $0x60] sm:$0xff]
  %v44 = vld [vmem:[%s1 + $0x68] sm:$0xff]
  %v45 = vld [vmem:[%s1 + $0x70] sm:$0xff]
  %v46 = vld [vmem:[%s1 + $0x78] sm:$0xff]
  %v47 = vld [vmem:[%s1 + $0x80] sm:$0xff]
  %v48 = vld [vmem:[%s1 + $0x88] sm:$0xff]
  %v49 = vld [vmem:[%s1 + $0x90] sm:$0xff]
  %v50 = vld [vmem:[%s1 + $0x98] sm:$0xff]
  %v51 = vld [vmem:[%s1 + $0xa0] sm:$0xff]
  %v52 = vld [vmem:[%s1 + $0xa8] sm:$0xff]
  %v53 = vld [vmem:[%s1 + $0xb0] sm:$0xff]
  %v54 = vld [vmem:[%s1 + $0xb8] sm:$0xff]
  %v55 = vld [vmem:[%s1 + $0xc0] sm:$0xff]
  %v56 = vld [vmem:[%s1 + $0xc8] sm:$0xff]
  %v57 = vld [vmem:[%s1 + $0xd0] sm:$0xff]
  %v58 = vld [vmem:[%s1 + $0xd8] sm:$0xff]
  %v59 = vld [vmem:[%s1 + $0xe0] sm:$0xff]
  %v60 = vld [vmem:[%s1 + $0xe8] sm:$0xff]
  %v61 = vld [vmem:[%s1 + $0xf0] sm:$0xff]
  %v62 = vld [vmem:[%s1 + $0xf8] sm:$0xff]
  %v63 = vld [vmem:[%s2] sm:$0xf]
  %v65 = vlaneseq
  %v66 = vshrl.u32 %v65, 7
  %v67 = vsub.s32 0, %v66
  %v68 = vrot.slane %v63, %v67
  %v69 = vlaneseq
  %v70 = vshrl.u32 %v69, 7
  %v71 = vsub.s32 1, %v70
  %v72 = vrot.slane %v63, %v71
  %v73 = vlaneseq
  %v74 = vshrl.u32 %v73, 7
  %v75 = vsub.s32 2, %v74
  %v76 = vrot.slane %v63, %v75
  %v77 = vlaneseq
  %v78 = vshrl.u32 %v77, 7
  %v79 = vsub.s32 3, %v78
  %v80 = vrot.slane %v63, %v79
  %v101 = vunpack.c.l.b16 %v15
  %v102 = vunpack.c.l.b16 %v16
  %v103 = vunpack.c.l.b16 %v17
  %v104 = vunpack.c.l.b16 %v18
  %v105 = vunpack.c.l.b16 %v19
  %v106 = vunpack.c.l.b16 %v20
  %v107 = vunpack.c.l.b16 %v21
  %v108 = vunpack.c.l.b16 %v22
  %v109 = vunpack.c.l.b16 %v23
  %v110 = vunpack.c.l.b16 %v24
  %v111 = vunpack.c.l.b16 %v25
  %v112 = vunpack.c.l.b16 %v26
  %v113 = vunpack.c.l.b16 %v27
  %v114 = vunpack.c.l.b16 %v28
  %v115 = vunpack.c.l.b16 %v29
  %v116 = vunpack.c.l.b16 %v30
  %v117 = vpack.c.b16 %v102, %v101
  %v118 = vpack.c.b16 %v104, %v103
  %v119 = vpack.c.b16 %v106, %v105
  %v120 = vpack.c.b16 %v108, %v107
  %v121 = vpack.c.b16 %v110, %v109
  %v122 = vpack.c.b16 %v112, %v111
  %v123 = vpack.c.b16 %v114, %v113
  %v124 = vpack.c.b16 %v116, %v115
  %v165 = vunpack.c.l.b16 %v31
  %v166 = vunpack.c.h.b16 %v31
  %v167 = vunpack.c.l.b16 %v32
  %v168 = vunpack.c.h.b16 %v32
  %v169 = vunpack.c.l.b16 %v33
  %v170 = vunpack.c.h.b16 %v33
  %v171 = vunpack.c.l.b16 %v34
  %v172 = vunpack.c.h.b16 %v34
  %v173 = vunpack.c.l.b16 %v35
  %v174 = vunpack.c.h.b16 %v35
  %v175 = vunpack.c.l.b16 %v36
  %v176 = vunpack.c.h.b16 %v36
  %v177 = vunpack.c.l.b16 %v37
  %v178 = vunpack.c.h.b16 %v37
  %v179 = vunpack.c.l.b16 %v38
  %v180 = vunpack.c.h.b16 %v38
  %v181 = vunpack.c.l.b16 %v39
  %v182 = vunpack.c.h.b16 %v39
  %v183 = vunpack.c.l.b16 %v40
  %v184 = vunpack.c.h.b16 %v40
  %v185 = vunpack.c.l.b16 %v41
  %v186 = vunpack.c.h.b16 %v41
  %v187 = vunpack.c.l.b16 %v42
  %v188 = vunpack.c.h.b16 %v42
  %v189 = vunpack.c.l.b16 %v43
  %v190 = vunpack.c.h.b16 %v43
  %v191 = vunpack.c.l.b16 %v44
  %v192 = vunpack.c.h.b16 %v44
  %v193 = vunpack.c.l.b16 %v45
  %v194 = vunpack.c.h.b16 %v45
  %v195 = vunpack.c.l.b16 %v46
  %v196 = vunpack.c.h.b16 %v46
  %v197 = vunpack.c.l.b16 %v47
  %v198 = vunpack.c.h.b16 %v47
  %v199 = vunpack.c.l.b16 %v48
  %v200 = vunpack.c.h.b16 %v48
  %v201 = vunpack.c.l.b16 %v49
  %v202 = vunpack.c.h.b16 %v49
  %v203 = vunpack.c.l.b16 %v50
  %v204 = vunpack.c.h.b16 %v50
  %v205 = vunpack.c.l.b16 %v51
  %v206 = vunpack.c.h.b16 %v51
  %v207 = vunpack.c.l.b16 %v52
  %v208 = vunpack.c.h.b16 %v52
  %v209 = vunpack.c.l.b16 %v53
  %v210 = vunpack.c.h.b16 %v53
  %v211 = vunpack.c.l.b16 %v54
  %v212 = vunpack.c.h.b16 %v54
  %v213 = vunpack.c.l.b16 %v55
  %v214 = vunpack.c.h.b16 %v55
  %v215 = vunpack.c.l.b16 %v56
  %v216 = vunpack.c.h.b16 %v56
  %v217 = vunpack.c.l.b16 %v57
  %v218 = vunpack.c.h.b16 %v57
  %v219 = vunpack.c.l.b16 %v58
  %v220 = vunpack.c.h.b16 %v58
  %v221 = vunpack.c.l.b16 %v59
  %v222 = vunpack.c.h.b16 %v59
  %v223 = vunpack.c.l.b16 %v60
  %v224 = vunpack.c.h.b16 %v60
  %v225 = vunpack.c.l.b16 %v61
  %v226 = vunpack.c.h.b16 %v61
  %v227 = vunpack.c.l.b16 %v62
  %v228 = vunpack.c.h.b16 %v62
  %v229 = vpack.c.b16 %v169, %v165
  %v230 = vpack.c.b16 %v170, %v166
  %v231 = vpack.c.b16 %v171, %v167
  %v232 = vpack.c.b16 %v172, %v168
  %v233 = vpack.c.b16 %v177, %v173
  %v234 = vpack.c.b16 %v178, %v174
  %v235 = vpack.c.b16 %v179, %v175
  %v236 = vpack.c.b16 %v180, %v176
  %v237 = vpack.c.b16 %v185, %v181
  %v238 = vpack.c.b16 %v186, %v182
  %v239 = vpack.c.b16 %v187, %v183
  %v240 = vpack.c.b16 %v188, %v184
  %v241 = vpack.c.b16 %v193, %v189
  %v242 = vpack.c.b16 %v194, %v190
  %v243 = vpack.c.b16 %v195, %v191
  %v244 = vpack.c.b16 %v196, %v192
  %v245 = vpack.c.b16 %v201, %v197
  %v246 = vpack.c.b16 %v202, %v198
  %v247 = vpack.c.b16 %v203, %v199
  %v248 = vpack.c.b16 %v204, %v200
  %v249 = vpack.c.b16 %v209, %v205
  %v250 = vpack.c.b16 %v210, %v206
  %v251 = vpack.c.b16 %v211, %v207
  %v252 = vpack.c.b16 %v212, %v208
  %v253 = vpack.c.b16 %v217, %v213
  %v254 = vpack.c.b16 %v218, %v214
  %v255 = vpack.c.b16 %v219, %v215
  %v256 = vpack.c.b16 %v220, %v216
  %v257 = vpack.c.b16 %v225, %v221
  %v258 = vpack.c.b16 %v226, %v222
  %v259 = vpack.c.b16 %v227, %v223
  %v260 = vpack.c.b16 %v228, %v224
  %293 = vmatprep.subr.bf16.mxu0 %v258
  %294 = vmatpush1.bf16.msra.mxu0 %v257
  %295 = vmatprep.subr.bf16.mxu0 %v254
  %296 = vmatpush1.bf16.msra.mxu0 %v253
  %297 = vmatprep.subr.bf16.mxu0 %v250
  %298 = vmatpush1.bf16.msra.mxu0 %v249
  %299 = vmatprep.subr.bf16.mxu0 %v246
  %300 = vmatpush1.bf16.msra.mxu0 %v245
  %301 = vmatprep.subr.bf16.mxu0 %v242
  %302 = vmatpush1.bf16.msra.mxu0 %v241
  %303 = vmatprep.subr.bf16.mxu0 %v238
  %304 = vmatpush1.bf16.msra.mxu0 %v237
  %305 = vmatprep.subr.bf16.mxu0 %v234
  %306 = vmatpush1.bf16.msra.mxu0 %v233
  %307 = vmatprep.subr.bf16.mxu0 %v230
  %308 = vmatpush1.bf16.msra.mxu0 %v229
  %309 = vmatprep.subr.bf16.mxu0 0
  %310 = vmatpush2.bf16.msra.mxu0 0
  %311 = vmatprep.subr.bf16.mxu0 0
  %312 = vmatpush2.bf16.msra.mxu0 0
  %313 = vmatprep.subr.bf16.mxu0 0
  %314 = vmatpush2.bf16.msra.mxu0 0
  %315 = vmatprep.subr.bf16.mxu0 0
  %316 = vmatpush2.bf16.msra.mxu0 0
  %317 = vmatprep.subr.bf16.mxu0 0
  %318 = vmatpush2.bf16.msra.mxu0 0
  %319 = vmatprep.subr.bf16.mxu0 0
  %320 = vmatpush2.bf16.msra.mxu0 0
  %321 = vmatprep.subr.bf16.mxu0 0
  %322 = vmatpush2.bf16.msra.mxu0 0
  %323 = vmatprep.subr.bf16.mxu0 0
  %324 = vmatpush2.bf16.msra.mxu0 0
  %325 = vmatprep.mubr.bf16.mxu0 0
  %326 = vmatmul.mubr.bf16.gmra.mxu0 %v117
  %v327 = vpop.f32.mrf.mxu0
  %v328 = vadd.f32 %v68, %v327
  %v329 = vpop.f32.mrf.mxu0
  %v330 = vadd.f32 %v72, %v329
  %v331 = vpop.f32.mrf.mxu0
  %v332 = vadd.f32 %v68, %v331
  %v333 = vpop.f32.mrf.mxu0
  %v334 = vadd.f32 %v72, %v333
  %335 = vmatprep.mubr.bf16.mxu0 0
  %336 = vmatmul.mubr.bf16.gmra.mxu0 %v118
  %v337 = vpop.f32.mrf.mxu0
  %v338 = vadd.f32 %v68, %v337
  %v339 = vpop.f32.mrf.mxu0
  %v340 = vadd.f32 %v72, %v339
  %v341 = vpop.f32.mrf.mxu0
  %v342 = vadd.f32 %v68, %v341
  %v343 = vpop.f32.mrf.mxu0
  %v344 = vadd.f32 %v72, %v343
  %345 = vmatprep.mubr.bf16.mxu0 0
  %346 = vmatmul.mubr.bf16.gmra.mxu0 %v119
  %v347 = vpop.f32.mrf.mxu0
  %v348 = vadd.f32 %v68, %v347
  %v349 = vpop.f32.mrf.mxu0
  %v350 = vadd.f32 %v72, %v349
  %v351 = vpop.f32.mrf.mxu0
  %v352 = vadd.f32 %v68, %v351
  %v353 = vpop.f32.mrf.mxu0
  %v354 = vadd.f32 %v72, %v353
  %355 = vmatprep.mubr.bf16.mxu0 0
  %356 = vmatmul.mubr.bf16.gmra.mxu0 %v120
  %v357 = vpop.f32.mrf.mxu0
  %v358 = vadd.f32 %v68, %v357
  %v359 = vpop.f32.mrf.mxu0
  %v360 = vadd.f32 %v72, %v359
  %v361 = vpop.f32.mrf.mxu0
  %v362 = vadd.f32 %v68, %v361
  %v363 = vpop.f32.mrf.mxu0
  %v364 = vadd.f32 %v72, %v363
  %365 = vmatprep.mubr.bf16.mxu0 0
  %366 = vmatmul.mubr.bf16.gmra.mxu0 %v121
  %v367 = vpop.f32.mrf.mxu0
  %v368 = vadd.f32 %v68, %v367
  %v369 = vpop.f32.mrf.mxu0
  %v370 = vadd.f32 %v72, %v369
  %v371 = vpop.f32.mrf.mxu0
  %v372 = vadd.f32 %v68, %v371
  %v373 = vpop.f32.mrf.mxu0
  %v374 = vadd.f32 %v72, %v373
  %375 = vmatprep.mubr.bf16.mxu0 0
  %376 = vmatmul.mubr.bf16.gmra.mxu0 %v122
  %v377 = vpop.f32.mrf.mxu0
  %v378 = vadd.f32 %v68, %v377
  %v379 = vpop.f32.mrf.mxu0
  %v380 = vadd.f32 %v72, %v379
  %v381 = vpop.f32.mrf.mxu0
  %v382 = vadd.f32 %v68, %v381
  %v383 = vpop.f32.mrf.mxu0
  %v384 = vadd.f32 %v72, %v383
  %385 = vmatprep.mubr.bf16.mxu0 0
  %386 = vmatmul.mubr.bf16.gmra.mxu0 %v123
  %v387 = vpop.f32.mrf.mxu0
  %v388 = vadd.f32 %v68, %v387
  %v389 = vpop.f32.mrf.mxu0
  %v390 = vadd.f32 %v72, %v389
  %v391 = vpop.f32.mrf.mxu0
  %v392 = vadd.f32 %v68, %v391
  %v393 = vpop.f32.mrf.mxu0
  %v394 = vadd.f32 %v72, %v393
  %395 = vmatprep.mubr.bf16.mxu0 0
  %396 = vmatmul.mubr.bf16.gmra.mxu0 %v124
  %v397 = vpop.f32.mrf.mxu0
  %v398 = vadd.f32 %v68, %v397
  %v399 = vpop.f32.mrf.mxu0
  %v400 = vadd.f32 %v72, %v399
  %v401 = vpop.f32.mrf.mxu0
  %v402 = vadd.f32 %v68, %v401
  %v403 = vpop.f32.mrf.mxu0
  %v404 = vadd.f32 %v72, %v403
  %405 = vdwg.mxu0
  %406 = vmatprep.subr.bf16.mxu0 %v260
  %407 = vmatpush1.bf16.msra.mxu0 %v259
  %408 = vmatprep.subr.bf16.mxu0 %v256
  %409 = vmatpush1.bf16.msra.mxu0 %v255
  %410 = vmatprep.subr.bf16.mxu0 %v252
  %411 = vmatpush1.bf16.msra.mxu0 %v251
  %412 = vmatprep.subr.bf16.mxu0 %v248
  %413 = vmatpush1.bf16.msra.mxu0 %v247
  %414 = vmatprep.subr.bf16.mxu0 %v244
  %415 = vmatpush1.bf16.msra.mxu0 %v243
  %416 = vmatprep.subr.bf16.mxu0 %v240
  %417 = vmatpush1.bf16.msra.mxu0 %v239
  %418 = vmatprep.subr.bf16.mxu0 %v236
  %419 = vmatpush1.bf16.msra.mxu0 %v235
  %420 = vmatprep.subr.bf16.mxu0 %v232
  %421 = vmatpush1.bf16.msra.mxu0 %v231
  %422 = vmatprep.subr.bf16.mxu0 0
  %423 = vmatpush2.bf16.msra.mxu0 0
  %424 = vmatprep.subr.bf16.mxu0 0
  %425 = vmatpush2.bf16.msra.mxu0 0
  %426 = vmatprep.subr.bf16.mxu0 0
  %427 = vmatpush2.bf16.msra.mxu0 0
  %428 = vmatprep.subr.bf16.mxu0 0
  %429 = vmatpush2.bf16.msra.mxu0 0
  %430 = vmatprep.subr.bf16.mxu0 0
  %431 = vmatpush2.bf16.msra.mxu0 0
  %432 = vmatprep.subr.bf16.mxu0 0
  %433 = vmatpush2.bf16.msra.mxu0 0
  %434 = vmatprep.subr.bf16.mxu0 0
  %435 = vmatpush2.bf16.msra.mxu0 0
  %436 = vmatprep.subr.bf16.mxu0 0
  %437 = vmatpush2.bf16.msra.mxu0 0
  %438 = vmatprep.mubr.bf16.mxu0 0
  %439 = vmatmul.mubr.bf16.gmra.mxu0 %v117
  %v440 = vpop.f32.mrf.mxu0
  %v441 = vadd.f32 %v76, %v440
  %v442 = vpop.f32.mrf.mxu0
  %v443 = vadd.f32 %v80, %v442
  %v444 = vpop.f32.mrf.mxu0
  %v445 = vadd.f32 %v76, %v444
  %v446 = vpop.f32.mrf.mxu0
  %v447 = vadd.f32 %v80, %v446
  %448 = vmatprep.mubr.bf16.mxu0 0
  %449 = vmatmul.mubr.bf16.gmra.mxu0 %v118
  %v450 = vpop.f32.mrf.mxu0
  %v451 = vadd.f32 %v76, %v450
  %v452 = vpop.f32.mrf.mxu0
  %v453 = vadd.f32 %v80, %v452
  %v454 = vpop.f32.mrf.mxu0
  %v455 = vadd.f32 %v76, %v454
  %v456 = vpop.f32.mrf.mxu0
  %v457 = vadd.f32 %v80, %v456
  %458 = vmatprep.mubr.bf16.mxu0 0
  %459 = vmatmul.mubr.bf16.gmra.mxu0 %v119
  %v460 = vpop.f32.mrf.mxu0
  %v461 = vadd.f32 %v76, %v460
  %v462 = vpop.f32.mrf.mxu0
  %v463 = vadd.f32 %v80, %v462
  %v464 = vpop.f32.mrf.mxu0
  %v465 = vadd.f32 %v76, %v464
  %v466 = vpop.f32.mrf.mxu0
  %v467 = vadd.f32 %v80, %v466
  %468 = vmatprep.mubr.bf16.mxu0 0
  %469 = vmatmul.mubr.bf16.gmra.mxu0 %v120
  %v470 = vpop.f32.mrf.mxu0
  %v471 = vadd.f32 %v76, %v470
  %v472 = vpop.f32.mrf.mxu0
  %v473 = vadd.f32 %v80, %v472
  %v474 = vpop.f32.mrf.mxu0
  %v475 = vadd.f32 %v76, %v474
  %v476 = vpop.f32.mrf.mxu0
  %v477 = vadd.f32 %v80, %v476
  %478 = vmatprep.mubr.bf16.mxu0 0
  %479 = vmatmul.mubr.bf16.gmra.mxu0 %v121
  %v480 = vpop.f32.mrf.mxu0
  %v481 = vadd.f32 %v76, %v480
  %v482 = vpop.f32.mrf.mxu0
  %v483 = vadd.f32 %v80, %v482
  %v484 = vpop.f32.mrf.mxu0
  %v485 = vadd.f32 %v76, %v484
  %v486 = vpop.f32.mrf.mxu0
  %v487 = vadd.f32 %v80, %v486
  %488 = vmatprep.mubr.bf16.mxu0 0
  %489 = vmatmul.mubr.bf16.gmra.mxu0 %v122
  %v490 = vpop.f32.mrf.mxu0
  %v491 = vadd.f32 %v76, %v490
  %v492 = vpop.f32.mrf.mxu0
  %v493 = vadd.f32 %v80, %v492
  %v494 = vpop.f32.mrf.mxu0
  %v495 = vadd.f32 %v76, %v494
  %v496 = vpop.f32.mrf.mxu0
  %v497 = vadd.f32 %v80, %v496
  %498 = vmatprep.mubr.bf16.mxu0 0
  %499 = vmatmul.mubr.bf16.gmra.mxu0 %v123
  %v500 = vpop.f32.mrf.mxu0
  %v501 = vadd.f32 %v76, %v500
  %v502 = vpop.f32.mrf.mxu0
  %v503 = vadd.f32 %v80, %v502
  %v504 = vpop.f32.mrf.mxu0
  %v505 = vadd.f32 %v76, %v504
  %v506 = vpop.f32.mrf.mxu0
  %v507 = vadd.f32 %v80, %v506
  %508 = vmatprep.mubr.bf16.mxu0 0
  %509 = vmatmul.mubr.bf16.gmra.mxu0 %v124
  %v510 = vpop.f32.mrf.mxu0
  %v511 = vadd.f32 %v76, %v510
  %v512 = vpop.f32.mrf.mxu0
  %v513 = vadd.f32 %v80, %v512
  %v514 = vpop.f32.mrf.mxu0
  %v515 = vadd.f32 %v76, %v514
  %v516 = vpop.f32.mrf.mxu0
  %v517 = vadd.f32 %v80, %v516
  %518 = vdwg.mxu0
  %v519 = vpack.c.bf16 %v332, %v328
  %v520 = vpack.c.bf16 %v334, %v330
  %v521 = vpack.c.bf16 %v445, %v441
  %v522 = vpack.c.bf16 %v447, %v443
  %v523 = vpack.c.bf16 %v342, %v338
  %v524 = vpack.c.bf16 %v344, %v340
  %v525 = vpack.c.bf16 %v455, %v451
  %v526 = vpack.c.bf16 %v457, %v453
  %v527 = vpack.c.bf16 %v352, %v348
  %v528 = vpack.c.bf16 %v354, %v350
  %v529 = vpack.c.bf16 %v465, %v461
  %v530 = vpack.c.bf16 %v467, %v463
  %v531 = vpack.c.bf16 %v362, %v358
  %v532 = vpack.c.bf16 %v364, %v360
  %v533 = vpack.c.bf16 %v475, %v471
  %v534 = vpack.c.bf16 %v477, %v473
  %v535 = vpack.c.bf16 %v372, %v368
  %v536 = vpack.c.bf16 %v374, %v370
  %v537 = vpack.c.bf16 %v485, %v481
  %v538 = vpack.c.bf16 %v487, %v483
  %v539 = vpack.c.bf16 %v382, %v378
  %v540 = vpack.c.bf16 %v384, %v380
  %v541 = vpack.c.bf16 %v495, %v491
  %v542 = vpack.c.bf16 %v497, %v493
  %v543 = vpack.c.bf16 %v392, %v388
  %v544 = vpack.c.bf16 %v394, %v390
  %v545 = vpack.c.bf16 %v505, %v501
  %v546 = vpack.c.bf16 %v507, %v503
  %v547 = vpack.c.bf16 %v402, %v398
  %v548 = vpack.c.bf16 %v404, %v400
  %v549 = vpack.c.bf16 %v515, %v511
  %v550 = vpack.c.bf16 %v517, %v513
  %v583 = vunpack.c.l.b16 %v519
  %v584 = vunpack.c.l.b16 %v520
  %v585 = vunpack.c.l.b16 %v521
  %v586 = vunpack.c.l.b16 %v522
  %v587 = vunpack.c.h.b16 %v519
  %v588 = vunpack.c.h.b16 %v520
  %v589 = vunpack.c.h.b16 %v521
  %v590 = vunpack.c.h.b16 %v522
  %v591 = vunpack.c.l.b16 %v523
  %v592 = vunpack.c.l.b16 %v524
  %v593 = vunpack.c.l.b16 %v525
  %v594 = vunpack.c.l.b16 %v526
  %v595 = vunpack.c.h.b16 %v523
  %v596 = vunpack.c.h.b16 %v524
  %v597 = vunpack.c.h.b16 %v525
  %v598 = vunpack.c.h.b16 %v526
  %v599 = vunpack.c.l.b16 %v527
  %v600 = vunpack.c.l.b16 %v528
  %v601 = vunpack.c.l.b16 %v529
  %v602 = vunpack.c.l.b16 %v530
  %v603 = vunpack.c.h.b16 %v527
  %v604 = vunpack.c.h.b16 %v528
  %v605 = vunpack.c.h.b16 %v529
  %v606 = vunpack.c.h.b16 %v530
  %v607 = vunpack.c.l.b16 %v531
  %v608 = vunpack.c.l.b16 %v532
  %v609 = vunpack.c.l.b16 %v533
  %v610 = vunpack.c.l.b16 %v534
  %v611 = vunpack.c.h.b16 %v531
  %v612 = vunpack.c.h.b16 %v532
  %v613 = vunpack.c.h.b16 %v533
  %v614 = vunpack.c.h.b16 %v534
  %v615 = vunpack.c.l.b16 %v535
  %v616 = vunpack.c.l.b16 %v536
  %v617 = vunpack.c.l.b16 %v537
  %v618 = vunpack.c.l.b16 %v538
  %v619 = vunpack.c.h.b16 %v535
  %v620 = vunpack.c.h.b16 %v536
  %v621 = vunpack.c.h.b16 %v537
  %v622 = vunpack.c.h.b16 %v538
  %v623 = vunpack.c.l.b16 %v539
  %v624 = vunpack.c.l.b16 %v540
  %v625 = vunpack.c.l.b16 %v541
  %v626 = vunpack.c.l.b16 %v542
  %v627 = vunpack.c.h.b16 %v539
  %v628 = vunpack.c.h.b16 %v540
  %v629 = vunpack.c.h.b16 %v541
  %v630 = vunpack.c.h.b16 %v542
  %v631 = vunpack.c.l.b16 %v543
  %v632 = vunpack.c.l.b16 %v544
  %v633 = vunpack.c.l.b16 %v545
  %v634 = vunpack.c.l.b16 %v546
  %v635 = vunpack.c.h.b16 %v543
  %v636 = vunpack.c.h.b16 %v544
  %v637 = vunpack.c.h.b16 %v545
  %v638 = vunpack.c.h.b16 %v546
  %v639 = vunpack.c.l.b16 %v547
  %v640 = vunpack.c.l.b16 %v548
  %v641 = vunpack.c.l.b16 %v549
  %v642 = vunpack.c.l.b16 %v550
  %v643 = vunpack.c.h.b16 %v547
  %v644 = vunpack.c.h.b16 %v548
  %v645 = vunpack.c.h.b16 %v549
  %v646 = vunpack.c.h.b16 %v550
  %v647 = vpack.c.b16 %v584, %v583
  %v648 = vpack.c.b16 %v586, %v585
  %v649 = vpack.c.b16 %v588, %v587
  %v650 = vpack.c.b16 %v590, %v589
  %v651 = vpack.c.b16 %v592, %v591
  %v652 = vpack.c.b16 %v594, %v593
  %v653 = vpack.c.b16 %v596, %v595
  %v654 = vpack.c.b16 %v598, %v597
  %v655 = vpack.c.b16 %v600, %v599
  %v656 = vpack.c.b16 %v602, %v601
  %v657 = vpack.c.b16 %v604, %v603
  %v658 = vpack.c.b16 %v606, %v605
  %v659 = vpack.c.b16 %v608, %v607
  %v660 = vpack.c.b16 %v610, %v609
  %v661 = vpack.c.b16 %v612, %v611
  %v662 = vpack.c.b16 %v614, %v613
  %v663 = vpack.c.b16 %v616, %v615
  %v664 = vpack.c.b16 %v618, %v617
  %v665 = vpack.c.b16 %v620, %v619
  %v666 = vpack.c.b16 %v622, %v621
  %v667 = vpack.c.b16 %v624, %v623
  %v668 = vpack.c.b16 %v626, %v625
  %v669 = vpack.c.b16 %v628, %v627
  %v670 = vpack.c.b16 %v630, %v629
  %v671 = vpack.c.b16 %v632, %v631
  %v672 = vpack.c.b16 %v634, %v633
  %v673 = vpack.c.b16 %v636, %v635
  %v674 = vpack.c.b16 %v638, %v637
  %v675 = vpack.c.b16 %v640, %v639
  %v676 = vpack.c.b16 %v642, %v641
  %v677 = vpack.c.b16 %v644, %v643
  %v678 = vpack.c.b16 %v646, %v645
  %711 = vst [vmem:[%s3] sm:$0xff] %v647
  %712 = vst [vmem:[%s3 + $0x8] sm:$0xff] %v648
  %713 = vst [vmem:[%s3 + $0x10] sm:$0xff] %v649
  %714 = vst [vmem:[%s3 + $0x18] sm:$0xff] %v650
  %715 = vst [vmem:[%s3 + $0x20] sm:$0xff] %v651
  %716 = vst [vmem:[%s3 + $0x28] sm:$0xff] %v652
  %717 = vst [vmem:[%s3 + $0x30] sm:$0xff] %v653
  %718 = vst [vmem:[%s3 + $0x38] sm:$0xff] %v654
  %719 = vst [vmem:[%s3 + $0x40] sm:$0xff] %v655
  %720 = vst [vmem:[%s3 + $0x48] sm:$0xff] %v656
  %721 = vst [vmem:[%s3 + $0x50] sm:$0xff] %v657
  %722 = vst [vmem:[%s3 + $0x58] sm:$0xff] %v658
  %723 = vst [vmem:[%s3 + $0x60] sm:$0xff] %v659
  %724 = vst [vmem:[%s3 + $0x68] sm:$0xff] %v660
  %725 = vst [vmem:[%s3 + $0x70] sm:$0xff] %v661
  %726 = vst [vmem:[%s3 + $0x78] sm:$0xff] %v662
  %727 = vst [vmem:[%s3 + $0x80] sm:$0xff] %v663
  %728 = vst [vmem:[%s3 + $0x88] sm:$0xff] %v664
  %729 = vst [vmem:[%s3 + $0x90] sm:$0xff] %v665
  %730 = vst [vmem:[%s3 + $0x98] sm:$0xff] %v666
  %731 = vst [vmem:[%s3 + $0xa0] sm:$0xff] %v667
  %732 = vst [vmem:[%s3 + $0xa8] sm:$0xff] %v668
  %733 = vst [vmem:[%s3 + $0xb0] sm:$0xff] %v669
  %734 = vst [vmem:[%s3 + $0xb8] sm:$0xff] %v670
  %735 = vst [vmem:[%s3 + $0xc0] sm:$0xff] %v671
  %736 = vst [vmem:[%s3 + $0xc8] sm:$0xff] %v672
  %737 = vst [vmem:[%s3 + $0xd0] sm:$0xff] %v673
  %738 = vst [vmem:[%s3 + $0xd8] sm:$0xff] %v674
  %739 = vst [vmem:[%s3 + $0xe0] sm:$0xff] %v675
  %740 = vst [vmem:[%s3 + $0xe8] sm:$0xff] %v676
  %741 = vst [vmem:[%s3 + $0xf0] sm:$0xff] %v677
  %742 = vst [vmem:[%s3 + $0xf8] sm:$0xff] %v678
  // Predicated region
  $region14: #{seq2seq_forward.5} parent=0 // pred_check
    _
  $region15: #{seq2seq_forward.5} parent=0 // pred_check_branch
    %744 = sbr.rel (0) target = $region17
  $region16: #{seq2seq_forward.5} parent=0 // pred_region
    _
  $region17: #{seq2seq_forward.5} parent=0 // pred_fallthru
    _
  // Predicated region
  $region18: #{seq2seq_forward.5} parent=0 // pred_check
    _
  $region19: #{seq2seq_forward.5} parent=0 // pred_check_branch
    %746 = sbr.rel (0) target = $region21
  $region20: #{seq2seq_forward.5} parent=0 // pred_region
    _
  $region21: #{seq2seq_forward.5} parent=0 // pred_fallthru
    _

// kernel: seq2seq_forward.6
$region0: #{seq2seq_forward.6}
  #allocation0 [shape = 'u32[]', space=smem, size = 0x4, offset = 0x4, fixed_abs, tag = 'smem constant byte address 0x4 - core index']
  #allocation1 [shape = 'u32[144,128]{1,0:T(1,128)}', space=vmem, size = 0x12000, scoped, tag = 'internal scratch']
  #allocation2 [shape = 'f32[16,128]{1,0:T(8,128)}', space=vmem, size = 0x2000, scoped, tag = 'scratch operand']
  #allocation3 [shape = 'f32[16,128]{1,0:T(8,128)}', space=vmem, size = 0x2000, scoped, tag = 'scratch operand']
  %s0 = inlined_call_operand.vmem [shape: bf16[8,16,512], index: 0, kind: input, shape index: {}]
  %s1 = inlined_call_operand.vmem [shape: bf16[8,16,512], index: 1, kind: input, shape index: {}]
  %s2 = inlined_call_operand.vmem [shape: bf16[128,512], index: 2, kind: input, shape index: {}]
  %s3 = inlined_call_operand.vmem [shape: bf16[128,512], index: 3, kind: input, shape index: {}]
  %s4 = inlined_call_operand.vmem [shape: bf16[8,16,128], index: 4, kind: output, shape index: {}]
  %s5 = sld [smem:[#allocation0]]
  $region26: #{seq2seq_forward.6} parent=0
    _
  %s7 = ssub.s32 1, %s5
  %s8 = scalar_select 0, %s7, %s5
  // Predicated region
  $region2: #{seq2seq_forward.6} parent=0 // pred_check
    _
  $region3: #{seq2seq_forward.6} parent=0 // pred_check_branch
    %10 = sbr.rel (0) target = $region5
  $region4: #{seq2seq_forward.6} parent=0 // pred_region
    _
  $region5: #{seq2seq_forward.6} parent=0 // pred_fallthru
    _
  // Predicated region
  $region6: #{seq2seq_forward.6} parent=0 // pred_check
    _
  $region7: #{seq2seq_forward.6} parent=0 // pred_check_branch
    %12 = sbr.rel (0) target = $region9
  $region8: #{seq2seq_forward.6} parent=0 // pred_region
    _
  $region9: #{seq2seq_forward.6} parent=0 // pred_fallthru
    _
  // Predicated region
  $region10: #{seq2seq_forward.6} parent=0 // pred_check
    _
  $region11: #{seq2seq_forward.6} parent=0 // pred_check_branch
    %14 = sbr.rel (0) target = $region13
  $region12: #{seq2seq_forward.6} parent=0 // pred_region
    _
  $region13: #{seq2seq_forward.6} parent=0 // pred_fallthru
    _
  // Predicated region
  $region14: #{seq2seq_forward.6} parent=0 // pred_check
    _
  $region15: #{seq2seq_forward.6} parent=0 // pred_check_branch
    %16 = sbr.rel (0) target = $region17
  $region16: #{seq2seq_forward.6} parent=0 // pred_region
    _
  $region17: #{seq2seq_forward.6} parent=0 // pred_fallthru
    _
  %18 = vst [vmem:[#allocation2] sm:$0xff] 0.0
  %19 = vst [vmem:[#allocation2 + $0x8] sm:$0xff] 0.0
  %20 = vst [vmem:[#allocation3] sm:$0xff] 0.0
  %21 = vst [vmem:[#allocation3 + $0x8] sm:$0xff] 0.0
  %v22 = vld [vmem:[%s0] sm:$0xff]
  %v23 = vld [vmem:[%s0 + $0x8] sm:$0xff]
  %v24 = vld [vmem:[%s0 + $0x10] sm:$0xff]
  %v25 = vld [vmem:[%s0 + $0x18] sm:$0xff]
  %v26 = vunpack.c.l.bf16 %v22
  %v27 = vunpack.c.h.bf16 %v22
  %v28 = vunpack.c.l.bf16 %v23
  %v29 = vunpack.c.h.bf16 %v23
  %v30 = vunpack.c.l.bf16 %v24
  %v31 = vunpack.c.h.bf16 %v24
  %v32 = vunpack.c.l.bf16 %v25
  %v33 = vunpack.c.h.bf16 %v25
  %v34 = vld [vmem:[#allocation2] sm:$0xff]
  %v35 = vld [vmem:[#allocation2 + $0x8] sm:$0xff]
  %v36 = vpack.c.bf16 %v35, %v34
  %v37 = vld [vmem:[%s2] sm:$0xff]
  %v38 = vld [vmem:[%s2 + $0x8] sm:$0xff]
  %v39 = vld [vmem:[%s2 + $0x10] sm:$0xff]
  %v40 = vld [vmem:[%s2 + $0x18] sm:$0xff]
  %v41 = vld [vmem:[%s2 + $0x20] sm:$0xff]
  %v42 = vld [vmem:[%s2 + $0x28] sm:$0xff]
  %v43 = vld [vmem:[%s2 + $0x30] sm:$0xff]
  %v44 = vld [vmem:[%s2 + $0x38] sm:$0xff]
  %v45 = vld [vmem:[%s2 + $0x40] sm:$0xff]
  %v46 = vld [vmem:[%s2 + $0x48] sm:$0xff]
  %v47 = vld [vmem:[%s2 + $0x50] sm:$0xff]
  %v48 = vld [vmem:[%s2 + $0x58] sm:$0xff]
  %v49 = vld [vmem:[%s2 + $0x60] sm:$0xff]
  %v50 = vld [vmem:[%s2 + $0x68] sm:$0xff]
  %v51 = vld [vmem:[%s2 + $0x70] sm:$0xff]
  %v52 = vld [vmem:[%s2 + $0x78] sm:$0xff]
  %v53 = vld [vmem:[%s2 + $0x80] sm:$0xff]
  %v54 = vld [vmem:[%s2 + $0x88] sm:$0xff]
  %v55 = vld [vmem:[%s2 + $0x90] sm:$0xff]
  %v56 = vld [vmem:[%s2 + $0x98] sm:$0xff]
  %v57 = vld [vmem:[%s2 + $0xa0] sm:$0xff]
  %v58 = vld [vmem:[%s2 + $0xa8] sm:$0xff]
  %v59 = vld [vmem:[%s2 + $0xb0] sm:$0xff]
  %v60 = vld [vmem:[%s2 + $0xb8] sm:$0xff]
  %v61 = vld [vmem:[%s2 + $0xc0] sm:$0xff]
  %v62 = vld [vmem:[%s2 + $0xc8] sm:$0xff]
  %v63 = vld [vmem:[%s2 + $0xd0] sm:$0xff]
  %v64 = vld [vmem:[%s2 + $0xd8] sm:$0xff]
  %v65 = vld [vmem:[%s2 + $0xe0] sm:$0xff]
  %v66 = vld [vmem:[%s2 + $0xe8] sm:$0xff]
  %v67 = vld [vmem:[%s2 + $0xf0] sm:$0xff]
  %v68 = vld [vmem:[%s2 + $0xf8] sm:$0xff]
  %v101 = vunpack.c.l.b16 %v37
  %v102 = vunpack.c.h.b16 %v37
  %v103 = vunpack.c.l.b16 %v38
  %v104 = vunpack.c.h.b16 %v38
  %v105 = vunpack.c.l.b16 %v39
  %v106 = vunpack.c.h.b16 %v39
  %v107 = vunpack.c.l.b16 %v40
  %v108 = vunpack.c.h.b16 %v40
  %v109 = vunpack.c.l.b16 %v41
  %v110 = vunpack.c.h.b16 %v41
  %v111 = vunpack.c.l.b16 %v42
  %v112 = vunpack.c.h.b16 %v42
  %v113 = vunpack.c.l.b16 %v43
  %v114 = vunpack.c.h.b16 %v43
  %v115 = vunpack.c.l.b16 %v44
  %v116 = vunpack.c.h.b16 %v44
  %v117 = vunpack.c.l.b16 %v45
  %v118 = vunpack.c.h.b16 %v45
  %v119 = vunpack.c.l.b16 %v46
  %v120 = vunpack.c.h.b16 %v46
  %v121 = vunpack.c.l.b16 %v47
  %v122 = vunpack.c.h.b16 %v47
  %v123 = vunpack.c.l.b16 %v48
  %v124 = vunpack.c.h.b16 %v48
  %v125 = vunpack.c.l.b16 %v49
  %v126 = vunpack.c.h.b16 %v49
  %v127 = vunpack.c.l.b16 %v50
  %v128 = vunpack.c.h.b16 %v50
  %v129 = vunpack.c.l.b16 %v51
  %v130 = vunpack.c.h.b16 %v51
  %v131 = vunpack.c.l.b16 %v52
  %v132 = vunpack.c.h.b16 %v52
  %v133 = vunpack.c.l.b16 %v53
  %v134 = vunpack.c.h.b16 %v53
  %v135 = vunpack.c.l.b16 %v54
  %v136 = vunpack.c.h.b16 %v54
  %v137 = vunpack.c.l.b16 %v55
  %v138 = vunpack.c.h.b16 %v55
  %v139 = vunpack.c.l.b16 %v56
  %v140 = vunpack.c.h.b16 %v56
  %v141 = vunpack.c.l.b16 %v57
  %v142 = vunpack.c.h.b16 %v57
  %v143 = vunpack.c.l.b16 %v58
  %v144 = vunpack.c.h.b16 %v58
  %v145 = vunpack.c.l.b16 %v59
  %v146 = vunpack.c.h.b16 %v59
  %v147 = vunpack.c.l.b16 %v60
  %v148 = vunpack.c.h.b16 %v60
  %v149 = vunpack.c.l.b16 %v61
  %v150 = vunpack.c.h.b16 %v61
  %v151 = vunpack.c.l.b16 %v62
  %v152 = vunpack.c.h.b16 %v62
  %v153 = vunpack.c.l.b16 %v63
  %v154 = vunpack.c.h.b16 %v63
  %v155 = vunpack.c.l.b16 %v64
  %v156 = vunpack.c.h.b16 %v64
  %v157 = vunpack.c.l.b16 %v65
  %v158 = vunpack.c.h.b16 %v65
  %v159 = vunpack.c.l.b16 %v66
  %v160 = vunpack.c.h.b16 %v66
  %v161 = vunpack.c.l.b16 %v67
  %v162 = vunpack.c.h.b16 %v67
  %v163 = vunpack.c.l.b16 %v68
  %v164 = vunpack.c.h.b16 %v68
  %v165 = vpack.c.b16 %v105, %v101
  %v166 = vpack.c.b16 %v106, %v102
  %v167 = vpack.c.b16 %v107, %v103
  %v168 = vpack.c.b16 %v108, %v104
  %v169 = vpack.c.b16 %v113, %v109
  %v170 = vpack.c.b16 %v114, %v110
  %v171 = vpack.c.b16 %v115, %v111
  %v172 = vpack.c.b16 %v116, %v112
  %v173 = vpack.c.b16 %v121, %v117
  %v174 = vpack.c.b16 %v122, %v118
  %v175 = vpack.c.b16 %v123, %v119
  %v176 = vpack.c.b16 %v124, %v120
  %v177 = vpack.c.b16 %v129, %v125
  %v178 = vpack.c.b16 %v130, %v126
  %v179 = vpack.c.b16 %v131, %v127
  %v180 = vpack.c.b16 %v132, %v128
  %v181 = vpack.c.b16 %v137, %v133
  %v182 = vpack.c.b16 %v138, %v134
  %v183 = vpack.c.b16 %v139, %v135
  %v184 = vpack.c.b16 %v140, %v136
  %v185 = vpack.c.b16 %v145, %v141
  %v186 = vpack.c.b16 %v146, %v142
  %v187 = vpack.c.b16 %v147, %v143
  %v188 = vpack.c.b16 %v148, %v144
  %v189 = vpack.c.b16 %v153, %v149
  %v190 = vpack.c.b16 %v154, %v150
  %v191 = vpack.c.b16 %v155, %v151
  %v192 = vpack.c.b16 %v156, %v152
  %v193 = vpack.c.b16 %v161, %v157
  %v194 = vpack.c.b16 %v162, %v158
  %v195 = vpack.c.b16 %v163, %v159
  %v196 = vpack.c.b16 %v164, %v160
  %229 = vmatprep.subr.bf16.mxu0 %v194
  %230 = vmatpush1.bf16.msra.mxu0 %v193
  %231 = vmatprep.subr.bf16.mxu0 %v190
  %232 = vmatpush1.bf16.msra.mxu0 %v189
  %233 = vmatprep.subr.bf16.mxu0 %v186
  %234 = vmatpush1.bf16.msra.mxu0 %v185
  %235 = vmatprep.subr.bf16.mxu0 %v182
  %236 = vmatpush1.bf16.msra.mxu0 %v181
  %237 = vmatprep.subr.bf16.mxu0 %v178
  %238 = vmatpush1.bf16.msra.mxu0 %v177
  %239 = vmatprep.subr.bf16.mxu0 %v174
  %240 = vmatpush1.bf16.msra.mxu0 %v173
  %241 = vmatprep.subr.bf16.mxu0 %v170
  %242 = vmatpush1.bf16.msra.mxu0 %v169
  %243 = vmatprep.subr.bf16.mxu0 %v166
  %244 = vmatpush1.bf16.msra.mxu0 %v165
  %245 = vmatprep.subr.bf16.mxu0 0
  %246 = vmatpush2.bf16.msra.mxu0 0
  %247 = vmatprep.subr.bf16.mxu0 0
  %248 = vmatpush2.bf16.msra.mxu0 0
  %249 = vmatprep.subr.bf16.mxu0 0
  %250 = vmatpush2.bf16.msra.mxu0 0
  %251 = vmatprep.subr.bf16.mxu0 0
  %252 = vmatpush2.bf16.msra.mxu0 0
  %253 = vmatprep.subr.bf16.mxu0 0
  %254 = vmatpush2.bf16.msra.mxu0 0
  %255 = vmatprep.subr.bf16.mxu0 0
  %256 = vmatpush2.bf16.msra.mxu0 0
  %257 = vmatprep.subr.bf16.mxu0 0
  %258 = vmatpush2.bf16.msra.mxu0 0
  %259 = vmatprep.subr.bf16.mxu0 0
  %260 = vmatpush2.bf16.msra.mxu0 0
  %261 = vmatprep.mubr.bf16.mxu0 0
  %262 = vmatmul.mubr.bf16.gmra.mxu0 %v36
  %v263 = vpop.f32.mrf.mxu0
  %v264 = vadd.f32 0.0, %v263
  %v265 = vpop.f32.mrf.mxu0
  %v266 = vadd.f32 0.0, %v265
  %v267 = vpop.f32.mrf.mxu0
  %v268 = vadd.f32 0.0, %v267
  %v269 = vpop.f32.mrf.mxu0
  %v270 = vadd.f32 0.0, %v269
  %271 = vdwg.mxu0
  %272 = vmatprep.subr.bf16.mxu0 %v196
  %273 = vmatpush1.bf16.msra.mxu0 %v195
  %274 = vmatprep.subr.bf16.mxu0 %v192
  %275 = vmatpush1.bf16.msra.mxu0 %v191
  %276 = vmatprep.subr.bf16.mxu0 %v188
  %277 = vmatpush1.bf16.msra.mxu0 %v187
  %278 = vmatprep.subr.bf16.mxu0 %v184
  %279 = vmatpush1.bf16.msra.mxu0 %v183
  %280 = vmatprep.subr.bf16.mxu0 %v180
  %281 = vmatpush1.bf16.msra.mxu0 %v179
  %282 = vmatprep.subr.bf16.mxu0 %v176
  %283 = vmatpush1.bf16.msra.mxu0 %v175
  %284 = vmatprep.subr.bf16.mxu0 %v172
  %285 = vmatpush1.bf16.msra.mxu0 %v171
  %286 = vmatprep.subr.bf16.mxu0 %v168
  %287 = vmatpush1.bf16.msra.mxu0 %v167
  %288 = vmatprep.subr.bf16.mxu0 0
  %289 = vmatpush2.bf16.msra.mxu0 0
  %290 = vmatprep.subr.bf16.mxu0 0
  %291 = vmatpush2.bf16.msra.mxu0 0
  %292 = vmatprep.subr.bf16.mxu0 0
  %293 = vmatpush2.bf16.msra.mxu0 0
  %294 = vmatprep.subr.bf16.mxu0 0
  %295 = vmatpush2.bf16.msra.mxu0 0
  %296 = vmatprep.subr.bf16.mxu0 0
  %297 = vmatpush2.bf16.msra.mxu0 0
  %298 = vmatprep.subr.bf16.mxu0 0
  %299 = vmatpush2.bf16.msra.mxu0 0
  %300 = vmatprep.subr.bf16.mxu0 0
  %301 = vmatpush2.bf16.msra.mxu0 0
  %302 = vmatprep.subr.bf16.mxu0 0
  %303 = vmatpush2.bf16.msra.mxu0 0
  %304 = vmatprep.mubr.bf16.mxu0 0
  %305 = vmatmul.mubr.bf16.gmra.mxu0 %v36
  %v306 = vpop.f32.mrf.mxu0
  %v307 = vadd.f32 0.0, %v306
  %v308 = vpop.f32.mrf.mxu0
  %v309 = vadd.f32 0.0, %v308
  %v310 = vpop.f32.mrf.mxu0
  %v311 = vadd.f32 0.0, %v310
  %v312 = vpop.f32.mrf.mxu0
  %v313 = vadd.f32 0.0, %v312
  %314 = vdwg.mxu0
  %v315 = vadd.f32 %v26, %v264
  %v316 = vadd.f32 %v27, %v266
  %v317 = vadd.f32 %v28, %v307
  %v318 = vadd.f32 %v29, %v309
  %v319 = vadd.f32 %v30, %v268
  %v320 = vadd.f32 %v31, %v270
  %v321 = vadd.f32 %v32, %v311
  %v322 = vadd.f32 %v33, %v313
  %v323 = vxor.u32 %v315, 2147483648
  %v324 = vxor.u32 %v319, 2147483648
  %v325 = vmul.f32 %v323, 1.442695
  %v326 = vpow.pop %v325
  %v327 = vmul.f32 %v324, 1.442695
  %v328 = vpow.pop %v327
  %v329 = vadd.f32 %v326, 1.0
  %v330 = vadd.f32 %v328, 1.0
  %v331 = vrcp.pop %v329
  %v332 = vmul.f32 1.0, %v331
  %v333 = vrcp.pop %v330
  %v334 = vmul.f32 1.0, %v333
  %v335 = vxor.u32 %v316, 2147483648
  %v336 = vxor.u32 %v320, 2147483648
  %v337 = vmul.f32 %v335, 1.442695
  %v338 = vpow.pop %v337
  %v339 = vmul.f32 %v336, 1.442695
  %v340 = vpow.pop %v339
  %v341 = vadd.f32 %v338, 1.0
  %v342 = vadd.f32 %v340, 1.0
  %v343 = vrcp.pop %v341
  %v344 = vmul.f32 1.0, %v343
  %v345 = vrcp.pop %v342
  %v346 = vmul.f32 1.0, %v345
  %v347 = vtanh.pop %v317
  %v348 = vtanh.pop %v321
  %v349 = vxor.u32 %v318, 2147483648
  %v350 = vxor.u32 %v322, 2147483648
  %v351 = vmul.f32 %v349, 1.442695
  %v352 = vpow.pop %v351
  %v353 = vmul.f32 %v350, 1.442695
  %v354 = vpow.pop %v353
  %v355 = vadd.f32 %v352, 1.0
  %v356 = vadd.f32 %v354, 1.0
  %v357 = vrcp.pop %v355
  %v358 = vmul.f32 1.0, %v357
  %v359 = vrcp.pop %v356
  %v360 = vmul.f32 1.0, %v359
  %v361 = vld [vmem:[#allocation3] sm:$0xff]
  %v362 = vld [vmem:[#allocation3 + $0x8] sm:$0xff]
  %v363 = vmul.f32 %v344, %v361
  %v364 = vmul.f32 %v346, %v362
  %v365 = vmul.f32 %v332, %v347
  %v366 = vmul.f32 %v334, %v348
  %v367 = vadd.f32 %v363, %v365
  %v368 = vadd.f32 %v364, %v366
  %v369 = vtanh.pop %v367
  %v370 = vtanh.pop %v368
  %v371 = vmul.f32 %v358, %v369
  %v372 = vmul.f32 %v360, %v370
  %373 = vst [vmem:[#allocation3] sm:$0xff] %v367
  %374 = vst [vmem:[#allocation3 + $0x8] sm:$0xff] %v368
  %375 = vst [vmem:[#allocation2] sm:$0xff] %v371
  %376 = vst [vmem:[#allocation2 + $0x8] sm:$0xff] %v372
  %s377 = scalar_lea.vmem %s0, 32
  %v378 = vld [vmem:[%s377] sm:$0xff]
  %v379 = vld [vmem:[%s377 + $0x8] sm:$0xff]
  %v380 = vld [vmem:[%s377 + $0x10] sm:$0xff]
  %v381 = vld [vmem:[%s377 + $0x18] sm:$0xff]
  %v382 = vunpack.c.l.bf16 %v378
  %v383 = vunpack.c.h.bf16 %v378
  %v384 = vunpack.c.l.bf16 %v379
  %v385 = vunpack.c.h.bf16 %v379
  %v386 = vunpack.c.l.bf16 %v380
  %v387 = vunpack.c.h.bf16 %v380
  %v388 = vunpack.c.l.bf16 %v381
  %v389 = vunpack.c.h.bf16 %v381
  %v390 = vld [vmem:[#allocation2] sm:$0xff]
  %v391 = vld [vmem:[#allocation2 + $0x8] sm:$0xff]
  %v392 = vpack.c.bf16 %v391, %v390
  %v393 = vld [vmem:[%s2] sm:$0xff]
  %v394 = vld [vmem:[%s2 + $0x8] sm:$0xff]
  %v395 = vld [vmem:[%s2 + $0x10] sm:$0xff]
  %v396 = vld [vmem:[%s2 + $0x18] sm:$0xff]
  %v397 = vld [vmem:[%s2 + $0x20] sm:$0xff]
  %v398 = vld [vmem:[%s2 + $0x28] sm:$0xff]
  %v399 = vld [vmem:[%s2 + $0x30] sm:$0xff]
  %v400 = vld [vmem:[%s2 + $0x38] sm:$0xff]
  %v401 = vld [vmem:[%s2 + $0x40] sm:$0xff]
  %v402 = vld [vmem:[%s2 + $0x48] sm:$0xff]
  %v403 = vld [vmem:[%s2 + $0x50] sm:$0xff]
  %v404 = vld [vmem:[%s2 + $0x58] sm:$0xff]
  %v405 = vld [vmem:[%s2 + $0x60] sm:$0xff]
  %v406 = vld [vmem:[%s2 + $0x68] sm:$0xff]
  %v407 = vld [vmem:[%s2 + $0x70] sm:$0xff]
  %v408 = vld [vmem:[%s2 + $0x78] sm:$0xff]
  %v409 = vld [vmem:[%s2 + $0x80] sm:$0xff]
  %v410 = vld [vmem:[%s2 + $0x88] sm:$0xff]
  %v411 = vld [vmem:[%s2 + $0x90] sm:$0xff]
  %v412 = vld [vmem:[%s2 + $0x98] sm:$0xff]
  %v413 = vld [vmem:[%s2 + $0xa0] sm:$0xff]
  %v414 = vld [vmem:[%s2 + $0xa8] sm:$0xff]
  %v415 = vld [vmem:[%s2 + $0xb0] sm:$0xff]
  %v416 = vld [vmem:[%s2 + $0xb8] sm:$0xff]
  %v417 = vld [vmem:[%s2 + $0xc0] sm:$0xff]
  %v418 = vld [vmem:[%s2 + $0xc8] sm:$0xff]
  %v419 = vld [vmem:[%s2 + $0xd0] sm:$0xff]
  %v420 = vld [vmem:[%s2 + $0xd8] sm:$0xff]
  %v421 = vld [vmem:[%s2 + $0xe0] sm:$0xff]
  %v422 = vld [vmem:[%s2 + $0xe8] sm:$0xff]
  %v423 = vld [vmem:[%s2 + $0xf0] sm:$0xff]
  %v424 = vld [vmem:[%s2 + $0xf8] sm:$0xff]
  %v457 = vunpack.c.l.b16 %v393
  %v458 = vunpack.c.h.b16 %v393
  %v459 = vunpack.c.l.b16 %v394
  %v460 = vunpack.c.h.b16 %v394
  %v461 = vunpack.c.l.b16 %v395
  %v462 = vunpack.c.h.b16 %v395
  %v463 = vunpack.c.l.b16 %v396
  %v464 = vunpack.c.h.b16 %v396
  %v465 = vunpack.c.l.b16 %v397
  %v466 = vunpack.c.h.b16 %v397
  %v467 = vunpack.c.l.b16 %v398
  %v468 = vunpack.c.h.b16 %v398
  %v469 = vunpack.c.l.b16 %v399
  %v470 = vunpack.c.h.b16 %v399
  %v471 = vunpack.c.l.b16 %v400
  %v472 = vunpack.c.h.b16 %v400
  %v473 = vunpack.c.l.b16 %v401
  %v474 = vunpack.c.h.b16 %v401
  %v475 = vunpack.c.l.b16 %v402
  %v476 = vunpack.c.h.b16 %v402
  %v477 = vunpack.c.l.b16 %v403
  %v478 = vunpack.c.h.b16 %v403
  %v479 = vunpack.c.l.b16 %v404
  %v480 = vunpack.c.h.b16 %v404
  %v481 = vunpack.c.l.b16 %v405
  %v482 = vunpack.c.h.b16 %v405
  %v483 = vunpack.c.l.b16 %v406
  %v484 = vunpack.c.h.b16 %v406
  %v485 = vunpack.c.l.b16 %v407
  %v486 = vunpack.c.h.b16 %v407
  %v487 = vunpack.c.l.b16 %v408
  %v488 = vunpack.c.h.b16 %v408
  %v489 = vunpack.c.l.b16 %v409
  %v490 = vunpack.c.h.b16 %v409
  %v491 = vunpack.c.l.b16 %v410
  %v492 = vunpack.c.h.b16 %v410
  %v493 = vunpack.c.l.b16 %v411
  %v494 = vunpack.c.h.b16 %v411
  %v495 = vunpack.c.l.b16 %v412
  %v496 = vunpack.c.h.b16 %v412
  %v497 = vunpack.c.l.b16 %v413
  %v498 = vunpack.c.h.b16 %v413
  %v499 = vunpack.c.l.b16 %v414
  %v500 = vunpack.c.h.b16 %v414
  %v501 = vunpack.c.l.b16 %v415
  %v502 = vunpack.c.h.b16 %v415
  %v503 = vunpack.c.l.b16 %v416
  %v504 = vunpack.c.h.b16 %v416
  %v505 = vunpack.c.l.b16 %v417
  %v506 = vunpack.c.h.b16 %v417
  %v507 = vunpack.c.l.b16 %v418
  %v508 = vunpack.c.h.b16 %v418
  %v509 = vunpack.c.l.b16 %v419
  %v510 = vunpack.c.h.b16 %v419
  %v511 = vunpack.c.l.b16 %v420
  %v512 = vunpack.c.h.b16 %v420
  %v513 = vunpack.c.l.b16 %v421
  %v514 = vunpack.c.h.b16 %v421
  %v515 = vunpack.c.l.b16 %v422
  %v516 = vunpack.c.h.b16 %v422
  %v517 = vunpack.c.l.b16 %v423
  %v518 = vunpack.c.h.b16 %v423
  %v519 = vunpack.c.l.b16 %v424
  %v520 = vunpack.c.h.b16 %v424
  %v521 = vpack.c.b16 %v461, %v457
  %v522 = vpack.c.b16 %v462, %v458
  %v523 = vpack.c.b16 %v463, %v459
  %v524 = vpack.c.b16 %v464, %v460
  %v525 = vpack.c.b16 %v469, %v465
  %v526 = vpack.c.b16 %v470, %v466
  %v527 = vpack.c.b16 %v471, %v467
  %v528 = vpack.c.b16 %v472, %v468
  %v529 = vpack.c.b16 %v477, %v473
  %v530 = vpack.c.b16 %v478, %v474
  %v531 = vpack.c.b16 %v479, %v475
  %v532 = vpack.c.b16 %v480, %v476
  %v533 = vpack.c.b16 %v485, %v481
  %v534 = vpack.c.b16 %v486, %v482
  %v535 = vpack.c.b16 %v487, %v483
  %v536 = vpack.c.b16 %v488, %v484
  %v537 = vpack.c.b16 %v493, %v489
  %v538 = vpack.c.b16 %v494, %v490
  %v539 = vpack.c.b16 %v495, %v491
  %v540 = vpack.c.b16 %v496, %v492
  %v541 = vpack.c.b16 %v501, %v497
  %v542 = vpack.c.b16 %v502, %v498
  %v543 = vpack.c.b16 %v503, %v499
  %v544 = vpack.c.b16 %v504, %v500
  %v545 = vpack.c.b16 %v509, %v505
  %v546 = vpack.c.b16 %v510, %v506
  %v547 = vpack.c.b16 %v511, %v507
  %v548 = vpack.c.b16 %v512, %v508
  %v549 = vpack.c.b16 %v517, %v513
  %v550 = vpack.c.b16 %v518, %v514
  %v551 = vpack.c.b16 %v519, %v515
  %v552 = vpack.c.b16 %v520, %v516
  %585 = vmatprep.subr.bf16.mxu0 %v550
  %586 = vmatpush1.bf16.msra.mxu0 %v549
  %587 = vmatprep.subr.bf16.mxu0 %v546
  %588 = vmatpush1.bf16.msra.mxu0 %v545
  %589 = vmatprep.subr.bf16.mxu0 %v542
  %590 = vmatpush1.bf16.msra.mxu0 %v541
  %591 = vmatprep.subr.bf16.mxu0 %v538
  %592 = vmatpush1.bf16.msra.mxu0 %v537
  %593 = vmatprep.subr.bf16.mxu0 %v534
  %594 = vmatpush1.bf16.msra.mxu0 %v533
  %595 = vmatprep.subr.bf16.mxu0 %v530
  %596 = vmatpush1.bf16.msra.mxu0 %v529
  %597 = vmatprep.subr.bf16.mxu0 %v526
  %598 = vmatpush1.bf16.msra.mxu0 %v525
  %599 = vmatprep.subr.bf16.mxu0 %v522
  %600 = vmatpush1.bf16.msra.mxu0 %v521
  %601 = vmatprep.subr.bf16.mxu0 0
  %602 = vmatpush2.bf16.msra.mxu0 0
  %603 = vmatprep.subr.bf16.mxu0 0
  %604 = vmatpush2.bf16.msra.mxu0 0
  %605 = vmatprep.subr.bf16.mxu0 0
  %606 = vmatpush2.bf16.msra.mxu0 0
  %607 = vmatprep.subr.bf16.mxu0 0
  %608 = vmatpush2.bf16.msra.mxu0 0
  %609 = vmatprep.subr.bf16.mxu0 0
  %610 = vmatpush2.bf16.msra.mxu0 0
  %611 = vmatprep.subr.bf16.mxu0 0
  %612 = vmatpush2.bf16.msra.mxu0 0
  %613 = vmatprep.subr.bf16.mxu0 0
  %614 = vmatpush2.bf16.msra.mxu0 0
  %615 = vmatprep.subr.bf16.mxu0 0
  %616 = vmatpush2.bf16.msra.mxu0 0
  %617 = vmatprep.mubr.bf16.mxu0 0
  %618 = vmatmul.mubr.bf16.gmra.mxu0 %v392
  %v619 = vpop.f32.mrf.mxu0
  %v620 = vadd.f32 0.0, %v619
  %v621 = vpop.f32.mrf.mxu0
  %v622 = vadd.f32 0.0, %v621
  %v623 = vpop.f32.mrf.mxu0
  %v624 = vadd.f32 0.0, %v623
  %v625 = vpop.f32.mrf.mxu0
  %v626 = vadd.f32 0.0, %v625
  %627 = vdwg.mxu0
  %628 = vmatprep.subr.bf16.mxu0 %v552
  %629 = vmatpush1.bf16.msra.mxu0 %v551
  %630 = vmatprep.subr.bf16.mxu0 %v548
  %631 = vmatpush1.bf16.msra.mxu0 %v547
  %632 = vmatprep.subr.bf16.mxu0 %v544
  %633 = vmatpush1.bf16.msra.mxu0 %v543
  %634 = vmatprep.subr.bf16.mxu0 %v540
  %635 = vmatpush1.bf16.msra.mxu0 %v539
  %636 = vmatprep.subr.bf16.mxu0 %v536
  %637 = vmatpush1.bf16.msra.mxu0 %v535
  %638 = vmatprep.subr.bf16.mxu0 %v532
  %639 = vmatpush1.bf16.msra.mxu0 %v531
  %640 = vmatprep.subr.bf16.mxu0 %v528
  %641 = vmatpush1.bf16.msra.mxu0 %v527
  %642 = vmatprep.subr.bf16.mxu0 %v524
  %643 = vmatpush1.bf16.msra.mxu0 %v523
  %644 = vmatprep.subr.bf16.mxu0 0
  %645 = vmatpush2.bf16.msra.mxu0 0
  %646 = vmatprep.subr.bf16.mxu0 0
  %647 = vmatpush2.bf16.msra.mxu0 0
  %648 = vmatprep.subr.bf16.mxu0 0
  %649 = vmatpush2.bf16.msra.mxu0 0
  %650 = vmatprep.subr.bf16.mxu0 0
  %651 = vmatpush2.bf16.msra.mxu0 0
  %652 = vmatprep.subr.bf16.mxu0 0
  %653 = vmatpush2.bf16.msra.mxu0 0
  %654 = vmatprep.subr.bf16.mxu0 0
  %655 = vmatpush2.bf16.msra.mxu0 0
  %656 = vmatprep.subr.bf16.mxu0 0
  %657 = vmatpush2.bf16.msra.mxu0 0
  %658 = vmatprep.subr.bf16.mxu0 0
  %659 = vmatpush2.bf16.msra.mxu0 0
  %660 = vmatprep.mubr.bf16.mxu0 0
  %661 = vmatmul.mubr.bf16.gmra.mxu0 %v392
  %v662 = vpop.f32.mrf.mxu0
  %v663 = vadd.f32 0.0, %v662
  %v664 = vpop.f32.mrf.mxu0
  %v665 = vadd.f32 0.0, %v664
  %v666 = vpop.f32.mrf.mxu0
  %v667 = vadd.f32 0.0, %v666
  %v668 = vpop.f32.mrf.mxu0
  %v669 = vadd.f32 0.0, %v668
  %670 = vdwg.mxu0
  %v671 = vadd.f32 %v382, %v620
  %v672 = vadd.f32 %v383, %v622
  %v673 = vadd.f32 %v384, %v663
  %v674 = vadd.f32 %v385, %v665
  %v675 = vadd.f32 %v386, %v624
  %v676 = vadd.f32 %v387, %v626
  %v677 = vadd.f32 %v388, %v667
  %v678 = vadd.f32 %v389, %v669
  %v679 = vxor.u32 %v671, 2147483648
  %v680 = vxor.u32 %v675, 2147483648
  %v681 = vmul.f32 %v679, 1.442695
  %v682 = vpow.pop %v681
  %v683 = vmul.f32 %v680, 1.442695
  %v684 = vpow.pop %v683
  %v685 = vadd.f32 %v682, 1.0
  %v686 = vadd.f32 %v684, 1.0
  %v687 = vrcp.pop %v685
  %v688 = vmul.f32 1.0, %v687
  %v689 = vrcp.pop %v686
  %v690 = vmul.f32 1.0, %v689
  %v691 = vxor.u32 %v672, 2147483648
  %v692 = vxor.u32 %v676, 2147483648
  %v693 = vmul.f32 %v691, 1.442695
  %v694 = vpow.pop %v693
  %v695 = vmul.f32 %v692, 1.442695
  %v696 = vpow.pop %v695
  %v697 = vadd.f32 %v694, 1.0
  %v698 = vadd.f32 %v696, 1.0
  %v699 = vrcp.pop %v697
  %v700 = vmul.f32 1.0, %v699
  %v701 = vrcp.pop %v698
  %v702 = vmul.f32 1.0, %v701
  %v703 = vtanh.pop %v673
  %v704 = vtanh.pop %v677
  %v705 = vxor.u32 %v674, 2147483648
  %v706 = vxor.u32 %v678, 2147483648
  %v707 = vmul.f32 %v705, 1.442695
  %v708 = vpow.pop %v707
  %v709 = vmul.f32 %v706, 1.442695
  %v710 = vpow.pop %v709
  %v711 = vadd.f32 %v708, 1.0
  %v712 = vadd.f32 %v710, 1.0
  %v713 = vrcp.pop %v711
  %v714 = vmul.f32 1.0, %v713
  %v715 = vrcp.pop %v712
  %v716 = vmul.f32 1.0, %v715
  %v717 = vld [vmem:[#allocation3] sm:$0xff]
  %v718 = vld [vmem:[#allocation3 + $0x8] sm:$0xff]
  %v719 = vmul.f32 %v700, %v717
  %v720 = vmul.f32 %v702, %v718
  %v721 = vmul.f32 %v688, %v703
  %v722 = vmul.f32 %v690, %v704
  %v723 = vadd.f32 %v719, %v721
  %v724 = vadd.f32 %v720, %v722
  %v725 = vtanh.pop %v723
  %v726 = vtanh.pop %v724
  %v727 = vmul.f32 %v714, %v725
  %v728 = vmul.f32 %v716, %v726
  %729 = vst [vmem:[#allocation3] sm:$0xff] %v723
  %730 = vst [vmem:[#allocation3 + $0x8] sm:$0xff] %v724
  %731 = vst [vmem:[#allocation2] sm:$0xff] %v727
  %732 = vst [vmem:[#allocation2 + $0x8] sm:$0xff] %v728
  %s733 = scalar_lea.vmem %s0, 64
  %v734 = vld [vmem:[%s733] sm:$0xff]
  %v735 = vld [vmem:[%s733 + $0x8] sm:$0xff]
  %v736 = vld [vmem:[%s733 + $0x10] sm:$0xff]
  %v737 = vld [vmem:[%s733 + $0x18] sm:$0xff]
  %v738 = vunpack.c.l.bf16 %v734
  %v739 = vunpack.c.h.bf16 %v734
  %v740 = vunpack.c.l.bf16 %v735
  %v741 = vunpack.c.h.bf16 %v735
  %v742 = vunpack.c.l.bf16 %v736
  %v743 = vunpack.c.h.bf16 %v736
  %v744 = vunpack.c.l.bf16 %v737
  %v745 = vunpack.c.h.bf16 %v737
  %v746 = vld [vmem:[#allocation2] sm:$0xff]
  %v747 = vld [vmem:[#allocation2 + $0x8] sm:$0xff]
  %v748 = vpack.c.bf16 %v747, %v746
  %v749 = vld [vmem:[%s2] sm:$0xff]
  %v750 = vld [vmem:[%s2 + $0x8] sm:$0xff]
  %v751 = vld [vmem:[%s2 + $0x10] sm:$0xff]
  %v752 = vld [vmem:[%s2 + $0x18] sm:$0xff]
  %v753 = vld [vmem:[%s2 + $0x20] sm:$0xff]
  %v754 = vld [vmem:[%s2 + $0x28] sm:$0xff]
  %v755 = vld [vmem:[%s2 + $0x30] sm:$0xff]
  %v756 = vld [vmem:[%s2 + $0x38] sm:$0xff]
  %v757 = vld [vmem:[%s2 + $0x40] sm:$0xff]
  %v758 = vld [vmem:[%s2 + $0x48] sm:$0xff]
  %v759 = vld [vmem:[%s2 + $0x50] sm:$0xff]
  %v760 = vld [vmem:[%s2 + $0x58] sm:$0xff]
  %v761 = vld [vmem:[%s2 + $0x60] sm:$0xff]
  %v762 = vld [vmem:[%s2 + $0x68] sm:$0xff]
  %v763 = vld [vmem:[%s2 + $0x70] sm:$0xff]
  %v764 = vld [vmem:[%s2 + $0x78] sm:$0xff]
  %v765 = vld [vmem:[%s2 + $0x80] sm:$0xff]
  %v766 = vld [vmem:[%s2 + $0x88] sm:$0xff]
  %v767 = vld [vmem:[%s2 + $0x90] sm:$0xff]
  %v768 = vld [vmem:[%s2 + $0x98] sm:$0xff]
  %v769 = vld [vmem:[%s2 + $0xa0] sm:$0xff]
  %v770 = vld [vmem:[%s2 + $0xa8] sm:$0xff]
  %v771 = vld [vmem:[%s2 + $0xb0] sm:$0xff]
  %v772 = vld [vmem:[%s2 + $0xb8] sm:$0xff]
  %v773 = vld [vmem:[%s2 + $0xc0] sm:$0xff]
  %v774 = vld [vmem:[%s2 + $0xc8] sm:$0xff]
  %v775 = vld [vmem:[%s2 + $0xd0] sm:$0xff]
  %v776 = vld [vmem:[%s2 + $0xd8] sm:$0xff]
  %v777 = vld [vmem:[%s2 + $0xe0] sm:$0xff]
  %v778 = vld [vmem:[%s2 + $0xe8] sm:$0xff]
  %v779 = vld [vmem:[%s2 + $0xf0] sm:$0xff]
  %v780 = vld [vmem:[%s2 + $0xf8] sm:$0xff]
  %v813 = vunpack.c.l.b16 %v749
  %v814 = vunpack.c.h.b16 %v749
  %v815 = vunpack.c.l.b16 %v750
  %v816 = vunpack.c.h.b16 %v750
  %v817 = vunpack.c.l.b16 %v751
  %v818 = vunpack.c.h.b16 %v751
  %v819 = vunpack.c.l.b16 %v752
  %v820 = vunpack.c.h.b16 %v752
  %v821 = vunpack.c.l.b16 %v753
  %v822 = vunpack.c.h.b16 %v753
  %v823 = vunpack.c.l.b16 %v754
  %v824 = vunpack.c.h.b16 %v754
  %v825 = vunpack.c.l.b16 %v755
  %v826 = vunpack.c.h.b16 %v755
  %v827 = vunpack.c.l.b16 %v756
  %v828 = vunpack.c.h.b16 %v756
  %v829 = vunpack.c.l.b16 %v757
  %v830 = vunpack.c.h.b16 %v757
  %v831 = vunpack.c.l.b16 %v758
  %v832 = vunpack.c.h.b16 %v758
  %v833 = vunpack.c.l.b16 %v759
  %v834 = vunpack.c.h.b16 %v759
  %v835 = vunpack.c.l.b16 %v760
  %v836 = vunpack.c.h.b16 %v760
  %v837 = vunpack.c.l.b16 %v761
  %v838 = vunpack.c.h.b16 %v761
  %v839 = vunpack.c.l.b16 %v762
  %v840 = vunpack.c.h.b16 %v762
  %v841 = vunpack.c.l.b16 %v763
  %v842 = vunpack.c.h.b16 %v763
  %v843 = vunpack.c.l.b16 %v764
  %v844 = vunpack.c.h.b16 %v764
  %v845 = vunpack.c.l.b16 %v765
  %v846 = vunpack.c.h.b16 %v765
  %v847 = vunpack.c.l.b16 %v766
  %v848 = vunpack.c.h.b16 %v766
  %v849 = vunpack.c.l.b16 %v767
  %v850 = vunpack.c.h.b16 %v767
  %v851 = vunpack.c.l.b16 %v768
  %v852 = vunpack.c.h.b16 %v768
  %v853 = vunpack.c.l.b16 %v769
  %v854 = vunpack.c.h.b16 %v769
  %v855 = vunpack.c.l.b16 %v770
  %v856 = vunpack.c.h.b16 %v770
  %v857 = vunpack.c.l.b16 %v771
  %v858 = vunpack.c.h.b16 %v771
  %v859 = vunpack.c.l.b16 %v772
  %v860 = vunpack.c.h.b16 %v772
  %v861 = vunpack.c.l.b16 %v773
  %v862 = vunpack.c.h.b16 %v773
  %v863 = vunpack.c.l.b16 %v774
  %v864 = vunpack.c.h.b16 %v774
  %v865 = vunpack.c.l.b16 %v775
  %v866 = vunpack.c.h.b16 %v775
  %v867 = vunpack.c.l.b16 %v776
  %v868 = vunpack.c.h.b16 %v776
  %v869 = vunpack.c.l.b16 %v777
  %v870 = vunpack.c.h.b16 %v777
  %v871 = vunpack.c.l.b16 %v778
  %v872 = vunpack.c.h.b16 %v778
  %v873 = vunpack.c.l.b16 %v779
  %v874 = vunpack.c.h.b16 %v779
  %v875 = vunpack.c.l.b16 %v780
  %v876 = vunpack.c.h.b16 %v780
  %v877 = vpack.c.b16 %v817, %v813
  %v878 = vpack.c.b16 %v818, %v814
  %v879 = vpack.c.b16 %v819, %v815
  %v880 = vpack.c.b16 %v820, %v816
  %v881 = vpack.c.b16 %v825, %v821
  %v882 = vpack.c.b16 %v826, %v822
  %v883 = vpack.c.b16 %v827, %v823
  %v884 = vpack.c.b16 %v828, %v824
  %v885 = vpack.c.b16 %v833, %v829
  %v886 = vpack.c.b16 %v834, %v830
  %v887 = vpack.c.b16 %v835, %v831
  %v888 = vpack.c.b16 %v836, %v832
  %v889 = vpack.c.b16 %v841, %v837
  %v890 = vpack.c.b16 %v842, %v838
  %v891 = vpack.c.b16 %v843, %v839
  %v892 = vpack.c.b16 %v844, %v840
  %v893 = vpack.c.b16 %v849, %v845
  %v894 = vpack.c.b16 %v850, %v846
  %v895 = vpack.c.b16 %v851, %v847
  %v896 = vpack.c.b16 %v852, %v848
  %v897 = vpack.c.b16 %v857, %v853
  %v898 = vpack.c.b16 %v858, %v854
  %v899 = vpack.c.b16 %v859, %v855
  %v900 = vpack.c.b16 %v860, %v856
  %v901 = vpack.c.b16 %v865, %v861
  %v902 = vpack.c.b16 %v866, %v862
  %v903 = vpack.c.b16 %v867, %v863
  %v904 = vpack.c.b16 %v868, %v864
  %v905 = vpack.c.b16 %v873, %v869
  %v906 = vpack.c.b16 %v874, %v870
  %v907 = vpack.c.b16 %v875, %v871
  %v908 = vpack.c.b16 %v876, %v872
  %941 = vmatprep.subr.bf16.mxu0 %v906
  %942 = vmatpush1.bf16.msra.mxu0 %v905
  %943 = vmatprep.subr.bf16.mxu0 %v902
  %944 = vmatpush1.bf16.msra.mxu0 %v901
  %945 = vmatprep.subr.bf16.mxu0 %v898
  %946 = vmatpush1.bf16.msra.mxu0 %v897
  %947 = vmatprep.subr.bf16.mxu0 %v894
  %948 = vmatpush1.bf16.msra.mxu0 %v893
  %949 = vmatprep.subr.bf16.mxu0 %v890
  %950 = vmatpush1.bf16.msra.mxu0 %v889
  %951 = vmatprep.subr.bf16.mxu0 %v886
  %952 = vmatpush1.bf16.msra.mxu0 %v885
  %953 = vmatprep.subr.bf16.mxu0 %v882
  %954 = vmatpush1.bf16.msra.mxu0 %v881
  %955 = vmatprep.subr.bf16.mxu0 %v878
  %956 = vmatpush1.bf16.msra.mxu0 %v877
  %957 = vmatprep.subr.bf16.mxu0 0
  %958 = vmatpush2.bf16.msra.mxu0 0
  %959 = vmatprep.subr.bf16.mxu0 0
  %960 = vmatpush2.bf16.msra.mxu0 0
  %961 = vmatprep.subr.bf16.mxu0 0
  %962 = vmatpush2.bf16.msra.mxu0 0
  %963 = vmatprep.subr.bf16.mxu0 0
  %964 = vmatpush2.bf16.msra.mxu0 0
  %965 = vmatprep.subr.bf16.mxu0 0
  %966 = vmatpush2.bf16.msra.mxu0 0
  %967 = vmatprep.subr.bf16.mxu0 0
  %968 = vmatpush2.bf16.msra.mxu0 0
  %969 = vmatprep.subr.bf16.mxu0 0
  %970 = vmatpush2.bf16.msra.mxu0 0
  %971 = vmatprep.subr.bf16.mxu0 0
  %972 = vmatpush2.bf16.msra.mxu0 0
  %973 = vmatprep.mubr.bf16.mxu0 0
  %974 = vmatmul.mubr.bf16.gmra.mxu0 %v748
  %v975 = vpop.f32.mrf.mxu0
  %v976 = vadd.f32 0.0, %v975
  %v977 = vpop.f32.mrf.mxu0
  %v978 = vadd.f32 0.0, %v977
  %v979 = vpop.f32.mrf.mxu0
  %v980 = vadd.f32 0.0, %v979
  %v981 = vpop.f32.mrf.mxu0
  %v982 = vadd.f32 0.0, %v981
  %983 = vdwg.mxu0
  %984 = vmatprep.subr.bf16.mxu0 %v908
  %985 = vmatpush1.bf16.msra.mxu0 %v907
  %986 = vmatprep.subr.bf16.mxu0 %v904
  %987 = vmatpush1.bf16.msra.mxu0 %v903
  %988 = vmatprep.subr.bf16.mxu0 %v900
  %989 = vmatpush1.bf16.msra.mxu0 %v899
  %990 = vmatprep.subr.bf16.mxu0 %v896
  %991 = vmatpush1.bf16.msra.mxu0 %v895
  %992 = vmatprep.subr.bf16.mxu0 %v892
  %993 = vmatpush1.bf16.msra.mxu0 %v891
  %994 = vmatprep.subr.bf16.mxu0 %v888
  %995 = vmatpush1.bf16.msra.mxu0 %v887
  %996 = vmatprep.subr.bf16.mxu0 %v884
  %997 = vmatpush1.bf16.msra.mxu0 %v883
  %998 = vmatprep.subr.bf16.mxu0 %v880
  %999 = vmatpush1.bf16.msra.mxu0 %v879
  %1000 = vmatprep.subr.bf16.mxu0 0
  %1001 = vmatpush2.bf16.msra.mxu0 0
  %1002 = vmatprep.subr.bf16.mxu0 0
  %1003 = vmatpush2.bf16.msra.mxu0 0
  %1004 = vmatprep.subr.bf16.mxu0 0
  %1005 = vmatpush2.bf16.msra.mxu0 0
  %1006 = vmatprep.subr.bf16.mxu0 0
  %1007 = vmatpush2.bf16.msra.mxu0 0
  %1008 = vmatprep.subr.bf16.mxu0 0
  %1009 = vmatpush2.bf16.msra.mxu0 0
  %1010 = vmatprep.subr.bf16.mxu0 0
  %1011 = vmatpush2.bf16.msra.mxu0 0
  %1012 = vmatprep.subr.bf16.mxu0 0
  %1013 = vmatpush2.bf16.msra.mxu0 0
  %1014 = vmatprep.subr.bf16.mxu0 0
  %1015 = vmatpush2.bf16.msra.mxu0 0
  %1016 = vmatprep.mubr.bf16.mxu0 0
  %1017 = vmatmul.mubr.bf16.gmra.mxu0 %v748
  %v1018 = vpop.f32.mrf.mxu0
  %v1019 = vadd.f32 0.0, %v1018
  %v1020 = vpop.f32.mrf.mxu0
  %v1021 = vadd.f32 0.0, %v1020
  %v1022 = vpop.f32.mrf.mxu0
  %v1023 = vadd.f32 0.0, %v1022
  %v1024 = vpop.f32.mrf.mxu0
  %v1025 = vadd.f32 0.0, %v1024
  %1026 = vdwg.mxu0
  %v1027 = vadd.f32 %v738, %v976
  %v1028 = vadd.f32 %v739, %v978
  %v1029 = vadd.f32 %v740, %v1019
  %v1030 = vadd.f32 %v741, %v1021
  %v1031 = vadd.f32 %v742, %v980
  %v1032 = vadd.f32 %v743, %v982
  %v1033 = vadd.f32 %v744, %v1023
  %v1034 = vadd.f32 %v745, %v1025
  %v1035 = vxor.u32 %v1027, 2147483648
  %v1036 = vxor.u32 %v1031, 2147483648
  %v1037 = vmul.f32 %v1035, 1.442695
  %v1038 = vpow.pop %v1037
  %v1039 = vmul.f32 %v1036, 1.442695
  %v1040 = vpow.pop %v1039
  %v1041 = vadd.f32 %v1038, 1.0
  %v1042 = vadd.f32 %v1040, 1.0
  %v1043 = vrcp.pop %v1041
  %v1044 = vmul.f32 1.0, %v1043
  %v1045 = vrcp.pop %v1042
  %v1046 = vmul.f32 1.0, %v1045
  %v1047 = vxor.u32 %v1028, 2147483648
  %v1048 = vxor.u32 %v1032, 2147483648
  %v1049 = vmul.f32 %v1047, 1.442695
  %v1050 = vpow.pop %v1049
  %v1051 = vmul.f32 %v1048, 1.442695
  %v1052 = vpow.pop %v1051
  %v1053 = vadd.f32 %v1050, 1.0
  %v1054 = vadd.f32 %v1052, 1.0
  %v1055 = vrcp.pop %v1053
  %v1056 = vmul.f32 1.0, %v1055
  %v1057 = vrcp.pop %v1054
  %v1058 = vmul.f32 1.0, %v1057
  %v1059 = vtanh.pop %v1029
  %v1060 = vtanh.pop %v1033
  %v1061 = vxor.u32 %v1030, 2147483648
  %v1062 = vxor.u32 %v1034, 2147483648
  %v1063 = vmul.f32 %v1061, 1.442695
  %v1064 = vpow.pop %v1063
  %v1065 = vmul.f32 %v1062, 1.442695
  %v1066 = vpow.pop %v1065
  %v1067 = vadd.f32 %v1064, 1.0
  %v1068 = vadd.f32 %v1066, 1.0
  %v1069 = vrcp.pop %v1067
  %v1070 = vmul.f32 1.0, %v1069
  %v1071 = vrcp.pop %v1068
  %v1072 = vmul.f32 1.0, %v1071
  %v1073 = vld [vmem:[#allocation3] sm:$0xff]
  %v1074 = vld [vmem:[#allocation3 + $0x8] sm:$0xff]
  %v1075 = vmul.f32 %v1056, %v1073
  %v1076 = vmul.f32 %v1058, %v1074
  %v1077 = vmul.f32 %v1044, %v1059
  %v1078 = vmul.f32 %v1046, %v1060
  %v1079 = vadd.f32 %v1075, %v1077
  %v1080 = vadd.f32 %v1076, %v1078
  %v1081 = vtanh.pop %v1079
  %v1082 = vtanh.pop %v1080
  %v1083 = vmul.f32 %v1070, %v1081
  %v1084 = vmul.f32 %v1072, %v1082
  %1085 = vst [vmem:[#allocation3] sm:$0xff] %v1079
  %1086 = vst [vmem:[#allocation3 + $0x8] sm:$0xff] %v1080
  %1087 = vst [vmem:[#allocation2] sm:$0xff] %v1083
  %1088 = vst [vmem:[#allocation2 + $0x8] sm:$0xff] %v1084
  %s1089 = scalar_lea.vmem %s0, 96
  %v1090 = vld [vmem:[%s1089] sm:$0xff]
  %v1091 = vld [vmem:[%s1089 + $0x8] sm:$0xff]
  %v1092 = vld [vmem:[%s1089 + $0x10] sm:$0xff]
  %v1093 = vld [vmem:[%s1089 + $0x18] sm:$0xff]
  %v1094 = vunpack.c.l.bf16 %v1090
  %v1095 = vunpack.c.h.bf16 %v1090
  %v1096 = vunpack.c.l.bf16 %v1091
  %v1097 = vunpack.c.h.bf16 %v1091
  %v1098 = vunpack.c.l.bf16 %v1092
  %v1099 = vunpack.c.h.bf16 %v1092
  %v1100 = vunpack.c.l.bf16 %v1093
  %v1101 = vunpack.c.h.bf16 %v1093
  %v1102 = vld [vmem:[#allocation2] sm:$0xff]
  %v1103 = vld [vmem:[#allocation2 + $0x8] sm:$0xff]
  %v1104 = vpack.c.bf16 %v1103, %v1102
  %v1105 = vld [vmem:[%s2] sm:$0xff]
  %v1106 = vld [vmem:[%s2 + $0x8] sm:$0xff]
  %v1107 = vld [vmem:[%s2 + $0x10] sm:$0xff]
  %v1108 = vld [vmem:[%s2 + $0x18] sm:$0xff]
  %v1109 = vld [vmem:[%s2 + $0x20] sm:$0xff]
  %v1110 = vld [vmem:[%s2 + $0x28] sm:$0xff]
  %v1111 = vld [vmem:[%s2 + $0x30] sm:$0xff]
  %v1112 = vld [vmem:[%s2 + $0x38] sm:$0xff]
  %v1113 = vld [vmem:[%s2 + $0x40] sm:$0xff]
  %v1114 = vld [vmem:[%s2 + $0x48] sm:$0xff]
  %v1115 = vld [vmem:[%s2 + $0x50] sm:$0xff]
  %v1116 = vld [vmem:[%s2 + $0x58] sm:$0xff]
  %v1117 = vld [vmem:[%s2 + $0x60] sm:$0xff]
  %v1118 = vld [vmem:[%s2 + $0x68] sm:$0xff]
  %v1119 = vld [vmem:[%s2 + $0x70] sm:$0xff]
  %v1120 = vld [vmem:[%s2 + $0x78] sm:$0xff]
  %v1121 = vld [vmem:[%s2 + $0x80] sm:$0xff]
  %v1122 = vld [vmem:[%s2 + $0x88] sm:$0xff]
  %v1123 = vld [vmem:[%s2 + $0x90] sm:$0xff]
  %v1124 = vld [vmem:[%s2 + $0x98] sm:$0xff]
  %v1125 = vld [vmem:[%s2 + $0xa0] sm:$0xff]
  %v1126 = vld [vmem:[%s2 + $0xa8] sm:$0xff]
  %v1127 = vld [vmem:[%s2 + $0xb0] sm:$0xff]
  %v1128 = vld [vmem:[%s2 + $0xb8] sm:$0xff]
  %v1129 = vld [vmem:[%s2 + $0xc0] sm:$0xff]
  %v1130 = vld [vmem:[%s2 + $0xc8] sm:$0xff]
  %v1131 = vld [vmem:[%s2 + $0xd0] sm:$0xff]
  %v1132 = vld [vmem:[%s2 + $0xd8] sm:$0xff]
  %v1133 = vld [vmem:[%s2 + $0xe0] sm:$0xff]
  %v1134 = vld [vmem:[%s2 + $0xe8] sm:$0xff]
  %v1135 = vld [vmem:[%s2 + $0xf0] sm:$0xff]
  %v1136 = vld [vmem:[%s2 + $0xf8] sm:$0xff]
  %v1169 = vunpack.c.l.b16 %v1105
  %v1170 = vunpack.c.h.b16 %v1105
  %v1171 = vunpack.c.l.b16 %v1106
  %v1172 = vunpack.c.h.b16 %v1106
  %v1173 = vunpack.c.l.b16 %v1107
  %v1174 = vunpack.c.h.b16 %v1107
  %v1175 = vunpack.c.l.b16 %v1108
  %v1176 = vunpack.c.h.b16 %v1108
  %v1177 = vunpack.c.l.b16 %v1109
  %v1178 = vunpack.c.h.b16 %v1109
  %v1179 = vunpack.c.l.b16 %v1110
  %v1180 = vunpack.c.h.b16 %v1110
  %v1181 = vunpack.c.l.b16 %v1111
  %v1182 = vunpack.c.h.b16 %v1111
  %v1183 = vunpack.c.l.b16 %v1112
  %v1184 = vunpack.c.h.b16 %v1112
  %v1185 = vunpack.c.l.b16 %v1113
  %v1186 = vunpack.c.h.b16 %v1113
  %v1187 = vunpack.c.l.b16 %v1114
  %v1188 = vunpack.c.h.b16 %v1114
  %v1189 = vunpack.c.l.b16 %v1115
  %v1190 = vunpack.c.h.b16 %v1115
  %v1191 = vunpack.c.l.b16 %v1116
  %v1192 = vunpack.c.h.b16 %v1116
  %v1193 = vunpack.c.l.b16 %v1117
  %v1194 = vunpack.c.h.b16 %v1117
  %v1195 = vunpack.c.l.b16 %v1118
  %v1196 = vunpack.c.h.b16 %v1118
  %v1197 = vunpack.c.l.b16 %v1119
  %v1198 = vunpack.c.h.b16 %v1119
  %v1199 = vunpack.c.l.b16 %v1120
  %v1200 = vunpack.c.h.b16 %v1120
  %v1201 = vunpack.c.l.b16 %v1121
  %v1202 = vunpack.c.h.b16 %v1121
  %v1203 = vunpack.c.l.b16 %v1122
  %v1204 = vunpack.c.h.b16 %v1122
  %v1205 = vunpack.c.l.b16 %v1123
  %v1206 = vunpack.c.h.b16 %v1123
  %v1207 = vunpack.c.l.b16 %v1124
  %v1208 = vunpack.c.h.b16 %v1124
  %v1209 = vunpack.c.l.b16 %v1125
  %v1210 = vunpack.c.h.b16 %v1125
  %v1211 = vunpack.c.l.b16 %v1126
  %v1212 = vunpack.c.h.b16 %v1126
  %v1213 = vunpack.c.l.b16 %v1127
  %v1214 = vunpack.c.h.b16 %v1127
  %v1215 = vunpack.c.l.b16 %v1128
  %v1216 = vunpack.c.h.b16 %v1128
  %v1217 = vunpack.c.l.b16 %v1129
  %v1218 = vunpack.c.h.b16 %v1129
  %v1219 = vunpack.c.l.b16 %v1130
  %v1220 = vunpack.c.h.b16 %v1130
  %v1221 = vunpack.c.l.b16 %v1131
  %v1222 = vunpack.c.h.b16 %v1131
  %v1223 = vunpack.c.l.b16 %v1132
  %v1224 = vunpack.c.h.b16 %v1132
  %v1225 = vunpack.c.l.b16 %v1133
  %v1226 = vunpack.c.h.b16 %v1133
  %v1227 = vunpack.c.l.b16 %v1134
  %v1228 = vunpack.c.h.b16 %v1134
  %v1229 = vunpack.c.l.b16 %v1135
  %v1230 = vunpack.c.h.b16 %v1135
  %v1231 = vunpack.c.l.b16 %v1136
  %v1232 = vunpack.c.h.b16 %v1136
  %v1233 = vpack.c.b16 %v1173, %v1169
  %v1234 = vpack.c.b16 %v1174, %v1170
  %v1235 = vpack.c.b16 %v1175, %v1171
  %v1236 = vpack.c.b16 %v1176, %v1172
  %v1237 = vpack.c.b16 %v1181, %v1177
  %v1238 = vpack.c.b16 %v1182, %v1178
  %v1239 = vpack.c.b16 %v1183, %v1179
  %v1240 = vpack.c.b16 %v1184, %v1180
  %v1241 = vpack.c.b16 %v1189, %v1185
  %v1242 = vpack.c.b16 %v1190, %v1186
  %v1243 = vpack.c.b16 %v1191, %v1187
  %v1244 = vpack.c.b16 %v1192, %v1188
  %v1245 = vpack.c.b16 %v1197, %v1193
  %v1246 = vpack.c.b16 %v1198, %v1194
  %v1247 = vpack.c.b16 %v1199, %v1195
  %v1248 = vpack.c.b16 %v1200, %v1196
  %v1249 = vpack.c.b16 %v1205, %v1201
  %v1250 = vpack.c.b16 %v1206, %v1202
  %v1251 = vpack.c.b16 %v1207, %v1203
  %v1252 = vpack.c.b16 %v1208, %v1204
  %v1253 = vpack.c.b16 %v1213, %v1209
  %v1254 = vpack.c.b16 %v1214, %v1210
  %v1255 = vpack.c.b16 %v1215, %v1211
  %v1256 = vpack.c.b16 %v1216, %v1212
  %v1257 = vpack.c.b16 %v1221, %v1217
  %v1258 = vpack.c.b16 %v1222, %v1218
  %v1259 = vpack.c.b16 %v1223, %v1219
  %v1260 = vpack.c.b16 %v1224, %v1220
  %v1261 = vpack.c.b16 %v1229, %v1225
  %v1262 = vpack.c.b16 %v1230, %v1226
  %v1263 = vpack.c.b16 %v1231, %v1227
  %v1264 = vpack.c.b16 %v1232, %v1228
  %1297 = vmatprep.subr.bf16.mxu0 %v1262
  %1298 = vmatpush1.bf16.msra.mxu0 %v1261
  %1299 = vmatprep.subr.bf16.mxu0 %v1258
  %1300 = vmatpush1.bf16.msra.mxu0 %v1257
  %1301 = vmatprep.subr.bf16.mxu0 %v1254
  %1302 = vmatpush1.bf16.msra.mxu0 %v1253
  %1303 = vmatprep.subr.bf16.mxu0 %v1250
  %1304 = vmatpush1.bf16.msra.mxu0 %v1249
  %1305 = vmatprep.subr.bf16.mxu0 %v1246
  %1306 = vmatpush1.bf16.msra.mxu0 %v1245
  %1307 = vmatprep.subr.bf16.mxu0 %v1242
  %1308 = vmatpush1.bf16.msra.mxu0 %v1241
  %1309 = vmatprep.subr.bf16.mxu0 %v1238
  %1310 = vmatpush1.bf16.msra.mxu0 %v1237
  %1311 = vmatprep.subr.bf16.mxu0 %v1234
  %1312 = vmatpush1.bf16.msra.mxu0 %v1233
  %1313 = vmatprep.subr.bf16.mxu0 0
  %1314 = vmatpush2.bf16.msra.mxu0 0
  %1315 = vmatprep.subr.bf16.mxu0 0
  %1316 = vmatpush2.bf16.msra.mxu0 0
  %1317 = vmatprep.subr.bf16.mxu0 0
  %1318 = vmatpush2.bf16.msra.mxu0 0
  %1319 = vmatprep.subr.bf16.mxu0 0
  %1320 = vmatpush2.bf16.msra.mxu0 0
  %1321 = vmatprep.subr.bf16.mxu0 0
  %1322 = vmatpush2.bf16.msra.mxu0 0
  %1323 = vmatprep.subr.bf16.mxu0 0
  %1324 = vmatpush2.bf16.msra.mxu0 0
  %1325 = vmatprep.subr.bf16.mxu0 0
  %1326 = vmatpush2.bf16.msra.mxu0 0
  %1327 = vmatprep.subr.bf16.mxu0 0
  %1328 = vmatpush2.bf16.msra.mxu0 0
  %1329 = vmatprep.mubr.bf16.mxu0 0
  %1330 = vmatmul.mubr.bf16.gmra.mxu0 %v1104
  %v1331 = vpop.f32.mrf.mxu0
  %v1332 = vadd.f32 0.0, %v1331
  %v1333 = vpop.f32.mrf.mxu0
  %v1334 = vadd.f32 0.0, %v1333
  %v1335 = vpop.f32.mrf.mxu0
  %v1336 = vadd.f32 0.0, %v1335
  %v1337 = vpop.f32.mrf.mxu0
  %v1338 = vadd.f32 0.0, %v1337
  %1339 = vdwg.mxu0
  %1340 = vmatprep.subr.bf16.mxu0 %v1264
  %1341 = vmatpush1.bf16.msra.mxu0 %v1263
  %1342 = vmatprep.subr.bf16.mxu0 %v1260
  %1343 = vmatpush1.bf16.msra.mxu0 %v1259
  %1344 = vmatprep.subr.bf16.mxu0 %v1256
  %1345 = vmatpush1.bf16.msra.mxu0 %v1255
  %1346 = vmatprep.subr.bf16.mxu0 %v1252
  %1347 = vmatpush1.bf16.msra.mxu0 %v1251
  %1348 = vmatprep.subr.bf16.mxu0 %v1248
  %1349 = vmatpush1.bf16.msra.mxu0 %v1247
  %1350 = vmatprep.subr.bf16.mxu0 %v1244
  %1351 = vmatpush1.bf16.msra.mxu0 %v1243
  %1352 = vmatprep.subr.bf16.mxu0 %v1240
  %1353 = vmatpush1.bf16.msra.mxu0 %v1239
  %1354 = vmatprep.subr.bf16.mxu0 %v1236
  %1355 = vmatpush1.bf16.msra.mxu0 %v1235
  %1356 = vmatprep.subr.bf16.mxu0 0
  %1357 = vmatpush2.bf16.msra.mxu0 0
  %1358 = vmatprep.subr.bf16.mxu0 0
  %1359 = vmatpush2.bf16.msra.mxu0 0
  %1360 = vmatprep.subr.bf16.mxu0 0
  %1361 = vmatpush2.bf16.msra.mxu0 0
  %1362 = vmatprep.subr.bf16.mxu0 0
  %1363 = vmatpush2.bf16.msra.mxu0 0
  %1364 = vmatprep.subr.bf16.mxu0 0
  %1365 = vmatpush2.bf16.msra.mxu0 0
  %1366 = vmatprep.subr.bf16.mxu0 0
  %1367 = vmatpush2.bf16.msra.mxu0 0
  %1368 = vmatprep.subr.bf16.mxu0 0
  %1369 = vmatpush2.bf16.msra.mxu0 0
  %1370 = vmatprep.subr.bf16.mxu0 0
  %1371 = vmatpush2.bf16.msra.mxu0 0
  %1372 = vmatprep.mubr.bf16.mxu0 0
  %1373 = vmatmul.mubr.bf16.gmra.mxu0 %v1104
  %v1374 = vpop.f32.mrf.mxu0
  %v1375 = vadd.f32 0.0, %v1374
  %v1376 = vpop.f32.mrf.mxu0
  %v1377 = vadd.f32 0.0, %v1376
  %v1378 = vpop.f32.mrf.mxu0
  %v1379 = vadd.f32 0.0, %v1378
  %v1380 = vpop.f32.mrf.mxu0
  %v1381 = vadd.f32 0.0, %v1380
  %1382 = vdwg.mxu0
  %v1383 = vadd.f32 %v1094, %v1332
  %v1384 = vadd.f32 %v1095, %v1334
  %v1385 = vadd.f32 %v1096, %v1375
  %v1386 = vadd.f32 %v1097, %v1377
  %v1387 = vadd.f32 %v1098, %v1336
  %v1388 = vadd.f32 %v1099, %v1338
  %v1389 = vadd.f32 %v1100, %v1379
  %v1390 = vadd.f32 %v1101, %v1381
  %v1391 = vxor.u32 %v1383, 2147483648
  %v1392 = vxor.u32 %v1387, 2147483648
  %v1393 = vmul.f32 %v1391, 1.442695
  %v1394 = vpow.pop %v1393
  %v1395 = vmul.f32 %v1392, 1.442695
  %v1396 = vpow.pop %v1395
  %v1397 = vadd.f32 %v1394, 1.0
  %v1398 = vadd.f32 %v1396, 1.0
  %v1399 = vrcp.pop %v1397
  %v1400 = vmul.f32 1.0, %v1399
  %v1401 = vrcp.pop %v1398
  %v1402 = vmul.f32 1.0, %v1401
  %v1403 = vxor.u32 %v1384, 2147483648
  %v1404 = vxor.u32 %v1388, 2147483648
  %v1405 = vmul.f32 %v1403, 1.442695
  %v1406 = vpow.pop %v1405
  %v1407 = vmul.f32 %v1404, 1.442695
  %v1408 = vpow.pop %v1407
  %v1409 = vadd.f32 %v1406, 1.0
  %v1410 = vadd.f32 %v1408, 1.0
  %v1411 = vrcp.pop %v1409
  %v1412 = vmul.f32 1.0, %v1411
  %v1413 = vrcp.pop %v1410
  %v1414 = vmul.f32 1.0, %v1413
  %v1415 = vtanh.pop %v1385
  %v1416 = vtanh.pop %v1389
  %v1417 = vxor.u32 %v1386, 2147483648
  %v1418 = vxor.u32 %v1390, 2147483648
  %v1419 = vmul.f32 %v1417, 1.442695
  %v1420 = vpow.pop %v1419
  %v1421 = vmul.f32 %v1418, 1.442695
  %v1422 = vpow.pop %v1421
  %v1423 = vadd.f32 %v1420, 1.0
  %v1424 = vadd.f32 %v1422, 1.0
  %v1425 = vrcp.pop %v1423
  %v1426 = vmul.f32 1.0, %v1425
  %v1427 = vrcp.pop %v1424
  %v1428 = vmul.f32 1.0, %v1427
  %v1429 = vld [vmem:[#allocation3] sm:$0xff]
  %v1430 = vld [vmem:[#allocation3 + $0x8] sm:$0xff]
  %v1431 = vmul.f32 %v1412, %v1429
  %v1432 = vmul.f32 %v1414, %v1430
  %v1433 = vmul.f32 %v1400, %v1415
  %v1434 = vmul.f32 %v1402, %v1416
  %v1435 = vadd.f32 %v1431, %v1433
  %v1436 = vadd.f32 %v1432, %v1434
  %v1437 = vtanh.pop %v1435
  %v1438 = vtanh.pop %v1436
  %v1439 = vmul.f32 %v1426, %v1437
  %v1440 = vmul.f32 %v1428, %v1438
  %1441 = vst [vmem:[#allocation3] sm:$0xff] %v1435
  %1442 = vst [vmem:[#allocation3 + $0x8] sm:$0xff] %v1436
  %1443 = vst [vmem:[#allocation2] sm:$0xff] %v1439
  %1444 = vst [vmem:[#allocation2 + $0x8] sm:$0xff] %v1440
  %s1445 = scalar_lea.vmem %s0, 128
  %v1446 = vld [vmem:[%s1445] sm:$0xff]
  %v1447 = vld [vmem:[%s1445 + $0x8] sm:$0xff]
  %v1448 = vld [vmem:[%s1445 + $0x10] sm:$0xff]
  %v1449 = vld [vmem:[%s1445 + $0x18] sm:$0xff]
  %v1450 = vunpack.c.l.bf16 %v1446
  %v1451 = vunpack.c.h.bf16 %v1446
  %v1452 = vunpack.c.l.bf16 %v1447
  %v1453 = vunpack.c.h.bf16 %v1447
  %v1454 = vunpack.c.l.bf16 %v1448
  %v1455 = vunpack.c.h.bf16 %v1448
  %v1456 = vunpack.c.l.bf16 %v1449
  %v1457 = vunpack.c.h.bf16 %v1449
  %v1458 = vld [vmem:[#allocation2] sm:$0xff]
  %v1459 = vld [vmem:[#allocation2 + $0x8] sm:$0xff]
  %v1460 = vpack.c.bf16 %v1459, %v1458
  %v1461 = vld [vmem:[%s2] sm:$0xff]
  %v1462 = vld [vmem:[%s2 + $0x8] sm:$0xff]
  %v1463 = vld [vmem:[%s2 + $0x10] sm:$0xff]
  %v1464 = vld [vmem:[%s2 + $0x18] sm:$0xff]
  %v1465 = vld [vmem:[%s2 + $0x20] sm:$0xff]
  %v1466 = vld [vmem:[%s2 + $0x28] sm:$0xff]
  %v1467 = vld [vmem:[%s2 + $0x30] sm:$0xff]
  %v1468 = vld [vmem:[%s2 + $0x38] sm:$0xff]
  %v1469 = vld [vmem:[%s2 + $0x40] sm:$0xff]
  %v1470 = vld [vmem:[%s2 + $0x48] sm:$0xff]
  %v1471 = vld [vmem:[%s2 + $0x50] sm:$0xff]
  %v1472 = vld [vmem:[%s2 + $0x58] sm:$0xff]
  %v1473 = vld [vmem:[%s2 + $0x60] sm:$0xff]
  %v1474 = vld [vmem:[%s2 + $0x68] sm:$0xff]
  %v1475 = vld [vmem:[%s2 + $0x70] sm:$0xff]
  %v1476 = vld [vmem:[%s2 + $0x78] sm:$0xff]
  %v1477 = vld [vmem:[%s2 + $0x80] sm:$0xff]
  %v1478 = vld [vmem:[%s2 + $0x88] sm:$0xff]
  %v1479 = vld [vmem:[%s2 + $0x90] sm:$0xff]
  %v1480 = vld [vmem:[%s2 + $0x98] sm:$0xff]
  %v1481 = vld [vmem:[%s2 + $0xa0] sm:$0xff]
  %v1482 = vld [vmem:[%s2 + $0xa8] sm:$0xff]
  %v1483 = vld [vmem:[%s2 + $0xb0] sm:$0xff]
  %v1484 = vld [vmem:[%s2 + $0xb8] sm:$0xff]
  %v1485 = vld [vmem:[%s2 + $0xc0] sm:$0xff]
  %v1486 = vld [vmem:[%s2 + $0xc8] sm:$0xff]
  %v1487 = vld [vmem:[%s2 + $0xd0] sm:$0xff]
  %v1488 = vld [vmem:[%s2 + $0xd8] sm:$0xff]
  %v1489 = vld [vmem:[%s2 + $0xe0] sm:$0xff]
  %v1490 = vld [vmem:[%s2 + $0xe8] sm:$0xff]
  %v1491 = vld [vmem:[%s2 + $0xf0] sm:$0xff]
  %v1492 = vld [vmem:[%s2 + $0xf8] sm:$0xff]
  %v1525 = vunpack.c.l.b16 %v1461
  %v1526 = vunpack.c.h.b16 %v1461
  %v1527 = vunpack.c.l.b16 %v1462
  %v1528 = vunpack.c.h.b16 %v1462
  %v1529 = vunpack.c.l.b16 %v1463
  %v1530 = vunpack.c.h.b16 %v1463
  %v1531 = vunpack.c.l.b16 %v1464
  %v1532 = vunpack.c.h.b16 %v1464
  %v1533 = vunpack.c.l.b16 %v1465
  %v1534 = vunpack.c.h.b16 %v1465
  %v1535 = vunpack.c.l.b16 %v1466
  %v1536 = vunpack.c.h.b16 %v1466
  %v1537 = vunpack.c.l.b16 %v1467
  %v1538 = vunpack.c.h.b16 %v1467
  %v1539 = vunpack.c.l.b16 %v1468
  %v1540 = vunpack.c.h.b16 %v1468
  %v1541 = vunpack.c.l.b16 %v1469
  %v1542 = vunpack.c.h.b16 %v1469
  %v1543 = vunpack.c.l.b16 %v1470
  %v1544 = vunpack.c.h.b16 %v1470
  %v1545 = vunpack.c.l.b16 %v1471
  %v1546 = vunpack.c.h.b16 %v1471
  %v1547 = vunpack.c.l.b16 %v1472
  %v1548 = vunpack.c.h.b16 %v1472
  %v1549 = vunpack.c.l.b16 %v1473
  %v1550 = vunpack.c.h.b16 %v1473
  %v1551 = vunpack.c.l.b16 %v1474
  %v1552 = vunpack.c.h.b16 %v1474
  %v1553 = vunpack.c.l.b16 %v1475
  %v1554 = vunpack.c.h.b16 %v1475
  %v1555 = vunpack.c.l.b16 %v1476
  %v1556 = vunpack.c.h.b16 %v1476
  %v1557 = vunpack.c.l.b16 %v1477
  %v1558 = vunpack.c.h.b16 %v1477
  %v1559 = vunpack.c.l.b16 %v1478
  %v1560 = vunpack.c.h.b16 %v1478
  %v1561 = vunpack.c.l.b16 %v1479
  %v1562 = vunpack.c.h.b16 %v1479
  %v1563 = vunpack.c.l.b16 %v1480
  %v1564 = vunpack.c.h.b16 %v1480
  %v1565 = vunpack.c.l.b16 %v1481
  %v1566 = vunpack.c.h.b16 %v1481
  %v1567 = vunpack.c.l.b16 %v1482
  %v1568 = vunpack.c.h.b16 %v1482
  %v1569 = vunpack.c.l.b16 %v1483
  %v1570 = vunpack.c.h.b16 %v1483
  %v1571 = vunpack.c.l.b16 %v1484
  %v1572 = vunpack.c.h.b16 %v1484
  %v1573 = vunpack.c.l.b16 %v1485
  %v1574 = vunpack.c.h.b16 %v1485
  %v1575 = vunpack.c.l.b16 %v1486
  %v1576 = vunpack.c.h.b16 %v1486
  %v1577 = vunpack.c.l.b16 %v1487
  %v1578 = vunpack.c.h.b16 %v1487
  %v1579 = vunpack.c.l.b16 %v1488
  %v1580 = vunpack.c.h.b16 %v1488
  %v1581 = vunpack.c.l.b16 %v1489
  %v1582 = vunpack.c.h.b16 %v1489
  %v1583 = vunpack.c.l.b16 %v1490
  %v1584 = vunpack.c.h.b16 %v1490
  %v1585 = vunpack.c.l.b16 %v1491
  %v1586 = vunpack.c.h.b16 %v1491
  %v1587 = vunpack.c.l.b16 %v1492
  %v1588 = vunpack.c.h.b16 %v1492
  %v1589 = vpack.c.b16 %v1529, %v1525
  %v1590 = vpack.c.b16 %v1530, %v1526
  %v1591 = vpack.c.b16 %v1531, %v1527
  %v1592 = vpack.c.b16 %v1532, %v1528
  %v1593 = vpack.c.b16 %v1537, %v1533
  %v1594 = vpack.c.b16 %v1538, %v1534
  %v1595 = vpack.c.b16 %v1539, %v1535
  %v1596 = vpack.c.b16 %v1540, %v1536
  %v1597 = vpack.c.b16 %v1545, %v1541
  %v1598 = vpack.c.b16 %v1546, %v1542
  %v1599 = vpack.c.b16 %v1547, %v1543
  %v1600 = vpack.c.b16 %v1548, %v1544
  %v1601 = vpack.c.b16 %v1553, %v1549
  %v1602 = vpack.c.b16 %v1554, %v1550
  %v1603 = vpack.c.b16 %v1555, %v1551
  %v1604 = vpack.c.b16 %v1556, %v1552
  %v1605 = vpack.c.b16 %v1561, %v1557
  %v1606 = vpack.c.b16 %v1562, %v1558
  %v1607 = vpack.c.b16 %v1563, %v1559
  %v1608 = vpack.c.b16 %v1564, %v1560
  %v1609 = vpack.c.b16 %v1569, %v1565
  %v1610 = vpack.c.b16 %v1570, %v1566
  %v1611 = vpack.c.b16 %v1571, %v1567
  %v1612 = vpack.c.b16 %v1572, %v1568
  %v1613 = vpack.c.b16 %v1577, %v1573
  %v1614 = vpack.c.b16 %v1578, %v1574
  %v1615 = vpack.c.b16 %v1579, %v1575
  %v1616 = vpack.c.b16 %v1580, %v1576
  %v1617 = vpack.c.b16 %v1585, %v1581
  %v1618 = vpack.c.b16 %v1586, %v1582
  %v1619 = vpack.c.b16 %v1587, %v1583
  %v1620 = vpack.c.b16 %v1588, %v1584
  %1653 = vmatprep.subr.bf16.mxu0 %v1618
  %1654 = vmatpush1.bf16.msra.mxu0 %v1617
  %1655 = vmatprep.subr.bf16.mxu0 %v1614
  %1656 = vmatpush1.bf16.msra.mxu0 %v1613
  %1657 = vmatprep.subr.bf16.mxu0 %v1610
  %1658 = vmatpush1.bf16.msra.mxu0 %v1609
  %1659 = vmatprep.subr.bf16.mxu0 %v1606
  %1660 = vmatpush1.bf16.msra.mxu0 %v1605
  %1661 = vmatprep.subr.bf16.mxu0 %v1602
  %1662 = vmatpush1.bf16.msra.mxu0 %v1601
  %1663 = vmatprep.subr.bf16.mxu0 %v1598
  %1664 = vmatpush1.bf16.msra.mxu0 %v1597
  %1665 = vmatprep.subr.bf16.mxu0 %v1594
  %1666 = vmatpush1.bf16.msra.mxu0 %v1593
  %1667 = vmatprep.subr.bf16.mxu0 %v1590
  %1668 = vmatpush1.bf16.msra.mxu0 %v1589
  %1669 = vmatprep.subr.bf16.mxu0 0
  %1670 = vmatpush2.bf16.msra.mxu0 0
  %1671 = vmatprep.subr.bf16.mxu0 0
  %1672 = vmatpush2.bf16.msra.mxu0 0
  %1673 = vmatprep.subr.bf16.mxu0 0
  %1674 = vmatpush2.bf16.msra.mxu0 0
  %1675 = vmatprep.subr.bf16.mxu0 0
  %1676 = vmatpush2.bf16.msra.mxu0 0
  %1677 = vmatprep.subr.bf16.mxu0 0
  %1678 = vmatpush2.bf16.msra.mxu0 0
  %1679 = vmatprep.subr.bf16.mxu0 0
  %1680 = vmatpush2.bf16.msra.mxu0 0
  %1681 = vmatprep.subr.bf16.mxu0 0
  %1682 = vmatpush2.bf16.msra.mxu0 0
  %1683 = vmatprep.subr.bf16.mxu0 0
  %1684 = vmatpush2.bf16.msra.mxu0 0
  %1685 = vmatprep.mubr.bf16.mxu0 0
  %1686 = vmatmul.mubr.bf16.gmra.mxu0 %v1460
  %v1687 = vpop.f32.mrf.mxu0
  %v1688 = vadd.f32 0.0, %v1687
  %v1689 = vpop.f32.mrf.mxu0
  %v1690 = vadd.f32 0.0, %v1689
  %v1691 = vpop.f32.mrf.mxu0
  %v1692 = vadd.f32 0.0, %v1691
  %v1693 = vpop.f32.mrf.mxu0
  %v1694 = vadd.f32 0.0, %v1693
  %1695 = vdwg.mxu0
  %1696 = vmatprep.subr.bf16.mxu0 %v1620
  %1697 = vmatpush1.bf16.msra.mxu0 %v1619
  %1698 = vmatprep.subr.bf16.mxu0 %v1616
  %1699 = vmatpush1.bf16.msra.mxu0 %v1615
  %1700 = vmatprep.subr.bf16.mxu0 %v1612
  %1701 = vmatpush1.bf16.msra.mxu0 %v1611
  %1702 = vmatprep.subr.bf16.mxu0 %v1608
  %1703 = vmatpush1.bf16.msra.mxu0 %v1607
  %1704 = vmatprep.subr.bf16.mxu0 %v1604
  %1705 = vmatpush1.bf16.msra.mxu0 %v1603
  %1706 = vmatprep.subr.bf16.mxu0 %v1600
  %1707 = vmatpush1.bf16.msra.mxu0 %v1599
  %1708 = vmatprep.subr.bf16.mxu0 %v1596
  %1709 = vmatpush1.bf16.msra.mxu0 %v1595
  %1710 = vmatprep.subr.bf16.mxu0 %v1592
  %1711 = vmatpush1.bf16.msra.mxu0 %v1591
  %1712 = vmatprep.subr.bf16.mxu0 0
  %1713 = vmatpush2.bf16.msra.mxu0 0
  %1714 = vmatprep.subr.bf16.mxu0 0
  %1715 = vmatpush2.bf16.msra.mxu0 0
  %1716 = vmatprep.subr.bf16.mxu0 0
  %1717 = vmatpush2.bf16.msra.mxu0 0
  %1718 = vmatprep.subr.bf16.mxu0 0
  %1719 = vmatpush2.bf16.msra.mxu0 0
  %1720 = vmatprep.subr.bf16.mxu0 0
  %1721 = vmatpush2.bf16.msra.mxu0 0
  %1722 = vmatprep.subr.bf16.mxu0 0
  %1723 = vmatpush2.bf16.msra.mxu0 0
  %1724 = vmatprep.subr.bf16.mxu0 0
  %1725 = vmatpush2.bf16.msra.mxu0 0
  %1726 = vmatprep.subr.bf16.mxu0 0
  %1727 = vmatpush2.bf16.msra.mxu0 0
  %1728 = vmatprep.mubr.bf16.mxu0 0
  %1729 = vmatmul.mubr.bf16.gmra.mxu0 %v1460
  %v1730 = vpop.f32.mrf.mxu0
  %v1731 = vadd.f32 0.0, %v1730
  %v1732 = vpop.f32.mrf.mxu0
  %v1733 = vadd.f32 0.0, %v1732
  %v1734 = vpop.f32.mrf.mxu0
  %v1735 = vadd.f32 0.0, %v1734
  %v1736 = vpop.f32.mrf.mxu0
  %v1737 = vadd.f32 0.0, %v1736
  %1738 = vdwg.mxu0
  %v1739 = vadd.f32 %v1450, %v1688
  %v1740 = vadd.f32 %v1451, %v1690
  %v1741 = vadd.f32 %v1452, %v1731
  %v1742 = vadd.f32 %v1453, %v1733
  %v1743 = vadd.f32 %v1454, %v1692
  %v1744 = vadd.f32 %v1455, %v1694
  %v1745 = vadd.f32 %v1456, %v1735
  %v1746 = vadd.f32 %v1457, %v1737
  %v1747 = vxor.u32 %v1739, 2147483648
  %v1748 = vxor.u32 %v1743, 2147483648
  %v1749 = vmul.f32 %v1747, 1.442695
  %v1750 = vpow.pop %v1749
  %v1751 = vmul.f32 %v1748, 1.442695
  %v1752 = vpow.pop %v1751
  %v1753 = vadd.f32 %v1750, 1.0
  %v1754 = vadd.f32 %v1752, 1.0
  %v1755 = vrcp.pop %v1753
  %v1756 = vmul.f32 1.0, %v1755
  %v1757 = vrcp.pop %v1754
  %v1758 = vmul.f32 1.0, %v1757
  %v1759 = vxor.u32 %v1740, 2147483648
  %v1760 = vxor.u32 %v1744, 2147483648
  %v1761 = vmul.f32 %v1759, 1.442695
  %v1762 = vpow.pop %v1761
  %v1763 = vmul.f32 %v1760, 1.442695
  %v1764 = vpow.pop %v1763
  %v1765 = vadd.f32 %v1762, 1.0
  %v1766 = vadd.f32 %v1764, 1.0
  %v1767 = vrcp.pop %v1765
  %v1768 = vmul.f32 1.0, %v1767
  %v1769 = vrcp.pop %v1766
  %v1770 = vmul.f32 1.0, %v1769
  %v1771 = vtanh.pop %v1741
  %v1772 = vtanh.pop %v1745
  %v1773 = vxor.u32 %v1742, 2147483648
  %v1774 = vxor.u32 %v1746, 2147483648
  %v1775 = vmul.f32 %v1773, 1.442695
  %v1776 = vpow.pop %v1775
  %v1777 = vmul.f32 %v1774, 1.442695
  %v1778 = vpow.pop %v1777
  %v1779 = vadd.f32 %v1776, 1.0
  %v1780 = vadd.f32 %v1778, 1.0
  %v1781 = vrcp.pop %v1779
  %v1782 = vmul.f32 1.0, %v1781
  %v1783 = vrcp.pop %v1780
  %v1784 = vmul.f32 1.0, %v1783
  %v1785 = vld [vmem:[#allocation3] sm:$0xff]
  %v1786 = vld [vmem:[#allocation3 + $0x8] sm:$0xff]
  %v1787 = vmul.f32 %v1768, %v1785
  %v1788 = vmul.f32 %v1770, %v1786
  %v1789 = vmul.f32 %v1756, %v1771
  %v1790 = vmul.f32 %v1758, %v1772
  %v1791 = vadd.f32 %v1787, %v1789
  %v1792 = vadd.f32 %v1788, %v1790
  %v1793 = vtanh.pop %v1791
  %v1794 = vtanh.pop %v1792
  %v1795 = vmul.f32 %v1782, %v1793
  %v1796 = vmul.f32 %v1784, %v1794
  %1797 = vst [vmem:[#allocation3] sm:$0xff] %v1791
  %1798 = vst [vmem:[#allocation3 + $0x8] sm:$0xff] %v1792
  %1799 = vst [vmem:[#allocation2] sm:$0xff] %v1795
  %1800 = vst [vmem:[#allocation2 + $0x8] sm:$0xff] %v1796
  %s1801 = scalar_lea.vmem %s0, 160
  %v1802 = vld [vmem:[%s1801] sm:$0xff]
  %v1803 = vld [vmem:[%s1801 + $0x8] sm:$0xff]
  %v1804 = vld [vmem:[%s1801 + $0x10] sm:$0xff]
  %v1805 = vld [vmem:[%s1801 + $0x18] sm:$0xff]
  %v1806 = vunpack.c.l.bf16 %v1802
  %v1807 = vunpack.c.h.bf16 %v1802
  %v1808 = vunpack.c.l.bf16 %v1803
  %v1809 = vunpack.c.h.bf16 %v1803
  %v1810 = vunpack.c.l.bf16 %v1804
  %v1811 = vunpack.c.h.bf16 %v1804
  %v1812 = vunpack.c.l.bf16 %v1805
  %v1813 = vunpack.c.h.bf16 %v1805
  %v1814 = vld [vmem:[#allocation2] sm:$0xff]
  %v1815 = vld [vmem:[#allocation2 + $0x8] sm:$0xff]
  %v1816 = vpack.c.bf16 %v1815, %v1814
  %v1817 = vld [vmem:[%s2] sm:$0xff]
  %v1818 = vld [vmem:[%s2 + $0x8] sm:$0xff]
  %v1819 = vld [vmem:[%s2 + $0x10] sm:$0xff]
  %v1820 = vld [vmem:[%s2 + $0x18] sm:$0xff]
  %v1821 = vld [vmem:[%s2 + $0x20] sm:$0xff]
  %v1822 = vld [vmem:[%s2 + $0x28] sm:$0xff]
  %v1823 = vld [vmem:[%s2 + $0x30] sm:$0xff]
  %v1824 = vld [vmem:[%s2 + $0x38] sm:$0xff]
  %v1825 = vld [vmem:[%s2 + $0x40] sm:$0xff]
  %v1826 = vld [vmem:[%s2 + $0x48] sm:$0xff]
  %v1827 = vld [vmem:[%s2 + $0x50] sm:$0xff]
  %v1828 = vld [vmem:[%s2 + $0x58] sm:$0xff]
  %v1829 = vld [vmem:[%s2 + $0x60] sm:$0xff]
  %v1830 = vld [vmem:[%s2 + $0x68] sm:$0xff]
  %v1831 = vld [vmem:[%s2 + $0x70] sm:$0xff]
  %v1832 = vld [vmem:[%s2 + $0x78] sm:$0xff]
  %v1833 = vld [vmem:[%s2 + $0x80] sm:$0xff]
  %v1834 = vld [vmem:[%s2 + $0x88] sm:$0xff]
  %v1835 = vld [vmem:[%s2 + $0x90] sm:$0xff]
  %v1836 = vld [vmem:[%s2 + $0x98] sm:$0xff]
  %v1837 = vld [vmem:[%s2 + $0xa0] sm:$0xff]
  %v1838 = vld [vmem:[%s2 + $0xa8] sm:$0xff]
  %v1839 = vld [vmem:[%s2 + $0xb0] sm:$0xff]
  %v1840 = vld [vmem:[%s2 + $0xb8] sm:$0xff]
  %v1841 = vld [vmem:[%s2 + $0xc0] sm:$0xff]
  %v1842 = vld [vmem:[%s2 + $0xc8] sm:$0xff]
  %v1843 = vld [vmem:[%s2 + $0xd0] sm:$0xff]
  %v1844 = vld [vmem:[%s2 + $0xd8] sm:$0xff]
  %v1845 = vld [vmem:[%s2 + $0xe0] sm:$0xff]
  %v1846 = vld [vmem:[%s2 + $0xe8] sm:$0xff]
  %v1847 = vld [vmem:[%s2 + $0xf0] sm:$0xff]
  %v1848 = vld [vmem:[%s2 + $0xf8] sm:$0xff]
  %v1881 = vunpack.c.l.b16 %v1817
  %v1882 = vunpack.c.h.b16 %v1817
  %v1883 = vunpack.c.l.b16 %v1818
  %v1884 = vunpack.c.h.b16 %v1818
  %v1885 = vunpack.c.l.b16 %v1819
  %v1886 = vunpack.c.h.b16 %v1819
  %v1887 = vunpack.c.l.b16 %v1820
  %v1888 = vunpack.c.h.b16 %v1820
  %v1889 = vunpack.c.l.b16 %v1821
  %v1890 = vunpack.c.h.b16 %v1821
  %v1891 = vunpack.c.l.b16 %v1822
  %v1892 = vunpack.c.h.b16 %v1822
  %v1893 = vunpack.c.l.b16 %v1823
  %v1894 = vunpack.c.h.b16 %v1823
  %v1895 = vunpack.c.l.b16 %v1824
  %v1896 = vunpack.c.h.b16 %v1824
  %v1897 = vunpack.c.l.b16 %v1825
  %v1898 = vunpack.c.h.b16 %v1825
  %v1899 = vunpack.c.l.b16 %v1826
  %v1900 = vunpack.c.h.b16 %v1826
  %v1901 = vunpack.c.l.b16 %v1827
  %v1902 = vunpack.c.h.b16 %v1827
  %v1903 = vunpack.c.l.b16 %v1828
  %v1904 = vunpack.c.h.b16 %v1828
  %v1905 = vunpack.c.l.b16 %v1829
  %v1906 = vunpack.c.h.b16 %v1829
  %v1907 = vunpack.c.l.b16 %v1830
  %v1908 = vunpack.c.h.b16 %v1830
  %v1909 = vunpack.c.l.b16 %v1831
  %v1910 = vunpack.c.h.b16 %v1831
  %v1911 = vunpack.c.l.b16 %v1832
  %v1912 = vunpack.c.h.b16 %v1832
  %v1913 = vunpack.c.l.b16 %v1833
  %v1914 = vunpack.c.h.b16 %v1833
  %v1915 = vunpack.c.l.b16 %v1834
  %v1916 = vunpack.c.h.b16 %v1834
  %v1917 = vunpack.c.l.b16 %v1835
  %v1918 = vunpack.c.h.b16 %v1835
  %v1919 = vunpack.c.l.b16 %v1836
  %v1920 = vunpack.c.h.b16 %v1836
  %v1921 = vunpack.c.l.b16 %v1837
  %v1922 = vunpack.c.h.b16 %v1837
  %v1923 = vunpack.c.l.b16 %v1838
  %v1924 = vunpack.c.h.b16 %v1838
  %v1925 = vunpack.c.l.b16 %v1839
  %v1926 = vunpack.c.h.b16 %v1839
  %v1927 = vunpack.c.l.b16 %v1840
  %v1928 = vunpack.c.h.b16 %v1840
  %v1929 = vunpack.c.l.b16 %v1841
  %v1930 = vunpack.c.h.b16 %v1841
  %v1931 = vunpack.c.l.b16 %v1842
  %v1932 = vunpack.c.h.b16 %v1842
  %v1933 = vunpack.c.l.b16 %v1843
  %v1934 = vunpack.c.h.b16 %v1843
  %v1935 = vunpack.c.l.b16 %v1844
  %v1936 = vunpack.c.h.b16 %v1844
  %v1937 = vunpack.c.l.b16 %v1845
  %v1938 = vunpack.c.h.b16 %v1845
  %v1939 = vunpack.c.l.b16 %v1846
  %v1940 = vunpack.c.h.b16 %v1846
  %v1941 = vunpack.c.l.b16 %v1847
  %v1942 = vunpack.c.h.b16 %v1847
  %v1943 = vunpack.c.l.b16 %v1848
  %v1944 = vunpack.c.h.b16 %v1848
  %v1945 = vpack.c.b16 %v1885, %v1881
  %v1946 = vpack.c.b16 %v1886, %v1882
  %v1947 = vpack.c.b16 %v1887, %v1883
  %v1948 = vpack.c.b16 %v1888, %v1884
  %v1949 = vpack.c.b16 %v1893, %v1889
  %v1950 = vpack.c.b16 %v1894, %v1890
  %v1951 = vpack.c.b16 %v1895, %v1891
  %v1952 = vpack.c.b16 %v1896, %v1892
  %v1953 = vpack.c.b16 %v1901, %v1897
  %v1954 = vpack.c.b16 %v1902, %v1898
  %v1955 = vpack.c.b16 %v1903, %v1899
  %v1956 = vpack.c.b16 %v1904, %v1900
  %v1957 = vpack.c.b16 %v1909, %v1905
  %v1958 = vpack.c.b16 %v1910, %v1906
  %v1959 = vpack.c.b16 %v1911, %v1907
  %v1960 = vpack.c.b16 %v1912, %v1908
  %v1961 = vpack.c.b16 %v1917, %v1913
  %v1962 = vpack.c.b16 %v1918, %v1914
  %v1963 = vpack.c.b16 %v1919, %v1915
  %v1964 = vpack.c.b16 %v1920, %v1916
  %v1965 = vpack.c.b16 %v1925, %v1921
  %v1966 = vpack.c.b16 %v1926, %v1922
  %v1967 = vpack.c.b16 %v1927, %v1923
  %v1968 = vpack.c.b16 %v1928, %v1924
  %v1969 = vpack.c.b16 %v1933, %v1929
  %v1970 = vpack.c.b16 %v1934, %v1930
  %v1971 = vpack.c.b16 %v1935, %v1931
  %v1972 = vpack.c.b16 %v1936, %v1932
  %v1973 = vpack.c.b16 %v1941, %v1937
  %v1974 = vpack.c.b16 %v1942, %v1938
  %v1975 = vpack.c.b16 %v1943, %v1939
  %v1976 = vpack.c.b16 %v1944, %v1940
  %2009 = vmatprep.subr.bf16.mxu0 %v1974
  %2010 = vmatpush1.bf16.msra.mxu0 %v1973
  %2011 = vmatprep.subr.bf16.mxu0 %v1970
  %2012 = vmatpush1.bf16.msra.mxu0 %v1969
  %2013 = vmatprep.subr.bf16.mxu0 %v1966
  %2014 = vmatpush1.bf16.msra.mxu0 %v1965
  %2015 = vmatprep.subr.bf16.mxu0 %v1962
  %2016 = vmatpush1.bf16.msra.mxu0 %v1961
  %2017 = vmatprep.subr.bf16.mxu0 %v1958
  %2018 = vmatpush1.bf16.msra.mxu0 %v1957
  %2019 = vmatprep.subr.bf16.mxu0 %v1954
  %2020 = vmatpush1.bf16.msra.mxu0 %v1953
  %2021 = vmatprep.subr.bf16.mxu0 %v1950
  %2022 = vmatpush1.bf16.msra.mxu0 %v1949
  %2023 = vmatprep.subr.bf16.mxu0 %v1946
  %2024 = vmatpush1.bf16.msra.mxu0 %v1945
  %2025 = vmatprep.subr.bf16.mxu0 0
  %2026 = vmatpush2.bf16.msra.mxu0 0
  %2027 = vmatprep.subr.bf16.mxu0 0
  %2028 = vmatpush2.bf16.msra.mxu0 0
  %2029 = vmatprep.subr.bf16.mxu0 0
  %2030 = vmatpush2.bf16.msra.mxu0 0
  %2031 = vmatprep.subr.bf16.mxu0 0
  %2032 = vmatpush2.bf16.msra.mxu0 0
  %2033 = vmatprep.subr.bf16.mxu0 0
  %2034 = vmatpush2.bf16.msra.mxu0 0
  %2035 = vmatprep.subr.bf16.mxu0 0
  %2036 = vmatpush2.bf16.msra.mxu0 0
  %2037 = vmatprep.subr.bf16.mxu0 0
  %2038 = vmatpush2.bf16.msra.mxu0 0
  %2039 = vmatprep.subr.bf16.mxu0 0
  %2040 = vmatpush2.bf16.msra.mxu0 0
  %2041 = vmatprep.mubr.bf16.mxu0 0
  %2042 = vmatmul.mubr.bf16.gmra.mxu0 %v1816
  %v2043 = vpop.f32.mrf.mxu0
  %v2044 = vadd.f32 0.0, %v2043
  %v2045 = vpop.f32.mrf.mxu0
  %v2046 = vadd.f32 0.0, %v2045
  %v2047 = vpop.f32.mrf.mxu0
  %v2048 = vadd.f32 0.0, %v2047
  %v2049 = vpop.f32.mrf.mxu0
  %v2050 = vadd.f32 0.0, %v2049
  %2051 = vdwg.mxu0
  %2052 = vmatprep.subr.bf16.mxu0 %v1976
  %2053 = vmatpush1.bf16.msra.mxu0 %v1975
  %2054 = vmatprep.subr.bf16.mxu0 %v1972
  %2055 = vmatpush1.bf16.msra.mxu0 %v1971
  %2056 = vmatprep.subr.bf16.mxu0 %v1968
  %2057 = vmatpush1.bf16.msra.mxu0 %v1967
  %2058 = vmatprep.subr.bf16.mxu0 %v1964
  %2059 = vmatpush1.bf16.msra.mxu0 %v1963
  %2060 = vmatprep.subr.bf16.mxu0 %v1960
  %2061 = vmatpush1.bf16.msra.mxu0 %v1959
  %2062 = vmatprep.subr.bf16.mxu0 %v1956
  %2063 = vmatpush1.bf16.msra.mxu0 %v1955
  %2064 = vmatprep.subr.bf16.mxu0 %v1952
  %2065 = vmatpush1.bf16.msra.mxu0 %v1951
  %2066 = vmatprep.subr.bf16.mxu0 %v1948
  %2067 = vmatpush1.bf16.msra.mxu0 %v1947
  %2068 = vmatprep.subr.bf16.mxu0 0
  %2069 = vmatpush2.bf16.msra.mxu0 0
  %2070 = vmatprep.subr.bf16.mxu0 0
  %2071 = vmatpush2.bf16.msra.mxu0 0
  %2072 = vmatprep.subr.bf16.mxu0 0
  %2073 = vmatpush2.bf16.msra.mxu0 0
  %2074 = vmatprep.subr.bf16.mxu0 0
  %2075 = vmatpush2.bf16.msra.mxu0 0
  %2076 = vmatprep.subr.bf16.mxu0 0
  %2077 = vmatpush2.bf16.msra.mxu0 0
  %2078 = vmatprep.subr.bf16.mxu0 0
  %2079 = vmatpush2.bf16.msra.mxu0 0
  %2080 = vmatprep.subr.bf16.mxu0 0
  %2081 = vmatpush2.bf16.msra.mxu0 0
  %2082 = vmatprep.subr.bf16.mxu0 0
  %2083 = vmatpush2.bf16.msra.mxu0 0
  %2084 = vmatprep.mubr.bf16.mxu0 0
  %2085 = vmatmul.mubr.bf16.gmra.mxu0 %v1816
  %v2086 = vpop.f32.mrf.mxu0
  %v2087 = vadd.f32 0.0, %v2086
  %v2088 = vpop.f32.mrf.mxu0
  %v2089 = vadd.f32 0.0, %v2088
  %v2090 = vpop.f32.mrf.mxu0
  %v2091 = vadd.f32 0.0, %v2090
  %v2092 = vpop.f32.mrf.mxu0
  %v2093 = vadd.f32 0.0, %v2092
  %2094 = vdwg.mxu0
  %v2095 = vadd.f32 %v1806, %v2044
  %v2096 = vadd.f32 %v1807, %v2046
  %v2097 = vadd.f32 %v1808, %v2087
  %v2098 = vadd.f32 %v1809, %v2089
  %v2099 = vadd.f32 %v1810, %v2048
  %v2100 = vadd.f32 %v1811, %v2050
  %v2101 = vadd.f32 %v1812, %v2091
  %v2102 = vadd.f32 %v1813, %v2093
  %v2103 = vxor.u32 %v2095, 2147483648
  %v2104 = vxor.u32 %v2099, 2147483648
  %v2105 = vmul.f32 %v2103, 1.442695
  %v2106 = vpow.pop %v2105
  %v2107 = vmul.f32 %v2104, 1.442695
  %v2108 = vpow.pop %v2107
  %v2109 = vadd.f32 %v2106, 1.0
  %v2110 = vadd.f32 %v2108, 1.0
  %v2111 = vrcp.pop %v2109
  %v2112 = vmul.f32 1.0, %v2111
  %v2113 = vrcp.pop %v2110
  %v2114 = vmul.f32 1.0, %v2113
  %v2115 = vxor.u32 %v2096, 2147483648
  %v2116 = vxor.u32 %v2100, 2147483648
  %v2117 = vmul.f32 %v2115, 1.442695
  %v2118 = vpow.pop %v2117
  %v2119 = vmul.f32 %v2116, 1.442695
  %v2120 = vpow.pop %v2119
  %v2121 = vadd.f32 %v2118, 1.0
  %v2122 = vadd.f32 %v2120, 1.0
  %v2123 = vrcp.pop %v2121
  %v2124 = vmul.f32 1.0, %v2123
  %v2125 = vrcp.pop %v2122
  %v2126 = vmul.f32 1.0, %v2125
  %v2127 = vtanh.pop %v2097
  %v2128 = vtanh.pop %v2101
  %v2129 = vxor.u32 %v2098, 2147483648
  %v2130 = vxor.u32 %v2102, 2147483648
  %v2131 = vmul.f32 %v2129, 1.442695
  %v2132 = vpow.pop %v2131
  %v2133 = vmul.f32 %v2130, 1.442695
  %v2134 = vpow.pop %v2133
  %v2135 = vadd.f32 %v2132, 1.0
  %v2136 = vadd.f32 %v2134, 1.0
  %v2137 = vrcp.pop %v2135
  %v2138 = vmul.f32 1.0, %v2137
  %v2139 = vrcp.pop %v2136
  %v2140 = vmul.f32 1.0, %v2139
  %v2141 = vld [vmem:[#allocation3] sm:$0xff]
  %v2142 = vld [vmem:[#allocation3 + $0x8] sm:$0xff]
  %v2143 = vmul.f32 %v2124, %v2141
  %v2144 = vmul.f32 %v2126, %v2142
  %v2145 = vmul.f32 %v2112, %v2127
  %v2146 = vmul.f32 %v2114, %v2128
  %v2147 = vadd.f32 %v2143, %v2145
  %v2148 = vadd.f32 %v2144, %v2146
  %v2149 = vtanh.pop %v2147
  %v2150 = vtanh.pop %v2148
  %v2151 = vmul.f32 %v2138, %v2149
  %v2152 = vmul.f32 %v2140, %v2150
  %2153 = vst [vmem:[#allocation3] sm:$0xff] %v2147
  %2154 = vst [vmem:[#allocation3 + $0x8] sm:$0xff] %v2148
  %2155 = vst [vmem:[#allocation2] sm:$0xff] %v2151
  %2156 = vst [vmem:[#allocation2 + $0x8] sm:$0xff] %v2152
  %s2157 = scalar_lea.vmem %s0, 192
  %v2158 = vld [vmem:[%s2157] sm:$0xff]
  %v2159 = vld [vmem:[%s2157 + $0x8] sm:$0xff]
  %v2160 = vld [vmem:[%s2157 + $0x10] sm:$0xff]
  %v2161 = vld [vmem:[%s2157 + $0x18] sm:$0xff]
  %v2162 = vunpack.c.l.bf16 %v2158
  %v2163 = vunpack.c.h.bf16 %v2158
  %v2164 = vunpack.c.l.bf16 %v2159
  %v2165 = vunpack.c.h.bf16 %v2159
  %v2166 = vunpack.c.l.bf16 %v2160
  %v2167 = vunpack.c.h.bf16 %v2160
  %v2168 = vunpack.c.l.bf16 %v2161
  %v2169 = vunpack.c.h.bf16 %v2161
  %v2170 = vld [vmem:[#allocation2] sm:$0xff]
  %v2171 = vld [vmem:[#allocation2 + $0x8] sm:$0xff]
  %v2172 = vpack.c.bf16 %v2171, %v2170
  %v2173 = vld [vmem:[%s2] sm:$0xff]
  %v2174 = vld [vmem:[%s2 + $0x8] sm:$0xff]
  %v2175 = vld [vmem:[%s2 + $0x10] sm:$0xff]
  %v2176 = vld [vmem:[%s2 + $0x18] sm:$0xff]
  %v2177 = vld [vmem:[%s2 + $0x20] sm:$0xff]
  %v2178 = vld [vmem:[%s2 + $0x28] sm:$0xff]
  %v2179 = vld [vmem:[%s2 + $0x30] sm:$0xff]
  %v2180 = vld [vmem:[%s2 + $0x38] sm:$0xff]
  %v2181 = vld [vmem:[%s2 + $0x40] sm:$0xff]
  %v2182 = vld [vmem:[%s2 + $0x48] sm:$0xff]
  %v2183 = vld [vmem:[%s2 + $0x50] sm:$0xff]
  %v2184 = vld [vmem:[%s2 + $0x58] sm:$0xff]
  %v2185 = vld [vmem:[%s2 + $0x60] sm:$0xff]
  %v2186 = vld [vmem:[%s2 + $0x68] sm:$0xff]
  %v2187 = vld [vmem:[%s2 + $0x70] sm:$0xff]
  %v2188 = vld [vmem:[%s2 + $0x78] sm:$0xff]
  %v2189 = vld [vmem:[%s2 + $0x80] sm:$0xff]
  %v2190 = vld [vmem:[%s2 + $0x88] sm:$0xff]
  %v2191 = vld [vmem:[%s2 + $0x90] sm:$0xff]
  %v2192 = vld [vmem:[%s2 + $0x98] sm:$0xff]
  %v2193 = vld [vmem:[%s2 + $0xa0] sm:$0xff]
  %v2194 = vld [vmem:[%s2 + $0xa8] sm:$0xff]
  %v2195 = vld [vmem:[%s2 + $0xb0] sm:$0xff]
  %v2196 = vld [vmem:[%s2 + $0xb8] sm:$0xff]
  %v2197 = vld [vmem:[%s2 + $0xc0] sm:$0xff]
  %v2198 = vld [vmem:[%s2 + $0xc8] sm:$0xff]
  %v2199 = vld [vmem:[%s2 + $0xd0] sm:$0xff]
  %v2200 = vld [vmem:[%s2 + $0xd8] sm:$0xff]
  %v2201 = vld [vmem:[%s2 + $0xe0] sm:$0xff]
  %v2202 = vld [vmem:[%s2 + $0xe8] sm:$0xff]
  %v2203 = vld [vmem:[%s2 + $0xf0] sm:$0xff]
  %v2204 = vld [vmem:[%s2 + $0xf8] sm:$0xff]
  %v2237 = vunpack.c.l.b16 %v2173
  %v2238 = vunpack.c.h.b16 %v2173
  %v2239 = vunpack.c.l.b16 %v2174
  %v2240 = vunpack.c.h.b16 %v2174
  %v2241 = vunpack.c.l.b16 %v2175
  %v2242 = vunpack.c.h.b16 %v2175
  %v2243 = vunpack.c.l.b16 %v2176
  %v2244 = vunpack.c.h.b16 %v2176
  %v2245 = vunpack.c.l.b16 %v2177
  %v2246 = vunpack.c.h.b16 %v2177
  %v2247 = vunpack.c.l.b16 %v2178
  %v2248 = vunpack.c.h.b16 %v2178
  %v2249 = vunpack.c.l.b16 %v2179
  %v2250 = vunpack.c.h.b16 %v2179
  %v2251 = vunpack.c.l.b16 %v2180
  %v2252 = vunpack.c.h.b16 %v2180
  %v2253 = vunpack.c.l.b16 %v2181
  %v2254 = vunpack.c.h.b16 %v2181
  %v2255 = vunpack.c.l.b16 %v2182
  %v2256 = vunpack.c.h.b16 %v2182
  %v2257 = vunpack.c.l.b16 %v2183
  %v2258 = vunpack.c.h.b16 %v2183
  %v2259 = vunpack.c.l.b16 %v2184
  %v2260 = vunpack.c.h.b16 %v2184
  %v2261 = vunpack.c.l.b16 %v2185
  %v2262 = vunpack.c.h.b16 %v2185
  %v2263 = vunpack.c.l.b16 %v2186
  %v2264 = vunpack.c.h.b16 %v2186
  %v2265 = vunpack.c.l.b16 %v2187
  %v2266 = vunpack.c.h.b16 %v2187
  %v2267 = vunpack.c.l.b16 %v2188
  %v2268 = vunpack.c.h.b16 %v2188
  %v2269 = vunpack.c.l.b16 %v2189
  %v2270 = vunpack.c.h.b16 %v2189
  %v2271 = vunpack.c.l.b16 %v2190
  %v2272 = vunpack.c.h.b16 %v2190
  %v2273 = vunpack.c.l.b16 %v2191
  %v2274 = vunpack.c.h.b16 %v2191
  %v2275 = vunpack.c.l.b16 %v2192
  %v2276 = vunpack.c.h.b16 %v2192
  %v2277 = vunpack.c.l.b16 %v2193
  %v2278 = vunpack.c.h.b16 %v2193
  %v2279 = vunpack.c.l.b16 %v2194
  %v2280 = vunpack.c.h.b16 %v2194
  %v2281 = vunpack.c.l.b16 %v2195
  %v2282 = vunpack.c.h.b16 %v2195
  %v2283 = vunpack.c.l.b16 %v2196
  %v2284 = vunpack.c.h.b16 %v2196
  %v2285 = vunpack.c.l.b16 %v2197
  %v2286 = vunpack.c.h.b16 %v2197
  %v2287 = vunpack.c.l.b16 %v2198
  %v2288 = vunpack.c.h.b16 %v2198
  %v2289 = vunpack.c.l.b16 %v2199
  %v2290 = vunpack.c.h.b16 %v2199
  %v2291 = vunpack.c.l.b16 %v2200
  %v2292 = vunpack.c.h.b16 %v2200
  %v2293 = vunpack.c.l.b16 %v2201
  %v2294 = vunpack.c.h.b16 %v2201
  %v2295 = vunpack.c.l.b16 %v2202
  %v2296 = vunpack.c.h.b16 %v2202
  %v2297 = vunpack.c.l.b16 %v2203
  %v2298 = vunpack.c.h.b16 %v2203
  %v2299 = vunpack.c.l.b16 %v2204
  %v2300 = vunpack.c.h.b16 %v2204
  %v2301 = vpack.c.b16 %v2241, %v2237
  %v2302 = vpack.c.b16 %v2242, %v2238
  %v2303 = vpack.c.b16 %v2243, %v2239
  %v2304 = vpack.c.b16 %v2244, %v2240
  %v2305 = vpack.c.b16 %v2249, %v2245
  %v2306 = vpack.c.b16 %v2250, %v2246
  %v2307 = vpack.c.b16 %v2251, %v2247
  %v2308 = vpack.c.b16 %v2252, %v2248
  %v2309 = vpack.c.b16 %v2257, %v2253
  %v2310 = vpack.c.b16 %v2258, %v2254
  %v2311 = vpack.c.b16 %v2259, %v2255
  %v2312 = vpack.c.b16 %v2260, %v2256
  %v2313 = vpack.c.b16 %v2265, %v2261
  %v2314 = vpack.c.b16 %v2266, %v2262
  %v2315 = vpack.c.b16 %v2267, %v2263
  %v2316 = vpack.c.b16 %v2268, %v2264
  %v2317 = vpack.c.b16 %v2273, %v2269
  %v2318 = vpack.c.b16 %v2274, %v2270
  %v2319 = vpack.c.b16 %v2275, %v2271
  %v2320 = vpack.c.b16 %v2276, %v2272
  %v2321 = vpack.c.b16 %v2281, %v2277
  %v2322 = vpack.c.b16 %v2282, %v2278
  %v2323 = vpack.c.b16 %v2283, %v2279
  %v2324 = vpack.c.b16 %v2284, %v2280
  %v2325 = vpack.c.b16 %v2289, %v2285
  %v2326 = vpack.c.b16 %v2290, %v2286
  %v2327 = vpack.c.b16 %v2291, %v2287
  %v2328 = vpack.c.b16 %v2292, %v2288
  %v2329 = vpack.c.b16 %v2297, %v2293
  %v2330 = vpack.c.b16 %v2298, %v2294
  %v2331 = vpack.c.b16 %v2299, %v2295
  %v2332 = vpack.c.b16 %v2300, %v2296
  %2365 = vmatprep.subr.bf16.mxu0 %v2330
  %2366 = vmatpush1.bf16.msra.mxu0 %v2329
  %2367 = vmatprep.subr.bf16.mxu0 %v2326
  %2368 = vmatpush1.bf16.msra.mxu0 %v2325
  %2369 = vmatprep.subr.bf16.mxu0 %v2322
  %2370 = vmatpush1.bf16.msra.mxu0 %v2321
  %2371 = vmatprep.subr.bf16.mxu0 %v2318
  %2372 = vmatpush1.bf16.msra.mxu0 %v2317
  %2373 = vmatprep.subr.bf16.mxu0 %v2314
  %2374 = vmatpush1.bf16.msra.mxu0 %v2313
  %2375 = vmatprep.subr.bf16.mxu0 %v2310
  %2376 = vmatpush1.bf16.msra.mxu0 %v2309
  %2377 = vmatprep.subr.bf16.mxu0 %v2306
  %2378 = vmatpush1.bf16.msra.mxu0 %v2305
  %2379 = vmatprep.subr.bf16.mxu0 %v2302
  %2380 = vmatpush1.bf16.msra.mxu0 %v2301
  %2381 = vmatprep.subr.bf16.mxu0 0
  %2382 = vmatpush2.bf16.msra.mxu0 0
  %2383 = vmatprep.subr.bf16.mxu0 0
  %2384 = vmatpush2.bf16.msra.mxu0 0
  %2385 = vmatprep.subr.bf16.mxu0 0
  %2386 = vmatpush2.bf16.msra.mxu0 0
  %2387 = vmatprep.subr.bf16.mxu0 0
  %2388 = vmatpush2.bf16.msra.mxu0 0
  %2389 = vmatprep.subr.bf16.mxu0 0
  %2390 = vmatpush2.bf16.msra.mxu0 0
  %2391 = vmatprep.subr.bf16.mxu0 0
  %2392 = vmatpush2.bf16.msra.mxu0 0
  %2393 = vmatprep.subr.bf16.mxu0 0
  %2394 = vmatpush2.bf16.msra.mxu0 0
  %2395 = vmatprep.subr.bf16.mxu0 0
  %2396 = vmatpush2.bf16.msra.mxu0 0
  %2397 = vmatprep.mubr.bf16.mxu0 0
  %2398 = vmatmul.mubr.bf16.gmra.mxu0 %v2172
  %v2399 = vpop.f32.mrf.mxu0
  %v2400 = vadd.f32 0.0, %v2399
  %v2401 = vpop.f32.mrf.mxu0
  %v2402 = vadd.f32 0.0, %v2401
  %v2403 = vpop.f32.mrf.mxu0
  %v2404 = vadd.f32 0.0, %v2403
  %v2405 = vpop.f32.mrf.mxu0
  %v2406 = vadd.f32 0.0, %v2405
  %2407 = vdwg.mxu0
  %2408 = vmatprep.subr.bf16.mxu0 %v2332
  %2409 = vmatpush1.bf16.msra.mxu0 %v2331
  %2410 = vmatprep.subr.bf16.mxu0 %v2328
  %2411 = vmatpush1.bf16.msra.mxu0 %v2327
  %2412 = vmatprep.subr.bf16.mxu0 %v2324
  %2413 = vmatpush1.bf16.msra.mxu0 %v2323
  %2414 = vmatprep.subr.bf16.mxu0 %v2320
  %2415 = vmatpush1.bf16.msra.mxu0 %v2319
  %2416 = vmatprep.subr.bf16.mxu0 %v2316
  %2417 = vmatpush1.bf16.msra.mxu0 %v2315
  %2418 = vmatprep.subr.bf16.mxu0 %v2312
  %2419 = vmatpush1.bf16.msra.mxu0 %v2311
  %2420 = vmatprep.subr.bf16.mxu0 %v2308
  %2421 = vmatpush1.bf16.msra.mxu0 %v2307
  %2422 = vmatprep.subr.bf16.mxu0 %v2304
  %2423 = vmatpush1.bf16.msra.mxu0 %v2303
  %2424 = vmatprep.subr.bf16.mxu0 0
  %2425 = vmatpush2.bf16.msra.mxu0 0
  %2426 = vmatprep.subr.bf16.mxu0 0
  %2427 = vmatpush2.bf16.msra.mxu0 0
  %2428 = vmatprep.subr.bf16.mxu0 0
  %2429 = vmatpush2.bf16.msra.mxu0 0
  %2430 = vmatprep.subr.bf16.mxu0 0
  %2431 = vmatpush2.bf16.msra.mxu0 0
  %2432 = vmatprep.subr.bf16.mxu0 0
  %2433 = vmatpush2.bf16.msra.mxu0 0
  %2434 = vmatprep.subr.bf16.mxu0 0
  %2435 = vmatpush2.bf16.msra.mxu0 0
  %2436 = vmatprep.subr.bf16.mxu0 0
  %2437 = vmatpush2.bf16.msra.mxu0 0
  %2438 = vmatprep.subr.bf16.mxu0 0
  %2439 = vmatpush2.bf16.msra.mxu0 0
  %2440 = vmatprep.mubr.bf16.mxu0 0
  %2441 = vmatmul.mubr.bf16.gmra.mxu0 %v2172
  %v2442 = vpop.f32.mrf.mxu0
  %v2443 = vadd.f32 0.0, %v2442
  %v2444 = vpop.f32.mrf.mxu0
  %v2445 = vadd.f32 0.0, %v2444
  %v2446 = vpop.f32.mrf.mxu0
  %v2447 = vadd.f32 0.0, %v2446
  %v2448 = vpop.f32.mrf.mxu0
  %v2449 = vadd.f32 0.0, %v2448
  %2450 = vdwg.mxu0
  %v2451 = vadd.f32 %v2162, %v2400
  %v2452 = vadd.f32 %v2163, %v2402
  %v2453 = vadd.f32 %v2164, %v2443
  %v2454 = vadd.f32 %v2165, %v2445
  %v2455 = vadd.f32 %v2166, %v2404
  %v2456 = vadd.f32 %v2167, %v2406
  %v2457 = vadd.f32 %v2168, %v2447
  %v2458 = vadd.f32 %v2169, %v2449
  %v2459 = vxor.u32 %v2451, 2147483648
  %v2460 = vxor.u32 %v2455, 2147483648
  %v2461 = vmul.f32 %v2459, 1.442695
  %v2462 = vpow.pop %v2461
  %v2463 = vmul.f32 %v2460, 1.442695
  %v2464 = vpow.pop %v2463
  %v2465 = vadd.f32 %v2462, 1.0
  %v2466 = vadd.f32 %v2464, 1.0
  %v2467 = vrcp.pop %v2465
  %v2468 = vmul.f32 1.0, %v2467
  %v2469 = vrcp.pop %v2466
  %v2470 = vmul.f32 1.0, %v2469
  %v2471 = vxor.u32 %v2452, 2147483648
  %v2472 = vxor.u32 %v2456, 2147483648
  %v2473 = vmul.f32 %v2471, 1.442695
  %v2474 = vpow.pop %v2473
  %v2475 = vmul.f32 %v2472, 1.442695
  %v2476 = vpow.pop %v2475
  %v2477 = vadd.f32 %v2474, 1.0
  %v2478 = vadd.f32 %v2476, 1.0
  %v2479 = vrcp.pop %v2477
  %v2480 = vmul.f32 1.0, %v2479
  %v2481 = vrcp.pop %v2478
  %v2482 = vmul.f32 1.0, %v2481
  %v2483 = vtanh.pop %v2453
  %v2484 = vtanh.pop %v2457
  %v2485 = vxor.u32 %v2454, 2147483648
  %v2486 = vxor.u32 %v2458, 2147483648
  %v2487 = vmul.f32 %v2485, 1.442695
  %v2488 = vpow.pop %v2487
  %v2489 = vmul.f32 %v2486, 1.442695
  %v2490 = vpow.pop %v2489
  %v2491 = vadd.f32 %v2488, 1.0
  %v2492 = vadd.f32 %v2490, 1.0
  %v2493 = vrcp.pop %v2491
  %v2494 = vmul.f32 1.0, %v2493
  %v2495 = vrcp.pop %v2492
  %v2496 = vmul.f32 1.0, %v2495
  %v2497 = vld [vmem:[#allocation3] sm:$0xff]
  %v2498 = vld [vmem:[#allocation3 + $0x8] sm:$0xff]
  %v2499 = vmul.f32 %v2480, %v2497
  %v2500 = vmul.f32 %v2482, %v2498
  %v2501 = vmul.f32 %v2468, %v2483
  %v2502 = vmul.f32 %v2470, %v2484
  %v2503 = vadd.f32 %v2499, %v2501
  %v2504 = vadd.f32 %v2500, %v2502
  %v2505 = vtanh.pop %v2503
  %v2506 = vtanh.pop %v2504
  %v2507 = vmul.f32 %v2494, %v2505
  %v2508 = vmul.f32 %v2496, %v2506
  %2509 = vst [vmem:[#allocation3] sm:$0xff] %v2503
  %2510 = vst [vmem:[#allocation3 + $0x8] sm:$0xff] %v2504
  %2511 = vst [vmem:[#allocation2] sm:$0xff] %v2507
  %2512 = vst [vmem:[#allocation2 + $0x8] sm:$0xff] %v2508
  %s2513 = scalar_lea.vmem %s0, 224
  %v2514 = vld [vmem:[%s2513] sm:$0xff]
  %v2515 = vld [vmem:[%s2513 + $0x8] sm:$0xff]
  %v2516 = vld [vmem:[%s2513 + $0x10] sm:$0xff]
  %v2517 = vld [vmem:[%s2513 + $0x18] sm:$0xff]
  %v2518 = vunpack.c.l.bf16 %v2514
  %v2519 = vunpack.c.h.bf16 %v2514
  %v2520 = vunpack.c.l.bf16 %v2515
  %v2521 = vunpack.c.h.bf16 %v2515
  %v2522 = vunpack.c.l.bf16 %v2516
  %v2523 = vunpack.c.h.bf16 %v2516
  %v2524 = vunpack.c.l.bf16 %v2517
  %v2525 = vunpack.c.h.bf16 %v2517
  %v2526 = vld [vmem:[#allocation2] sm:$0xff]
  %v2527 = vld [vmem:[#allocation2 + $0x8] sm:$0xff]
  %v2528 = vpack.c.bf16 %v2527, %v2526
  %v2529 = vld [vmem:[%s2] sm:$0xff]
  %v2530 = vld [vmem:[%s2 + $0x8] sm:$0xff]
  %v2531 = vld [vmem:[%s2 + $0x10] sm:$0xff]
  %v2532 = vld [vmem:[%s2 + $0x18] sm:$0xff]
  %v2533 = vld [vmem:[%s2 + $0x20] sm:$0xff]
  %v2534 = vld [vmem:[%s2 + $0x28] sm:$0xff]
  %v2535 = vld [vmem:[%s2 + $0x30] sm:$0xff]
  %v2536 = vld [vmem:[%s2 + $0x38] sm:$0xff]
  %v2537 = vld [vmem:[%s2 + $0x40] sm:$0xff]
  %v2538 = vld [vmem:[%s2 + $0x48] sm:$0xff]
  %v2539 = vld [vmem:[%s2 + $0x50] sm:$0xff]
  %v2540 = vld [vmem:[%s2 + $0x58] sm:$0xff]
  %v2541 = vld [vmem:[%s2 + $0x60] sm:$0xff]
  %v2542 = vld [vmem:[%s2 + $0x68] sm:$0xff]
  %v2543 = vld [vmem:[%s2 + $0x70] sm:$0xff]
  %v2544 = vld [vmem:[%s2 + $0x78] sm:$0xff]
  %v2545 = vld [vmem:[%s2 + $0x80] sm:$0xff]
  %v2546 = vld [vmem:[%s2 + $0x88] sm:$0xff]
  %v2547 = vld [vmem:[%s2 + $0x90] sm:$0xff]
  %v2548 = vld [vmem:[%s2 + $0x98] sm:$0xff]
  %v2549 = vld [vmem:[%s2 + $0xa0] sm:$0xff]
  %v2550 = vld [vmem:[%s2 + $0xa8] sm:$0xff]
  %v2551 = vld [vmem:[%s2 + $0xb0] sm:$0xff]
  %v2552 = vld [vmem:[%s2 + $0xb8] sm:$0xff]
  %v2553 = vld [vmem:[%s2 + $0xc0] sm:$0xff]
  %v2554 = vld [vmem:[%s2 + $0xc8] sm:$0xff]
  %v2555 = vld [vmem:[%s2 + $0xd0] sm:$0xff]
  %v2556 = vld [vmem:[%s2 + $0xd8] sm:$0xff]
  %v2557 = vld [vmem:[%s2 + $0xe0] sm:$0xff]
  %v2558 = vld [vmem:[%s2 + $0xe8] sm:$0xff]
  %v2559 = vld [vmem:[%s2 + $0xf0] sm:$0xff]
  %v2560 = vld [vmem:[%s2 + $0xf8] sm:$0xff]
  %v2593 = vunpack.c.l.b16 %v2529
  %v2594 = vunpack.c.h.b16 %v2529
  %v2595 = vunpack.c.l.b16 %v2530
  %v2596 = vunpack.c.h.b16 %v2530
  %v2597 = vunpack.c.l.b16 %v2531
  %v2598 = vunpack.c.h.b16 %v2531
  %v2599 = vunpack.c.l.b16 %v2532
  %v2600 = vunpack.c.h.b16 %v2532
  %v2601 = vunpack.c.l.b16 %v2533
  %v2602 = vunpack.c.h.b16 %v2533
  %v2603 = vunpack.c.l.b16 %v2534
  %v2604 = vunpack.c.h.b16 %v2534
  %v2605 = vunpack.c.l.b16 %v2535
  %v2606 = vunpack.c.h.b16 %v2535
  %v2607 = vunpack.c.l.b16 %v2536
  %v2608 = vunpack.c.h.b16 %v2536
  %v2609 = vunpack.c.l.b16 %v2537
  %v2610 = vunpack.c.h.b16 %v2537
  %v2611 = vunpack.c.l.b16 %v2538
  %v2612 = vunpack.c.h.b16 %v2538
  %v2613 = vunpack.c.l.b16 %v2539
  %v2614 = vunpack.c.h.b16 %v2539
  %v2615 = vunpack.c.l.b16 %v2540
  %v2616 = vunpack.c.h.b16 %v2540
  %v2617 = vunpack.c.l.b16 %v2541
  %v2618 = vunpack.c.h.b16 %v2541
  %v2619 = vunpack.c.l.b16 %v2542
  %v2620 = vunpack.c.h.b16 %v2542
  %v2621 = vunpack.c.l.b16 %v2543
  %v2622 = vunpack.c.h.b16 %v2543
  %v2623 = vunpack.c.l.b16 %v2544
  %v2624 = vunpack.c.h.b16 %v2544
  %v2625 = vunpack.c.l.b16 %v2545
  %v2626 = vunpack.c.h.b16 %v2545
  %v2627 = vunpack.c.l.b16 %v2546
  %v2628 = vunpack.c.h.b16 %v2546
  %v2629 = vunpack.c.l.b16 %v2547
  %v2630 = vunpack.c.h.b16 %v2547
  %v2631 = vunpack.c.l.b16 %v2548
  %v2632 = vunpack.c.h.b16 %v2548
  %v2633 = vunpack.c.l.b16 %v2549
  %v2634 = vunpack.c.h.b16 %v2549
  %v2635 = vunpack.c.l.b16 %v2550
  %v2636 = vunpack.c.h.b16 %v2550
  %v2637 = vunpack.c.l.b16 %v2551
  %v2638 = vunpack.c.h.b16 %v2551
  %v2639 = vunpack.c.l.b16 %v2552
  %v2640 = vunpack.c.h.b16 %v2552
  %v2641 = vunpack.c.l.b16 %v2553
  %v2642 = vunpack.c.h.b16 %v2553
  %v2643 = vunpack.c.l.b16 %v2554
  %v2644 = vunpack.c.h.b16 %v2554
  %v2645 = vunpack.c.l.b16 %v2555
  %v2646 = vunpack.c.h.b16 %v2555
  %v2647 = vunpack.c.l.b16 %v2556
  %v2648 = vunpack.c.h.b16 %v2556
  %v2649 = vunpack.c.l.b16 %v2557
  %v2650 = vunpack.c.h.b16 %v2557
  %v2651 = vunpack.c.l.b16 %v2558
  %v2652 = vunpack.c.h.b16 %v2558
  %v2653 = vunpack.c.l.b16 %v2559
  %v2654 = vunpack.c.h.b16 %v2559
  %v2655 = vunpack.c.l.b16 %v2560
  %v2656 = vunpack.c.h.b16 %v2560
  %v2657 = vpack.c.b16 %v2597, %v2593
  %v2658 = vpack.c.b16 %v2598, %v2594
  %v2659 = vpack.c.b16 %v2599, %v2595
  %v2660 = vpack.c.b16 %v2600, %v2596
  %v2661 = vpack.c.b16 %v2605, %v2601
  %v2662 = vpack.c.b16 %v2606, %v2602
  %v2663 = vpack.c.b16 %v2607, %v2603
  %v2664 = vpack.c.b16 %v2608, %v2604
  %v2665 = vpack.c.b16 %v2613, %v2609
  %v2666 = vpack.c.b16 %v2614, %v2610
  %v2667 = vpack.c.b16 %v2615, %v2611
  %v2668 = vpack.c.b16 %v2616, %v2612
  %v2669 = vpack.c.b16 %v2621, %v2617
  %v2670 = vpack.c.b16 %v2622, %v2618
  %v2671 = vpack.c.b16 %v2623, %v2619
  %v2672 = vpack.c.b16 %v2624, %v2620
  %v2673 = vpack.c.b16 %v2629, %v2625
  %v2674 = vpack.c.b16 %v2630, %v2626
  %v2675 = vpack.c.b16 %v2631, %v2627
  %v2676 = vpack.c.b16 %v2632, %v2628
  %v2677 = vpack.c.b16 %v2637, %v2633
  %v2678 = vpack.c.b16 %v2638, %v2634
  %v2679 = vpack.c.b16 %v2639, %v2635
  %v2680 = vpack.c.b16 %v2640, %v2636
  %v2681 = vpack.c.b16 %v2645, %v2641
  %v2682 = vpack.c.b16 %v2646, %v2642
  %v2683 = vpack.c.b16 %v2647, %v2643
  %v2684 = vpack.c.b16 %v2648, %v2644
  %v2685 = vpack.c.b16 %v2653, %v2649
  %v2686 = vpack.c.b16 %v2654, %v2650
  %v2687 = vpack.c.b16 %v2655, %v2651
  %v2688 = vpack.c.b16 %v2656, %v2652
  %2721 = vmatprep.subr.bf16.mxu0 %v2686
  %2722 = vmatpush1.bf16.msra.mxu0 %v2685
  %2723 = vmatprep.subr.bf16.mxu0 %v2682
  %2724 = vmatpush1.bf16.msra.mxu0 %v2681
  %2725 = vmatprep.subr.bf16.mxu0 %v2678
  %2726 = vmatpush1.bf16.msra.mxu0 %v2677
  %2727 = vmatprep.subr.bf16.mxu0 %v2674
  %2728 = vmatpush1.bf16.msra.mxu0 %v2673
  %2729 = vmatprep.subr.bf16.mxu0 %v2670
  %2730 = vmatpush1.bf16.msra.mxu0 %v2669
  %2731 = vmatprep.subr.bf16.mxu0 %v2666
  %2732 = vmatpush1.bf16.msra.mxu0 %v2665
  %2733 = vmatprep.subr.bf16.mxu0 %v2662
  %2734 = vmatpush1.bf16.msra.mxu0 %v2661
  %2735 = vmatprep.subr.bf16.mxu0 %v2658
  %2736 = vmatpush1.bf16.msra.mxu0 %v2657
  %2737 = vmatprep.subr.bf16.mxu0 0
  %2738 = vmatpush2.bf16.msra.mxu0 0
  %2739 = vmatprep.subr.bf16.mxu0 0
  %2740 = vmatpush2.bf16.msra.mxu0 0
  %2741 = vmatprep.subr.bf16.mxu0 0
  %2742 = vmatpush2.bf16.msra.mxu0 0
  %2743 = vmatprep.subr.bf16.mxu0 0
  %2744 = vmatpush2.bf16.msra.mxu0 0
  %2745 = vmatprep.subr.bf16.mxu0 0
  %2746 = vmatpush2.bf16.msra.mxu0 0
  %2747 = vmatprep.subr.bf16.mxu0 0
  %2748 = vmatpush2.bf16.msra.mxu0 0
  %2749 = vmatprep.subr.bf16.mxu0 0
  %2750 = vmatpush2.bf16.msra.mxu0 0
  %2751 = vmatprep.subr.bf16.mxu0 0
  %2752 = vmatpush2.bf16.msra.mxu0 0
  %2753 = vmatprep.mubr.bf16.mxu0 0
  %2754 = vmatmul.mubr.bf16.gmra.mxu0 %v2528
  %v2755 = vpop.f32.mrf.mxu0
  %v2756 = vadd.f32 0.0, %v2755
  %v2757 = vpop.f32.mrf.mxu0
  %v2758 = vadd.f32 0.0, %v2757
  %v2759 = vpop.f32.mrf.mxu0
  %v2760 = vadd.f32 0.0, %v2759
  %v2761 = vpop.f32.mrf.mxu0
  %v2762 = vadd.f32 0.0, %v2761
  %2763 = vdwg.mxu0
  %2764 = vmatprep.subr.bf16.mxu0 %v2688
  %2765 = vmatpush1.bf16.msra.mxu0 %v2687
  %2766 = vmatprep.subr.bf16.mxu0 %v2684
  %2767 = vmatpush1.bf16.msra.mxu0 %v2683
  %2768 = vmatprep.subr.bf16.mxu0 %v2680
  %2769 = vmatpush1.bf16.msra.mxu0 %v2679
  %2770 = vmatprep.subr.bf16.mxu0 %v2676
  %2771 = vmatpush1.bf16.msra.mxu0 %v2675
  %2772 = vmatprep.subr.bf16.mxu0 %v2672
  %2773 = vmatpush1.bf16.msra.mxu0 %v2671
  %2774 = vmatprep.subr.bf16.mxu0 %v2668
  %2775 = vmatpush1.bf16.msra.mxu0 %v2667
  %2776 = vmatprep.subr.bf16.mxu0 %v2664
  %2777 = vmatpush1.bf16.msra.mxu0 %v2663
  %2778 = vmatprep.subr.bf16.mxu0 %v2660
  %2779 = vmatpush1.bf16.msra.mxu0 %v2659
  %2780 = vmatprep.subr.bf16.mxu0 0
  %2781 = vmatpush2.bf16.msra.mxu0 0
  %2782 = vmatprep.subr.bf16.mxu0 0
  %2783 = vmatpush2.bf16.msra.mxu0 0
  %2784 = vmatprep.subr.bf16.mxu0 0
  %2785 = vmatpush2.bf16.msra.mxu0 0
  %2786 = vmatprep.subr.bf16.mxu0 0
  %2787 = vmatpush2.bf16.msra.mxu0 0
  %2788 = vmatprep.subr.bf16.mxu0 0
  %2789 = vmatpush2.bf16.msra.mxu0 0
  %2790 = vmatprep.subr.bf16.mxu0 0
  %2791 = vmatpush2.bf16.msra.mxu0 0
  %2792 = vmatprep.subr.bf16.mxu0 0
  %2793 = vmatpush2.bf16.msra.mxu0 0
  %2794 = vmatprep.subr.bf16.mxu0 0
  %2795 = vmatpush2.bf16.msra.mxu0 0
  %2796 = vmatprep.mubr.bf16.mxu0 0
  %2797 = vmatmul.mubr.bf16.gmra.mxu0 %v2528
  %v2798 = vpop.f32.mrf.mxu0
  %v2799 = vadd.f32 0.0, %v2798
  %v2800 = vpop.f32.mrf.mxu0
  %v2801 = vadd.f32 0.0, %v2800
  %v2802 = vpop.f32.mrf.mxu0
  %v2803 = vadd.f32 0.0, %v2802
  %v2804 = vpop.f32.mrf.mxu0
  %v2805 = vadd.f32 0.0, %v2804
  %2806 = vdwg.mxu0
  %v2807 = vadd.f32 %v2518, %v2756
  %v2808 = vadd.f32 %v2519, %v2758
  %v2809 = vadd.f32 %v2520, %v2799
  %v2810 = vadd.f32 %v2521, %v2801
  %v2811 = vadd.f32 %v2522, %v2760
  %v2812 = vadd.f32 %v2523, %v2762
  %v2813 = vadd.f32 %v2524, %v2803
  %v2814 = vadd.f32 %v2525, %v2805
  %v2815 = vxor.u32 %v2807, 2147483648
  %v2816 = vxor.u32 %v2811, 2147483648
  %v2817 = vmul.f32 %v2815, 1.442695
  %v2818 = vpow.pop %v2817
  %v2819 = vmul.f32 %v2816, 1.442695
  %v2820 = vpow.pop %v2819
  %v2821 = vadd.f32 %v2818, 1.0
  %v2822 = vadd.f32 %v2820, 1.0
  %v2823 = vrcp.pop %v2821
  %v2824 = vmul.f32 1.0, %v2823
  %v2825 = vrcp.pop %v2822
  %v2826 = vmul.f32 1.0, %v2825
  %v2827 = vxor.u32 %v2808, 2147483648
  %v2828 = vxor.u32 %v2812, 2147483648
  %v2829 = vmul.f32 %v2827, 1.442695
  %v2830 = vpow.pop %v2829
  %v2831 = vmul.f32 %v2828, 1.442695
  %v2832 = vpow.pop %v2831
  %v2833 = vadd.f32 %v2830, 1.0
  %v2834 = vadd.f32 %v2832, 1.0
  %v2835 = vrcp.pop %v2833
  %v2836 = vmul.f32 1.0, %v2835
  %v2837 = vrcp.pop %v2834
  %v2838 = vmul.f32 1.0, %v2837
  %v2839 = vtanh.pop %v2809
  %v2840 = vtanh.pop %v2813
  %v2841 = vxor.u32 %v2810, 2147483648
  %v2842 = vxor.u32 %v2814, 2147483648
  %v2843 = vmul.f32 %v2841, 1.442695
  %v2844 = vpow.pop %v2843
  %v2845 = vmul.f32 %v2842, 1.442695
  %v2846 = vpow.pop %v2845
  %v2847 = vadd.f32 %v2844, 1.0
  %v2848 = vadd.f32 %v2846, 1.0
  %v2849 = vrcp.pop %v2847
  %v2850 = vmul.f32 1.0, %v2849
  %v2851 = vrcp.pop %v2848
  %v2852 = vmul.f32 1.0, %v2851
  %v2853 = vld [vmem:[#allocation3] sm:$0xff]
  %v2854 = vld [vmem:[#allocation3 + $0x8] sm:$0xff]
  %v2855 = vmul.f32 %v2836, %v2853
  %v2856 = vmul.f32 %v2838, %v2854
  %v2857 = vmul.f32 %v2824, %v2839
  %v2858 = vmul.f32 %v2826, %v2840
  %v2859 = vadd.f32 %v2855, %v2857
  %v2860 = vadd.f32 %v2856, %v2858
  %v2861 = vtanh.pop %v2859
  %v2862 = vtanh.pop %v2860
  %v2863 = vmul.f32 %v2850, %v2861
  %v2864 = vmul.f32 %v2852, %v2862
  %2865 = vst [vmem:[#allocation3] sm:$0xff] %v2859
  %2866 = vst [vmem:[#allocation3 + $0x8] sm:$0xff] %v2860
  %2867 = vst [vmem:[#allocation2] sm:$0xff] %v2863
  %2868 = vst [vmem:[#allocation2 + $0x8] sm:$0xff] %v2864
  %v2869 = vld [vmem:[%s1] sm:$0xff]
  %v2870 = vld [vmem:[%s1 + $0x8] sm:$0xff]
  %v2871 = vld [vmem:[%s1 + $0x10] sm:$0xff]
  %v2872 = vld [vmem:[%s1 + $0x18] sm:$0xff]
  %v2873 = vunpack.c.l.bf16 %v2869
  %v2874 = vunpack.c.h.bf16 %v2869
  %v2875 = vunpack.c.l.bf16 %v2870
  %v2876 = vunpack.c.h.bf16 %v2870
  %v2877 = vunpack.c.l.bf16 %v2871
  %v2878 = vunpack.c.h.bf16 %v2871
  %v2879 = vunpack.c.l.bf16 %v2872
  %v2880 = vunpack.c.h.bf16 %v2872
  %v2881 = vld [vmem:[#allocation2] sm:$0xff]
  %v2882 = vld [vmem:[#allocation2 + $0x8] sm:$0xff]
  %v2883 = vpack.c.bf16 %v2882, %v2881
  %v2884 = vld [vmem:[%s3] sm:$0xff]
  %v2885 = vld [vmem:[%s3 + $0x8] sm:$0xff]
  %v2886 = vld [vmem:[%s3 + $0x10] sm:$0xff]
  %v2887 = vld [vmem:[%s3 + $0x18] sm:$0xff]
  %v2888 = vld [vmem:[%s3 + $0x20] sm:$0xff]
  %v2889 = vld [vmem:[%s3 + $0x28] sm:$0xff]
  %v2890 = vld [vmem:[%s3 + $0x30] sm:$0xff]
  %v2891 = vld [vmem:[%s3 + $0x38] sm:$0xff]
  %v2892 = vld [vmem:[%s3 + $0x40] sm:$0xff]
  %v2893 = vld [vmem:[%s3 + $0x48] sm:$0xff]
  %v2894 = vld [vmem:[%s3 + $0x50] sm:$0xff]
  %v2895 = vld [vmem:[%s3 + $0x58] sm:$0xff]
  %v2896 = vld [vmem:[%s3 + $0x60] sm:$0xff]
  %v2897 = vld [vmem:[%s3 + $0x68] sm:$0xff]
  %v2898 = vld [vmem:[%s3 + $0x70] sm:$0xff]
  %v2899 = vld [vmem:[%s3 + $0x78] sm:$0xff]
  %v2900 = vld [vmem:[%s3 + $0x80] sm:$0xff]
  %v2901 = vld [vmem:[%s3 + $0x88] sm:$0xff]
  %v2902 = vld [vmem:[%s3 + $0x90] sm:$0xff]
  %v2903 = vld [vmem:[%s3 + $0x98] sm:$0xff]
  %v2904 = vld [vmem:[%s3 + $0xa0] sm:$0xff]
  %v2905 = vld [vmem:[%s3 + $0xa8] sm:$0xff]
  %v2906 = vld [vmem:[%s3 + $0xb0] sm:$0xff]
  %v2907 = vld [vmem:[%s3 + $0xb8] sm:$0xff]
  %v2908 = vld [vmem:[%s3 + $0xc0] sm:$0xff]
  %v2909 = vld [vmem:[%s3 + $0xc8] sm:$0xff]
  %v2910 = vld [vmem:[%s3 + $0xd0] sm:$0xff]
  %v2911 = vld [vmem:[%s3 + $0xd8] sm:$0xff]
  %v2912 = vld [vmem:[%s3 + $0xe0] sm:$0xff]
  %v2913 = vld [vmem:[%s3 + $0xe8] sm:$0xff]
  %v2914 = vld [vmem:[%s3 + $0xf0] sm:$0xff]
  %v2915 = vld [vmem:[%s3 + $0xf8] sm:$0xff]
  %v2948 = vunpack.c.l.b16 %v2884
  %v2949 = vunpack.c.h.b16 %v2884
  %v2950 = vunpack.c.l.b16 %v2885
  %v2951 = vunpack.c.h.b16 %v2885
  %v2952 = vunpack.c.l.b16 %v2886
  %v2953 = vunpack.c.h.b16 %v2886
  %v2954 = vunpack.c.l.b16 %v2887
  %v2955 = vunpack.c.h.b16 %v2887
  %v2956 = vunpack.c.l.b16 %v2888
  %v2957 = vunpack.c.h.b16 %v2888
  %v2958 = vunpack.c.l.b16 %v2889
  %v2959 = vunpack.c.h.b16 %v2889
  %v2960 = vunpack.c.l.b16 %v2890
  %v2961 = vunpack.c.h.b16 %v2890
  %v2962 = vunpack.c.l.b16 %v2891
  %v2963 = vunpack.c.h.b16 %v2891
  %v2964 = vunpack.c.l.b16 %v2892
  %v2965 = vunpack.c.h.b16 %v2892
  %v2966 = vunpack.c.l.b16 %v2893
  %v2967 = vunpack.c.h.b16 %v2893
  %v2968 = vunpack.c.l.b16 %v2894
  %v2969 = vunpack.c.h.b16 %v2894
  %v2970 = vunpack.c.l.b16 %v2895
  %v2971 = vunpack.c.h.b16 %v2895
  %v2972 = vunpack.c.l.b16 %v2896
  %v2973 = vunpack.c.h.b16 %v2896
  %v2974 = vunpack.c.l.b16 %v2897
  %v2975 = vunpack.c.h.b16 %v2897
  %v2976 = vunpack.c.l.b16 %v2898
  %v2977 = vunpack.c.h.b16 %v2898
  %v2978 = vunpack.c.l.b16 %v2899
  %v2979 = vunpack.c.h.b16 %v2899
  %v2980 = vunpack.c.l.b16 %v2900
  %v2981 = vunpack.c.h.b16 %v2900
  %v2982 = vunpack.c.l.b16 %v2901
  %v2983 = vunpack.c.h.b16 %v2901
  %v2984 = vunpack.c.l.b16 %v2902
  %v2985 = vunpack.c.h.b16 %v2902
  %v2986 = vunpack.c.l.b16 %v2903
  %v2987 = vunpack.c.h.b16 %v2903
  %v2988 = vunpack.c.l.b16 %v2904
  %v2989 = vunpack.c.h.b16 %v2904
  %v2990 = vunpack.c.l.b16 %v2905
  %v2991 = vunpack.c.h.b16 %v2905
  %v2992 = vunpack.c.l.b16 %v2906
  %v2993 = vunpack.c.h.b16 %v2906
  %v2994 = vunpack.c.l.b16 %v2907
  %v2995 = vunpack.c.h.b16 %v2907
  %v2996 = vunpack.c.l.b16 %v2908
  %v2997 = vunpack.c.h.b16 %v2908
  %v2998 = vunpack.c.l.b16 %v2909
  %v2999 = vunpack.c.h.b16 %v2909
  %v3000 = vunpack.c.l.b16 %v2910
  %v3001 = vunpack.c.h.b16 %v2910
  %v3002 = vunpack.c.l.b16 %v2911
  %v3003 = vunpack.c.h.b16 %v2911
  %v3004 = vunpack.c.l.b16 %v2912
  %v3005 = vunpack.c.h.b16 %v2912
  %v3006 = vunpack.c.l.b16 %v2913
  %v3007 = vunpack.c.h.b16 %v2913
  %v3008 = vunpack.c.l.b16 %v2914
  %v3009 = vunpack.c.h.b16 %v2914
  %v3010 = vunpack.c.l.b16 %v2915
  %v3011 = vunpack.c.h.b16 %v2915
  %v3012 = vpack.c.b16 %v2952, %v2948
  %v3013 = vpack.c.b16 %v2953, %v2949
  %v3014 = vpack.c.b16 %v2954, %v2950
  %v3015 = vpack.c.b16 %v2955, %v2951
  %v3016 = vpack.c.b16 %v2960, %v2956
  %v3017 = vpack.c.b16 %v2961, %v2957
  %v3018 = vpack.c.b16 %v2962, %v2958
  %v3019 = vpack.c.b16 %v2963, %v2959
  %v3020 = vpack.c.b16 %v2968, %v2964
  %v3021 = vpack.c.b16 %v2969, %v2965
  %v3022 = vpack.c.b16 %v2970, %v2966
  %v3023 = vpack.c.b16 %v2971, %v2967
  %v3024 = vpack.c.b16 %v2976, %v2972
  %v3025 = vpack.c.b16 %v2977, %v2973
  %v3026 = vpack.c.b16 %v2978, %v2974
  %v3027 = vpack.c.b16 %v2979, %v2975
  %v3028 = vpack.c.b16 %v2984, %v2980
  %v3029 = vpack.c.b16 %v2985, %v2981
  %v3030 = vpack.c.b16 %v2986, %v2982
  %v3031 = vpack.c.b16 %v2987, %v2983
  %v3032 = vpack.c.b16 %v2992, %v2988
  %v3033 = vpack.c.b16 %v2993, %v2989
  %v3034 = vpack.c.b16 %v2994, %v2990
  %v3035 = vpack.c.b16 %v2995, %v2991
  %v3036 = vpack.c.b16 %v3000, %v2996
  %v3037 = vpack.c.b16 %v3001, %v2997
  %v3038 = vpack.c.b16 %v3002, %v2998
  %v3039 = vpack.c.b16 %v3003, %v2999
  %v3040 = vpack.c.b16 %v3008, %v3004
  %v3041 = vpack.c.b16 %v3009, %v3005
  %v3042 = vpack.c.b16 %v3010, %v3006
  %v3043 = vpack.c.b16 %v3011, %v3007
  %3076 = vmatprep.subr.bf16.mxu0 %v3041
  %3077 = vmatpush1.bf16.msra.mxu0 %v3040
  %3078 = vmatprep.subr.bf16.mxu0 %v3037
  %3079 = vmatpush1.bf16.msra.mxu0 %v3036
  %3080 = vmatprep.subr.bf16.mxu0 %v3033
  %3081 = vmatpush1.bf16.msra.mxu0 %v3032
  %3082 = vmatprep.subr.bf16.mxu0 %v3029
  %3083 = vmatpush1.bf16.msra.mxu0 %v3028
  %3084 = vmatprep.subr.bf16.mxu0 %v3025
  %3085 = vmatpush1.bf16.msra.mxu0 %v3024
  %3086 = vmatprep.subr.bf16.mxu0 %v3021
  %3087 = vmatpush1.bf16.msra.mxu0 %v3020
  %3088 = vmatprep.subr.bf16.mxu0 %v3017
  %3089 = vmatpush1.bf16.msra.mxu0 %v3016
  %3090 = vmatprep.subr.bf16.mxu0 %v3013
  %3091 = vmatpush1.bf16.msra.mxu0 %v3012
  %3092 = vmatprep.subr.bf16.mxu0 0
  %3093 = vmatpush2.bf16.msra.mxu0 0
  %3094 = vmatprep.subr.bf16.mxu0 0
  %3095 = vmatpush2.bf16.msra.mxu0 0
  %3096 = vmatprep.subr.bf16.mxu0 0
  %3097 = vmatpush2.bf16.msra.mxu0 0
  %3098 = vmatprep.subr.bf16.mxu0 0
  %3099 = vmatpush2.bf16.msra.mxu0 0
  %3100 = vmatprep.subr.bf16.mxu0 0
  %3101 = vmatpush2.bf16.msra.mxu0 0
  %3102 = vmatprep.subr.bf16.mxu0 0
  %3103 = vmatpush2.bf16.msra.mxu0 0
  %3104 = vmatprep.subr.bf16.mxu0 0
  %3105 = vmatpush2.bf16.msra.mxu0 0
  %3106 = vmatprep.subr.bf16.mxu0 0
  %3107 = vmatpush2.bf16.msra.mxu0 0
  %3108 = vmatprep.mubr.bf16.mxu0 0
  %3109 = vmatmul.mubr.bf16.gmra.mxu0 %v2883
  %v3110 = vpop.f32.mrf.mxu0
  %v3111 = vadd.f32 0.0, %v3110
  %v3112 = vpop.f32.mrf.mxu0
  %v3113 = vadd.f32 0.0, %v3112
  %v3114 = vpop.f32.mrf.mxu0
  %v3115 = vadd.f32 0.0, %v3114
  %v3116 = vpop.f32.mrf.mxu0
  %v3117 = vadd.f32 0.0, %v3116
  %3118 = vdwg.mxu0
  %3119 = vmatprep.subr.bf16.mxu0 %v3043
  %3120 = vmatpush1.bf16.msra.mxu0 %v3042
  %3121 = vmatprep.subr.bf16.mxu0 %v3039
  %3122 = vmatpush1.bf16.msra.mxu0 %v3038
  %3123 = vmatprep.subr.bf16.mxu0 %v3035
  %3124 = vmatpush1.bf16.msra.mxu0 %v3034
  %3125 = vmatprep.subr.bf16.mxu0 %v3031
  %3126 = vmatpush1.bf16.msra.mxu0 %v3030
  %3127 = vmatprep.subr.bf16.mxu0 %v3027
  %3128 = vmatpush1.bf16.msra.mxu0 %v3026
  %3129 = vmatprep.subr.bf16.mxu0 %v3023
  %3130 = vmatpush1.bf16.msra.mxu0 %v3022
  %3131 = vmatprep.subr.bf16.mxu0 %v3019
  %3132 = vmatpush1.bf16.msra.mxu0 %v3018
  %3133 = vmatprep.subr.bf16.mxu0 %v3015
  %3134 = vmatpush1.bf16.msra.mxu0 %v3014
  %3135 = vmatprep.subr.bf16.mxu0 0
  %3136 = vmatpush2.bf16.msra.mxu0 0
  %3137 = vmatprep.subr.bf16.mxu0 0
  %3138 = vmatpush2.bf16.msra.mxu0 0
  %3139 = vmatprep.subr.bf16.mxu0 0
  %3140 = vmatpush2.bf16.msra.mxu0 0
  %3141 = vmatprep.subr.bf16.mxu0 0
  %3142 = vmatpush2.bf16.msra.mxu0 0
  %3143 = vmatprep.subr.bf16.mxu0 0
  %3144 = vmatpush2.bf16.msra.mxu0 0
  %3145 = vmatprep.subr.bf16.mxu0 0
  %3146 = vmatpush2.bf16.msra.mxu0 0
  %3147 = vmatprep.subr.bf16.mxu0 0
  %3148 = vmatpush2.bf16.msra.mxu0 0
  %3149 = vmatprep.subr.bf16.mxu0 0
  %3150 = vmatpush2.bf16.msra.mxu0 0
  %3151 = vmatprep.mubr.bf16.mxu0 0
  %3152 = vmatmul.mubr.bf16.gmra.mxu0 %v2883
  %v3153 = vpop.f32.mrf.mxu0
  %v3154 = vadd.f32 0.0, %v3153
  %v3155 = vpop.f32.mrf.mxu0
  %v3156 = vadd.f32 0.0, %v3155
  %v3157 = vpop.f32.mrf.mxu0
  %v3158 = vadd.f32 0.0, %v3157
  %v3159 = vpop.f32.mrf.mxu0
  %v3160 = vadd.f32 0.0, %v3159
  %3161 = vdwg.mxu0
  %v3162 = vadd.f32 %v2873, %v3111
  %v3163 = vadd.f32 %v2874, %v3113
  %v3164 = vadd.f32 %v2875, %v3154
  %v3165 = vadd.f32 %v2876, %v3156
  %v3166 = vadd.f32 %v2877, %v3115
  %v3167 = vadd.f32 %v2878, %v3117
  %v3168 = vadd.f32 %v2879, %v3158
  %v3169 = vadd.f32 %v2880, %v3160
  %v3170 = vxor.u32 %v3162, 2147483648
  %v3171 = vxor.u32 %v3166, 2147483648
  %v3172 = vmul.f32 %v3170, 1.442695
  %v3173 = vpow.pop %v3172
  %v3174 = vmul.f32 %v3171, 1.442695
  %v3175 = vpow.pop %v3174
  %v3176 = vadd.f32 %v3173, 1.0
  %v3177 = vadd.f32 %v3175, 1.0
  %v3178 = vrcp.pop %v3176
  %v3179 = vmul.f32 1.0, %v3178
  %v3180 = vrcp.pop %v3177
  %v3181 = vmul.f32 1.0, %v3180
  %v3182 = vxor.u32 %v3163, 2147483648
  %v3183 = vxor.u32 %v3167, 2147483648
  %v3184 = vmul.f32 %v3182, 1.442695
  %v3185 = vpow.pop %v3184
  %v3186 = vmul.f32 %v3183, 1.442695
  %v3187 = vpow.pop %v3186
  %v3188 = vadd.f32 %v3185, 1.0
  %v3189 = vadd.f32 %v3187, 1.0
  %v3190 = vrcp.pop %v3188
  %v3191 = vmul.f32 1.0, %v3190
  %v3192 = vrcp.pop %v3189
  %v3193 = vmul.f32 1.0, %v3192
  %v3194 = vtanh.pop %v3164
  %v3195 = vtanh.pop %v3168
  %v3196 = vxor.u32 %v3165, 2147483648
  %v3197 = vxor.u32 %v3169, 2147483648
  %v3198 = vmul.f32 %v3196, 1.442695
  %v3199 = vpow.pop %v3198
  %v3200 = vmul.f32 %v3197, 1.442695
  %v3201 = vpow.pop %v3200
  %v3202 = vadd.f32 %v3199, 1.0
  %v3203 = vadd.f32 %v3201, 1.0
  %v3204 = vrcp.pop %v3202
  %v3205 = vmul.f32 1.0, %v3204
  %v3206 = vrcp.pop %v3203
  %v3207 = vmul.f32 1.0, %v3206
  %v3208 = vld [vmem:[#allocation3] sm:$0xff]
  %v3209 = vld [vmem:[#allocation3 + $0x8] sm:$0xff]
  %v3210 = vmul.f32 %v3191, %v3208
  %v3211 = vmul.f32 %v3193, %v3209
  %v3212 = vmul.f32 %v3179, %v3194
  %v3213 = vmul.f32 %v3181, %v3195
  %v3214 = vadd.f32 %v3210, %v3212
  %v3215 = vadd.f32 %v3211, %v3213
  %v3216 = vtanh.pop %v3214
  %v3217 = vtanh.pop %v3215
  %v3218 = vmul.f32 %v3205, %v3216
  %v3219 = vmul.f32 %v3207, %v3217
  %3220 = vst [vmem:[#allocation3] sm:$0xff] %v3214
  %3221 = vst [vmem:[#allocation3 + $0x8] sm:$0xff] %v3215
  %3222 = vst [vmem:[#allocation2] sm:$0xff] %v3218
  %3223 = vst [vmem:[#allocation2 + $0x8] sm:$0xff] %v3219
  %v3224 = vpack.c.bf16 %v3219, %v3218
  %v3226 = vunpack.c.l.b16 %v3224
  %v3227 = vunpack.c.h.b16 %v3224
  %v3228 = vpack.c.b16 %v3226, %v3226
  %v3229 = vpack.c.b16 %v3227, %v3227
  %3232 = vst [vmem:[%s4] sm:$0xf] %v3228
  %3233 = vst [vmem:[%s4 + $0x4] sm:$0xf] %v3229
  %s3234 = scalar_lea.vmem %s1, 32
  %v3235 = vld [vmem:[%s3234] sm:$0xff]
  %v3236 = vld [vmem:[%s3234 + $0x8] sm:$0xff]
  %v3237 = vld [vmem:[%s3234 + $0x10] sm:$0xff]
  %v3238 = vld [vmem:[%s3234 + $0x18] sm:$0xff]
  %v3239 = vunpack.c.l.bf16 %v3235
  %v3240 = vunpack.c.h.bf16 %v3235
  %v3241 = vunpack.c.l.bf16 %v3236
  %v3242 = vunpack.c.h.bf16 %v3236
  %v3243 = vunpack.c.l.bf16 %v3237
  %v3244 = vunpack.c.h.bf16 %v3237
  %v3245 = vunpack.c.l.bf16 %v3238
  %v3246 = vunpack.c.h.bf16 %v3238
  %v3247 = vld [vmem:[#allocation2] sm:$0xff]
  %v3248 = vld [vmem:[#allocation2 + $0x8] sm:$0xff]
  %v3249 = vpack.c.bf16 %v3248, %v3247
  %v3250 = vld [vmem:[%s3] sm:$0xff]
  %v3251 = vld [vmem:[%s3 + $0x8] sm:$0xff]
  %v3252 = vld [vmem:[%s3 + $0x10] sm:$0xff]
  %v3253 = vld [vmem:[%s3 + $0x18] sm:$0xff]
  %v3254 = vld [vmem:[%s3 + $0x20] sm:$0xff]
  %v3255 = vld [vmem:[%s3 + $0x28] sm:$0xff]
  %v3256 = vld [vmem:[%s3 + $0x30] sm:$0xff]
  %v3257 = vld [vmem:[%s3 + $0x38] sm:$0xff]
  %v3258 = vld [vmem:[%s3 + $0x40] sm:$0xff]
  %v3259 = vld [vmem:[%s3 + $0x48] sm:$0xff]
  %v3260 = vld [vmem:[%s3 + $0x50] sm:$0xff]
  %v3261 = vld [vmem:[%s3 + $0x58] sm:$0xff]
  %v3262 = vld [vmem:[%s3 + $0x60] sm:$0xff]
  %v3263 = vld [vmem:[%s3 + $0x68] sm:$0xff]
  %v3264 = vld [vmem:[%s3 + $0x70] sm:$0xff]
  %v3265 = vld [vmem:[%s3 + $0x78] sm:$0xff]
  %v3266 = vld [vmem:[%s3 + $0x80] sm:$0xff]
  %v3267 = vld [vmem:[%s3 + $0x88] sm:$0xff]
  %v3268 = vld [vmem:[%s3 + $0x90] sm:$0xff]
  %v3269 = vld [vmem:[%s3 + $0x98] sm:$0xff]
  %v3270 = vld [vmem:[%s3 + $0xa0] sm:$0xff]
  %v3271 = vld [vmem:[%s3 + $0xa8] sm:$0xff]
  %v3272 = vld [vmem:[%s3 + $0xb0] sm:$0xff]
  %v3273 = vld [vmem:[%s3 + $0xb8] sm:$0xff]
  %v3274 = vld [vmem:[%s3 + $0xc0] sm:$0xff]
  %v3275 = vld [vmem:[%s3 + $0xc8] sm:$0xff]
  %v3276 = vld [vmem:[%s3 + $0xd0] sm:$0xff]
  %v3277 = vld [vmem:[%s3 + $0xd8] sm:$0xff]
  %v3278 = vld [vmem:[%s3 + $0xe0] sm:$0xff]
  %v3279 = vld [vmem:[%s3 + $0xe8] sm:$0xff]
  %v3280 = vld [vmem:[%s3 + $0xf0] sm:$0xff]
  %v3281 = vld [vmem:[%s3 + $0xf8] sm:$0xff]
  %v3314 = vunpack.c.l.b16 %v3250
  %v3315 = vunpack.c.h.b16 %v3250
  %v3316 = vunpack.c.l.b16 %v3251
  %v3317 = vunpack.c.h.b16 %v3251
  %v3318 = vunpack.c.l.b16 %v3252
  %v3319 = vunpack.c.h.b16 %v3252
  %v3320 = vunpack.c.l.b16 %v3253
  %v3321 = vunpack.c.h.b16 %v3253
  %v3322 = vunpack.c.l.b16 %v3254
  %v3323 = vunpack.c.h.b16 %v3254
  %v3324 = vunpack.c.l.b16 %v3255
  %v3325 = vunpack.c.h.b16 %v3255
  %v3326 = vunpack.c.l.b16 %v3256
  %v3327 = vunpack.c.h.b16 %v3256
  %v3328 = vunpack.c.l.b16 %v3257
  %v3329 = vunpack.c.h.b16 %v3257
  %v3330 = vunpack.c.l.b16 %v3258
  %v3331 = vunpack.c.h.b16 %v3258
  %v3332 = vunpack.c.l.b16 %v3259
  %v3333 = vunpack.c.h.b16 %v3259
  %v3334 = vunpack.c.l.b16 %v3260
  %v3335 = vunpack.c.h.b16 %v3260
  %v3336 = vunpack.c.l.b16 %v3261
  %v3337 = vunpack.c.h.b16 %v3261
  %v3338 = vunpack.c.l.b16 %v3262
  %v3339 = vunpack.c.h.b16 %v3262
  %v3340 = vunpack.c.l.b16 %v3263
  %v3341 = vunpack.c.h.b16 %v3263
  %v3342 = vunpack.c.l.b16 %v3264
  %v3343 = vunpack.c.h.b16 %v3264
  %v3344 = vunpack.c.l.b16 %v3265
  %v3345 = vunpack.c.h.b16 %v3265
  %v3346 = vunpack.c.l.b16 %v3266
  %v3347 = vunpack.c.h.b16 %v3266
  %v3348 = vunpack.c.l.b16 %v3267
  %v3349 = vunpack.c.h.b16 %v3267
  %v3350 = vunpack.c.l.b16 %v3268
  %v3351 = vunpack.c.h.b16 %v3268
  %v3352 = vunpack.c.l.b16 %v3269
  %v3353 = vunpack.c.h.b16 %v3269
  %v3354 = vunpack.c.l.b16 %v3270
  %v3355 = vunpack.c.h.b16 %v3270
  %v3356 = vunpack.c.l.b16 %v3271
  %v3357 = vunpack.c.h.b16 %v3271
  %v3358 = vunpack.c.l.b16 %v3272
  %v3359 = vunpack.c.h.b16 %v3272
  %v3360 = vunpack.c.l.b16 %v3273
  %v3361 = vunpack.c.h.b16 %v3273
  %v3362 = vunpack.c.l.b16 %v3274
  %v3363 = vunpack.c.h.b16 %v3274
  %v3364 = vunpack.c.l.b16 %v3275
  %v3365 = vunpack.c.h.b16 %v3275
  %v3366 = vunpack.c.l.b16 %v3276
  %v3367 = vunpack.c.h.b16 %v3276
  %v3368 = vunpack.c.l.b16 %v3277
  %v3369 = vunpack.c.h.b16 %v3277
  %v3370 = vunpack.c.l.b16 %v3278
  %v3371 = vunpack.c.h.b16 %v3278
  %v3372 = vunpack.c.l.b16 %v3279
  %v3373 = vunpack.c.h.b16 %v3279
  %v3374 = vunpack.c.l.b16 %v3280
  %v3375 = vunpack.c.h.b16 %v3280
  %v3376 = vunpack.c.l.b16 %v3281
  %v3377 = vunpack.c.h.b16 %v3281
  %v3378 = vpack.c.b16 %v3318, %v3314
  %v3379 = vpack.c.b16 %v3319, %v3315
  %v3380 = vpack.c.b16 %v3320, %v3316
  %v3381 = vpack.c.b16 %v3321, %v3317
  %v3382 = vpack.c.b16 %v3326, %v3322
  %v3383 = vpack.c.b16 %v3327, %v3323
  %v3384 = vpack.c.b16 %v3328, %v3324
  %v3385 = vpack.c.b16 %v3329, %v3325
  %v3386 = vpack.c.b16 %v3334, %v3330
  %v3387 = vpack.c.b16 %v3335, %v3331
  %v3388 = vpack.c.b16 %v3336, %v3332
  %v3389 = vpack.c.b16 %v3337, %v3333
  %v3390 = vpack.c.b16 %v3342, %v3338
  %v3391 = vpack.c.b16 %v3343, %v3339
  %v3392 = vpack.c.b16 %v3344, %v3340
  %v3393 = vpack.c.b16 %v3345, %v3341
  %v3394 = vpack.c.b16 %v3350, %v3346
  %v3395 = vpack.c.b16 %v3351, %v3347
  %v3396 = vpack.c.b16 %v3352, %v3348
  %v3397 = vpack.c.b16 %v3353, %v3349
  %v3398 = vpack.c.b16 %v3358, %v3354
  %v3399 = vpack.c.b16 %v3359, %v3355
  %v3400 = vpack.c.b16 %v3360, %v3356
  %v3401 = vpack.c.b16 %v3361, %v3357
  %v3402 = vpack.c.b16 %v3366, %v3362
  %v3403 = vpack.c.b16 %v3367, %v3363
  %v3404 = vpack.c.b16 %v3368, %v3364
  %v3405 = vpack.c.b16 %v3369, %v3365
  %v3406 = vpack.c.b16 %v3374, %v3370
  %v3407 = vpack.c.b16 %v3375, %v3371
  %v3408 = vpack.c.b16 %v3376, %v3372
  %v3409 = vpack.c.b16 %v3377, %v3373
  %3442 = vmatprep.subr.bf16.mxu0 %v3407
  %3443 = vmatpush1.bf16.msra.mxu0 %v3406
  %3444 = vmatprep.subr.bf16.mxu0 %v3403
  %3445 = vmatpush1.bf16.msra.mxu0 %v3402
  %3446 = vmatprep.subr.bf16.mxu0 %v3399
  %3447 = vmatpush1.bf16.msra.mxu0 %v3398
  %3448 = vmatprep.subr.bf16.mxu0 %v3395
  %3449 = vmatpush1.bf16.msra.mxu0 %v3394
  %3450 = vmatprep.subr.bf16.mxu0 %v3391
  %3451 = vmatpush1.bf16.msra.mxu0 %v3390
  %3452 = vmatprep.subr.bf16.mxu0 %v3387
  %3453 = vmatpush1.bf16.msra.mxu0 %v3386
  %3454 = vmatprep.subr.bf16.mxu0 %v3383
  %3455 = vmatpush1.bf16.msra.mxu0 %v3382
  %3456 = vmatprep.subr.bf16.mxu0 %v3379
  %3457 = vmatpush1.bf16.msra.mxu0 %v3378
  %3458 = vmatprep.subr.bf16.mxu0 0
  %3459 = vmatpush2.bf16.msra.mxu0 0
  %3460 = vmatprep.subr.bf16.mxu0 0
  %3461 = vmatpush2.bf16.msra.mxu0 0
  %3462 = vmatprep.subr.bf16.mxu0 0
  %3463 = vmatpush2.bf16.msra.mxu0 0
  %3464 = vmatprep.subr.bf16.mxu0 0
  %3465 = vmatpush2.bf16.msra.mxu0 0
  %3466 = vmatprep.subr.bf16.mxu0 0
  %3467 = vmatpush2.bf16.msra.mxu0 0
  %3468 = vmatprep.subr.bf16.mxu0 0
  %3469 = vmatpush2.bf16.msra.mxu0 0
  %3470 = vmatprep.subr.bf16.mxu0 0
  %3471 = vmatpush2.bf16.msra.mxu0 0
  %3472 = vmatprep.subr.bf16.mxu0 0
  %3473 = vmatpush2.bf16.msra.mxu0 0
  %3474 = vmatprep.mubr.bf16.mxu0 0
  %3475 = vmatmul.mubr.bf16.gmra.mxu0 %v3249
  %v3476 = vpop.f32.mrf.mxu0
  %v3477 = vadd.f32 0.0, %v3476
  %v3478 = vpop.f32.mrf.mxu0
  %v3479 = vadd.f32 0.0, %v3478
  %v3480 = vpop.f32.mrf.mxu0
  %v3481 = vadd.f32 0.0, %v3480
  %v3482 = vpop.f32.mrf.mxu0
  %v3483 = vadd.f32 0.0, %v3482
  %3484 = vdwg.mxu0
  %3485 = vmatprep.subr.bf16.mxu0 %v3409
  %3486 = vmatpush1.bf16.msra.mxu0 %v3408
  %3487 = vmatprep.subr.bf16.mxu0 %v3405
  %3488 = vmatpush1.bf16.msra.mxu0 %v3404
  %3489 = vmatprep.subr.bf16.mxu0 %v3401
  %3490 = vmatpush1.bf16.msra.mxu0 %v3400
  %3491 = vmatprep.subr.bf16.mxu0 %v3397
  %3492 = vmatpush1.bf16.msra.mxu0 %v3396
  %3493 = vmatprep.subr.bf16.mxu0 %v3393
  %3494 = vmatpush1.bf16.msra.mxu0 %v3392
  %3495 = vmatprep.subr.bf16.mxu0 %v3389
  %3496 = vmatpush1.bf16.msra.mxu0 %v3388
  %3497 = vmatprep.subr.bf16.mxu0 %v3385
  %3498 = vmatpush1.bf16.msra.mxu0 %v3384
  %3499 = vmatprep.subr.bf16.mxu0 %v3381
  %3500 = vmatpush1.bf16.msra.mxu0 %v3380
  %3501 = vmatprep.subr.bf16.mxu0 0
  %3502 = vmatpush2.bf16.msra.mxu0 0
  %3503 = vmatprep.subr.bf16.mxu0 0
  %3504 = vmatpush2.bf16.msra.mxu0 0
  %3505 = vmatprep.subr.bf16.mxu0 0
  %3506 = vmatpush2.bf16.msra.mxu0 0
  %3507 = vmatprep.subr.bf16.mxu0 0
  %3508 = vmatpush2.bf16.msra.mxu0 0
  %3509 = vmatprep.subr.bf16.mxu0 0
  %3510 = vmatpush2.bf16.msra.mxu0 0
  %3511 = vmatprep.subr.bf16.mxu0 0
  %3512 = vmatpush2.bf16.msra.mxu0 0
  %3513 = vmatprep.subr.bf16.mxu0 0
  %3514 = vmatpush2.bf16.msra.mxu0 0
  %3515 = vmatprep.subr.bf16.mxu0 0
  %3516 = vmatpush2.bf16.msra.mxu0 0
  %3517 = vmatprep.mubr.bf16.mxu0 0
  %3518 = vmatmul.mubr.bf16.gmra.mxu0 %v3249
  %v3519 = vpop.f32.mrf.mxu0
  %v3520 = vadd.f32 0.0, %v3519
  %v3521 = vpop.f32.mrf.mxu0
  %v3522 = vadd.f32 0.0, %v3521
  %v3523 = vpop.f32.mrf.mxu0
  %v3524 = vadd.f32 0.0, %v3523
  %v3525 = vpop.f32.mrf.mxu0
  %v3526 = vadd.f32 0.0, %v3525
  %3527 = vdwg.mxu0
  %v3528 = vadd.f32 %v3239, %v3477
  %v3529 = vadd.f32 %v3240, %v3479
  %v3530 = vadd.f32 %v3241, %v3520
  %v3531 = vadd.f32 %v3242, %v3522
  %v3532 = vadd.f32 %v3243, %v3481
  %v3533 = vadd.f32 %v3244, %v3483
  %v3534 = vadd.f32 %v3245, %v3524
  %v3535 = vadd.f32 %v3246, %v3526
  %v3536 = vxor.u32 %v3528, 2147483648
  %v3537 = vxor.u32 %v3532, 2147483648
  %v3538 = vmul.f32 %v3536, 1.442695
  %v3539 = vpow.pop %v3538
  %v3540 = vmul.f32 %v3537, 1.442695
  %v3541 = vpow.pop %v3540
  %v3542 = vadd.f32 %v3539, 1.0
  %v3543 = vadd.f32 %v3541, 1.0
  %v3544 = vrcp.pop %v3542
  %v3545 = vmul.f32 1.0, %v3544
  %v3546 = vrcp.pop %v3543
  %v3547 = vmul.f32 1.0, %v3546
  %v3548 = vxor.u32 %v3529, 2147483648
  %v3549 = vxor.u32 %v3533, 2147483648
  %v3550 = vmul.f32 %v3548, 1.442695
  %v3551 = vpow.pop %v3550
  %v3552 = vmul.f32 %v3549, 1.442695
  %v3553 = vpow.pop %v3552
  %v3554 = vadd.f32 %v3551, 1.0
  %v3555 = vadd.f32 %v3553, 1.0
  %v3556 = vrcp.pop %v3554
  %v3557 = vmul.f32 1.0, %v3556
  %v3558 = vrcp.pop %v3555
  %v3559 = vmul.f32 1.0, %v3558
  %v3560 = vtanh.pop %v3530
  %v3561 = vtanh.pop %v3534
  %v3562 = vxor.u32 %v3531, 2147483648
  %v3563 = vxor.u32 %v3535, 2147483648
  %v3564 = vmul.f32 %v3562, 1.442695
  %v3565 = vpow.pop %v3564
  %v3566 = vmul.f32 %v3563, 1.442695
  %v3567 = vpow.pop %v3566
  %v3568 = vadd.f32 %v3565, 1.0
  %v3569 = vadd.f32 %v3567, 1.0
  %v3570 = vrcp.pop %v3568
  %v3571 = vmul.f32 1.0, %v3570
  %v3572 = vrcp.pop %v3569
  %v3573 = vmul.f32 1.0, %v3572
  %v3574 = vld [vmem:[#allocation3] sm:$0xff]
  %v3575 = vld [vmem:[#allocation3 + $0x8] sm:$0xff]
  %v3576 = vmul.f32 %v3557, %v3574
  %v3577 = vmul.f32 %v3559, %v3575
  %v3578 = vmul.f32 %v3545, %v3560
  %v3579 = vmul.f32 %v3547, %v3561
  %v3580 = vadd.f32 %v3576, %v3578
  %v3581 = vadd.f32 %v3577, %v3579
  %v3582 = vtanh.pop %v3580
  %v3583 = vtanh.pop %v3581
  %v3584 = vmul.f32 %v3571, %v3582
  %v3585 = vmul.f32 %v3573, %v3583
  %3586 = vst [vmem:[#allocation3] sm:$0xff] %v3580
  %3587 = vst [vmem:[#allocation3 + $0x8] sm:$0xff] %v3581
  %3588 = vst [vmem:[#allocation2] sm:$0xff] %v3584
  %3589 = vst [vmem:[#allocation2 + $0x8] sm:$0xff] %v3585
  %v3590 = vpack.c.bf16 %v3585, %v3584
  %v3592 = vunpack.c.l.b16 %v3590
  %v3593 = vunpack.c.h.b16 %v3590
  %v3594 = vpack.c.b16 %v3592, %v3592
  %v3595 = vpack.c.b16 %v3593, %v3593
  %s3598 = scalar_lea.vmem %s4, 8
  %3599 = vst [vmem:[%s3598] sm:$0xf] %v3594
  %3600 = vst [vmem:[%s3598 + $0x4] sm:$0xf] %v3595
  %s3601 = scalar_lea.vmem %s1, 64
  %v3602 = vld [vmem:[%s3601] sm:$0xff]
  %v3603 = vld [vmem:[%s3601 + $0x8] sm:$0xff]
  %v3604 = vld [vmem:[%s3601 + $0x10] sm:$0xff]
  %v3605 = vld [vmem:[%s3601 + $0x18] sm:$0xff]
  %v3606 = vunpack.c.l.bf16 %v3602
  %v3607 = vunpack.c.h.bf16 %v3602
  %v3608 = vunpack.c.l.bf16 %v3603
  %v3609 = vunpack.c.h.bf16 %v3603
  %v3610 = vunpack.c.l.bf16 %v3604
  %v3611 = vunpack.c.h.bf16 %v3604
  %v3612 = vunpack.c.l.bf16 %v3605
  %v3613 = vunpack.c.h.bf16 %v3605
  %v3614 = vld [vmem:[#allocation2] sm:$0xff]
  %v3615 = vld [vmem:[#allocation2 + $0x8] sm:$0xff]
  %v3616 = vpack.c.bf16 %v3615, %v3614
  %v3617 = vld [vmem:[%s3] sm:$0xff]
  %v3618 = vld [vmem:[%s3 + $0x8] sm:$0xff]
  %v3619 = vld [vmem:[%s3 + $0x10] sm:$0xff]
  %v3620 = vld [vmem:[%s3 + $0x18] sm:$0xff]
  %v3621 = vld [vmem:[%s3 + $0x20] sm:$0xff]
  %v3622 = vld [vmem:[%s3 + $0x28] sm:$0xff]
  %v3623 = vld [vmem:[%s3 + $0x30] sm:$0xff]
  %v3624 = vld [vmem:[%s3 + $0x38] sm:$0xff]
  %v3625 = vld [vmem:[%s3 + $0x40] sm:$0xff]
  %v3626 = vld [vmem:[%s3 + $0x48] sm:$0xff]
  %v3627 = vld [vmem:[%s3 + $0x50] sm:$0xff]
  %v3628 = vld [vmem:[%s3 + $0x58] sm:$0xff]
  %v3629 = vld [vmem:[%s3 + $0x60] sm:$0xff]
  %v3630 = vld [vmem:[%s3 + $0x68] sm:$0xff]
  %v3631 = vld [vmem:[%s3 + $0x70] sm:$0xff]
  %v3632 = vld [vmem:[%s3 + $0x78] sm:$0xff]
  %v3633 = vld [vmem:[%s3 + $0x80] sm:$0xff]
  %v3634 = vld [vmem:[%s3 + $0x88] sm:$0xff]
  %v3635 = vld [vmem:[%s3 + $0x90] sm:$0xff]
  %v3636 = vld [vmem:[%s3 + $0x98] sm:$0xff]
  %v3637 = vld [vmem:[%s3 + $0xa0] sm:$0xff]
  %v3638 = vld [vmem:[%s3 + $0xa8] sm:$0xff]
  %v3639 = vld [vmem:[%s3 + $0xb0] sm:$0xff]
  %v3640 = vld [vmem:[%s3 + $0xb8] sm:$0xff]
  %v3641 = vld [vmem:[%s3 + $0xc0] sm:$0xff]
  %v3642 = vld [vmem:[%s3 + $0xc8] sm:$0xff]
  %v3643 = vld [vmem:[%s3 + $0xd0] sm:$0xff]
  %v3644 = vld [vmem:[%s3 + $0xd8] sm:$0xff]
  %v3645 = vld [vmem:[%s3 + $0xe0] sm:$0xff]
  %v3646 = vld [vmem:[%s3 + $0xe8] sm:$0xff]
  %v3647 = vld [vmem:[%s3 + $0xf0] sm:$0xff]
  %v3648 = vld [vmem:[%s3 + $0xf8] sm:$0xff]
  %v3681 = vunpack.c.l.b16 %v3617
  %v3682 = vunpack.c.h.b16 %v3617
  %v3683 = vunpack.c.l.b16 %v3618
  %v3684 = vunpack.c.h.b16 %v3618
  %v3685 = vunpack.c.l.b16 %v3619
  %v3686 = vunpack.c.h.b16 %v3619
  %v3687 = vunpack.c.l.b16 %v3620
  %v3688 = vunpack.c.h.b16 %v3620
  %v3689 = vunpack.c.l.b16 %v3621
  %v3690 = vunpack.c.h.b16 %v3621
  %v3691 = vunpack.c.l.b16 %v3622
  %v3692 = vunpack.c.h.b16 %v3622
  %v3693 = vunpack.c.l.b16 %v3623
  %v3694 = vunpack.c.h.b16 %v3623
  %v3695 = vunpack.c.l.b16 %v3624
  %v3696 = vunpack.c.h.b16 %v3624
  %v3697 = vunpack.c.l.b16 %v3625
  %v3698 = vunpack.c.h.b16 %v3625
  %v3699 = vunpack.c.l.b16 %v3626
  %v3700 = vunpack.c.h.b16 %v3626
  %v3701 = vunpack.c.l.b16 %v3627
  %v3702 = vunpack.c.h.b16 %v3627
  %v3703 = vunpack.c.l.b16 %v3628
  %v3704 = vunpack.c.h.b16 %v3628
  %v3705 = vunpack.c.l.b16 %v3629
  %v3706 = vunpack.c.h.b16 %v3629
  %v3707 = vunpack.c.l.b16 %v3630
  %v3708 = vunpack.c.h.b16 %v3630
  %v3709 = vunpack.c.l.b16 %v3631
  %v3710 = vunpack.c.h.b16 %v3631
  %v3711 = vunpack.c.l.b16 %v3632
  %v3712 = vunpack.c.h.b16 %v3632
  %v3713 = vunpack.c.l.b16 %v3633
  %v3714 = vunpack.c.h.b16 %v3633
  %v3715 = vunpack.c.l.b16 %v3634
  %v3716 = vunpack.c.h.b16 %v3634
  %v3717 = vunpack.c.l.b16 %v3635
  %v3718 = vunpack.c.h.b16 %v3635
  %v3719 = vunpack.c.l.b16 %v3636
  %v3720 = vunpack.c.h.b16 %v3636
  %v3721 = vunpack.c.l.b16 %v3637
  %v3722 = vunpack.c.h.b16 %v3637
  %v3723 = vunpack.c.l.b16 %v3638
  %v3724 = vunpack.c.h.b16 %v3638
  %v3725 = vunpack.c.l.b16 %v3639
  %v3726 = vunpack.c.h.b16 %v3639
  %v3727 = vunpack.c.l.b16 %v3640
  %v3728 = vunpack.c.h.b16 %v3640
  %v3729 = vunpack.c.l.b16 %v3641
  %v3730 = vunpack.c.h.b16 %v3641
  %v3731 = vunpack.c.l.b16 %v3642
  %v3732 = vunpack.c.h.b16 %v3642
  %v3733 = vunpack.c.l.b16 %v3643
  %v3734 = vunpack.c.h.b16 %v3643
  %v3735 = vunpack.c.l.b16 %v3644
  %v3736 = vunpack.c.h.b16 %v3644
  %v3737 = vunpack.c.l.b16 %v3645
  %v3738 = vunpack.c.h.b16 %v3645
  %v3739 = vunpack.c.l.b16 %v3646
  %v3740 = vunpack.c.h.b16 %v3646
  %v3741 = vunpack.c.l.b16 %v3647
  %v3742 = vunpack.c.h.b16 %v3647
  %v3743 = vunpack.c.l.b16 %v3648
  %v3744 = vunpack.c.h.b16 %v3648
  %v3745 = vpack.c.b16 %v3685, %v3681
  %v3746 = vpack.c.b16 %v3686, %v3682
  %v3747 = vpack.c.b16 %v3687, %v3683
  %v3748 = vpack.c.b16 %v3688, %v3684
  %v3749 = vpack.c.b16 %v3693, %v3689
  %v3750 = vpack.c.b16 %v3694, %v3690
  %v3751 = vpack.c.b16 %v3695, %v3691
  %v3752 = vpack.c.b16 %v3696, %v3692
  %v3753 = vpack.c.b16 %v3701, %v3697
  %v3754 = vpack.c.b16 %v3702, %v3698
  %v3755 = vpack.c.b16 %v3703, %v3699
  %v3756 = vpack.c.b16 %v3704, %v3700
  %v3757 = vpack.c.b16 %v3709, %v3705
  %v3758 = vpack.c.b16 %v3710, %v3706
  %v3759 = vpack.c.b16 %v3711, %v3707
  %v3760 = vpack.c.b16 %v3712, %v3708
  %v3761 = vpack.c.b16 %v3717, %v3713
  %v3762 = vpack.c.b16 %v3718, %v3714
  %v3763 = vpack.c.b16 %v3719, %v3715
  %v3764 = vpack.c.b16 %v3720, %v3716
  %v3765 = vpack.c.b16 %v3725, %v3721
  %v3766 = vpack.c.b16 %v3726, %v3722
  %v3767 = vpack.c.b16 %v3727, %v3723
  %v3768 = vpack.c.b16 %v3728, %v3724
  %v3769 = vpack.c.b16 %v3733, %v3729
  %v3770 = vpack.c.b16 %v3734, %v3730
  %v3771 = vpack.c.b16 %v3735, %v3731
  %v3772 = vpack.c.b16 %v3736, %v3732
  %v3773 = vpack.c.b16 %v3741, %v3737
  %v3774 = vpack.c.b16 %v3742, %v3738
  %v3775 = vpack.c.b16 %v3743, %v3739
  %v3776 = vpack.c.b16 %v3744, %v3740
  %3809 = vmatprep.subr.bf16.mxu0 %v3774
  %3810 = vmatpush1.bf16.msra.mxu0 %v3773
  %3811 = vmatprep.subr.bf16.mxu0 %v3770
  %3812 = vmatpush1.bf16.msra.mxu0 %v3769
  %3813 = vmatprep.subr.bf16.mxu0 %v3766
  %3814 = vmatpush1.bf16.msra.mxu0 %v3765
  %3815 = vmatprep.subr.bf16.mxu0 %v3762
  %3816 = vmatpush1.bf16.msra.mxu0 %v3761
  %3817 = vmatprep.subr.bf16.mxu0 %v3758
  %3818 = vmatpush1.bf16.msra.mxu0 %v3757
  %3819 = vmatprep.subr.bf16.mxu0 %v3754
  %3820 = vmatpush1.bf16.msra.mxu0 %v3753
  %3821 = vmatprep.subr.bf16.mxu0 %v3750
  %3822 = vmatpush1.bf16.msra.mxu0 %v3749
  %3823 = vmatprep.subr.bf16.mxu0 %v3746
  %3824 = vmatpush1.bf16.msra.mxu0 %v3745
  %3825 = vmatprep.subr.bf16.mxu0 0
  %3826 = vmatpush2.bf16.msra.mxu0 0
  %3827 = vmatprep.subr.bf16.mxu0 0
  %3828 = vmatpush2.bf16.msra.mxu0 0
  %3829 = vmatprep.subr.bf16.mxu0 0
  %3830 = vmatpush2.bf16.msra.mxu0 0
  %3831 = vmatprep.subr.bf16.mxu0 0
  %3832 = vmatpush2.bf16.msra.mxu0 0
  %3833 = vmatprep.subr.bf16.mxu0 0
  %3834 = vmatpush2.bf16.msra.mxu0 0
  %3835 = vmatprep.subr.bf16.mxu0 0
  %3836 = vmatpush2.bf16.msra.mxu0 0
  %3837 = vmatprep.subr.bf16.mxu0 0
  %3838 = vmatpush2.bf16.msra.mxu0 0
  %3839 = vmatprep.subr.bf16.mxu0 0
  %3840 = vmatpush2.bf16.msra.mxu0 0
  %3841 = vmatprep.mubr.bf16.mxu0 0
  %3842 = vmatmul.mubr.bf16.gmra.mxu0 %v3616
  %v3843 = vpop.f32.mrf.mxu0
  %v3844 = vadd.f32 0.0, %v3843
  %v3845 = vpop.f32.mrf.mxu0
  %v3846 = vadd.f32 0.0, %v3845
  %v3847 = vpop.f32.mrf.mxu0
  %v3848 = vadd.f32 0.0, %v3847
  %v3849 = vpop.f32.mrf.mxu0
  %v3850 = vadd.f32 0.0, %v3849
  %3851 = vdwg.mxu0
  %3852 = vmatprep.subr.bf16.mxu0 %v3776
  %3853 = vmatpush1.bf16.msra.mxu0 %v3775
  %3854 = vmatprep.subr.bf16.mxu0 %v3772
  %3855 = vmatpush1.bf16.msra.mxu0 %v3771
  %3856 = vmatprep.subr.bf16.mxu0 %v3768
  %3857 = vmatpush1.bf16.msra.mxu0 %v3767
  %3858 = vmatprep.subr.bf16.mxu0 %v3764
  %3859 = vmatpush1.bf16.msra.mxu0 %v3763
  %3860 = vmatprep.subr.bf16.mxu0 %v3760
  %3861 = vmatpush1.bf16.msra.mxu0 %v3759
  %3862 = vmatprep.subr.bf16.mxu0 %v3756
  %3863 = vmatpush1.bf16.msra.mxu0 %v3755
  %3864 = vmatprep.subr.bf16.mxu0 %v3752
  %3865 = vmatpush1.bf16.msra.mxu0 %v3751
  %3866 = vmatprep.subr.bf16.mxu0 %v3748
  %3867 = vmatpush1.bf16.msra.mxu0 %v3747
  %3868 = vmatprep.subr.bf16.mxu0 0
  %3869 = vmatpush2.bf16.msra.mxu0 0
  %3870 = vmatprep.subr.bf16.mxu0 0
  %3871 = vmatpush2.bf16.msra.mxu0 0
  %3872 = vmatprep.subr.bf16.mxu0 0
  %3873 = vmatpush2.bf16.msra.mxu0 0
  %3874 = vmatprep.subr.bf16.mxu0 0
  %3875 = vmatpush2.bf16.msra.mxu0 0
  %3876 = vmatprep.subr.bf16.mxu0 0
  %3877 = vmatpush2.bf16.msra.mxu0 0
  %3878 = vmatprep.subr.bf16.mxu0 0
  %3879 = vmatpush2.bf16.msra.mxu0 0
  %3880 = vmatprep.subr.bf16.mxu0 0
  %3881 = vmatpush2.bf16.msra.mxu0 0
  %3882 = vmatprep.subr.bf16.mxu0 0
  %3883 = vmatpush2.bf16.msra.mxu0 0
  %3884 = vmatprep.mubr.bf16.mxu0 0
  %3885 = vmatmul.mubr.bf16.gmra.mxu0 %v3616
  %v3886 = vpop.f32.mrf.mxu0
  %v3887 = vadd.f32 0.0, %v3886
  %v3888 = vpop.f32.mrf.mxu0
  %v3889 = vadd.f32 0.0, %v3888
  %v3890 = vpop.f32.mrf.mxu0
  %v3891 = vadd.f32 0.0, %v3890
  %v3892 = vpop.f32.mrf.mxu0
  %v3893 = vadd.f32 0.0, %v3892
  %3894 = vdwg.mxu0
  %v3895 = vadd.f32 %v3606, %v3844
  %v3896 = vadd.f32 %v3607, %v3846
  %v3897 = vadd.f32 %v3608, %v3887
  %v3898 = vadd.f32 %v3609, %v3889
  %v3899 = vadd.f32 %v3610, %v3848
  %v3900 = vadd.f32 %v3611, %v3850
  %v3901 = vadd.f32 %v3612, %v3891
  %v3902 = vadd.f32 %v3613, %v3893
  %v3903 = vxor.u32 %v3895, 2147483648
  %v3904 = vxor.u32 %v3899, 2147483648
  %v3905 = vmul.f32 %v3903, 1.442695
  %v3906 = vpow.pop %v3905
  %v3907 = vmul.f32 %v3904, 1.442695
  %v3908 = vpow.pop %v3907
  %v3909 = vadd.f32 %v3906, 1.0
  %v3910 = vadd.f32 %v3908, 1.0
  %v3911 = vrcp.pop %v3909
  %v3912 = vmul.f32 1.0, %v3911
  %v3913 = vrcp.pop %v3910
  %v3914 = vmul.f32 1.0, %v3913
  %v3915 = vxor.u32 %v3896, 2147483648
  %v3916 = vxor.u32 %v3900, 2147483648
  %v3917 = vmul.f32 %v3915, 1.442695
  %v3918 = vpow.pop %v3917
  %v3919 = vmul.f32 %v3916, 1.442695
  %v3920 = vpow.pop %v3919
  %v3921 = vadd.f32 %v3918, 1.0
  %v3922 = vadd.f32 %v3920, 1.0
  %v3923 = vrcp.pop %v3921
  %v3924 = vmul.f32 1.0, %v3923
  %v3925 = vrcp.pop %v3922
  %v3926 = vmul.f32 1.0, %v3925
  %v3927 = vtanh.pop %v3897
  %v3928 = vtanh.pop %v3901
  %v3929 = vxor.u32 %v3898, 2147483648
  %v3930 = vxor.u32 %v3902, 2147483648
  %v3931 = vmul.f32 %v3929, 1.442695
  %v3932 = vpow.pop %v3931
  %v3933 = vmul.f32 %v3930, 1.442695
  %v3934 = vpow.pop %v3933
  %v3935 = vadd.f32 %v3932, 1.0
  %v3936 = vadd.f32 %v3934, 1.0
  %v3937 = vrcp.pop %v3935
  %v3938 = vmul.f32 1.0, %v3937
  %v3939 = vrcp.pop %v3936
  %v3940 = vmul.f32 1.0, %v3939
  %v3941 = vld [vmem:[#allocation3] sm:$0xff]
  %v3942 = vld [vmem:[#allocation3 + $0x8] sm:$0xff]
  %v3943 = vmul.f32 %v3924, %v3941
  %v3944 = vmul.f32 %v3926, %v3942
  %v3945 = vmul.f32 %v3912, %v3927
  %v3946 = vmul.f32 %v3914, %v3928
  %v3947 = vadd.f32 %v3943, %v3945
  %v3948 = vadd.f32 %v3944, %v3946
  %v3949 = vtanh.pop %v3947
  %v3950 = vtanh.pop %v3948
  %v3951 = vmul.f32 %v3938, %v3949
  %v3952 = vmul.f32 %v3940, %v3950
  %3953 = vst [vmem:[#allocation3] sm:$0xff] %v3947
  %3954 = vst [vmem:[#allocation3 + $0x8] sm:$0xff] %v3948
  %3955 = vst [vmem:[#allocation2] sm:$0xff] %v3951
  %3956 = vst [vmem:[#allocation2 + $0x8] sm:$0xff] %v3952
  %v3957 = vpack.c.bf16 %v3952, %v3951
  %v3959 = vunpack.c.l.b16 %v3957
  %v3960 = vunpack.c.h.b16 %v3957
  %v3961 = vpack.c.b16 %v3959, %v3959
  %v3962 = vpack.c.b16 %v3960, %v3960
  %s3965 = scalar_lea.vmem %s4, 16
  %3966 = vst [vmem:[%s3965] sm:$0xf] %v3961
  %3967 = vst [vmem:[%s3965 + $0x4] sm:$0xf] %v3962
  %s3968 = scalar_lea.vmem %s1, 96
  %v3969 = vld [vmem:[%s3968] sm:$0xff]
  %v3970 = vld [vmem:[%s3968 + $0x8] sm:$0xff]
  %v3971 = vld [vmem:[%s3968 + $0x10] sm:$0xff]
  %v3972 = vld [vmem:[%s3968 + $0x18] sm:$0xff]
  %v3973 = vunpack.c.l.bf16 %v3969
  %v3974 = vunpack.c.h.bf16 %v3969
  %v3975 = vunpack.c.l.bf16 %v3970
  %v3976 = vunpack.c.h.bf16 %v3970
  %v3977 = vunpack.c.l.bf16 %v3971
  %v3978 = vunpack.c.h.bf16 %v3971
  %v3979 = vunpack.c.l.bf16 %v3972
  %v3980 = vunpack.c.h.bf16 %v3972
  %v3981 = vld [vmem:[#allocation2] sm:$0xff]
  %v3982 = vld [vmem:[#allocation2 + $0x8] sm:$0xff]
  %v3983 = vpack.c.bf16 %v3982, %v3981
  %v3984 = vld [vmem:[%s3] sm:$0xff]
  %v3985 = vld [vmem:[%s3 + $0x8] sm:$0xff]
  %v3986 = vld [vmem:[%s3 + $0x10] sm:$0xff]
  %v3987 = vld [vmem:[%s3 + $0x18] sm:$0xff]
  %v3988 = vld [vmem:[%s3 + $0x20] sm:$0xff]
  %v3989 = vld [vmem:[%s3 + $0x28] sm:$0xff]
  %v3990 = vld [vmem:[%s3 + $0x30] sm:$0xff]
  %v3991 = vld [vmem:[%s3 + $0x38] sm:$0xff]
  %v3992 = vld [vmem:[%s3 + $0x40] sm:$0xff]
  %v3993 = vld [vmem:[%s3 + $0x48] sm:$0xff]
  %v3994 = vld [vmem:[%s3 + $0x50] sm:$0xff]
  %v3995 = vld [vmem:[%s3 + $0x58] sm:$0xff]
  %v3996 = vld [vmem:[%s3 + $0x60] sm:$0xff]
  %v3997 = vld [vmem:[%s3 + $0x68] sm:$0xff]
  %v3998 = vld [vmem:[%s3 + $0x70] sm:$0xff]
  %v3999 = vld [vmem:[%s3 + $0x78] sm:$0xff]
  %v4000 = vld [vmem:[%s3 + $0x80] sm:$0xff]
  %v4001 = vld [vmem:[%s3 + $0x88] sm:$0xff]
  %v4002 = vld [vmem:[%s3 + $0x90] sm:$0xff]
  %v4003 = vld [vmem:[%s3 + $0x98] sm:$0xff]
  %v4004 = vld [vmem:[%s3 + $0xa0] sm:$0xff]
  %v4005 = vld [vmem:[%s3 + $0xa8] sm:$0xff]
  %v4006 = vld [vmem:[%s3 + $0xb0] sm:$0xff]
  %v4007 = vld [vmem:[%s3 + $0xb8] sm:$0xff]
  %v4008 = vld [vmem:[%s3 + $0xc0] sm:$0xff]
  %v4009 = vld [vmem:[%s3 + $0xc8] sm:$0xff]
  %v4010 = vld [vmem:[%s3 + $0xd0] sm:$0xff]
  %v4011 = vld [vmem:[%s3 + $0xd8] sm:$0xff]
  %v4012 = vld [vmem:[%s3 + $0xe0] sm:$0xff]
  %v4013 = vld [vmem:[%s3 + $0xe8] sm:$0xff]
  %v4014 = vld [vmem:[%s3 + $0xf0] sm:$0xff]
  %v4015 = vld [vmem:[%s3 + $0xf8] sm:$0xff]
  %v4048 = vunpack.c.l.b16 %v3984
  %v4049 = vunpack.c.h.b16 %v3984
  %v4050 = vunpack.c.l.b16 %v3985
  %v4051 = vunpack.c.h.b16 %v3985
  %v4052 = vunpack.c.l.b16 %v3986
  %v4053 = vunpack.c.h.b16 %v3986
  %v4054 = vunpack.c.l.b16 %v3987
  %v4055 = vunpack.c.h.b16 %v3987
  %v4056 = vunpack.c.l.b16 %v3988
  %v4057 = vunpack.c.h.b16 %v3988
  %v4058 = vunpack.c.l.b16 %v3989
  %v4059 = vunpack.c.h.b16 %v3989
  %v4060 = vunpack.c.l.b16 %v3990
  %v4061 = vunpack.c.h.b16 %v3990
  %v4062 = vunpack.c.l.b16 %v3991
  %v4063 = vunpack.c.h.b16 %v3991
  %v4064 = vunpack.c.l.b16 %v3992
  %v4065 = vunpack.c.h.b16 %v3992
  %v4066 = vunpack.c.l.b16 %v3993
  %v4067 = vunpack.c.h.b16 %v3993
  %v4068 = vunpack.c.l.b16 %v3994
  %v4069 = vunpack.c.h.b16 %v3994
  %v4070 = vunpack.c.l.b16 %v3995
  %v4071 = vunpack.c.h.b16 %v3995
  %v4072 = vunpack.c.l.b16 %v3996
  %v4073 = vunpack.c.h.b16 %v3996
  %v4074 = vunpack.c.l.b16 %v3997
  %v4075 = vunpack.c.h.b16 %v3997
  %v4076 = vunpack.c.l.b16 %v3998
  %v4077 = vunpack.c.h.b16 %v3998
  %v4078 = vunpack.c.l.b16 %v3999
  %v4079 = vunpack.c.h.b16 %v3999
  %v4080 = vunpack.c.l.b16 %v4000
  %v4081 = vunpack.c.h.b16 %v4000
  %v4082 = vunpack.c.l.b16 %v4001
  %v4083 = vunpack.c.h.b16 %v4001
  %v4084 = vunpack.c.l.b16 %v4002
  %v4085 = vunpack.c.h.b16 %v4002
  %v4086 = vunpack.c.l.b16 %v4003
  %v4087 = vunpack.c.h.b16 %v4003
  %v4088 = vunpack.c.l.b16 %v4004
  %v4089 = vunpack.c.h.b16 %v4004
  %v4090 = vunpack.c.l.b16 %v4005
  %v4091 = vunpack.c.h.b16 %v4005
  %v4092 = vunpack.c.l.b16 %v4006
  %v4093 = vunpack.c.h.b16 %v4006
  %v4094 = vunpack.c.l.b16 %v4007
  %v4095 = vunpack.c.h.b16 %v4007
  %v4096 = vunpack.c.l.b16 %v4008
  %v4097 = vunpack.c.h.b16 %v4008
  %v4098 = vunpack.c.l.b16 %v4009
  %v4099 = vunpack.c.h.b16 %v4009
  %v4100 = vunpack.c.l.b16 %v4010
  %v4101 = vunpack.c.h.b16 %v4010
  %v4102 = vunpack.c.l.b16 %v4011
  %v4103 = vunpack.c.h.b16 %v4011
  %v4104 = vunpack.c.l.b16 %v4012
  %v4105 = vunpack.c.h.b16 %v4012
  %v4106 = vunpack.c.l.b16 %v4013
  %v4107 = vunpack.c.h.b16 %v4013
  %v4108 = vunpack.c.l.b16 %v4014
  %v4109 = vunpack.c.h.b16 %v4014
  %v4110 = vunpack.c.l.b16 %v4015
  %v4111 = vunpack.c.h.b16 %v4015
  %v4112 = vpack.c.b16 %v4052, %v4048
  %v4113 = vpack.c.b16 %v4053, %v4049
  %v4114 = vpack.c.b16 %v4054, %v4050
  %v4115 = vpack.c.b16 %v4055, %v4051
  %v4116 = vpack.c.b16 %v4060, %v4056
  %v4117 = vpack.c.b16 %v4061, %v4057
  %v4118 = vpack.c.b16 %v4062, %v4058
  %v4119 = vpack.c.b16 %v4063, %v4059
  %v4120 = vpack.c.b16 %v4068, %v4064
  %v4121 = vpack.c.b16 %v4069, %v4065
  %v4122 = vpack.c.b16 %v4070, %v4066
  %v4123 = vpack.c.b16 %v4071, %v4067
  %v4124 = vpack.c.b16 %v4076, %v4072
  %v4125 = vpack.c.b16 %v4077, %v4073
  %v4126 = vpack.c.b16 %v4078, %v4074
  %v4127 = vpack.c.b16 %v4079, %v4075
  %v4128 = vpack.c.b16 %v4084, %v4080
  %v4129 = vpack.c.b16 %v4085, %v4081
  %v4130 = vpack.c.b16 %v4086, %v4082
  %v4131 = vpack.c.b16 %v4087, %v4083
  %v4132 = vpack.c.b16 %v4092, %v4088
  %v4133 = vpack.c.b16 %v4093, %v4089
  %v4134 = vpack.c.b16 %v4094, %v4090
  %v4135 = vpack.c.b16 %v4095, %v4091
  %v4136 = vpack.c.b16 %v4100, %v4096
  %v4137 = vpack.c.b16 %v4101, %v4097
  %v4138 = vpack.c.b16 %v4102, %v4098
  %v4139 = vpack.c.b16 %v4103, %v4099
  %v4140 = vpack.c.b16 %v4108, %v4104
  %v4141 = vpack.c.b16 %v4109, %v4105
  %v4142 = vpack.c.b16 %v4110, %v4106
  %v4143 = vpack.c.b16 %v4111, %v4107
  %4176 = vmatprep.subr.bf16.mxu0 %v4141
  %4177 = vmatpush1.bf16.msra.mxu0 %v4140
  %4178 = vmatprep.subr.bf16.mxu0 %v4137
  %4179 = vmatpush1.bf16.msra.mxu0 %v4136
  %4180 = vmatprep.subr.bf16.mxu0 %v4133
  %4181 = vmatpush1.bf16.msra.mxu0 %v4132
  %4182 = vmatprep.subr.bf16.mxu0 %v4129
  %4183 = vmatpush1.bf16.msra.mxu0 %v4128
  %4184 = vmatprep.subr.bf16.mxu0 %v4125
  %4185 = vmatpush1.bf16.msra.mxu0 %v4124
  %4186 = vmatprep.subr.bf16.mxu0 %v4121
  %4187 = vmatpush1.bf16.msra.mxu0 %v4120
  %4188 = vmatprep.subr.bf16.mxu0 %v4117
  %4189 = vmatpush1.bf16.msra.mxu0 %v4116
  %4190 = vmatprep.subr.bf16.mxu0 %v4113
  %4191 = vmatpush1.bf16.msra.mxu0 %v4112
  %4192 = vmatprep.subr.bf16.mxu0 0
  %4193 = vmatpush2.bf16.msra.mxu0 0
  %4194 = vmatprep.subr.bf16.mxu0 0
  %4195 = vmatpush2.bf16.msra.mxu0 0
  %4196 = vmatprep.subr.bf16.mxu0 0
  %4197 = vmatpush2.bf16.msra.mxu0 0
  %4198 = vmatprep.subr.bf16.mxu0 0
  %4199 = vmatpush2.bf16.msra.mxu0 0
  %4200 = vmatprep.subr.bf16.mxu0 0
  %4201 = vmatpush2.bf16.msra.mxu0 0
  %4202 = vmatprep.subr.bf16.mxu0 0
  %4203 = vmatpush2.bf16.msra.mxu0 0
  %4204 = vmatprep.subr.bf16.mxu0 0
  %4205 = vmatpush2.bf16.msra.mxu0 0
  %4206 = vmatprep.subr.bf16.mxu0 0
  %4207 = vmatpush2.bf16.msra.mxu0 0
  %4208 = vmatprep.mubr.bf16.mxu0 0
  %4209 = vmatmul.mubr.bf16.gmra.mxu0 %v3983
  %v4210 = vpop.f32.mrf.mxu0
  %v4211 = vadd.f32 0.0, %v4210
  %v4212 = vpop.f32.mrf.mxu0
  %v4213 = vadd.f32 0.0, %v4212
  %v4214 = vpop.f32.mrf.mxu0
  %v4215 = vadd.f32 0.0, %v4214
  %v4216 = vpop.f32.mrf.mxu0
  %v4217 = vadd.f32 0.0, %v4216
  %4218 = vdwg.mxu0
  %4219 = vmatprep.subr.bf16.mxu0 %v4143
  %4220 = vmatpush1.bf16.msra.mxu0 %v4142
  %4221 = vmatprep.subr.bf16.mxu0 %v4139
  %4222 = vmatpush1.bf16.msra.mxu0 %v4138
  %4223 = vmatprep.subr.bf16.mxu0 %v4135
  %4224 = vmatpush1.bf16.msra.mxu0 %v4134
  %4225 = vmatprep.subr.bf16.mxu0 %v4131
  %4226 = vmatpush1.bf16.msra.mxu0 %v4130
  %4227 = vmatprep.subr.bf16.mxu0 %v4127
  %4228 = vmatpush1.bf16.msra.mxu0 %v4126
  %4229 = vmatprep.subr.bf16.mxu0 %v4123
  %4230 = vmatpush1.bf16.msra.mxu0 %v4122
  %4231 = vmatprep.subr.bf16.mxu0 %v4119
  %4232 = vmatpush1.bf16.msra.mxu0 %v4118
  %4233 = vmatprep.subr.bf16.mxu0 %v4115
  %4234 = vmatpush1.bf16.msra.mxu0 %v4114
  %4235 = vmatprep.subr.bf16.mxu0 0
  %4236 = vmatpush2.bf16.msra.mxu0 0
  %4237 = vmatprep.subr.bf16.mxu0 0
  %4238 = vmatpush2.bf16.msra.mxu0 0
  %4239 = vmatprep.subr.bf16.mxu0 0
  %4240 = vmatpush2.bf16.msra.mxu0 0
  %4241 = vmatprep.subr.bf16.mxu0 0
  %4242 = vmatpush2.bf16.msra.mxu0 0
  %4243 = vmatprep.subr.bf16.mxu0 0
  %4244 = vmatpush2.bf16.msra.mxu0 0
  %4245 = vmatprep.subr.bf16.mxu0 0
  %4246 = vmatpush2.bf16.msra.mxu0 0
  %4247 = vmatprep.subr.bf16.mxu0 0
  %4248 = vmatpush2.bf16.msra.mxu0 0
  %4249 = vmatprep.subr.bf16.mxu0 0
  %4250 = vmatpush2.bf16.msra.mxu0 0
  %4251 = vmatprep.mubr.bf16.mxu0 0
  %4252 = vmatmul.mubr.bf16.gmra.mxu0 %v3983
  %v4253 = vpop.f32.mrf.mxu0
  %v4254 = vadd.f32 0.0, %v4253
  %v4255 = vpop.f32.mrf.mxu0
  %v4256 = vadd.f32 0.0, %v4255
  %v4257 = vpop.f32.mrf.mxu0
  %v4258 = vadd.f32 0.0, %v4257
  %v4259 = vpop.f32.mrf.mxu0
  %v4260 = vadd.f32 0.0, %v4259
  %4261 = vdwg.mxu0
  %v4262 = vadd.f32 %v3973, %v4211
  %v4263 = vadd.f32 %v3974, %v4213
  %v4264 = vadd.f32 %v3975, %v4254
  %v4265 = vadd.f32 %v3976, %v4256
  %v4266 = vadd.f32 %v3977, %v4215
  %v4267 = vadd.f32 %v3978, %v4217
  %v4268 = vadd.f32 %v3979, %v4258
  %v4269 = vadd.f32 %v3980, %v4260
  %v4270 = vxor.u32 %v4262, 2147483648
  %v4271 = vxor.u32 %v4266, 2147483648
  %v4272 = vmul.f32 %v4270, 1.442695
  %v4273 = vpow.pop %v4272
  %v4274 = vmul.f32 %v4271, 1.442695
  %v4275 = vpow.pop %v4274
  %v4276 = vadd.f32 %v4273, 1.0
  %v4277 = vadd.f32 %v4275, 1.0
  %v4278 = vrcp.pop %v4276
  %v4279 = vmul.f32 1.0, %v4278
  %v4280 = vrcp.pop %v4277
  %v4281 = vmul.f32 1.0, %v4280
  %v4282 = vxor.u32 %v4263, 2147483648
  %v4283 = vxor.u32 %v4267, 2147483648
  %v4284 = vmul.f32 %v4282, 1.442695
  %v4285 = vpow.pop %v4284
  %v4286 = vmul.f32 %v4283, 1.442695
  %v4287 = vpow.pop %v4286
  %v4288 = vadd.f32 %v4285, 1.0
  %v4289 = vadd.f32 %v4287, 1.0
  %v4290 = vrcp.pop %v4288
  %v4291 = vmul.f32 1.0, %v4290
  %v4292 = vrcp.pop %v4289
  %v4293 = vmul.f32 1.0, %v4292
  %v4294 = vtanh.pop %v4264
  %v4295 = vtanh.pop %v4268
  %v4296 = vxor.u32 %v4265, 2147483648
  %v4297 = vxor.u32 %v4269, 2147483648
  %v4298 = vmul.f32 %v4296, 1.442695
  %v4299 = vpow.pop %v4298
  %v4300 = vmul.f32 %v4297, 1.442695
  %v4301 = vpow.pop %v4300
  %v4302 = vadd.f32 %v4299, 1.0
  %v4303 = vadd.f32 %v4301, 1.0
  %v4304 = vrcp.pop %v4302
  %v4305 = vmul.f32 1.0, %v4304
  %v4306 = vrcp.pop %v4303
  %v4307 = vmul.f32 1.0, %v4306
  %v4308 = vld [vmem:[#allocation3] sm:$0xff]
  %v4309 = vld [vmem:[#allocation3 + $0x8] sm:$0xff]
  %v4310 = vmul.f32 %v4291, %v4308
  %v4311 = vmul.f32 %v4293, %v4309
  %v4312 = vmul.f32 %v4279, %v4294
  %v4313 = vmul.f32 %v4281, %v4295
  %v4314 = vadd.f32 %v4310, %v4312
  %v4315 = vadd.f32 %v4311, %v4313
  %v4316 = vtanh.pop %v4314
  %v4317 = vtanh.pop %v4315
  %v4318 = vmul.f32 %v4305, %v4316
  %v4319 = vmul.f32 %v4307, %v4317
  %4320 = vst [vmem:[#allocation3] sm:$0xff] %v4314
  %4321 = vst [vmem:[#allocation3 + $0x8] sm:$0xff] %v4315
  %4322 = vst [vmem:[#allocation2] sm:$0xff] %v4318
  %4323 = vst [vmem:[#allocation2 + $0x8] sm:$0xff] %v4319
  %v4324 = vpack.c.bf16 %v4319, %v4318
  %v4326 = vunpack.c.l.b16 %v4324
  %v4327 = vunpack.c.h.b16 %v4324
  %v4328 = vpack.c.b16 %v4326, %v4326
  %v4329 = vpack.c.b16 %v4327, %v4327
  %s4332 = scalar_lea.vmem %s4, 24
  %4333 = vst [vmem:[%s4332] sm:$0xf] %v4328
  %4334 = vst [vmem:[%s4332 + $0x4] sm:$0xf] %v4329
  %s4335 = scalar_lea.vmem %s1, 128
  %v4336 = vld [vmem:[%s4335] sm:$0xff]
  %v4337 = vld [vmem:[%s4335 + $0x8] sm:$0xff]
  %v4338 = vld [vmem:[%s4335 + $0x10] sm:$0xff]
  %v4339 = vld [vmem:[%s4335 + $0x18] sm:$0xff]
  %v4340 = vunpack.c.l.bf16 %v4336
  %v4341 = vunpack.c.h.bf16 %v4336
  %v4342 = vunpack.c.l.bf16 %v4337
  %v4343 = vunpack.c.h.bf16 %v4337
  %v4344 = vunpack.c.l.bf16 %v4338
  %v4345 = vunpack.c.h.bf16 %v4338
  %v4346 = vunpack.c.l.bf16 %v4339
  %v4347 = vunpack.c.h.bf16 %v4339
  %v4348 = vld [vmem:[#allocation2] sm:$0xff]
  %v4349 = vld [vmem:[#allocation2 + $0x8] sm:$0xff]
  %v4350 = vpack.c.bf16 %v4349, %v4348
  %v4351 = vld [vmem:[%s3] sm:$0xff]
  %v4352 = vld [vmem:[%s3 + $0x8] sm:$0xff]
  %v4353 = vld [vmem:[%s3 + $0x10] sm:$0xff]
  %v4354 = vld [vmem:[%s3 + $0x18] sm:$0xff]
  %v4355 = vld [vmem:[%s3 + $0x20] sm:$0xff]
  %v4356 = vld [vmem:[%s3 + $0x28] sm:$0xff]
  %v4357 = vld [vmem:[%s3 + $0x30] sm:$0xff]
  %v4358 = vld [vmem:[%s3 + $0x38] sm:$0xff]
  %v4359 = vld [vmem:[%s3 + $0x40] sm:$0xff]
  %v4360 = vld [vmem:[%s3 + $0x48] sm:$0xff]
  %v4361 = vld [vmem:[%s3 + $0x50] sm:$0xff]
  %v4362 = vld [vmem:[%s3 + $0x58] sm:$0xff]
  %v4363 = vld [vmem:[%s3 + $0x60] sm:$0xff]
  %v4364 = vld [vmem:[%s3 + $0x68] sm:$0xff]
  %v4365 = vld [vmem:[%s3 + $0x70] sm:$0xff]
  %v4366 = vld [vmem:[%s3 + $0x78] sm:$0xff]
  %v4367 = vld [vmem:[%s3 + $0x80] sm:$0xff]
  %v4368 = vld [vmem:[%s3 + $0x88] sm:$0xff]
  %v4369 = vld [vmem:[%s3 + $0x90] sm:$0xff]
  %v4370 = vld [vmem:[%s3 + $0x98] sm:$0xff]
  %v4371 = vld [vmem:[%s3 + $0xa0] sm:$0xff]
  %v4372 = vld [vmem:[%s3 + $0xa8] sm:$0xff]
  %v4373 = vld [vmem:[%s3 + $0xb0] sm:$0xff]
  %v4374 = vld [vmem:[%s3 + $0xb8] sm:$0xff]
  %v4375 = vld [vmem:[%s3 + $0xc0] sm:$0xff]
  %v4376 = vld [vmem:[%s3 + $0xc8] sm:$0xff]
  %v4377 = vld [vmem:[%s3 + $0xd0] sm:$0xff]
  %v4378 = vld [vmem:[%s3 + $0xd8] sm:$0xff]
  %v4379 = vld [vmem:[%s3 + $0xe0] sm:$0xff]
  %v4380 = vld [vmem:[%s3 + $0xe8] sm:$0xff]
  %v4381 = vld [vmem:[%s3 + $0xf0] sm:$0xff]
  %v4382 = vld [vmem:[%s3 + $0xf8] sm:$0xff]
  %v4415 = vunpack.c.l.b16 %v4351
  %v4416 = vunpack.c.h.b16 %v4351
  %v4417 = vunpack.c.l.b16 %v4352
  %v4418 = vunpack.c.h.b16 %v4352
  %v4419 = vunpack.c.l.b16 %v4353
  %v4420 = vunpack.c.h.b16 %v4353
  %v4421 = vunpack.c.l.b16 %v4354
  %v4422 = vunpack.c.h.b16 %v4354
  %v4423 = vunpack.c.l.b16 %v4355
  %v4424 = vunpack.c.h.b16 %v4355
  %v4425 = vunpack.c.l.b16 %v4356
  %v4426 = vunpack.c.h.b16 %v4356
  %v4427 = vunpack.c.l.b16 %v4357
  %v4428 = vunpack.c.h.b16 %v4357
  %v4429 = vunpack.c.l.b16 %v4358
  %v4430 = vunpack.c.h.b16 %v4358
  %v4431 = vunpack.c.l.b16 %v4359
  %v4432 = vunpack.c.h.b16 %v4359
  %v4433 = vunpack.c.l.b16 %v4360
  %v4434 = vunpack.c.h.b16 %v4360
  %v4435 = vunpack.c.l.b16 %v4361
  %v4436 = vunpack.c.h.b16 %v4361
  %v4437 = vunpack.c.l.b16 %v4362
  %v4438 = vunpack.c.h.b16 %v4362
  %v4439 = vunpack.c.l.b16 %v4363
  %v4440 = vunpack.c.h.b16 %v4363
  %v4441 = vunpack.c.l.b16 %v4364
  %v4442 = vunpack.c.h.b16 %v4364
  %v4443 = vunpack.c.l.b16 %v4365
  %v4444 = vunpack.c.h.b16 %v4365
  %v4445 = vunpack.c.l.b16 %v4366
  %v4446 = vunpack.c.h.b16 %v4366
  %v4447 = vunpack.c.l.b16 %v4367
  %v4448 = vunpack.c.h.b16 %v4367
  %v4449 = vunpack.c.l.b16 %v4368
  %v4450 = vunpack.c.h.b16 %v4368
  %v4451 = vunpack.c.l.b16 %v4369
  %v4452 = vunpack.c.h.b16 %v4369
  %v4453 = vunpack.c.l.b16 %v4370
  %v4454 = vunpack.c.h.b16 %v4370
  %v4455 = vunpack.c.l.b16 %v4371
  %v4456 = vunpack.c.h.b16 %v4371
  %v4457 = vunpack.c.l.b16 %v4372
  %v4458 = vunpack.c.h.b16 %v4372
  %v4459 = vunpack.c.l.b16 %v4373
  %v4460 = vunpack.c.h.b16 %v4373
  %v4461 = vunpack.c.l.b16 %v4374
  %v4462 = vunpack.c.h.b16 %v4374
  %v4463 = vunpack.c.l.b16 %v4375
  %v4464 = vunpack.c.h.b16 %v4375
  %v4465 = vunpack.c.l.b16 %v4376
  %v4466 = vunpack.c.h.b16 %v4376
  %v4467 = vunpack.c.l.b16 %v4377
  %v4468 = vunpack.c.h.b16 %v4377
  %v4469 = vunpack.c.l.b16 %v4378
  %v4470 = vunpack.c.h.b16 %v4378
  %v4471 = vunpack.c.l.b16 %v4379
  %v4472 = vunpack.c.h.b16 %v4379
  %v4473 = vunpack.c.l.b16 %v4380
  %v4474 = vunpack.c.h.b16 %v4380
  %v4475 = vunpack.c.l.b16 %v4381
  %v4476 = vunpack.c.h.b16 %v4381
  %v4477 = vunpack.c.l.b16 %v4382
  %v4478 = vunpack.c.h.b16 %v4382
  %v4479 = vpack.c.b16 %v4419, %v4415
  %v4480 = vpack.c.b16 %v4420, %v4416
  %v4481 = vpack.c.b16 %v4421, %v4417
  %v4482 = vpack.c.b16 %v4422, %v4418
  %v4483 = vpack.c.b16 %v4427, %v4423
  %v4484 = vpack.c.b16 %v4428, %v4424
  %v4485 = vpack.c.b16 %v4429, %v4425
  %v4486 = vpack.c.b16 %v4430, %v4426
  %v4487 = vpack.c.b16 %v4435, %v4431
  %v4488 = vpack.c.b16 %v4436, %v4432
  %v4489 = vpack.c.b16 %v4437, %v4433
  %v4490 = vpack.c.b16 %v4438, %v4434
  %v4491 = vpack.c.b16 %v4443, %v4439
  %v4492 = vpack.c.b16 %v4444, %v4440
  %v4493 = vpack.c.b16 %v4445, %v4441
  %v4494 = vpack.c.b16 %v4446, %v4442
  %v4495 = vpack.c.b16 %v4451, %v4447
  %v4496 = vpack.c.b16 %v4452, %v4448
  %v4497 = vpack.c.b16 %v4453, %v4449
  %v4498 = vpack.c.b16 %v4454, %v4450
  %v4499 = vpack.c.b16 %v4459, %v4455
  %v4500 = vpack.c.b16 %v4460, %v4456
  %v4501 = vpack.c.b16 %v4461, %v4457
  %v4502 = vpack.c.b16 %v4462, %v4458
  %v4503 = vpack.c.b16 %v4467, %v4463
  %v4504 = vpack.c.b16 %v4468, %v4464
  %v4505 = vpack.c.b16 %v4469, %v4465
  %v4506 = vpack.c.b16 %v4470, %v4466
  %v4507 = vpack.c.b16 %v4475, %v4471
  %v4508 = vpack.c.b16 %v4476, %v4472
  %v4509 = vpack.c.b16 %v4477, %v4473
  %v4510 = vpack.c.b16 %v4478, %v4474
  %4543 = vmatprep.subr.bf16.mxu0 %v4508
  %4544 = vmatpush1.bf16.msra.mxu0 %v4507
  %4545 = vmatprep.subr.bf16.mxu0 %v4504
  %4546 = vmatpush1.bf16.msra.mxu0 %v4503
  %4547 = vmatprep.subr.bf16.mxu0 %v4500
  %4548 = vmatpush1.bf16.msra.mxu0 %v4499
  %4549 = vmatprep.subr.bf16.mxu0 %v4496
  %4550 = vmatpush1.bf16.msra.mxu0 %v4495
  %4551 = vmatprep.subr.bf16.mxu0 %v4492
  %4552 = vmatpush1.bf16.msra.mxu0 %v4491
  %4553 = vmatprep.subr.bf16.mxu0 %v4488
  %4554 = vmatpush1.bf16.msra.mxu0 %v4487
  %4555 = vmatprep.subr.bf16.mxu0 %v4484
  %4556 = vmatpush1.bf16.msra.mxu0 %v4483
  %4557 = vmatprep.subr.bf16.mxu0 %v4480
  %4558 = vmatpush1.bf16.msra.mxu0 %v4479
  %4559 = vmatprep.subr.bf16.mxu0 0
  %4560 = vmatpush2.bf16.msra.mxu0 0
  %4561 = vmatprep.subr.bf16.mxu0 0
  %4562 = vmatpush2.bf16.msra.mxu0 0
  %4563 = vmatprep.subr.bf16.mxu0 0
  %4564 = vmatpush2.bf16.msra.mxu0 0
  %4565 = vmatprep.subr.bf16.mxu0 0
  %4566 = vmatpush2.bf16.msra.mxu0 0
  %4567 = vmatprep.subr.bf16.mxu0 0
  %4568 = vmatpush2.bf16.msra.mxu0 0
  %4569 = vmatprep.subr.bf16.mxu0 0
  %4570 = vmatpush2.bf16.msra.mxu0 0
  %4571 = vmatprep.subr.bf16.mxu0 0
  %4572 = vmatpush2.bf16.msra.mxu0 0
  %4573 = vmatprep.subr.bf16.mxu0 0
  %4574 = vmatpush2.bf16.msra.mxu0 0
  %4575 = vmatprep.mubr.bf16.mxu0 0
  %4576 = vmatmul.mubr.bf16.gmra.mxu0 %v4350
  %v4577 = vpop.f32.mrf.mxu0
  %v4578 = vadd.f32 0.0, %v4577
  %v4579 = vpop.f32.mrf.mxu0
  %v4580 = vadd.f32 0.0, %v4579
  %v4581 = vpop.f32.mrf.mxu0
  %v4582 = vadd.f32 0.0, %v4581
  %v4583 = vpop.f32.mrf.mxu0
  %v4584 = vadd.f32 0.0, %v4583
  %4585 = vdwg.mxu0
  %4586 = vmatprep.subr.bf16.mxu0 %v4510
  %4587 = vmatpush1.bf16.msra.mxu0 %v4509
  %4588 = vmatprep.subr.bf16.mxu0 %v4506
  %4589 = vmatpush1.bf16.msra.mxu0 %v4505
  %4590 = vmatprep.subr.bf16.mxu0 %v4502
  %4591 = vmatpush1.bf16.msra.mxu0 %v4501
  %4592 = vmatprep.subr.bf16.mxu0 %v4498
  %4593 = vmatpush1.bf16.msra.mxu0 %v4497
  %4594 = vmatprep.subr.bf16.mxu0 %v4494
  %4595 = vmatpush1.bf16.msra.mxu0 %v4493
  %4596 = vmatprep.subr.bf16.mxu0 %v4490
  %4597 = vmatpush1.bf16.msra.mxu0 %v4489
  %4598 = vmatprep.subr.bf16.mxu0 %v4486
  %4599 = vmatpush1.bf16.msra.mxu0 %v4485
  %4600 = vmatprep.subr.bf16.mxu0 %v4482
  %4601 = vmatpush1.bf16.msra.mxu0 %v4481
  %4602 = vmatprep.subr.bf16.mxu0 0
  %4603 = vmatpush2.bf16.msra.mxu0 0
  %4604 = vmatprep.subr.bf16.mxu0 0
  %4605 = vmatpush2.bf16.msra.mxu0 0
  %4606 = vmatprep.subr.bf16.mxu0 0
  %4607 = vmatpush2.bf16.msra.mxu0 0
  %4608 = vmatprep.subr.bf16.mxu0 0
  %4609 = vmatpush2.bf16.msra.mxu0 0
  %4610 = vmatprep.subr.bf16.mxu0 0
  %4611 = vmatpush2.bf16.msra.mxu0 0
  %4612 = vmatprep.subr.bf16.mxu0 0
  %4613 = vmatpush2.bf16.msra.mxu0 0
  %4614 = vmatprep.subr.bf16.mxu0 0
  %4615 = vmatpush2.bf16.msra.mxu0 0
  %4616 = vmatprep.subr.bf16.mxu0 0
  %4617 = vmatpush2.bf16.msra.mxu0 0
  %4618 = vmatprep.mubr.bf16.mxu0 0
  %4619 = vmatmul.mubr.bf16.gmra.mxu0 %v4350
  %v4620 = vpop.f32.mrf.mxu0
  %v4621 = vadd.f32 0.0, %v4620
  %v4622 = vpop.f32.mrf.mxu0
  %v4623 = vadd.f32 0.0, %v4622
  %v4624 = vpop.f32.mrf.mxu0
  %v4625 = vadd.f32 0.0, %v4624
  %v4626 = vpop.f32.mrf.mxu0
  %v4627 = vadd.f32 0.0, %v4626
  %4628 = vdwg.mxu0
  %v4629 = vadd.f32 %v4340, %v4578
  %v4630 = vadd.f32 %v4341, %v4580
  %v4631 = vadd.f32 %v4342, %v4621
  %v4632 = vadd.f32 %v4343, %v4623
  %v4633 = vadd.f32 %v4344, %v4582
  %v4634 = vadd.f32 %v4345, %v4584
  %v4635 = vadd.f32 %v4346, %v4625
  %v4636 = vadd.f32 %v4347, %v4627
  %v4637 = vxor.u32 %v4629, 2147483648
  %v4638 = vxor.u32 %v4633, 2147483648
  %v4639 = vmul.f32 %v4637, 1.442695
  %v4640 = vpow.pop %v4639
  %v4641 = vmul.f32 %v4638, 1.442695
  %v4642 = vpow.pop %v4641
  %v4643 = vadd.f32 %v4640, 1.0
  %v4644 = vadd.f32 %v4642, 1.0
  %v4645 = vrcp.pop %v4643
  %v4646 = vmul.f32 1.0, %v4645
  %v4647 = vrcp.pop %v4644
  %v4648 = vmul.f32 1.0, %v4647
  %v4649 = vxor.u32 %v4630, 2147483648
  %v4650 = vxor.u32 %v4634, 2147483648
  %v4651 = vmul.f32 %v4649, 1.442695
  %v4652 = vpow.pop %v4651
  %v4653 = vmul.f32 %v4650, 1.442695
  %v4654 = vpow.pop %v4653
  %v4655 = vadd.f32 %v4652, 1.0
  %v4656 = vadd.f32 %v4654, 1.0
  %v4657 = vrcp.pop %v4655
  %v4658 = vmul.f32 1.0, %v4657
  %v4659 = vrcp.pop %v4656
  %v4660 = vmul.f32 1.0, %v4659
  %v4661 = vtanh.pop %v4631
  %v4662 = vtanh.pop %v4635
  %v4663 = vxor.u32 %v4632, 2147483648
  %v4664 = vxor.u32 %v4636, 2147483648
  %v4665 = vmul.f32 %v4663, 1.442695
  %v4666 = vpow.pop %v4665
  %v4667 = vmul.f32 %v4664, 1.442695
  %v4668 = vpow.pop %v4667
  %v4669 = vadd.f32 %v4666, 1.0
  %v4670 = vadd.f32 %v4668, 1.0
  %v4671 = vrcp.pop %v4669
  %v4672 = vmul.f32 1.0, %v4671
  %v4673 = vrcp.pop %v4670
  %v4674 = vmul.f32 1.0, %v4673
  %v4675 = vld [vmem:[#allocation3] sm:$0xff]
  %v4676 = vld [vmem:[#allocation3 + $0x8] sm:$0xff]
  %v4677 = vmul.f32 %v4658, %v4675
  %v4678 = vmul.f32 %v4660, %v4676
  %v4679 = vmul.f32 %v4646, %v4661
  %v4680 = vmul.f32 %v4648, %v4662
  %v4681 = vadd.f32 %v4677, %v4679
  %v4682 = vadd.f32 %v4678, %v4680
  %v4683 = vtanh.pop %v4681
  %v4684 = vtanh.pop %v4682
  %v4685 = vmul.f32 %v4672, %v4683
  %v4686 = vmul.f32 %v4674, %v4684
  %4687 = vst [vmem:[#allocation3] sm:$0xff] %v4681
  %4688 = vst [vmem:[#allocation3 + $0x8] sm:$0xff] %v4682
  %4689 = vst [vmem:[#allocation2] sm:$0xff] %v4685
  %4690 = vst [vmem:[#allocation2 + $0x8] sm:$0xff] %v4686
  %v4691 = vpack.c.bf16 %v4686, %v4685
  %v4693 = vunpack.c.l.b16 %v4691
  %v4694 = vunpack.c.h.b16 %v4691
  %v4695 = vpack.c.b16 %v4693, %v4693
  %v4696 = vpack.c.b16 %v4694, %v4694
  %s4699 = scalar_lea.vmem %s4, 32
  %4700 = vst [vmem:[%s4699] sm:$0xf] %v4695
  %4701 = vst [vmem:[%s4699 + $0x4] sm:$0xf] %v4696
  %s4702 = scalar_lea.vmem %s1, 160
  %v4703 = vld [vmem:[%s4702] sm:$0xff]
  %v4704 = vld [vmem:[%s4702 + $0x8] sm:$0xff]
  %v4705 = vld [vmem:[%s4702 + $0x10] sm:$0xff]
  %v4706 = vld [vmem:[%s4702 + $0x18] sm:$0xff]
  %v4707 = vunpack.c.l.bf16 %v4703
  %v4708 = vunpack.c.h.bf16 %v4703
  %v4709 = vunpack.c.l.bf16 %v4704
  %v4710 = vunpack.c.h.bf16 %v4704
  %v4711 = vunpack.c.l.bf16 %v4705
  %v4712 = vunpack.c.h.bf16 %v4705
  %v4713 = vunpack.c.l.bf16 %v4706
  %v4714 = vunpack.c.h.bf16 %v4706
  %v4715 = vld [vmem:[#allocation2] sm:$0xff]
  %v4716 = vld [vmem:[#allocation2 + $0x8] sm:$0xff]
  %v4717 = vpack.c.bf16 %v4716, %v4715
  %v4718 = vld [vmem:[%s3] sm:$0xff]
  %v4719 = vld [vmem:[%s3 + $0x8] sm:$0xff]
  %v4720 = vld [vmem:[%s3 + $0x10] sm:$0xff]
  %v4721 = vld [vmem:[%s3 + $0x18] sm:$0xff]
  %v4722 = vld [vmem:[%s3 + $0x20] sm:$0xff]
  %v4723 = vld [vmem:[%s3 + $0x28] sm:$0xff]
  %v4724 = vld [vmem:[%s3 + $0x30] sm:$0xff]
  %v4725 = vld [vmem:[%s3 + $0x38] sm:$0xff]
  %v4726 = vld [vmem:[%s3 + $0x40] sm:$0xff]
  %v4727 = vld [vmem:[%s3 + $0x48] sm:$0xff]
  %v4728 = vld [vmem:[%s3 + $0x50] sm:$0xff]
  %v4729 = vld [vmem:[%s3 + $0x58] sm:$0xff]
  %v4730 = vld [vmem:[%s3 + $0x60] sm:$0xff]
  %v4731 = vld [vmem:[%s3 + $0x68] sm:$0xff]
  %v4732 = vld [vmem:[%s3 + $0x70] sm:$0xff]
  %v4733 = vld [vmem:[%s3 + $0x78] sm:$0xff]
  %v4734 = vld [vmem:[%s3 + $0x80] sm:$0xff]
  %v4735 = vld [vmem:[%s3 + $0x88] sm:$0xff]
  %v4736 = vld [vmem:[%s3 + $0x90] sm:$0xff]
  %v4737 = vld [vmem:[%s3 + $0x98] sm:$0xff]
  %v4738 = vld [vmem:[%s3 + $0xa0] sm:$0xff]
  %v4739 = vld [vmem:[%s3 + $0xa8] sm:$0xff]
  %v4740 = vld [vmem:[%s3 + $0xb0] sm:$0xff]
  %v4741 = vld [vmem:[%s3 + $0xb8] sm:$0xff]
  %v4742 = vld [vmem:[%s3 + $0xc0] sm:$0xff]
  %v4743 = vld [vmem:[%s3 + $0xc8] sm:$0xff]
  %v4744 = vld [vmem:[%s3 + $0xd0] sm:$0xff]
  %v4745 = vld [vmem:[%s3 + $0xd8] sm:$0xff]
  %v4746 = vld [vmem:[%s3 + $0xe0] sm:$0xff]
  %v4747 = vld [vmem:[%s3 + $0xe8] sm:$0xff]
  %v4748 = vld [vmem:[%s3 + $0xf0] sm:$0xff]
  %v4749 = vld [vmem:[%s3 + $0xf8] sm:$0xff]
  %v4782 = vunpack.c.l.b16 %v4718
  %v4783 = vunpack.c.h.b16 %v4718
  %v4784 = vunpack.c.l.b16 %v4719
  %v4785 = vunpack.c.h.b16 %v4719
  %v4786 = vunpack.c.l.b16 %v4720
  %v4787 = vunpack.c.h.b16 %v4720
  %v4788 = vunpack.c.l.b16 %v4721
  %v4789 = vunpack.c.h.b16 %v4721
  %v4790 = vunpack.c.l.b16 %v4722
  %v4791 = vunpack.c.h.b16 %v4722
  %v4792 = vunpack.c.l.b16 %v4723
  %v4793 = vunpack.c.h.b16 %v4723
  %v4794 = vunpack.c.l.b16 %v4724
  %v4795 = vunpack.c.h.b16 %v4724
  %v4796 = vunpack.c.l.b16 %v4725
  %v4797 = vunpack.c.h.b16 %v4725
  %v4798 = vunpack.c.l.b16 %v4726
  %v4799 = vunpack.c.h.b16 %v4726
  %v4800 = vunpack.c.l.b16 %v4727
  %v4801 = vunpack.c.h.b16 %v4727
  %v4802 = vunpack.c.l.b16 %v4728
  %v4803 = vunpack.c.h.b16 %v4728
  %v4804 = vunpack.c.l.b16 %v4729
  %v4805 = vunpack.c.h.b16 %v4729
  %v4806 = vunpack.c.l.b16 %v4730
  %v4807 = vunpack.c.h.b16 %v4730
  %v4808 = vunpack.c.l.b16 %v4731
  %v4809 = vunpack.c.h.b16 %v4731
  %v4810 = vunpack.c.l.b16 %v4732
  %v4811 = vunpack.c.h.b16 %v4732
  %v4812 = vunpack.c.l.b16 %v4733
  %v4813 = vunpack.c.h.b16 %v4733
  %v4814 = vunpack.c.l.b16 %v4734
  %v4815 = vunpack.c.h.b16 %v4734
  %v4816 = vunpack.c.l.b16 %v4735
  %v4817 = vunpack.c.h.b16 %v4735
  %v4818 = vunpack.c.l.b16 %v4736
  %v4819 = vunpack.c.h.b16 %v4736
  %v4820 = vunpack.c.l.b16 %v4737
  %v4821 = vunpack.c.h.b16 %v4737
  %v4822 = vunpack.c.l.b16 %v4738
  %v4823 = vunpack.c.h.b16 %v4738
  %v4824 = vunpack.c.l.b16 %v4739
  %v4825 = vunpack.c.h.b16 %v4739
  %v4826 = vunpack.c.l.b16 %v4740
  %v4827 = vunpack.c.h.b16 %v4740
  %v4828 = vunpack.c.l.b16 %v4741
  %v4829 = vunpack.c.h.b16 %v4741
  %v4830 = vunpack.c.l.b16 %v4742
  %v4831 = vunpack.c.h.b16 %v4742
  %v4832 = vunpack.c.l.b16 %v4743
  %v4833 = vunpack.c.h.b16 %v4743
  %v4834 = vunpack.c.l.b16 %v4744
  %v4835 = vunpack.c.h.b16 %v4744
  %v4836 = vunpack.c.l.b16 %v4745
  %v4837 = vunpack.c.h.b16 %v4745
  %v4838 = vunpack.c.l.b16 %v4746
  %v4839 = vunpack.c.h.b16 %v4746
  %v4840 = vunpack.c.l.b16 %v4747
  %v4841 = vunpack.c.h.b16 %v4747
  %v4842 = vunpack.c.l.b16 %v4748
  %v4843 = vunpack.c.h.b16 %v4748
  %v4844 = vunpack.c.l.b16 %v4749
  %v4845 = vunpack.c.h.b16 %v4749
  %v4846 = vpack.c.b16 %v4786, %v4782
  %v4847 = vpack.c.b16 %v4787, %v4783
  %v4848 = vpack.c.b16 %v4788, %v4784
  %v4849 = vpack.c.b16 %v4789, %v4785
  %v4850 = vpack.c.b16 %v4794, %v4790
  %v4851 = vpack.c.b16 %v4795, %v4791
  %v4852 = vpack.c.b16 %v4796, %v4792
  %v4853 = vpack.c.b16 %v4797, %v4793
  %v4854 = vpack.c.b16 %v4802, %v4798
  %v4855 = vpack.c.b16 %v4803, %v4799
  %v4856 = vpack.c.b16 %v4804, %v4800
  %v4857 = vpack.c.b16 %v4805, %v4801
  %v4858 = vpack.c.b16 %v4810, %v4806
  %v4859 = vpack.c.b16 %v4811, %v4807
  %v4860 = vpack.c.b16 %v4812, %v4808
  %v4861 = vpack.c.b16 %v4813, %v4809
  %v4862 = vpack.c.b16 %v4818, %v4814
  %v4863 = vpack.c.b16 %v4819, %v4815
  %v4864 = vpack.c.b16 %v4820, %v4816
  %v4865 = vpack.c.b16 %v4821, %v4817
  %v4866 = vpack.c.b16 %v4826, %v4822
  %v4867 = vpack.c.b16 %v4827, %v4823
  %v4868 = vpack.c.b16 %v4828, %v4824
  %v4869 = vpack.c.b16 %v4829, %v4825
  %v4870 = vpack.c.b16 %v4834, %v4830
  %v4871 = vpack.c.b16 %v4835, %v4831
  %v4872 = vpack.c.b16 %v4836, %v4832
  %v4873 = vpack.c.b16 %v4837, %v4833
  %v4874 = vpack.c.b16 %v4842, %v4838
  %v4875 = vpack.c.b16 %v4843, %v4839
  %v4876 = vpack.c.b16 %v4844, %v4840
  %v4877 = vpack.c.b16 %v4845, %v4841
  %4910 = vmatprep.subr.bf16.mxu0 %v4875
  %4911 = vmatpush1.bf16.msra.mxu0 %v4874
  %4912 = vmatprep.subr.bf16.mxu0 %v4871
  %4913 = vmatpush1.bf16.msra.mxu0 %v4870
  %4914 = vmatprep.subr.bf16.mxu0 %v4867
  %4915 = vmatpush1.bf16.msra.mxu0 %v4866
  %4916 = vmatprep.subr.bf16.mxu0 %v4863
  %4917 = vmatpush1.bf16.msra.mxu0 %v4862
  %4918 = vmatprep.subr.bf16.mxu0 %v4859
  %4919 = vmatpush1.bf16.msra.mxu0 %v4858
  %4920 = vmatprep.subr.bf16.mxu0 %v4855
  %4921 = vmatpush1.bf16.msra.mxu0 %v4854
  %4922 = vmatprep.subr.bf16.mxu0 %v4851
  %4923 = vmatpush1.bf16.msra.mxu0 %v4850
  %4924 = vmatprep.subr.bf16.mxu0 %v4847
  %4925 = vmatpush1.bf16.msra.mxu0 %v4846
  %4926 = vmatprep.subr.bf16.mxu0 0
  %4927 = vmatpush2.bf16.msra.mxu0 0
  %4928 = vmatprep.subr.bf16.mxu0 0
  %4929 = vmatpush2.bf16.msra.mxu0 0
  %4930 = vmatprep.subr.bf16.mxu0 0
  %4931 = vmatpush2.bf16.msra.mxu0 0
  %4932 = vmatprep.subr.bf16.mxu0 0
  %4933 = vmatpush2.bf16.msra.mxu0 0
  %4934 = vmatprep.subr.bf16.mxu0 0
  %4935 = vmatpush2.bf16.msra.mxu0 0
  %4936 = vmatprep.subr.bf16.mxu0 0
  %4937 = vmatpush2.bf16.msra.mxu0 0
  %4938 = vmatprep.subr.bf16.mxu0 0
  %4939 = vmatpush2.bf16.msra.mxu0 0
  %4940 = vmatprep.subr.bf16.mxu0 0
  %4941 = vmatpush2.bf16.msra.mxu0 0
  %4942 = vmatprep.mubr.bf16.mxu0 0
  %4943 = vmatmul.mubr.bf16.gmra.mxu0 %v4717
  %v4944 = vpop.f32.mrf.mxu0
  %v4945 = vadd.f32 0.0, %v4944
  %v4946 = vpop.f32.mrf.mxu0
  %v4947 = vadd.f32 0.0, %v4946
  %v4948 = vpop.f32.mrf.mxu0
  %v4949 = vadd.f32 0.0, %v4948
  %v4950 = vpop.f32.mrf.mxu0
  %v4951 = vadd.f32 0.0, %v4950
  %4952 = vdwg.mxu0
  %4953 = vmatprep.subr.bf16.mxu0 %v4877
  %4954 = vmatpush1.bf16.msra.mxu0 %v4876
  %4955 = vmatprep.subr.bf16.mxu0 %v4873
  %4956 = vmatpush1.bf16.msra.mxu0 %v4872
  %4957 = vmatprep.subr.bf16.mxu0 %v4869
  %4958 = vmatpush1.bf16.msra.mxu0 %v4868
  %4959 = vmatprep.subr.bf16.mxu0 %v4865
  %4960 = vmatpush1.bf16.msra.mxu0 %v4864
  %4961 = vmatprep.subr.bf16.mxu0 %v4861
  %4962 = vmatpush1.bf16.msra.mxu0 %v4860
  %4963 = vmatprep.subr.bf16.mxu0 %v4857
  %4964 = vmatpush1.bf16.msra.mxu0 %v4856
  %4965 = vmatprep.subr.bf16.mxu0 %v4853
  %4966 = vmatpush1.bf16.msra.mxu0 %v4852
  %4967 = vmatprep.subr.bf16.mxu0 %v4849
  %4968 = vmatpush1.bf16.msra.mxu0 %v4848
  %4969 = vmatprep.subr.bf16.mxu0 0
  %4970 = vmatpush2.bf16.msra.mxu0 0
  %4971 = vmatprep.subr.bf16.mxu0 0
  %4972 = vmatpush2.bf16.msra.mxu0 0
  %4973 = vmatprep.subr.bf16.mxu0 0
  %4974 = vmatpush2.bf16.msra.mxu0 0
  %4975 = vmatprep.subr.bf16.mxu0 0
  %4976 = vmatpush2.bf16.msra.mxu0 0
  %4977 = vmatprep.subr.bf16.mxu0 0
  %4978 = vmatpush2.bf16.msra.mxu0 0
  %4979 = vmatprep.subr.bf16.mxu0 0
  %4980 = vmatpush2.bf16.msra.mxu0 0
  %4981 = vmatprep.subr.bf16.mxu0 0
  %4982 = vmatpush2.bf16.msra.mxu0 0
  %4983 = vmatprep.subr.bf16.mxu0 0
  %4984 = vmatpush2.bf16.msra.mxu0 0
  %4985 = vmatprep.mubr.bf16.mxu0 0
  %4986 = vmatmul.mubr.bf16.gmra.mxu0 %v4717
  %v4987 = vpop.f32.mrf.mxu0
  %v4988 = vadd.f32 0.0, %v4987
  %v4989 = vpop.f32.mrf.mxu0
  %v4990 = vadd.f32 0.0, %v4989
  %v4991 = vpop.f32.mrf.mxu0
  %v4992 = vadd.f32 0.0, %v4991
  %v4993 = vpop.f32.mrf.mxu0
  %v4994 = vadd.f32 0.0, %v4993
  %4995 = vdwg.mxu0
  %v4996 = vadd.f32 %v4707, %v4945
  %v4997 = vadd.f32 %v4708, %v4947
  %v4998 = vadd.f32 %v4709, %v4988
  %v4999 = vadd.f32 %v4710, %v4990
  %v5000 = vadd.f32 %v4711, %v4949
  %v5001 = vadd.f32 %v4712, %v4951
  %v5002 = vadd.f32 %v4713, %v4992
  %v5003 = vadd.f32 %v4714, %v4994
  %v5004 = vxor.u32 %v4996, 2147483648
  %v5005 = vxor.u32 %v5000, 2147483648
  %v5006 = vmul.f32 %v5004, 1.442695
  %v5007 = vpow.pop %v5006
  %v5008 = vmul.f32 %v5005, 1.442695
  %v5009 = vpow.pop %v5008
  %v5010 = vadd.f32 %v5007, 1.0
  %v5011 = vadd.f32 %v5009, 1.0
  %v5012 = vrcp.pop %v5010
  %v5013 = vmul.f32 1.0, %v5012
  %v5014 = vrcp.pop %v5011
  %v5015 = vmul.f32 1.0, %v5014
  %v5016 = vxor.u32 %v4997, 2147483648
  %v5017 = vxor.u32 %v5001, 2147483648
  %v5018 = vmul.f32 %v5016, 1.442695
  %v5019 = vpow.pop %v5018
  %v5020 = vmul.f32 %v5017, 1.442695
  %v5021 = vpow.pop %v5020
  %v5022 = vadd.f32 %v5019, 1.0
  %v5023 = vadd.f32 %v5021, 1.0
  %v5024 = vrcp.pop %v5022
  %v5025 = vmul.f32 1.0, %v5024
  %v5026 = vrcp.pop %v5023
  %v5027 = vmul.f32 1.0, %v5026
  %v5028 = vtanh.pop %v4998
  %v5029 = vtanh.pop %v5002
  %v5030 = vxor.u32 %v4999, 2147483648
  %v5031 = vxor.u32 %v5003, 2147483648
  %v5032 = vmul.f32 %v5030, 1.442695
  %v5033 = vpow.pop %v5032
  %v5034 = vmul.f32 %v5031, 1.442695
  %v5035 = vpow.pop %v5034
  %v5036 = vadd.f32 %v5033, 1.0
  %v5037 = vadd.f32 %v5035, 1.0
  %v5038 = vrcp.pop %v5036
  %v5039 = vmul.f32 1.0, %v5038
  %v5040 = vrcp.pop %v5037
  %v5041 = vmul.f32 1.0, %v5040
  %v5042 = vld [vmem:[#allocation3] sm:$0xff]
  %v5043 = vld [vmem:[#allocation3 + $0x8] sm:$0xff]
  %v5044 = vmul.f32 %v5025, %v5042
  %v5045 = vmul.f32 %v5027, %v5043
  %v5046 = vmul.f32 %v5013, %v5028
  %v5047 = vmul.f32 %v5015, %v5029
  %v5048 = vadd.f32 %v5044, %v5046
  %v5049 = vadd.f32 %v5045, %v5047
  %v5050 = vtanh.pop %v5048
  %v5051 = vtanh.pop %v5049
  %v5052 = vmul.f32 %v5039, %v5050
  %v5053 = vmul.f32 %v5041, %v5051
  %5054 = vst [vmem:[#allocation3] sm:$0xff] %v5048
  %5055 = vst [vmem:[#allocation3 + $0x8] sm:$0xff] %v5049
  %5056 = vst [vmem:[#allocation2] sm:$0xff] %v5052
  %5057 = vst [vmem:[#allocation2 + $0x8] sm:$0xff] %v5053
  %v5058 = vpack.c.bf16 %v5053, %v5052
  %v5060 = vunpack.c.l.b16 %v5058
  %v5061 = vunpack.c.h.b16 %v5058
  %v5062 = vpack.c.b16 %v5060, %v5060
  %v5063 = vpack.c.b16 %v5061, %v5061
  %s5066 = scalar_lea.vmem %s4, 40
  %5067 = vst [vmem:[%s5066] sm:$0xf] %v5062
  %5068 = vst [vmem:[%s5066 + $0x4] sm:$0xf] %v5063
  %s5069 = scalar_lea.vmem %s1, 192
  %v5070 = vld [vmem:[%s5069] sm:$0xff]
  %v5071 = vld [vmem:[%s5069 + $0x8] sm:$0xff]
  %v5072 = vld [vmem:[%s5069 + $0x10] sm:$0xff]
  %v5073 = vld [vmem:[%s5069 + $0x18] sm:$0xff]
  %v5074 = vunpack.c.l.bf16 %v5070
  %v5075 = vunpack.c.h.bf16 %v5070
  %v5076 = vunpack.c.l.bf16 %v5071
  %v5077 = vunpack.c.h.bf16 %v5071
  %v5078 = vunpack.c.l.bf16 %v5072
  %v5079 = vunpack.c.h.bf16 %v5072
  %v5080 = vunpack.c.l.bf16 %v5073
  %v5081 = vunpack.c.h.bf16 %v5073
  %v5082 = vld [vmem:[#allocation2] sm:$0xff]
  %v5083 = vld [vmem:[#allocation2 + $0x8] sm:$0xff]
  %v5084 = vpack.c.bf16 %v5083, %v5082
  %v5085 = vld [vmem:[%s3] sm:$0xff]
  %v5086 = vld [vmem:[%s3 + $0x8] sm:$0xff]
  %v5087 = vld [vmem:[%s3 + $0x10] sm:$0xff]
  %v5088 = vld [vmem:[%s3 + $0x18] sm:$0xff]
  %v5089 = vld [vmem:[%s3 + $0x20] sm:$0xff]
  %v5090 = vld [vmem:[%s3 + $0x28] sm:$0xff]
  %v5091 = vld [vmem:[%s3 + $0x30] sm:$0xff]
  %v5092 = vld [vmem:[%s3 + $0x38] sm:$0xff]
  %v5093 = vld [vmem:[%s3 + $0x40] sm:$0xff]
  %v5094 = vld [vmem:[%s3 + $0x48] sm:$0xff]
  %v5095 = vld [vmem:[%s3 + $0x50] sm:$0xff]
  %v5096 = vld [vmem:[%s3 + $0x58] sm:$0xff]
  %v5097 = vld [vmem:[%s3 + $0x60] sm:$0xff]
  %v5098 = vld [vmem:[%s3 + $0x68] sm:$0xff]
  %v5099 = vld [vmem:[%s3 + $0x70] sm:$0xff]
  %v5100 = vld [vmem:[%s3 + $0x78] sm:$0xff]
  %v5101 = vld [vmem:[%s3 + $0x80] sm:$0xff]
  %v5102 = vld [vmem:[%s3 + $0x88] sm:$0xff]
  %v5103 = vld [vmem:[%s3 + $0x90] sm:$0xff]
  %v5104 = vld [vmem:[%s3 + $0x98] sm:$0xff]
  %v5105 = vld [vmem:[%s3 + $0xa0] sm:$0xff]
  %v5106 = vld [vmem:[%s3 + $0xa8] sm:$0xff]
  %v5107 = vld [vmem:[%s3 + $0xb0] sm:$0xff]
  %v5108 = vld [vmem:[%s3 + $0xb8] sm:$0xff]
  %v5109 = vld [vmem:[%s3 + $0xc0] sm:$0xff]
  %v5110 = vld [vmem:[%s3 + $0xc8] sm:$0xff]
  %v5111 = vld [vmem:[%s3 + $0xd0] sm:$0xff]
  %v5112 = vld [vmem:[%s3 + $0xd8] sm:$0xff]
  %v5113 = vld [vmem:[%s3 + $0xe0] sm:$0xff]
  %v5114 = vld [vmem:[%s3 + $0xe8] sm:$0xff]
  %v5115 = vld [vmem:[%s3 + $0xf0] sm:$0xff]
  %v5116 = vld [vmem:[%s3 + $0xf8] sm:$0xff]
  %v5149 = vunpack.c.l.b16 %v5085
  %v5150 = vunpack.c.h.b16 %v5085
  %v5151 = vunpack.c.l.b16 %v5086
  %v5152 = vunpack.c.h.b16 %v5086
  %v5153 = vunpack.c.l.b16 %v5087
  %v5154 = vunpack.c.h.b16 %v5087
  %v5155 = vunpack.c.l.b16 %v5088
  %v5156 = vunpack.c.h.b16 %v5088
  %v5157 = vunpack.c.l.b16 %v5089
  %v5158 = vunpack.c.h.b16 %v5089
  %v5159 = vunpack.c.l.b16 %v5090
  %v5160 = vunpack.c.h.b16 %v5090
  %v5161 = vunpack.c.l.b16 %v5091
  %v5162 = vunpack.c.h.b16 %v5091
  %v5163 = vunpack.c.l.b16 %v5092
  %v5164 = vunpack.c.h.b16 %v5092
  %v5165 = vunpack.c.l.b16 %v5093
  %v5166 = vunpack.c.h.b16 %v5093
  %v5167 = vunpack.c.l.b16 %v5094
  %v5168 = vunpack.c.h.b16 %v5094
  %v5169 = vunpack.c.l.b16 %v5095
  %v5170 = vunpack.c.h.b16 %v5095
  %v5171 = vunpack.c.l.b16 %v5096
  %v5172 = vunpack.c.h.b16 %v5096
  %v5173 = vunpack.c.l.b16 %v5097
  %v5174 = vunpack.c.h.b16 %v5097
  %v5175 = vunpack.c.l.b16 %v5098
  %v5176 = vunpack.c.h.b16 %v5098
  %v5177 = vunpack.c.l.b16 %v5099
  %v5178 = vunpack.c.h.b16 %v5099
  %v5179 = vunpack.c.l.b16 %v5100
  %v5180 = vunpack.c.h.b16 %v5100
  %v5181 = vunpack.c.l.b16 %v5101
  %v5182 = vunpack.c.h.b16 %v5101
  %v5183 = vunpack.c.l.b16 %v5102
  %v5184 = vunpack.c.h.b16 %v5102
  %v5185 = vunpack.c.l.b16 %v5103
  %v5186 = vunpack.c.h.b16 %v5103
  %v5187 = vunpack.c.l.b16 %v5104
  %v5188 = vunpack.c.h.b16 %v5104
  %v5189 = vunpack.c.l.b16 %v5105
  %v5190 = vunpack.c.h.b16 %v5105
  %v5191 = vunpack.c.l.b16 %v5106
  %v5192 = vunpack.c.h.b16 %v5106
  %v5193 = vunpack.c.l.b16 %v5107
  %v5194 = vunpack.c.h.b16 %v5107
  %v5195 = vunpack.c.l.b16 %v5108
  %v5196 = vunpack.c.h.b16 %v5108
  %v5197 = vunpack.c.l.b16 %v5109
  %v5198 = vunpack.c.h.b16 %v5109
  %v5199 = vunpack.c.l.b16 %v5110
  %v5200 = vunpack.c.h.b16 %v5110
  %v5201 = vunpack.c.l.b16 %v5111
  %v5202 = vunpack.c.h.b16 %v5111
  %v5203 = vunpack.c.l.b16 %v5112
  %v5204 = vunpack.c.h.b16 %v5112
  %v5205 = vunpack.c.l.b16 %v5113
  %v5206 = vunpack.c.h.b16 %v5113
  %v5207 = vunpack.c.l.b16 %v5114
  %v5208 = vunpack.c.h.b16 %v5114
  %v5209 = vunpack.c.l.b16 %v5115
  %v5210 = vunpack.c.h.b16 %v5115
  %v5211 = vunpack.c.l.b16 %v5116
  %v5212 = vunpack.c.h.b16 %v5116
  %v5213 = vpack.c.b16 %v5153, %v5149
  %v5214 = vpack.c.b16 %v5154, %v5150
  %v5215 = vpack.c.b16 %v5155, %v5151
  %v5216 = vpack.c.b16 %v5156, %v5152
  %v5217 = vpack.c.b16 %v5161, %v5157
  %v5218 = vpack.c.b16 %v5162, %v5158
  %v5219 = vpack.c.b16 %v5163, %v5159
  %v5220 = vpack.c.b16 %v5164, %v5160
  %v5221 = vpack.c.b16 %v5169, %v5165
  %v5222 = vpack.c.b16 %v5170, %v5166
  %v5223 = vpack.c.b16 %v5171, %v5167
  %v5224 = vpack.c.b16 %v5172, %v5168
  %v5225 = vpack.c.b16 %v5177, %v5173
  %v5226 = vpack.c.b16 %v5178, %v5174
  %v5227 = vpack.c.b16 %v5179, %v5175
  %v5228 = vpack.c.b16 %v5180, %v5176
  %v5229 = vpack.c.b16 %v5185, %v5181
  %v5230 = vpack.c.b16 %v5186, %v5182
  %v5231 = vpack.c.b16 %v5187, %v5183
  %v5232 = vpack.c.b16 %v5188, %v5184
  %v5233 = vpack.c.b16 %v5193, %v5189
  %v5234 = vpack.c.b16 %v5194, %v5190
  %v5235 = vpack.c.b16 %v5195, %v5191
  %v5236 = vpack.c.b16 %v5196, %v5192
  %v5237 = vpack.c.b16 %v5201, %v5197
  %v5238 = vpack.c.b16 %v5202, %v5198
  %v5239 = vpack.c.b16 %v5203, %v5199
  %v5240 = vpack.c.b16 %v5204, %v5200
  %v5241 = vpack.c.b16 %v5209, %v5205
  %v5242 = vpack.c.b16 %v5210, %v5206
  %v5243 = vpack.c.b16 %v5211, %v5207
  %v5244 = vpack.c.b16 %v5212, %v5208
  %5277 = vmatprep.subr.bf16.mxu0 %v5242
  %5278 = vmatpush1.bf16.msra.mxu0 %v5241
  %5279 = vmatprep.subr.bf16.mxu0 %v5238
  %5280 = vmatpush1.bf16.msra.mxu0 %v5237
  %5281 = vmatprep.subr.bf16.mxu0 %v5234
  %5282 = vmatpush1.bf16.msra.mxu0 %v5233
  %5283 = vmatprep.subr.bf16.mxu0 %v5230
  %5284 = vmatpush1.bf16.msra.mxu0 %v5229
  %5285 = vmatprep.subr.bf16.mxu0 %v5226
  %5286 = vmatpush1.bf16.msra.mxu0 %v5225
  %5287 = vmatprep.subr.bf16.mxu0 %v5222
  %5288 = vmatpush1.bf16.msra.mxu0 %v5221
  %5289 = vmatprep.subr.bf16.mxu0 %v5218
  %5290 = vmatpush1.bf16.msra.mxu0 %v5217
  %5291 = vmatprep.subr.bf16.mxu0 %v5214
  %5292 = vmatpush1.bf16.msra.mxu0 %v5213
  %5293 = vmatprep.subr.bf16.mxu0 0
  %5294 = vmatpush2.bf16.msra.mxu0 0
  %5295 = vmatprep.subr.bf16.mxu0 0
  %5296 = vmatpush2.bf16.msra.mxu0 0
  %5297 = vmatprep.subr.bf16.mxu0 0
  %5298 = vmatpush2.bf16.msra.mxu0 0
  %5299 = vmatprep.subr.bf16.mxu0 0
  %5300 = vmatpush2.bf16.msra.mxu0 0
  %5301 = vmatprep.subr.bf16.mxu0 0
  %5302 = vmatpush2.bf16.msra.mxu0 0
  %5303 = vmatprep.subr.bf16.mxu0 0
  %5304 = vmatpush2.bf16.msra.mxu0 0
  %5305 = vmatprep.subr.bf16.mxu0 0
  %5306 = vmatpush2.bf16.msra.mxu0 0
  %5307 = vmatprep.subr.bf16.mxu0 0
  %5308 = vmatpush2.bf16.msra.mxu0 0
  %5309 = vmatprep.mubr.bf16.mxu0 0
  %5310 = vmatmul.mubr.bf16.gmra.mxu0 %v5084
  %v5311 = vpop.f32.mrf.mxu0
  %v5312 = vadd.f32 0.0, %v5311
  %v5313 = vpop.f32.mrf.mxu0
  %v5314 = vadd.f32 0.0, %v5313
  %v5315 = vpop.f32.mrf.mxu0
  %v5316 = vadd.f32 0.0, %v5315
  %v5317 = vpop.f32.mrf.mxu0
  %v5318 = vadd.f32 0.0, %v5317
  %5319 = vdwg.mxu0
  %5320 = vmatprep.subr.bf16.mxu0 %v5244
  %5321 = vmatpush1.bf16.msra.mxu0 %v5243
  %5322 = vmatprep.subr.bf16.mxu0 %v5240
  %5323 = vmatpush1.bf16.msra.mxu0 %v5239
  %5324 = vmatprep.subr.bf16.mxu0 %v5236
  %5325 = vmatpush1.bf16.msra.mxu0 %v5235
  %5326 = vmatprep.subr.bf16.mxu0 %v5232
  %5327 = vmatpush1.bf16.msra.mxu0 %v5231
  %5328 = vmatprep.subr.bf16.mxu0 %v5228
  %5329 = vmatpush1.bf16.msra.mxu0 %v5227
  %5330 = vmatprep.subr.bf16.mxu0 %v5224
  %5331 = vmatpush1.bf16.msra.mxu0 %v5223
  %5332 = vmatprep.subr.bf16.mxu0 %v5220
  %5333 = vmatpush1.bf16.msra.mxu0 %v5219
  %5334 = vmatprep.subr.bf16.mxu0 %v5216
  %5335 = vmatpush1.bf16.msra.mxu0 %v5215
  %5336 = vmatprep.subr.bf16.mxu0 0
  %5337 = vmatpush2.bf16.msra.mxu0 0
  %5338 = vmatprep.subr.bf16.mxu0 0
  %5339 = vmatpush2.bf16.msra.mxu0 0
  %5340 = vmatprep.subr.bf16.mxu0 0
  %5341 = vmatpush2.bf16.msra.mxu0 0
  %5342 = vmatprep.subr.bf16.mxu0 0
  %5343 = vmatpush2.bf16.msra.mxu0 0
  %5344 = vmatprep.subr.bf16.mxu0 0
  %5345 = vmatpush2.bf16.msra.mxu0 0
  %5346 = vmatprep.subr.bf16.mxu0 0
  %5347 = vmatpush2.bf16.msra.mxu0 0
  %5348 = vmatprep.subr.bf16.mxu0 0
  %5349 = vmatpush2.bf16.msra.mxu0 0
  %5350 = vmatprep.subr.bf16.mxu0 0
  %5351 = vmatpush2.bf16.msra.mxu0 0
  %5352 = vmatprep.mubr.bf16.mxu0 0
  %5353 = vmatmul.mubr.bf16.gmra.mxu0 %v5084
  %v5354 = vpop.f32.mrf.mxu0
  %v5355 = vadd.f32 0.0, %v5354
  %v5356 = vpop.f32.mrf.mxu0
  %v5357 = vadd.f32 0.0, %v5356
  %v5358 = vpop.f32.mrf.mxu0
  %v5359 = vadd.f32 0.0, %v5358
  %v5360 = vpop.f32.mrf.mxu0
  %v5361 = vadd.f32 0.0, %v5360
  %5362 = vdwg.mxu0
  %v5363 = vadd.f32 %v5074, %v5312
  %v5364 = vadd.f32 %v5075, %v5314
  %v5365 = vadd.f32 %v5076, %v5355
  %v5366 = vadd.f32 %v5077, %v5357
  %v5367 = vadd.f32 %v5078, %v5316
  %v5368 = vadd.f32 %v5079, %v5318
  %v5369 = vadd.f32 %v5080, %v5359
  %v5370 = vadd.f32 %v5081, %v5361
  %v5371 = vxor.u32 %v5363, 2147483648
  %v5372 = vxor.u32 %v5367, 2147483648
  %v5373 = vmul.f32 %v5371, 1.442695
  %v5374 = vpow.pop %v5373
  %v5375 = vmul.f32 %v5372, 1.442695
  %v5376 = vpow.pop %v5375
  %v5377 = vadd.f32 %v5374, 1.0
  %v5378 = vadd.f32 %v5376, 1.0
  %v5379 = vrcp.pop %v5377
  %v5380 = vmul.f32 1.0, %v5379
  %v5381 = vrcp.pop %v5378
  %v5382 = vmul.f32 1.0, %v5381
  %v5383 = vxor.u32 %v5364, 2147483648
  %v5384 = vxor.u32 %v5368, 2147483648
  %v5385 = vmul.f32 %v5383, 1.442695
  %v5386 = vpow.pop %v5385
  %v5387 = vmul.f32 %v5384, 1.442695
  %v5388 = vpow.pop %v5387
  %v5389 = vadd.f32 %v5386, 1.0
  %v5390 = vadd.f32 %v5388, 1.0
  %v5391 = vrcp.pop %v5389
  %v5392 = vmul.f32 1.0, %v5391
  %v5393 = vrcp.pop %v5390
  %v5394 = vmul.f32 1.0, %v5393
  %v5395 = vtanh.pop %v5365
  %v5396 = vtanh.pop %v5369
  %v5397 = vxor.u32 %v5366, 2147483648
  %v5398 = vxor.u32 %v5370, 2147483648
  %v5399 = vmul.f32 %v5397, 1.442695
  %v5400 = vpow.pop %v5399
  %v5401 = vmul.f32 %v5398, 1.442695
  %v5402 = vpow.pop %v5401
  %v5403 = vadd.f32 %v5400, 1.0
  %v5404 = vadd.f32 %v5402, 1.0
  %v5405 = vrcp.pop %v5403
  %v5406 = vmul.f32 1.0, %v5405
  %v5407 = vrcp.pop %v5404
  %v5408 = vmul.f32 1.0, %v5407
  %v5409 = vld [vmem:[#allocation3] sm:$0xff]
  %v5410 = vld [vmem:[#allocation3 + $0x8] sm:$0xff]
  %v5411 = vmul.f32 %v5392, %v5409
  %v5412 = vmul.f32 %v5394, %v5410
  %v5413 = vmul.f32 %v5380, %v5395
  %v5414 = vmul.f32 %v5382, %v5396
  %v5415 = vadd.f32 %v5411, %v5413
  %v5416 = vadd.f32 %v5412, %v5414
  %v5417 = vtanh.pop %v5415
  %v5418 = vtanh.pop %v5416
  %v5419 = vmul.f32 %v5406, %v5417
  %v5420 = vmul.f32 %v5408, %v5418
  %5421 = vst [vmem:[#allocation3] sm:$0xff] %v5415
  %5422 = vst [vmem:[#allocation3 + $0x8] sm:$0xff] %v5416
  %5423 = vst [vmem:[#allocation2] sm:$0xff] %v5419
  %5424 = vst [vmem:[#allocation2 + $0x8] sm:$0xff] %v5420
  %v5425 = vpack.c.bf16 %v5420, %v5419
  %v5427 = vunpack.c.l.b16 %v5425
  %v5428 = vunpack.c.h.b16 %v5425
  %v5429 = vpack.c.b16 %v5427, %v5427
  %v5430 = vpack.c.b16 %v5428, %v5428
  %s5433 = scalar_lea.vmem %s4, 48
  %5434 = vst [vmem:[%s5433] sm:$0xf] %v5429
  %5435 = vst [vmem:[%s5433 + $0x4] sm:$0xf] %v5430
  %s5436 = scalar_lea.vmem %s1, 224
  %v5437 = vld [vmem:[%s5436] sm:$0xff]
  %v5438 = vld [vmem:[%s5436 + $0x8] sm:$0xff]
  %v5439 = vld [vmem:[%s5436 + $0x10] sm:$0xff]
  %v5440 = vld [vmem:[%s5436 + $0x18] sm:$0xff]
  %v5441 = vunpack.c.l.bf16 %v5437
  %v5442 = vunpack.c.h.bf16 %v5437
  %v5443 = vunpack.c.l.bf16 %v5438
  %v5444 = vunpack.c.h.bf16 %v5438
  %v5445 = vunpack.c.l.bf16 %v5439
  %v5446 = vunpack.c.h.bf16 %v5439
  %v5447 = vunpack.c.l.bf16 %v5440
  %v5448 = vunpack.c.h.bf16 %v5440
  %v5449 = vld [vmem:[#allocation2] sm:$0xff]
  %v5450 = vld [vmem:[#allocation2 + $0x8] sm:$0xff]
  %v5451 = vpack.c.bf16 %v5450, %v5449
  %v5452 = vld [vmem:[%s3] sm:$0xff]
  %v5453 = vld [vmem:[%s3 + $0x8] sm:$0xff]
  %v5454 = vld [vmem:[%s3 + $0x10] sm:$0xff]
  %v5455 = vld [vmem:[%s3 + $0x18] sm:$0xff]
  %v5456 = vld [vmem:[%s3 + $0x20] sm:$0xff]
  %v5457 = vld [vmem:[%s3 + $0x28] sm:$0xff]
  %v5458 = vld [vmem:[%s3 + $0x30] sm:$0xff]
  %v5459 = vld [vmem:[%s3 + $0x38] sm:$0xff]
  %v5460 = vld [vmem:[%s3 + $0x40] sm:$0xff]
  %v5461 = vld [vmem:[%s3 + $0x48] sm:$0xff]
  %v5462 = vld [vmem:[%s3 + $0x50] sm:$0xff]
  %v5463 = vld [vmem:[%s3 + $0x58] sm:$0xff]
  %v5464 = vld [vmem:[%s3 + $0x60] sm:$0xff]
  %v5465 = vld [vmem:[%s3 + $0x68] sm:$0xff]
  %v5466 = vld [vmem:[%s3 + $0x70] sm:$0xff]
  %v5467 = vld [vmem:[%s3 + $0x78] sm:$0xff]
  %v5468 = vld [vmem:[%s3 + $0x80] sm:$0xff]
  %v5469 = vld [vmem:[%s3 + $0x88] sm:$0xff]
  %v5470 = vld [vmem:[%s3 + $0x90] sm:$0xff]
  %v5471 = vld [vmem:[%s3 + $0x98] sm:$0xff]
  %v5472 = vld [vmem:[%s3 + $0xa0] sm:$0xff]
  %v5473 = vld [vmem:[%s3 + $0xa8] sm:$0xff]
  %v5474 = vld [vmem:[%s3 + $0xb0] sm:$0xff]
  %v5475 = vld [vmem:[%s3 + $0xb8] sm:$0xff]
  %v5476 = vld [vmem:[%s3 + $0xc0] sm:$0xff]
  %v5477 = vld [vmem:[%s3 + $0xc8] sm:$0xff]
  %v5478 = vld [vmem:[%s3 + $0xd0] sm:$0xff]
  %v5479 = vld [vmem:[%s3 + $0xd8] sm:$0xff]
  %v5480 = vld [vmem:[%s3 + $0xe0] sm:$0xff]
  %v5481 = vld [vmem:[%s3 + $0xe8] sm:$0xff]
  %v5482 = vld [vmem:[%s3 + $0xf0] sm:$0xff]
  %v5483 = vld [vmem:[%s3 + $0xf8] sm:$0xff]
  %v5516 = vunpack.c.l.b16 %v5452
  %v5517 = vunpack.c.h.b16 %v5452
  %v5518 = vunpack.c.l.b16 %v5453
  %v5519 = vunpack.c.h.b16 %v5453
  %v5520 = vunpack.c.l.b16 %v5454
  %v5521 = vunpack.c.h.b16 %v5454
  %v5522 = vunpack.c.l.b16 %v5455
  %v5523 = vunpack.c.h.b16 %v5455
  %v5524 = vunpack.c.l.b16 %v5456
  %v5525 = vunpack.c.h.b16 %v5456
  %v5526 = vunpack.c.l.b16 %v5457
  %v5527 = vunpack.c.h.b16 %v5457
  %v5528 = vunpack.c.l.b16 %v5458
  %v5529 = vunpack.c.h.b16 %v5458
  %v5530 = vunpack.c.l.b16 %v5459
  %v5531 = vunpack.c.h.b16 %v5459
  %v5532 = vunpack.c.l.b16 %v5460
  %v5533 = vunpack.c.h.b16 %v5460
  %v5534 = vunpack.c.l.b16 %v5461
  %v5535 = vunpack.c.h.b16 %v5461
  %v5536 = vunpack.c.l.b16 %v5462
  %v5537 = vunpack.c.h.b16 %v5462
  %v5538 = vunpack.c.l.b16 %v5463
  %v5539 = vunpack.c.h.b16 %v5463
  %v5540 = vunpack.c.l.b16 %v5464
  %v5541 = vunpack.c.h.b16 %v5464
  %v5542 = vunpack.c.l.b16 %v5465
  %v5543 = vunpack.c.h.b16 %v5465
  %v5544 = vunpack.c.l.b16 %v5466
  %v5545 = vunpack.c.h.b16 %v5466
  %v5546 = vunpack.c.l.b16 %v5467
  %v5547 = vunpack.c.h.b16 %v5467
  %v5548 = vunpack.c.l.b16 %v5468
  %v5549 = vunpack.c.h.b16 %v5468
  %v5550 = vunpack.c.l.b16 %v5469
  %v5551 = vunpack.c.h.b16 %v5469
  %v5552 = vunpack.c.l.b16 %v5470
  %v5553 = vunpack.c.h.b16 %v5470
  %v5554 = vunpack.c.l.b16 %v5471
  %v5555 = vunpack.c.h.b16 %v5471
  %v5556 = vunpack.c.l.b16 %v5472
  %v5557 = vunpack.c.h.b16 %v5472
  %v5558 = vunpack.c.l.b16 %v5473
  %v5559 = vunpack.c.h.b16 %v5473
  %v5560 = vunpack.c.l.b16 %v5474
  %v5561 = vunpack.c.h.b16 %v5474
  %v5562 = vunpack.c.l.b16 %v5475
  %v5563 = vunpack.c.h.b16 %v5475
  %v5564 = vunpack.c.l.b16 %v5476
  %v5565 = vunpack.c.h.b16 %v5476
  %v5566 = vunpack.c.l.b16 %v5477
  %v5567 = vunpack.c.h.b16 %v5477
  %v5568 = vunpack.c.l.b16 %v5478
  %v5569 = vunpack.c.h.b16 %v5478
  %v5570 = vunpack.c.l.b16 %v5479
  %v5571 = vunpack.c.h.b16 %v5479
  %v5572 = vunpack.c.l.b16 %v5480
  %v5573 = vunpack.c.h.b16 %v5480
  %v5574 = vunpack.c.l.b16 %v5481
  %v5575 = vunpack.c.h.b16 %v5481
  %v5576 = vunpack.c.l.b16 %v5482
  %v5577 = vunpack.c.h.b16 %v5482
  %v5578 = vunpack.c.l.b16 %v5483
  %v5579 = vunpack.c.h.b16 %v5483
  %v5580 = vpack.c.b16 %v5520, %v5516
  %v5581 = vpack.c.b16 %v5521, %v5517
  %v5582 = vpack.c.b16 %v5522, %v5518
  %v5583 = vpack.c.b16 %v5523, %v5519
  %v5584 = vpack.c.b16 %v5528, %v5524
  %v5585 = vpack.c.b16 %v5529, %v5525
  %v5586 = vpack.c.b16 %v5530, %v5526
  %v5587 = vpack.c.b16 %v5531, %v5527
  %v5588 = vpack.c.b16 %v5536, %v5532
  %v5589 = vpack.c.b16 %v5537, %v5533
  %v5590 = vpack.c.b16 %v5538, %v5534
  %v5591 = vpack.c.b16 %v5539, %v5535
  %v5592 = vpack.c.b16 %v5544, %v5540
  %v5593 = vpack.c.b16 %v5545, %v5541
  %v5594 = vpack.c.b16 %v5546, %v5542
  %v5595 = vpack.c.b16 %v5547, %v5543
  %v5596 = vpack.c.b16 %v5552, %v5548
  %v5597 = vpack.c.b16 %v5553, %v5549
  %v5598 = vpack.c.b16 %v5554, %v5550
  %v5599 = vpack.c.b16 %v5555, %v5551
  %v5600 = vpack.c.b16 %v5560, %v5556
  %v5601 = vpack.c.b16 %v5561, %v5557
  %v5602 = vpack.c.b16 %v5562, %v5558
  %v5603 = vpack.c.b16 %v5563, %v5559
  %v5604 = vpack.c.b16 %v5568, %v5564
  %v5605 = vpack.c.b16 %v5569, %v5565
  %v5606 = vpack.c.b16 %v5570, %v5566
  %v5607 = vpack.c.b16 %v5571, %v5567
  %v5608 = vpack.c.b16 %v5576, %v5572
  %v5609 = vpack.c.b16 %v5577, %v5573
  %v5610 = vpack.c.b16 %v5578, %v5574
  %v5611 = vpack.c.b16 %v5579, %v5575
  %5644 = vmatprep.subr.bf16.mxu0 %v5609
  %5645 = vmatpush1.bf16.msra.mxu0 %v5608
  %5646 = vmatprep.subr.bf16.mxu0 %v5605
  %5647 = vmatpush1.bf16.msra.mxu0 %v5604
  %5648 = vmatprep.subr.bf16.mxu0 %v5601
  %5649 = vmatpush1.bf16.msra.mxu0 %v5600
  %5650 = vmatprep.subr.bf16.mxu0 %v5597
  %5651 = vmatpush1.bf16.msra.mxu0 %v5596
  %5652 = vmatprep.subr.bf16.mxu0 %v5593
  %5653 = vmatpush1.bf16.msra.mxu0 %v5592
  %5654 = vmatprep.subr.bf16.mxu0 %v5589
  %5655 = vmatpush1.bf16.msra.mxu0 %v5588
  %5656 = vmatprep.subr.bf16.mxu0 %v5585
  %5657 = vmatpush1.bf16.msra.mxu0 %v5584
  %5658 = vmatprep.subr.bf16.mxu0 %v5581
  %5659 = vmatpush1.bf16.msra.mxu0 %v5580
  %5660 = vmatprep.subr.bf16.mxu0 0
  %5661 = vmatpush2.bf16.msra.mxu0 0
  %5662 = vmatprep.subr.bf16.mxu0 0
  %5663 = vmatpush2.bf16.msra.mxu0 0
  %5664 = vmatprep.subr.bf16.mxu0 0
  %5665 = vmatpush2.bf16.msra.mxu0 0
  %5666 = vmatprep.subr.bf16.mxu0 0
  %5667 = vmatpush2.bf16.msra.mxu0 0
  %5668 = vmatprep.subr.bf16.mxu0 0
  %5669 = vmatpush2.bf16.msra.mxu0 0
  %5670 = vmatprep.subr.bf16.mxu0 0
  %5671 = vmatpush2.bf16.msra.mxu0 0
  %5672 = vmatprep.subr.bf16.mxu0 0
  %5673 = vmatpush2.bf16.msra.mxu0 0
  %5674 = vmatprep.subr.bf16.mxu0 0
  %5675 = vmatpush2.bf16.msra.mxu0 0
  %5676 = vmatprep.mubr.bf16.mxu0 0
  %5677 = vmatmul.mubr.bf16.gmra.mxu0 %v5451
  %v5678 = vpop.f32.mrf.mxu0
  %v5679 = vadd.f32 0.0, %v5678
  %v5680 = vpop.f32.mrf.mxu0
  %v5681 = vadd.f32 0.0, %v5680
  %v5682 = vpop.f32.mrf.mxu0
  %v5683 = vadd.f32 0.0, %v5682
  %v5684 = vpop.f32.mrf.mxu0
  %v5685 = vadd.f32 0.0, %v5684
  %5686 = vdwg.mxu0
  %5687 = vmatprep.subr.bf16.mxu0 %v5611
  %5688 = vmatpush1.bf16.msra.mxu0 %v5610
  %5689 = vmatprep.subr.bf16.mxu0 %v5607
  %5690 = vmatpush1.bf16.msra.mxu0 %v5606
  %5691 = vmatprep.subr.bf16.mxu0 %v5603
  %5692 = vmatpush1.bf16.msra.mxu0 %v5602
  %5693 = vmatprep.subr.bf16.mxu0 %v5599
  %5694 = vmatpush1.bf16.msra.mxu0 %v5598
  %5695 = vmatprep.subr.bf16.mxu0 %v5595
  %5696 = vmatpush1.bf16.msra.mxu0 %v5594
  %5697 = vmatprep.subr.bf16.mxu0 %v5591
  %5698 = vmatpush1.bf16.msra.mxu0 %v5590
  %5699 = vmatprep.subr.bf16.mxu0 %v5587
  %5700 = vmatpush1.bf16.msra.mxu0 %v5586
  %5701 = vmatprep.subr.bf16.mxu0 %v5583
  %5702 = vmatpush1.bf16.msra.mxu0 %v5582
  %5703 = vmatprep.subr.bf16.mxu0 0
  %5704 = vmatpush2.bf16.msra.mxu0 0
  %5705 = vmatprep.subr.bf16.mxu0 0
  %5706 = vmatpush2.bf16.msra.mxu0 0
  %5707 = vmatprep.subr.bf16.mxu0 0
  %5708 = vmatpush2.bf16.msra.mxu0 0
  %5709 = vmatprep.subr.bf16.mxu0 0
  %5710 = vmatpush2.bf16.msra.mxu0 0
  %5711 = vmatprep.subr.bf16.mxu0 0
  %5712 = vmatpush2.bf16.msra.mxu0 0
  %5713 = vmatprep.subr.bf16.mxu0 0
  %5714 = vmatpush2.bf16.msra.mxu0 0
  %5715 = vmatprep.subr.bf16.mxu0 0
  %5716 = vmatpush2.bf16.msra.mxu0 0
  %5717 = vmatprep.subr.bf16.mxu0 0
  %5718 = vmatpush2.bf16.msra.mxu0 0
  %5719 = vmatprep.mubr.bf16.mxu0 0
  %5720 = vmatmul.mubr.bf16.gmra.mxu0 %v5451
  %v5721 = vpop.f32.mrf.mxu0
  %v5722 = vadd.f32 0.0, %v5721
  %v5723 = vpop.f32.mrf.mxu0
  %v5724 = vadd.f32 0.0, %v5723
  %v5725 = vpop.f32.mrf.mxu0
  %v5726 = vadd.f32 0.0, %v5725
  %v5727 = vpop.f32.mrf.mxu0
  %v5728 = vadd.f32 0.0, %v5727
  %5729 = vdwg.mxu0
  %v5730 = vadd.f32 %v5441, %v5679
  %v5731 = vadd.f32 %v5442, %v5681
  %v5732 = vadd.f32 %v5443, %v5722
  %v5733 = vadd.f32 %v5444, %v5724
  %v5734 = vadd.f32 %v5445, %v5683
  %v5735 = vadd.f32 %v5446, %v5685
  %v5736 = vadd.f32 %v5447, %v5726
  %v5737 = vadd.f32 %v5448, %v5728
  %v5738 = vxor.u32 %v5730, 2147483648
  %v5739 = vxor.u32 %v5734, 2147483648
  %v5740 = vmul.f32 %v5738, 1.442695
  %v5741 = vpow.pop %v5740
  %v5742 = vmul.f32 %v5739, 1.442695
  %v5743 = vpow.pop %v5742
  %v5744 = vadd.f32 %v5741, 1.0
  %v5745 = vadd.f32 %v5743, 1.0
  %v5746 = vrcp.pop %v5744
  %v5747 = vmul.f32 1.0, %v5746
  %v5748 = vrcp.pop %v5745
  %v5749 = vmul.f32 1.0, %v5748
  %v5750 = vxor.u32 %v5731, 2147483648
  %v5751 = vxor.u32 %v5735, 2147483648
  %v5752 = vmul.f32 %v5750, 1.442695
  %v5753 = vpow.pop %v5752
  %v5754 = vmul.f32 %v5751, 1.442695
  %v5755 = vpow.pop %v5754
  %v5756 = vadd.f32 %v5753, 1.0
  %v5757 = vadd.f32 %v5755, 1.0
  %v5758 = vrcp.pop %v5756
  %v5759 = vmul.f32 1.0, %v5758
  %v5760 = vrcp.pop %v5757
  %v5761 = vmul.f32 1.0, %v5760
  %v5762 = vtanh.pop %v5732
  %v5763 = vtanh.pop %v5736
  %v5764 = vxor.u32 %v5733, 2147483648
  %v5765 = vxor.u32 %v5737, 2147483648
  %v5766 = vmul.f32 %v5764, 1.442695
  %v5767 = vpow.pop %v5766
  %v5768 = vmul.f32 %v5765, 1.442695
  %v5769 = vpow.pop %v5768
  %v5770 = vadd.f32 %v5767, 1.0
  %v5771 = vadd.f32 %v5769, 1.0
  %v5772 = vrcp.pop %v5770
  %v5773 = vmul.f32 1.0, %v5772
  %v5774 = vrcp.pop %v5771
  %v5775 = vmul.f32 1.0, %v5774
  %v5776 = vld [vmem:[#allocation3] sm:$0xff]
  %v5777 = vld [vmem:[#allocation3 + $0x8] sm:$0xff]
  %v5778 = vmul.f32 %v5759, %v5776
  %v5779 = vmul.f32 %v5761, %v5777
  %v5780 = vmul.f32 %v5747, %v5762
  %v5781 = vmul.f32 %v5749, %v5763
  %v5782 = vadd.f32 %v5778, %v5780
  %v5783 = vadd.f32 %v5779, %v5781
  %v5784 = vtanh.pop %v5782
  %v5785 = vtanh.pop %v5783
  %v5786 = vmul.f32 %v5773, %v5784
  %v5787 = vmul.f32 %v5775, %v5785
  %5788 = vst [vmem:[#allocation3] sm:$0xff] %v5782
  %5789 = vst [vmem:[#allocation3 + $0x8] sm:$0xff] %v5783
  %5790 = vst [vmem:[#allocation2] sm:$0xff] %v5786
  %5791 = vst [vmem:[#allocation2 + $0x8] sm:$0xff] %v5787
  %v5792 = vpack.c.bf16 %v5787, %v5786
  %v5794 = vunpack.c.l.b16 %v5792
  %v5795 = vunpack.c.h.b16 %v5792
  %v5796 = vpack.c.b16 %v5794, %v5794
  %v5797 = vpack.c.b16 %v5795, %v5795
  %s5800 = scalar_lea.vmem %s4, 56
  %5801 = vst [vmem:[%s5800] sm:$0xf] %v5796
  %5802 = vst [vmem:[%s5800 + $0x4] sm:$0xf] %v5797
  // Predicated region
  $region18: #{seq2seq_forward.6} parent=0 // pred_check
    _
  $region19: #{seq2seq_forward.6} parent=0 // pred_check_branch
    %5804 = sbr.rel (0) target = $region21
  $region20: #{seq2seq_forward.6} parent=0 // pred_region
    _
  $region21: #{seq2seq_forward.6} parent=0 // pred_fallthru
    _
  // Predicated region
  $region22: #{seq2seq_forward.6} parent=0 // pred_check
    _
  $region23: #{seq2seq_forward.6} parent=0 // pred_check_branch
    %5806 = sbr.rel (0) target = $region25
  $region24: #{seq2seq_forward.6} parent=0 // pred_region
    _
  $region25: #{seq2seq_forward.6} parent=0 // pred_fallthru
    _

</llo_original>
